<compile_context>
chip_gen: v5e
topology: v5e:2x2
jax: 0.10.0
libtpu: 0.0.40
codegen_flags: <defaults>
</compile_context>

<pallas_src>
import jax
import jax.numpy as jnp
import numpy as np
from jax import lax
from jax.experimental import pallas as pl
from jax.experimental.pallas import tpu as pltpu

# Geometry implied by fc1 = Linear(64*25*25, 128): input images are 100x100.
P1 = 50                   # conv1 pooled spatial size (100 -> 50)
P2 = 25                   # conv2 pooled spatial size (50  -> 25)
NCOL2 = 26                # parity-plane grid cols (25 valid + 1 garbage)
NROW2 = 27                # parity-plane grid rows
NPLANE = NROW2 * NCOL2    # 702
M2 = P2 * NCOL2           # 650 conv2-kernel output rows (j == 25 is garbage)
K_FC = M2 * 64            # 41600; garbage cols map to zero fc1 weight rows
TK_FC = 65 * 128          # 8320 -> 5 K-steps per hidden half, divides K_FC


# ----------------------------------------------------------------------------
# Pallas kernels
# ----------------------------------------------------------------------------
def conv_kernel(pt_ref, w1_ref, b1_ref, mk_ref, w2_ref, b2_ref, o_ref, x2_ref):
    """Fused conv1+relu+pool and conv2+relu+pool for one image.

    pt_ref: (702, 36)  bf16  6x6 stride-4 input neighbourhood per plane-grid row
    w1_ref: (36, 512)  bf16  taps -> [quadrant(4)][plane(4)][channel(32)]
    b1_ref: (1, 128)   f32   conv1 bias tiled over the 4 planes
    mk_ref: (702, 128) bf16  plane-validity mask (zero borders = conv2 padding)
    w2_ref: (4, 128, 256) bf16  conv2 group weights [(plane,cin) x (class,cout)]
    b2_ref: (1, 64)    f32
    o_ref : (650, 64)  bf16  pooled conv2 output, rows = m*26 + j (j<25 valid)
    x2_ref: (702, 128) bf16  VMEM scratch: conv1 output in conv2-input layout
    """
    # conv1 + bias + relu + 2x2 maxpool, emitted directly in the lane-dense
    # parity-plane layout.  The 4 pooling quadrants come out as 4 contiguous
    # 128-lane groups, so the pool is an elementwise max.
    y = jnp.dot(pt_ref[...], w1_ref[...], preferred_element_type=jnp.float32)
    m = jnp.maximum(jnp.maximum(y[:, 0:128], y[:, 128:256]),
                    jnp.maximum(y[:, 256:384], y[:, 384:512]))
    h1 = jnp.maximum(m + b1_ref[...], 0.0).astype(jnp.bfloat16)
    x2_ref[...] = h1 * mk_ref[...]          # zero plane borders (conv2 padding)

    # conv2 + bias + relu + 2x2 maxpool: one full-width dot per row-offset
    # group; the 256 output lanes hold the 4 pooling classes, so the pool is
    # again an elementwise max.  No per-tap slice copies.
    acc = None
    for g, s in enumerate((0, 1, NCOL2, NCOL2 + 1)):
        t = jnp.dot(x2_ref[s:s + M2, :], w2_ref[g],
                    preferred_element_type=jnp.float32)
        acc = t if acc is None else acc + t
    z = jnp.maximum(jnp.maximum(acc[:, 0:64], acc[:, 64:128]),
                    jnp.maximum(acc[:, 128:192], acc[:, 192:256]))
    o_ref[...] = jnp.maximum(z + b2_ref[...], 0.0).astype(o_ref.dtype)


def mlp_kernel(x_ref, w1_ref, b1_ref, w2_ref, o_ref, acc_ref):
    """fc1 (K-streamed, f32 accum) + relu + fc2 for one 64-wide hidden half."""
    k = pl.program_id(1)

    @pl.when(k == 0)
    def _():
        acc_ref[...] = jnp.zeros_like(acc_ref)

    acc_ref[...] += jnp.dot(x_ref[...], w1_ref[0],
                            preferred_element_type=jnp.float32)

    @pl.when(k == pl.num_programs(1) - 1)
    def _():
        h = jnp.maximum(acc_ref[...] + b1_ref[0], 0.0)
        o_ref[0] = jnp.dot(h, w2_ref[0], preferred_element_type=jnp.float32)


# ----------------------------------------------------------------------------
# pallas_call wrappers
# ----------------------------------------------------------------------------
def conv_call(patches, prep):
    B = patches.shape[0]
    grid_spec = pltpu.PrefetchScalarGridSpec(
        num_scalar_prefetch=0,
        grid=(B,),
        in_specs=[
            pl.BlockSpec((None, NPLANE, 36), lambda b: (b, 0, 0)),
            pl.BlockSpec((36, 512), lambda b: (0, 0)),
            pl.BlockSpec((1, 128), lambda b: (0, 0)),
            pl.BlockSpec((NPLANE, 128), lambda b: (0, 0)),
            pl.BlockSpec((4, 128, 256), lambda b: (0, 0, 0)),
            pl.BlockSpec((1, 64), lambda b: (0, 0)),
        ],
        out_specs=pl.BlockSpec((None, M2, 64), lambda b: (b, 0, 0)),
        scratch_shapes=[pltpu.VMEM((NPLANE, 128), jnp.bfloat16)],
    )
    return pl.pallas_call(
        conv_kernel,
        out_shape=jax.ShapeDtypeStruct((B, M2, 64), jnp.bfloat16),
        grid_spec=grid_spec,
        compiler_params=pltpu.CompilerParams(dimension_semantics=("parallel",)),
    )(patches, prep["w1n"], prep["b1t"], prep["mask"], prep["w2g"], prep["b2"])


def mlp_call(x, w1p, b1p, w2p, tk=TK_FC):
    # TODO: overlap the first fc1 weight tiles with the conv phase via a
    # cross-pallas_call DMA future (P10); optional int8 (v5e/v6e) / fp8 (v7x)
    # fc1 weights would further halve the dominant weight stream.
    B, K = x.shape
    n_half, _, hid = w1p.shape              # (2, 41600, 64)
    n_out = w2p.shape[-1]                   # 20
    assert K % tk == 0 and tk % 128 == 0
    grid_spec = pltpu.PrefetchScalarGridSpec(
        num_scalar_prefetch=0,
        grid=(n_half, K // tk),
        in_specs=[
            pl.BlockSpec((B, tk), lambda h, k: (0, k)),
            pl.BlockSpec((1, tk, hid), lambda h, k: (h, k, 0)),
            pl.BlockSpec((1, 1, hid), lambda h, k: (h, 0, 0)),
            pl.BlockSpec((1, hid, n_out), lambda h, k: (h, 0, 0)),
        ],
        out_specs=pl.BlockSpec((1, B, n_out), lambda h, k: (h, 0, 0)),
        scratch_shapes=[pltpu.VMEM((B, hid), jnp.float32)],
    )
    return pl.pallas_call(
        mlp_kernel,
        out_shape=jax.ShapeDtypeStruct((n_half, B, n_out), jnp.float32),
        grid_spec=grid_spec,
        compiler_params=pltpu.CompilerParams(
            dimension_semantics=("parallel", "arbitrary")),
    )(x, w1p, b1p, w2p)


# ----------------------------------------------------------------------------
# Plain-JAX glue (cheap, per-call): conv1 neighbourhood patches
# ----------------------------------------------------------------------------
def conv1_patches(x_img):
    """x_img: (B, 100, 100) f32 -> (B, 702, 36) bf16.

    Row t = mm*26 + nn indexes the conv2 parity-plane grid.  The 36 columns
    are the 6x6 stride-4 input neighbourhood xq[4*mm + dr, 4*nn + dc]
    (dr, dc in 0..5, xq = image padded by 3), which covers every conv1 tap of
    every pooling quadrant of every parity plane rooted at (mm, nn).
    """
    B = x_img.shape[0]
    xq = jnp.pad(x_img, ((0, 0), (3, 7), (3, 7)))            # (B, 110, 110)
    cols = []
    for dr in range(6):
        for dc in range(6):
            cols.append(xq[:, dr:dr + 105:4, dc:dc + 101:4])  # (B, 27, 26)
    q = jnp.stack(cols, axis=-1)                              # (B, 27, 26, 36)
    return q.reshape(B, NPLANE, 36).astype(jnp.bfloat16)


# ----------------------------------------------------------------------------
# Parameters (PyTorch shapes) and one-time kernel-layout preparation
# ----------------------------------------------------------------------------
def init_params(key):
    ks = jax.random.split(key, 8)
    return dict(
        conv1_w=jax.random.normal(ks[0], (32, 1, 3, 3), jnp.float32) * 0.1,
        conv1_b=jax.random.normal(ks[1], (32,), jnp.float32) * 0.1,
        conv2_w=jax.random.normal(ks[2], (64, 32, 3, 3), jnp.float32) * 0.05,
        conv2_b=jax.random.normal(ks[3], (64,), jnp.float32) * 0.05,
        fc1_w=jax.random.normal(ks[4], (128, 64 * P2 * P2), jnp.float32) * 0.01,
        fc1_b=jax.random.normal(ks[5], (128,), jnp.float32) * 0.01,
        fc2_w=jax.random.normal(ks[6], (20, 128), jnp.float32) * 0.05,
        fc2_b=jax.random.normal(ks[7], (20,), jnp.float32) * 0.05,
    )


def prepare_params(p):
    """One-time weight layout prep -- never runs in the per-call path."""
    w1 = np.asarray(p["conv1_w"], np.float32)[:, 0]           # (32, 3, 3)
    b1 = np.asarray(p["conv1_b"], np.float32)
    w2 = np.asarray(p["conv2_w"], np.float32)                 # (64, 32, 3, 3)

    # conv1: 6x6 neighbourhood taps -> [quadrant q][plane p][channel c].
    w1n = np.zeros((36, 512), np.float32)
    for q in range(4):
        qi, qj = divmod(q, 2)
        for pp in range(4):
            pr, pc = divmod(pp, 2)
            for kh in range(3):
                for kw in range(3):
                    r = (2 * pr + qi + kh) * 6 + (2 * pc + qj + kw)
                    c0 = q * 128 + pp * 32
                    w1n[r, c0:c0 + 32] = w1[:, kh, kw]
    b1t = np.tile(b1, 4).reshape(1, 128)

    # Plane-validity mask: zeros at each parity plane's border (conv2 padding).
    mask = np.zeros((NROW2, NCOL2, 4, 32), np.float32)
    for pp in range(4):
        pr, pc = divmod(pp, 2)
        mask[1 - pr:26 - pr, 1 - pc:26 - pc, pp, :] = 1.0
    mask = mask.reshape(NPLANE, 128)

    # conv2 group weights: 4 row-offset groups x (plane, cin) x (class, cout).
    w2g = np.zeros((4, 128, 256), np.float32)
    for g in range(4):
        ra, rb = divmod(g, 2)
        for pp in range(4):
            pr, pc = divmod(pp, 2)
            for rp in range(2):
                for cp in range(2):
                    kh = 2 * ra + pr - rp
                    kw = 2 * rb + pc - cp
                    if 0 <= kh <= 2 and 0 <= kw <= 2:
                        w2g[g, pp * 32:pp * 32 + 32,
                            (rp * 2 + cp) * 64:(rp * 2 + cp) * 64 + 64] = \
                            w2[:, :, kh, kw].T

    # fc1: PyTorch flatten order (c, h, w) -> ours ((m*26 + j)*64 + c); insert
    # zero rows at the j == 25 garbage column; split hidden 128 -> 2 x 64.
    w1fc = p["fc1_w"].reshape(128, 64, P2, P2).transpose(2, 3, 1, 0)  # (m,j,c,n)
    w1fc = jnp.pad(w1fc, ((0, 0), (0, 1), (0, 0), (0, 0)))            # (25,26,64,128)
    w1fc = w1fc.reshape(K_FC, 128).reshape(K_FC, 2, 64).transpose(1, 0, 2)
    w2fc = p["fc2_w"].T.reshape(2, 64, 20)                            # (2, 64, 20)

    return dict(
        w1n=jnp.asarray(w1n, jnp.bfloat16),
        b1t=jnp.asarray(b1t, jnp.float32),
        mask=jnp.asarray(mask, jnp.bfloat16),
        w2g=jnp.asarray(w2g, jnp.bfloat16),
        b2=p["conv2_b"].reshape(1, 64),
        fc1_w=w1fc.astype(jnp.bfloat16),
        fc1_b=p["fc1_b"].reshape(2, 1, 64),
        fc2_w=w2fc,
        fc2_b=p["fc2_b"].reshape(1, 20),
    )


# ----------------------------------------------------------------------------
# Forward pass
# ----------------------------------------------------------------------------
@jax.jit
def mycnn_forward(prep, x):
    B = x.shape[0]
    patches = conv1_patches(x[:, 0, :, :])                    # (B, 702, 36) bf16
    h2 = conv_call(patches, prep)                              # (B, 650, 64) bf16
    flat = h2.reshape(B, K_FC)                                 # (B, 41600) bf16
    parts = mlp_call(flat, prep["fc1_w"], prep["fc1_b"], prep["fc2_w"])
    return parts.sum(axis=0) + prep["fc2_b"]                   # (B, 20)


def mycnn_reference(params, x):
    """Pure-JAX/XLA reference of the PyTorch forward pass (for validation)."""
    def conv(y, w, b):
        y = lax.conv_general_dilated(
            y, w, window_strides=(1, 1), padding="SAME",
            dimension_numbers=("NCHW", "OIHW", "NCHW"))
        return y + b.reshape(1, -1, 1, 1)

    def pool(y):
        return lax.reduce_window(y, -jnp.inf, lax.max,
                                 (1, 1, 2, 2), (1, 1, 2, 2), "VALID")

    h = pool(jax.nn.relu(conv(x, params["conv1_w"], params["conv1_b"])))
    h = pool(jax.nn.relu(conv(h, params["conv2_w"], params["conv2_b"])))
    h = h.reshape(x.shape[0], -1)
    h = jax.nn.relu(h @ params["fc1_w"].T + params["fc1_b"])
    return h @ params["fc2_w"].T + params["fc2_b"]


if __name__ == "__main__":
    key = jax.random.PRNGKey(0)
    pkey, xkey = jax.random.split(key)
    params = init_params(pkey)
    prep = prepare_params(params)      # one-time layout prep (outside fwd path)

    # batch=2; spatial 100x100 is forced by fc1 expecting 64*25*25 features.
    x = jax.random.normal(xkey, (2, 1, 100, 100), jnp.float32)

    out = jax.block_until_ready(mycnn_forward(prep, x))
    assert out.shape == (2, 20), out.shape

    ref = jax.block_until_ready(mycnn_reference(params, x))
    max_err = float(jnp.max(jnp.abs(out - ref)))
    assert max_err < 5e-2, f"max abs error vs reference: {max_err}"

    print("KERNEL_OK")
</pallas_src>

<mosaic_0001>
module attributes {stable_mosaic.version = 11 : i64} {
  func.func @conv_kernel(%arg0: i32, %arg1: memref<1x702x36xbf16, #tpu.memory_space<vmem>>, %arg2: memref<36x512xbf16, #tpu.memory_space<vmem>>, %arg3: memref<1x128xf32, #tpu.memory_space<vmem>>, %arg4: memref<702x128xbf16, #tpu.memory_space<vmem>>, %arg5: memref<4x128x256xbf16, #tpu.memory_space<vmem>>, %arg6: memref<1x64xf32, #tpu.memory_space<vmem>>, %arg7: memref<1x650x64xbf16, #tpu.memory_space<vmem>>, %arg8: memref<702x128xbf16, #tpu.memory_space<vmem>>) attributes {dimension_semantics = [#tpu.dimension_semantics<parallel>], iteration_bounds = array<i64: 2>, scalar_prefetch = 0 : i64, scratch_operands = 1 : i64, tpu.core_type = #tpu.core_type<tc>, window_params = [{transform_indices = @transform_0, window_bounds = array<i64: 1, 702, 36>}, {pipeline_mode = #tpu.pipeline_mode<synchronous>, transform_indices = @transform_1, window_bounds = array<i64: 36, 512>}, {pipeline_mode = #tpu.pipeline_mode<synchronous>, transform_indices = @transform_2, window_bounds = array<i64: 1, 128>}, {pipeline_mode = #tpu.pipeline_mode<synchronous>, transform_indices = @transform_3, window_bounds = array<i64: 702, 128>}, {pipeline_mode = #tpu.pipeline_mode<synchronous>, transform_indices = @transform_4, window_bounds = array<i64: 4, 128, 256>}, {pipeline_mode = #tpu.pipeline_mode<synchronous>, transform_indices = @transform_5, window_bounds = array<i64: 1, 64>}, {transform_indices = @transform_6, window_bounds = array<i64: 1, 650, 64>}]} {
    %c0 = arith.constant 0 : index
    %c0_0 = arith.constant 0 : index
    %c0_1 = arith.constant 0 : index
    %0 = vector.load %arg1[%c0, %c0_0, %c0_1] : memref<1x702x36xbf16, #tpu.memory_space<vmem>>, vector<1x702x36xbf16>
    %1 = vector.shape_cast %0 : vector<1x702x36xbf16> to vector<702x36xbf16>
    %c0_2 = arith.constant 0 : index
    %c0_3 = arith.constant 0 : index
    %2 = vector.load %arg2[%c0_2, %c0_3] : memref<36x512xbf16, #tpu.memory_space<vmem>>, vector<36x512xbf16>
    %cst = arith.constant dense<0.000000e+00> : vector<702x512xf32>
    %3 = tpu.matmul %1, %2, %cst {dimension_numbers = #tpu.dot_dimension_numbers<[1], [0], [0], [1], [0, 0, 1, 1], [], []>} : vector<702x36xbf16>, vector<36x512xbf16>, vector<702x512xf32> -> vector<702x512xf32>
    %4 = vector.extract_strided_slice %3 {offsets = [0, 0], sizes = [702, 128], strides = [1, 1]} : vector<702x512xf32> to vector<702x128xf32>
    %5 = vector.extract_strided_slice %3 {offsets = [0, 128], sizes = [702, 128], strides = [1, 1]} : vector<702x512xf32> to vector<702x128xf32>
    %6 = arith.maximumf %4, %5 : vector<702x128xf32>
    %7 = vector.extract_strided_slice %3 {offsets = [0, 256], sizes = [702, 128], strides = [1, 1]} : vector<702x512xf32> to vector<702x128xf32>
    %8 = vector.extract_strided_slice %3 {offsets = [0, 384], sizes = [702, 128], strides = [1, 1]} : vector<702x512xf32> to vector<702x128xf32>
    %9 = arith.maximumf %7, %8 : vector<702x128xf32>
    %10 = arith.maximumf %6, %9 : vector<702x128xf32>
    %c0_4 = arith.constant 0 : index
    %c0_5 = arith.constant 0 : index
    %11 = vector.load %arg3[%c0_4, %c0_5] : memref<1x128xf32, #tpu.memory_space<vmem>>, vector<1x128xf32>
    %12 = vector.broadcast %11 : vector<1x128xf32> to vector<702x128xf32>
    %13 = arith.addf %10, %12 : vector<702x128xf32>
    %cst_6 = arith.constant 0.000000e+00 : f32
    %14 = vector.broadcast %cst_6 : f32 to vector<702x128xf32>
    %15 = arith.maximumf %13, %14 : vector<702x128xf32>
    %16 = arith.truncf %15 : vector<702x128xf32> to vector<702x128xbf16>
    %c0_7 = arith.constant 0 : index
    %c0_8 = arith.constant 0 : index
    %17 = vector.load %arg4[%c0_7, %c0_8] : memref<702x128xbf16, #tpu.memory_space<vmem>>, vector<702x128xbf16>
    %18 = arith.mulf %16, %17 : vector<702x128xbf16>
    %c0_9 = arith.constant 0 : index
    %c0_10 = arith.constant 0 : index
    %19 = vector.load %arg8[%c0_9, %c0_10] : memref<702x128xbf16, #tpu.memory_space<vmem>>, vector<702x128xbf16>
    tpu.vector_store %arg8[%c0_9, %c0_10], %18 {strides = array<i32>} : memref<702x128xbf16, #tpu.memory_space<vmem>>, vector<702x128xbf16>,
    %c0_11 = arith.constant 0 : index
    %c0_12 = arith.constant 0 : index
    %20 = vector.load %arg8[%c0_11, %c0_12] : memref<702x128xbf16, #tpu.memory_space<vmem>>, vector<650x128xbf16>
    %c0_13 = arith.constant 0 : index
    %c0_14 = arith.constant 0 : index
    %c0_15 = arith.constant 0 : index
    %21 = vector.load %arg5[%c0_13, %c0_14, %c0_15] : memref<4x128x256xbf16, #tpu.memory_space<vmem>>, vector<1x128x256xbf16>
    %22 = vector.shape_cast %21 : vector<1x128x256xbf16> to vector<128x256xbf16>
    %cst_16 = arith.constant dense<0.000000e+00> : vector<650x256xf32>
    %23 = tpu.matmul %20, %22, %cst_16 {dimension_numbers = #tpu.dot_dimension_numbers<[1], [0], [0], [1], [0, 0, 1, 1], [], []>} : vector<650x128xbf16>, vector<128x256xbf16>, vector<650x256xf32> -> vector<650x256xf32>
    %c1 = arith.constant 1 : index
    %c0_17 = arith.constant 0 : index
    %24 = vector.load %arg8[%c1, %c0_17] : memref<702x128xbf16, #tpu.memory_space<vmem>>, vector<650x128xbf16>
    %c1_18 = arith.constant 1 : index
    %c0_19 = arith.constant 0 : index
    %c0_20 = arith.constant 0 : index
    %25 = vector.load %arg5[%c1_18, %c0_19, %c0_20] : memref<4x128x256xbf16, #tpu.memory_space<vmem>>, vector<1x128x256xbf16>
    %26 = vector.shape_cast %25 : vector<1x128x256xbf16> to vector<128x256xbf16>
    %cst_21 = arith.constant dense<0.000000e+00> : vector<650x256xf32>
    %27 = tpu.matmul %24, %26, %cst_21 {dimension_numbers = #tpu.dot_dimension_numbers<[1], [0], [0], [1], [0, 0, 1, 1], [], []>} : vector<650x128xbf16>, vector<128x256xbf16>, vector<650x256xf32> -> vector<650x256xf32>
    %28 = arith.addf %23, %27 : vector<650x256xf32>
    %c26 = arith.constant 26 : index
    %c0_22 = arith.constant 0 : index
    %29 = vector.load %arg8[%c26, %c0_22] : memref<702x128xbf16, #tpu.memory_space<vmem>>, vector<650x128xbf16>
    %c2 = arith.constant 2 : index
    %c0_23 = arith.constant 0 : index
    %c0_24 = arith.constant 0 : index
    %30 = vector.load %arg5[%c2, %c0_23, %c0_24] : memref<4x128x256xbf16, #tpu.memory_space<vmem>>, vector<1x128x256xbf16>
    %31 = vector.shape_cast %30 : vector<1x128x256xbf16> to vector<128x256xbf16>
    %cst_25 = arith.constant dense<0.000000e+00> : vector<650x256xf32>
    %32 = tpu.matmul %29, %31, %cst_25 {dimension_numbers = #tpu.dot_dimension_numbers<[1], [0], [0], [1], [0, 0, 1, 1], [], []>} : vector<650x128xbf16>, vector<128x256xbf16>, vector<650x256xf32> -> vector<650x256xf32>
    %33 = arith.addf %28, %32 : vector<650x256xf32>
    %c27 = arith.constant 27 : index
    %c0_26 = arith.constant 0 : index
    %34 = vector.load %arg8[%c27, %c0_26] : memref<702x128xbf16, #tpu.memory_space<vmem>>, vector<650x128xbf16>
    %c3 = arith.constant 3 : index
    %c0_27 = arith.constant 0 : index
    %c0_28 = arith.constant 0 : index
    %35 = vector.load %arg5[%c3, %c0_27, %c0_28] : memref<4x128x256xbf16, #tpu.memory_space<vmem>>, vector<1x128x256xbf16>
    %36 = vector.shape_cast %35 : vector<1x128x256xbf16> to vector<128x256xbf16>
    %cst_29 = arith.constant dense<0.000000e+00> : vector<650x256xf32>
    %37 = tpu.matmul %34, %36, %cst_29 {dimension_numbers = #tpu.dot_dimension_numbers<[1], [0], [0], [1], [0, 0, 1, 1], [], []>} : vector<650x128xbf16>, vector<128x256xbf16>, vector<650x256xf32> -> vector<650x256xf32>
    %38 = arith.addf %33, %37 : vector<650x256xf32>
    %39 = vector.extract_strided_slice %38 {offsets = [0, 0], sizes = [650, 64], strides = [1, 1]} : vector<650x256xf32> to vector<650x64xf32>
    %40 = vector.extract_strided_slice %38 {offsets = [0, 64], sizes = [650, 64], strides = [1, 1]} : vector<650x256xf32> to vector<650x64xf32>
    %41 = arith.maximumf %39, %40 : vector<650x64xf32>
    %42 = vector.extract_strided_slice %38 {offsets = [0, 128], sizes = [650, 64], strides = [1, 1]} : vector<650x256xf32> to vector<650x64xf32>
    %43 = vector.extract_strided_slice %38 {offsets = [0, 192], sizes = [650, 64], strides = [1, 1]} : vector<650x256xf32> to vector<650x64xf32>
    %44 = arith.maximumf %42, %43 : vector<650x64xf32>
    %45 = arith.maximumf %41, %44 : vector<650x64xf32>
    %c0_30 = arith.constant 0 : index
    %c0_31 = arith.constant 0 : index
    %46 = vector.load %arg6[%c0_30, %c0_31] : memref<1x64xf32, #tpu.memory_space<vmem>>, vector<1x64xf32>
    %47 = vector.broadcast %46 : vector<1x64xf32> to vector<650x64xf32>
    %48 = arith.addf %45, %47 : vector<650x64xf32>
    %cst_32 = arith.constant 0.000000e+00 : f32
    %49 = vector.broadcast %cst_32 : f32 to vector<650x64xf32>
    %50 = arith.maximumf %48, %49 : vector<650x64xf32>
    %51 = arith.truncf %50 : vector<650x64xf32> to vector<650x64xbf16>
    %c0_33 = arith.constant 0 : index
    %c0_34 = arith.constant 0 : index
    %c0_35 = arith.constant 0 : index
    %52 = vector.load %arg7[%c0_33, %c0_34, %c0_35] : memref<1x650x64xbf16, #tpu.memory_space<vmem>>, vector<1x650x64xbf16>
    %53 = vector.shape_cast %52 : vector<1x650x64xbf16> to vector<650x64xbf16>
    %54 = vector.shape_cast %51 : vector<650x64xbf16> to vector<1x650x64xbf16>
    tpu.vector_store %arg7[%c0_33, %c0_34, %c0_35], %54 {strides = array<i32>} : memref<1x650x64xbf16, #tpu.memory_space<vmem>>, vector<1x650x64xbf16>,
    return
  }
  func.func @transform_0(%arg0: i32) -> (i32, i32, i32) {
    %c0_i32 = arith.constant 0 : i32
    %c0_i32_0 = arith.constant 0 : i32
    %c0_i32_1 = arith.constant 0 : i32
    return %arg0, %c0_i32, %c0_i32_0 : i32, i32, i32
  }
  func.func @transform_1(%arg0: i32) -> (i32, i32) {
    %c0_i32 = arith.constant 0 : i32
    %c0_i32_0 = arith.constant 0 : i32
    %c0_i32_1 = arith.constant 0 : i32
    return %c0_i32, %c0_i32_0 : i32, i32
  }
  func.func @transform_2(%arg0: i32) -> (i32, i32) {
    %c0_i32 = arith.constant 0 : i32
    %c0_i32_0 = arith.constant 0 : i32
    %c0_i32_1 = arith.constant 0 : i32
    return %c0_i32, %c0_i32_0 : i32, i32
  }
  func.func @transform_3(%arg0: i32) -> (i32, i32) {
    %c0_i32 = arith.constant 0 : i32
    %c0_i32_0 = arith.constant 0 : i32
    %c0_i32_1 = arith.constant 0 : i32
    return %c0_i32, %c0_i32_0 : i32, i32
  }
  func.func @transform_4(%arg0: i32) -> (i32, i32, i32) {
    %c0_i32 = arith.constant 0 : i32
    %c0_i32_0 = arith.constant 0 : i32
    %c0_i32_1 = arith.constant 0 : i32
    %c0_i32_2 = arith.constant 0 : i32
    return %c0_i32, %c0_i32_0, %c0_i32_1 : i32, i32, i32
  }
  func.func @transform_5(%arg0: i32) -> (i32, i32) {
    %c0_i32 = arith.constant 0 : i32
    %c0_i32_0 = arith.constant 0 : i32
    %c0_i32_1 = arith.constant 0 : i32
    return %c0_i32, %c0_i32_0 : i32, i32
  }
  func.func @transform_6(%arg0: i32) -> (i32, i32, i32) {
    %c0_i32 = arith.constant 0 : i32
    %c0_i32_0 = arith.constant 0 : i32
    %c0_i32_1 = arith.constant 0 : i32
    return %arg0, %c0_i32, %c0_i32_0 : i32, i32, i32
  }
}

module attributes {stable_mosaic.version = 11 : i64} {
  func.func @mlp_kernel(%arg0: i32, %arg1: i32, %arg2: memref<2x8320xbf16, #tpu.memory_space<vmem>>, %arg3: memref<1x8320x64xbf16, #tpu.memory_space<vmem>>, %arg4: memref<1x1x64xf32, #tpu.memory_space<vmem>>, %arg5: memref<1x64x20xf32, #tpu.memory_space<vmem>>, %arg6: memref<1x2x20xf32, #tpu.memory_space<vmem>>, %arg7: memref<2x64xf32, #tpu.memory_space<vmem>>) attributes {dimension_semantics = [#tpu.dimension_semantics<parallel>, #tpu.dimension_semantics<arbitrary>], iteration_bounds = array<i64: 2, 5>, scalar_prefetch = 0 : i64, scratch_operands = 1 : i64, tpu.core_type = #tpu.core_type<tc>, window_params = [{transform_indices = @transform_0, window_bounds = array<i64: 2, 8320>}, {transform_indices = @transform_1, window_bounds = array<i64: 1, 8320, 64>}, {transform_indices = @transform_2, window_bounds = array<i64: 1, 1, 64>}, {transform_indices = @transform_3, window_bounds = array<i64: 1, 64, 20>}, {transform_indices = @transform_4, window_bounds = array<i64: 1, 2, 20>}]} {
    %c0_i32 = arith.constant 0 : i32
    %0 = arith.cmpi eq, %arg1, %c0_i32 : i32
    %1 = arith.extui %0 : i1 to i32
    %c0_i32_0 = arith.constant 0 : i32
    %2 = arith.cmpi ne, %1, %c0_i32_0 : i32
    scf.if %2 {
      %cst_10 = arith.constant 0.000000e+00 : f32
      %13 = vector.broadcast %cst_10 : f32 to vector<2x64xf32>
      %c0_11 = arith.constant 0 : index
      %c0_12 = arith.constant 0 : index
      %14 = vector.load %arg7[%c0_11, %c0_12] : memref<2x64xf32, #tpu.memory_space<vmem>>, vector<2x64xf32>
      tpu.vector_store %arg7[%c0_11, %c0_12], %13 {strides = array<i32>} : memref<2x64xf32, #tpu.memory_space<vmem>>, vector<2x64xf32>,
    } else {
    }
    %c0 = arith.constant 0 : index
    %c0_1 = arith.constant 0 : index
    %3 = vector.load %arg7[%c0, %c0_1] : memref<2x64xf32, #tpu.memory_space<vmem>>, vector<2x64xf32>
    %c0_2 = arith.constant 0 : index
    %c0_3 = arith.constant 0 : index
    %4 = vector.load %arg2[%c0_2, %c0_3] : memref<2x8320xbf16, #tpu.memory_space<vmem>>, vector<2x8320xbf16>
    %c0_4 = arith.constant 0 : index
    %c0_5 = arith.constant 0 : index
    %c0_6 = arith.constant 0 : index
    %5 = vector.load %arg3[%c0_4, %c0_5, %c0_6] : memref<1x8320x64xbf16, #tpu.memory_space<vmem>>, vector<1x8320x64xbf16>
    %6 = vector.shape_cast %5 : vector<1x8320x64xbf16> to vector<8320x64xbf16>
    %cst = arith.constant dense<0.000000e+00> : vector<2x64xf32>
    %7 = tpu.matmul %4, %6, %cst {dimension_numbers = #tpu.dot_dimension_numbers<[1], [0], [0], [1], [0, 0, 1, 1], [], []>} : vector<2x8320xbf16>, vector<8320x64xbf16>, vector<2x64xf32> -> vector<2x64xf32>
    %8 = arith.addf %3, %7 : vector<2x64xf32>
    %c0_7 = arith.constant 0 : index
    %c0_8 = arith.constant 0 : index
    %9 = vector.load %arg7[%c0_7, %c0_8] : memref<2x64xf32, #tpu.memory_space<vmem>>, vector<2x64xf32>
    tpu.vector_store %arg7[%c0_7, %c0_8], %8 {strides = array<i32>} : memref<2x64xf32, #tpu.memory_space<vmem>>, vector<2x64xf32>,
    %c4_i32 = arith.constant 4 : i32
    %10 = arith.cmpi eq, %arg1, %c4_i32 : i32
    %11 = arith.extui %10 : i1 to i32
    %c0_i32_9 = arith.constant 0 : i32
    %12 = arith.cmpi ne, %11, %c0_i32_9 : i32
    scf.if %12 {
      %c0_10 = arith.constant 0 : index
      %c0_11 = arith.constant 0 : index
      %13 = vector.load %arg7[%c0_10, %c0_11] : memref<2x64xf32, #tpu.memory_space<vmem>>, vector<2x64xf32>
      %c0_12 = arith.constant 0 : index
      %c0_13 = arith.constant 0 : index
      %c0_14 = arith.constant 0 : index
      %14 = vector.load %arg4[%c0_12, %c0_13, %c0_14] : memref<1x1x64xf32, #tpu.memory_space<vmem>>, vector<1x1x64xf32>
      %15 = vector.shape_cast %14 : vector<1x1x64xf32> to vector<1x64xf32>
      %16 = vector.broadcast %15 : vector<1x64xf32> to vector<2x64xf32>
      %17 = arith.addf %13, %16 : vector<2x64xf32>
      %cst_15 = arith.constant 0.000000e+00 : f32
      %18 = vector.broadcast %cst_15 : f32 to vector<2x64xf32>
      %19 = arith.maximumf %17, %18 : vector<2x64xf32>
      %c0_16 = arith.constant 0 : index
      %c0_17 = arith.constant 0 : index
      %c0_18 = arith.constant 0 : index
      %20 = vector.load %arg5[%c0_16, %c0_17, %c0_18] : memref<1x64x20xf32, #tpu.memory_space<vmem>>, vector<1x64x20xf32>
      %21 = vector.shape_cast %20 : vector<1x64x20xf32> to vector<64x20xf32>
      %cst_19 = arith.constant dense<0.000000e+00> : vector<2x20xf32>
      %22 = tpu.matmul %19, %21, %cst_19 {dimension_numbers = #tpu.dot_dimension_numbers<[1], [0], [0], [1], [0, 0, 1, 1], [], []>} : vector<2x64xf32>, vector<64x20xf32>, vector<2x20xf32> -> vector<2x20xf32>
      %c0_20 = arith.constant 0 : index
      %c0_21 = arith.constant 0 : index
      %c0_22 = arith.constant 0 : index
      %23 = vector.load %arg6[%c0_20, %c0_21, %c0_22] : memref<1x2x20xf32, #tpu.memory_space<vmem>>, vector<1x2x20xf32>
      %24 = vector.shape_cast %23 : vector<1x2x20xf32> to vector<2x20xf32>
      %25 = vector.shape_cast %22 : vector<2x20xf32> to vector<1x2x20xf32>
      tpu.vector_store %arg6[%c0_20, %c0_21, %c0_22], %25 {strides = array<i32>} : memref<1x2x20xf32, #tpu.memory_space<vmem>>, vector<1x2x20xf32>,
    } else {
    }
    return
  }
  func.func @transform_0(%arg0: i32, %arg1: i32) -> (i32, i32) {
    %c0_i32 = arith.constant 0 : i32
    %c0_i32_0 = arith.constant 0 : i32
    return %c0_i32, %arg1 : i32, i32
  }
  func.func @transform_1(%arg0: i32, %arg1: i32) -> (i32, i32, i32) {
    %c0_i32 = arith.constant 0 : i32
    %c0_i32_0 = arith.constant 0 : i32
    return %arg0, %arg1, %c0_i32 : i32, i32, i32
  }
  func.func @transform_2(%arg0: i32, %arg1: i32) -> (i32, i32, i32) {
    %c0_i32 = arith.constant 0 : i32
    %c0_i32_0 = arith.constant 0 : i32
    %c0_i32_1 = arith.constant 0 : i32
    return %arg0, %c0_i32, %c0_i32_0 : i32, i32, i32
  }
  func.func @transform_3(%arg0: i32, %arg1: i32) -> (i32, i32, i32) {
    %c0_i32 = arith.constant 0 : i32
    %c0_i32_0 = arith.constant 0 : i32
    %c0_i32_1 = arith.constant 0 : i32
    return %arg0, %c0_i32, %c0_i32_0 : i32, i32, i32
  }
  func.func @transform_4(%arg0: i32, %arg1: i32) -> (i32, i32, i32) {
    %c0_i32 = arith.constant 0 : i32
    %c0_i32_0 = arith.constant 0 : i32
    %c0_i32_1 = arith.constant 0 : i32
    return %arg0, %c0_i32, %c0_i32_0 : i32, i32, i32
  }
}

</mosaic_0001>

<llo_original>
// kernel: mycnn_forward.2
$region0: #{mycnn_forward.2}
  #allocation0 [shape = 'u32[]', space=smem, size = 0x4, offset = 0x4, fixed_abs, tag = 'smem constant byte address 0x4 - core index']
  #allocation1 [shape = 'u32[72,128]{1,0:T(1,128)}', space=vmem, size = 0x9000, scoped, tag = 'internal scratch']
  #allocation2 [shape = 'bf16[702,128]{1,0:T(8,128)(2,1)}', space=vmem, size = 0x2c000, scoped, tag = 'scratch operand']
  %s0 = inlined_call_operand.vmem [shape: bf16[2,702,36], index: 0, kind: input, shape index: {}]
  %s1 = inlined_call_operand.hbm [shape: bf16[36,512], index: 1, kind: input, shape index: {}]
  %s2 = inlined_call_operand.hbm [shape: f32[1,128], index: 2, kind: input, shape index: {}]
  %s3 = inlined_call_operand.hbm [shape: bf16[702,128], index: 3, kind: input, shape index: {}]
  %s4 = inlined_call_operand.hbm [shape: bf16[4,128,256], index: 4, kind: input, shape index: {}]
  %s5 = inlined_call_operand.hbm [shape: f32[1,64], index: 5, kind: input, shape index: {}]
  %s6 = inlined_call_operand.vmem [shape: bf16[2,650,64], index: 6, kind: output, shape index: {}]
  %s7 = sld [smem:[#allocation0]]
  $region77: #{mycnn_forward.2} parent=0
    _
  %s9 = ssub.s32 1, %s7
  %s10 = scalar_select 0, %s9, %s7
  $region1: #{mycnn_forward.2} parent=0
    #allocation3 [shape = 'u8[40960]{0}', space=vmem, size = 0xa000, scoped, tag = 'input window, operand 1, single buffered']
    #allocation4 [shape = 's32[2]{0}', space=sflag, size = 0x8, scoped, tag = 'scoped memory for mycnn_forward.2']
    #allocation5 [shape = 'u8[512]{0}', space=vmem, size = 0x400, scoped, tag = 'input window, operand 2, single buffered']
    #allocation6 [shape = 's32[1]{0}', space=sflag, size = 0x4, scoped, tag = 'scoped memory for mycnn_forward.2']
    #allocation7 [shape = 'u8[180224]{0}', space=vmem, size = 0x2c000, scoped, tag = 'input window, operand 3, single buffered']
    #allocation8 [shape = 'u8[262144]{0}', space=vmem, size = 0x40000, scoped, tag = 'input window, operand 4, single buffered']
    #allocation9 [shape = 's32[1]{0}', space=sflag, size = 0x4, scoped, tag = 'scoped memory for mycnn_forward.2']
    #allocation10 [shape = 'u8[512]{0}', space=vmem, size = 0x400, scoped, tag = 'input window, operand 5, single buffered']
    %11 = vsyncpa [#allocation4], 0
    %12 = vsyncpa [#allocation6], 0
    %13 = vsyncpa [#allocation9], 0
    loop: start=0, step=1, limit=4
    $region2: #{mycnn_forward.2} parent=1 // loop_pre_header
      _
    $region3: #{mycnn_forward.2} parent=1 // loop_header
      %s15 = sphi 0, %s19
      %p16 = scmp.ge.s32.totalorder %s15, 4
      %s25 = sphi 0, %s27
      %s28 = sphi 0, %s25
      %s29 = sphi 0, %s28
      %s45 = sphi 0, %s29
      %s49 = sphi 0, %s49
      %s51 = sphi 0, %s49
      %s52 = sphi 0, %s51
      %s66 = sphi 0, %s52
      %s70 = sphi 0, %s70
      %s72 = sphi 0, %s70
      %s73 = sphi 0, %s72
      %s87 = sphi 0, %s73
      %s91 = sphi 0, %s91
      %s93 = sphi 0, %s91
      %s94 = sphi 0, %s93
      %s108 = sphi 0, %s94
      %s112 = sphi 0, %s112
      %s114 = sphi 0, %s112
      %s115 = sphi 0, %s114
      %s129 = sphi 0, %s115
      %s133 = sphi 0, %s133
      %s135 = sphi 0, %s133
      %s136 = sphi 0, %s135
      %s150 = sphi 0, %s136
      %s156 = sphi 0, %s158
      %s159 = sphi 0, %s156
      %s160 = sphi 0, %s159
      %s176 = sphi 0, %s160
    $region4: #{mycnn_forward.2} parent=1 // loop_header_branch
      %18 = sbr.rel (%p16) target = $region8
    $region5: #{mycnn_forward.2} parent=1 // loop_body
      %s20 = ssub.s32 %s15, 1
      %s21 = ssub.s32 %s15, 2
      %s22 = sadd.s32 %s15, 1
      %s23 = ssub.s32 %s15, %s22
      %p24 = scmp.eq.s32.totalorder %s23, 0
      %s26 = sadd.s32 %s25, 1
      %s27 = scalar_select %p24, %s25, %s26
      %p30 = pneg %p24
      %p31 = scmp.eq.s32.totalorder %s15, 1
      %p32 = por %p30, %p31
      %p33 = scmp.ne.s32.totalorder %s25, %s28
      %p34 = scmp.eq.s32.totalorder %s15, 0
      %p35 = por %p33, %p34
      %p36 = scmp.ne.s32.totalorder %s25, %s28
      %p37 = scmp.eq.s32.totalorder %s20, 1
      %p38 = por %p36, %p37
      %p39 = scmp.ne.s32.totalorder %s28, %s29
      %p40 = scmp.eq.s32.totalorder %s20, 0
      %p41 = por %p39, %p40
      %p42 = scmp.ne.s32.totalorder %s28, %s29
      %p43 = scmp.eq.s32.totalorder %s21, 1
      %p44 = por %p42, %p43
      %p46 = scmp.ne.s32.totalorder %s29, %s45
      %p47 = scmp.eq.s32.totalorder %s21, 0
      %p48 = por %p46, %p47
      %s50 = sadd.s32 %s49, 1
      %p53 = scmp.eq.s32.totalorder %s15, 1
      %p54 = scmp.ne.s32.totalorder %s49, %s51
      %p55 = scmp.eq.s32.totalorder %s15, 0
      %p56 = por %p54, %p55
      %p57 = scmp.ne.s32.totalorder %s49, %s51
      %p58 = scmp.eq.s32.totalorder %s20, 1
      %p59 = por %p57, %p58
      %p60 = scmp.ne.s32.totalorder %s51, %s52
      %p61 = scmp.eq.s32.totalorder %s20, 0
      %p62 = por %p60, %p61
      %p63 = scmp.ne.s32.totalorder %s51, %s52
      %p64 = scmp.eq.s32.totalorder %s21, 1
      %p65 = por %p63, %p64
      %p67 = scmp.ne.s32.totalorder %s52, %s66
      %p68 = scmp.eq.s32.totalorder %s21, 0
      %p69 = por %p67, %p68
      %s71 = sadd.s32 %s70, 1
      %p74 = scmp.eq.s32.totalorder %s15, 1
      %p75 = scmp.ne.s32.totalorder %s70, %s72
      %p76 = scmp.eq.s32.totalorder %s15, 0
      %p77 = por %p75, %p76
      %p78 = scmp.ne.s32.totalorder %s70, %s72
      %p79 = scmp.eq.s32.totalorder %s20, 1
      %p80 = por %p78, %p79
      %p81 = scmp.ne.s32.totalorder %s72, %s73
      %p82 = scmp.eq.s32.totalorder %s20, 0
      %p83 = por %p81, %p82
      %p84 = scmp.ne.s32.totalorder %s72, %s73
      %p85 = scmp.eq.s32.totalorder %s21, 1
      %p86 = por %p84, %p85
      %p88 = scmp.ne.s32.totalorder %s73, %s87
      %p89 = scmp.eq.s32.totalorder %s21, 0
      %p90 = por %p88, %p89
      %s92 = sadd.s32 %s91, 1
      %p95 = scmp.eq.s32.totalorder %s15, 1
      %p96 = scmp.ne.s32.totalorder %s91, %s93
      %p97 = scmp.eq.s32.totalorder %s15, 0
      %p98 = por %p96, %p97
      %p99 = scmp.ne.s32.totalorder %s91, %s93
      %p100 = scmp.eq.s32.totalorder %s20, 1
      %p101 = por %p99, %p100
      %p102 = scmp.ne.s32.totalorder %s93, %s94
      %p103 = scmp.eq.s32.totalorder %s20, 0
      %p104 = por %p102, %p103
      %p105 = scmp.ne.s32.totalorder %s93, %s94
      %p106 = scmp.eq.s32.totalorder %s21, 1
      %p107 = por %p105, %p106
      %p109 = scmp.ne.s32.totalorder %s94, %s108
      %p110 = scmp.eq.s32.totalorder %s21, 0
      %p111 = por %p109, %p110
      %s113 = sadd.s32 %s112, 1
      %p116 = scmp.eq.s32.totalorder %s15, 1
      %p117 = scmp.ne.s32.totalorder %s112, %s114
      %p118 = scmp.eq.s32.totalorder %s15, 0
      %p119 = por %p117, %p118
      %p120 = scmp.ne.s32.totalorder %s112, %s114
      %p121 = scmp.eq.s32.totalorder %s20, 1
      %p122 = por %p120, %p121
      %p123 = scmp.ne.s32.totalorder %s114, %s115
      %p124 = scmp.eq.s32.totalorder %s20, 0
      %p125 = por %p123, %p124
      %p126 = scmp.ne.s32.totalorder %s114, %s115
      %p127 = scmp.eq.s32.totalorder %s21, 1
      %p128 = por %p126, %p127
      %p130 = scmp.ne.s32.totalorder %s115, %s129
      %p131 = scmp.eq.s32.totalorder %s21, 0
      %p132 = por %p130, %p131
      %s134 = sadd.s32 %s133, 1
      %p137 = scmp.eq.s32.totalorder %s15, 1
      %p138 = scmp.ne.s32.totalorder %s133, %s135
      %p139 = scmp.eq.s32.totalorder %s15, 0
      %p140 = por %p138, %p139
      %p141 = scmp.ne.s32.totalorder %s133, %s135
      %p142 = scmp.eq.s32.totalorder %s20, 1
      %p143 = por %p141, %p142
      %p144 = scmp.ne.s32.totalorder %s135, %s136
      %p145 = scmp.eq.s32.totalorder %s20, 0
      %p146 = por %p144, %p145
      %p147 = scmp.ne.s32.totalorder %s135, %s136
      %p148 = scmp.eq.s32.totalorder %s21, 1
      %p149 = por %p147, %p148
      %p151 = scmp.ne.s32.totalorder %s136, %s150
      %p152 = scmp.eq.s32.totalorder %s21, 0
      %p153 = por %p151, %p152
      %s154 = ssub.s32 %s15, %s22
      %p155 = scmp.eq.s32.totalorder %s154, 0
      %s157 = sadd.s32 %s156, 1
      %s158 = scalar_select %p155, %s156, %s157
      %p161 = pneg %p155
      %p162 = scmp.eq.s32.totalorder %s15, 1
      %p163 = por %p161, %p162
      %p164 = scmp.ne.s32.totalorder %s156, %s159
      %p165 = scmp.eq.s32.totalorder %s15, 0
      %p166 = por %p164, %p165
      %p167 = scmp.ne.s32.totalorder %s156, %s159
      %p168 = scmp.eq.s32.totalorder %s20, 1
      %p169 = por %p167, %p168
      %p170 = scmp.ne.s32.totalorder %s159, %s160
      %p171 = scmp.eq.s32.totalorder %s20, 0
      %p172 = por %p170, %p171
      %p173 = scmp.ne.s32.totalorder %s159, %s160
      %p174 = scmp.eq.s32.totalorder %s21, 1
      %p175 = por %p173, %p174
      %p177 = scmp.ne.s32.totalorder %s160, %s176
      %p178 = scmp.eq.s32.totalorder %s21, 0
      %p179 = por %p177, %p178
      %p180 = scmp.le.s32.totalorder 1, %s15
      %p181 = scmp.lt.s32.totalorder %s15, 3
      %p182 = pnand %p180, %p181
      %p183 = pneg %p182
      // Predicated region
      $region9: #{mycnn_forward.2} parent=5 // pred_check
        _
      $region10: #{mycnn_forward.2} parent=5 // pred_check_branch
        %185 = sbr.rel (%p182) target = $region12
      $region11: #{mycnn_forward.2} parent=5 // pred_region
        %s186 = ssub.s32 %s15, 1
        // Predicated region
        $region13: #{mycnn_forward.2} parent=11 // pred_check
          %p187 = pneg %p62
        $region14: #{mycnn_forward.2} parent=11 // pred_check_branch
          %189 = sbr.rel (%p187) target = $region16
        $region15: #{mycnn_forward.2} parent=11 // pred_region
          %191 = vsyncadd [#allocation4], 0
          %s192 = sshll.u32 %s1, 4
          %s193 = int_to_ptr.hbm [resolvable:$true] %s192
          %s194 = sshll.u32 [#allocation3], 4
          %s195 = int_to_ptr.vmem [resolvable:$true] %s194
          %200 = dma.hbm_to_vmem [thread:$0]  %s193, 1280, %s195, [#allocation4], 256, 256, 16
        $region16: #{mycnn_forward.2} parent=11 // pred_fallthru
          _
        // Predicated region
        $region17: #{mycnn_forward.2} parent=11 // pred_check
          %p201 = pneg %p83
        $region18: #{mycnn_forward.2} parent=11 // pred_check_branch
          %203 = sbr.rel (%p201) target = $region20
        $region19: #{mycnn_forward.2} parent=11 // pred_region
          %205 = vsyncadd [#allocation6], 0
          %s207 = sshll.u32 %s2, 4
          %s208 = int_to_ptr.hbm [resolvable:$true] %s207
          %s209 = sshll.u32 [#allocation5], 4
          %s210 = int_to_ptr.vmem [resolvable:$true] %s209
          %212 = dma.hbm_to_vmem [thread:$0]  %s208, 16, %s210, [#allocation6]
        $region20: #{mycnn_forward.2} parent=11 // pred_fallthru
          _
        // Predicated region
        $region21: #{mycnn_forward.2} parent=11 // pred_check
          %p213 = pneg %p104
        $region22: #{mycnn_forward.2} parent=11 // pred_check_branch
          %215 = sbr.rel (%p213) target = $region24
        $region23: #{mycnn_forward.2} parent=11 // pred_region
          %217 = vsyncadd [#allocation6], 0
          %s218 = sshll.u32 %s3, 4
          %s219 = int_to_ptr.hbm [resolvable:$true] %s218
          %s220 = sshll.u32 [#allocation7], 4
          %s221 = int_to_ptr.vmem [resolvable:$true] %s220
          %226 = dma.hbm_to_vmem [thread:$0]  %s219, 5632, %s221, [#allocation6], 64, 64, 4
        $region24: #{mycnn_forward.2} parent=11 // pred_fallthru
          _
        // Predicated region
        $region25: #{mycnn_forward.2} parent=11 // pred_check
          %p227 = pneg %p125
        $region26: #{mycnn_forward.2} parent=11 // pred_check_branch
          %229 = sbr.rel (%p227) target = $region28
        $region27: #{mycnn_forward.2} parent=11 // pred_region
          %231 = vsyncadd [#allocation9], 0
          %s232 = sshll.u32 %s4, 4
          %s233 = int_to_ptr.hbm [resolvable:$true] %s232
          %s234 = sshll.u32 [#allocation8], 4
          %s235 = int_to_ptr.vmem [resolvable:$true] %s234
          %240 = dma.hbm_to_vmem [thread:$0]  %s233, 8192, %s235, [#allocation9], 128, 128, 8
        $region28: #{mycnn_forward.2} parent=11 // pred_fallthru
          _
        // Predicated region
        $region29: #{mycnn_forward.2} parent=11 // pred_check
          %p241 = pneg %p146
        $region30: #{mycnn_forward.2} parent=11 // pred_check_branch
          %243 = sbr.rel (%p241) target = $region32
        $region31: #{mycnn_forward.2} parent=11 // pred_region
          %245 = vsyncadd [#allocation9], 0
          %s247 = sshll.u32 %s5, 4
          %s248 = int_to_ptr.hbm [resolvable:$true] %s247
          %s249 = sshll.u32 [#allocation10], 4
          %s250 = int_to_ptr.vmem [resolvable:$true] %s249
          %252 = dma.hbm_to_vmem [thread:$0]  %s248, 16, %s250, [#allocation9]
        $region32: #{mycnn_forward.2} parent=11 // pred_fallthru
          _
      $region12: #{mycnn_forward.2} parent=5 // pred_fallthru
        _
      %p253 = scmp.lt.s32.totalorder %s15, 2
      // Predicated region
      $region33: #{mycnn_forward.2} parent=5 // pred_check
        %p254 = pneg %p253
      $region34: #{mycnn_forward.2} parent=5 // pred_check_branch
        %256 = sbr.rel (%p254) target = $region36
      $region35: #{mycnn_forward.2} parent=5 // pred_region
        // Predicated region
        $region37: #{mycnn_forward.2} parent=35 // pred_check
          %p257 = pneg %p35
        $region38: #{mycnn_forward.2} parent=35 // pred_check_branch
          %259 = sbr.rel (%p257) target = $region40
        $region39: #{mycnn_forward.2} parent=35 // pred_region
          %p260 = scmp.lt.s32.totalorder %s15, 1
          %s261 = scalar_select %p260, %s15, 1
          %s262 = smul.addr %s261, 88
          %s263 = smul.addr %s262, 4
          %s264 = scalar_lea.vmem %s0, %s263
        $region40: #{mycnn_forward.2} parent=35 // pred_fallthru
          _
      $region36: #{mycnn_forward.2} parent=5 // pred_fallthru
        _
      %p265 = scmp.le.s32.totalorder 1, %s15
      %p266 = scmp.lt.s32.totalorder %s15, 3
      %p267 = pnand %p265, %p266
      %p268 = pneg %p267
      // Predicated region
      $region41: #{mycnn_forward.2} parent=5 // pred_check
        _
      $region42: #{mycnn_forward.2} parent=5 // pred_check_branch
        %270 = sbr.rel (%p267) target = $region44
      $region43: #{mycnn_forward.2} parent=5 // pred_region
        %s271 = ssub.s32 %s15, 1
        // Predicated region
        $region45: #{mycnn_forward.2} parent=43 // pred_check
          %p272 = pneg %p62
        $region46: #{mycnn_forward.2} parent=43 // pred_check_branch
          %274 = sbr.rel (%p272) target = $region48
        $region47: #{mycnn_forward.2} parent=43 // pred_region
          %276 = dma.done [#allocation4], 1280
        $region48: #{mycnn_forward.2} parent=43 // pred_fallthru
          _
        // Predicated region
        $region49: #{mycnn_forward.2} parent=43 // pred_check
          %p277 = pneg %p83
        $region50: #{mycnn_forward.2} parent=43 // pred_check_branch
          %279 = sbr.rel (%p277) target = $region52
        $region51: #{mycnn_forward.2} parent=43 // pred_region
          %281 = dma.done [#allocation6], 16
        $region52: #{mycnn_forward.2} parent=43 // pred_fallthru
          _
        // Predicated region
        $region53: #{mycnn_forward.2} parent=43 // pred_check
          %p282 = pneg %p104
        $region54: #{mycnn_forward.2} parent=43 // pred_check_branch
          %284 = sbr.rel (%p282) target = $region56
        $region55: #{mycnn_forward.2} parent=43 // pred_region
          %286 = dma.done [#allocation6], 5632
        $region56: #{mycnn_forward.2} parent=43 // pred_fallthru
          _
        // Predicated region
        $region57: #{mycnn_forward.2} parent=43 // pred_check
          %p287 = pneg %p125
        $region58: #{mycnn_forward.2} parent=43 // pred_check_branch
          %289 = sbr.rel (%p287) target = $region60
        $region59: #{mycnn_forward.2} parent=43 // pred_region
          %291 = dma.done [#allocation9], 8192
        $region60: #{mycnn_forward.2} parent=43 // pred_fallthru
          _
        // Predicated region
        $region61: #{mycnn_forward.2} parent=43 // pred_check
          %p292 = pneg %p146
        $region62: #{mycnn_forward.2} parent=43 // pred_check_branch
          %294 = sbr.rel (%p292) target = $region64
        $region63: #{mycnn_forward.2} parent=43 // pred_region
          %296 = dma.done [#allocation9], 16
        $region64: #{mycnn_forward.2} parent=43 // pred_fallthru
          _
        %p297 = scmp.lt.s32.totalorder %s20, 1
        %s298 = scalar_select %p297, %s20, 1
        %s299 = smul.addr %s298, 88
        %s300 = smul.addr %s299, 4
        %s301 = scalar_lea.vmem %s0, %s300
        %p302 = pneg %p41
        %p303 = pneg %p38
        %p304 = pneg %p62
        %p305 = pneg %p59
        %p306 = pneg %p83
        %p307 = pneg %p80
        %p308 = pneg %p104
        %p309 = pneg %p101
        %p310 = pneg %p125
        %p311 = pneg %p122
        %p312 = pneg %p146
        %p313 = pneg %p143
        %p314 = pneg %p172
        %p315 = pneg %p169
        %p316 = scmp.lt.s32.totalorder %s20, 1
        %s317 = scalar_select %p316, %s20, 1
        %s318 = smul.addr %s317, 82
        %s319 = smul.addr %s318, 4
        %s320 = scalar_lea.vmem %s6, %s319
        %p321 = scmp.lt.s32.totalorder %s20, 1
        %s322 = scalar_select %p321, %s20, 1
        %s323 = smul.addr %s322, 88
        %s324 = smul.addr %s323, 4
        %s325 = scalar_lea.vmem %s0, %s324
        %p326 = scmp.lt.s32.totalorder %s20, 1
        %s327 = scalar_select %p326, %s20, 1
        %s328 = smul.addr %s327, 82
        %s329 = smul.addr %s328, 4
        %s330 = scalar_lea.vmem %s6, %s329
        %v332 = vld [vmem:[%s325] sm:$0xf]
        %v333 = vld [vmem:[%s325 + $0x4] sm:$0xf]
        %v334 = vld [vmem:[%s325 + $0x8] sm:$0xf]
        %v335 = vld [vmem:[%s325 + $0xc] sm:$0xf]
        %v336 = vld [vmem:[%s325 + $0x10] sm:$0xf]
        %v337 = vld [vmem:[%s325 + $0x14] sm:$0xf]
        %v338 = vld [vmem:[%s325 + $0x18] sm:$0xf]
        %v339 = vld [vmem:[%s325 + $0x1c] sm:$0xf]
        %v340 = vld [vmem:[%s325 + $0x20] sm:$0xf]
        %v341 = vld [vmem:[%s325 + $0x24] sm:$0xf]
        %v342 = vld [vmem:[%s325 + $0x28] sm:$0xf]
        %v343 = vld [vmem:[%s325 + $0x2c] sm:$0xf]
        %v344 = vld [vmem:[%s325 + $0x30] sm:$0xf]
        %v345 = vld [vmem:[%s325 + $0x34] sm:$0xf]
        %v346 = vld [vmem:[%s325 + $0x38] sm:$0xf]
        %v347 = vld [vmem:[%s325 + $0x3c] sm:$0xf]
        %v348 = vld [vmem:[%s325 + $0x40] sm:$0xf]
        %v349 = vld [vmem:[%s325 + $0x44] sm:$0xf]
        %v350 = vld [vmem:[%s325 + $0x48] sm:$0xf]
        %v351 = vld [vmem:[%s325 + $0x4c] sm:$0xf]
        %v352 = vld [vmem:[%s325 + $0x50] sm:$0xf]
        %v353 = vld [vmem:[%s325 + $0x54] sm:$0xf]
        %v354 = vld [vmem:[%s325 + $0x58] sm:$0xf]
        %v355 = vld [vmem:[%s325 + $0x5c] sm:$0xf]
        %v356 = vld [vmem:[%s325 + $0x60] sm:$0xf]
        %v357 = vld [vmem:[%s325 + $0x64] sm:$0xf]
        %v358 = vld [vmem:[%s325 + $0x68] sm:$0xf]
        %v359 = vld [vmem:[%s325 + $0x6c] sm:$0xf]
        %v360 = vld [vmem:[%s325 + $0x70] sm:$0xf]
        %v361 = vld [vmem:[%s325 + $0x74] sm:$0xf]
        %v362 = vld [vmem:[%s325 + $0x78] sm:$0xf]
        %v363 = vld [vmem:[%s325 + $0x7c] sm:$0xf]
        %v364 = vld [vmem:[%s325 + $0x80] sm:$0xf]
        %v365 = vld [vmem:[%s325 + $0x84] sm:$0xf]
        %v366 = vld [vmem:[%s325 + $0x88] sm:$0xf]
        %v367 = vld [vmem:[%s325 + $0x8c] sm:$0xf]
        %v368 = vld [vmem:[%s325 + $0x90] sm:$0xf]
        %v369 = vld [vmem:[%s325 + $0x94] sm:$0xf]
        %v370 = vld [vmem:[%s325 + $0x98] sm:$0xf]
        %v371 = vld [vmem:[%s325 + $0x9c] sm:$0xf]
        %v372 = vld [vmem:[%s325 + $0xa0] sm:$0xf]
        %v373 = vld [vmem:[%s325 + $0xa4] sm:$0xf]
        %v374 = vld [vmem:[%s325 + $0xa8] sm:$0xf]
        %v375 = vld [vmem:[%s325 + $0xac] sm:$0xf]
        %v376 = vld [vmem:[%s325 + $0xb0] sm:$0xf]
        %v377 = vld [vmem:[%s325 + $0xb4] sm:$0xf]
        %v378 = vld [vmem:[%s325 + $0xb8] sm:$0xf]
        %v379 = vld [vmem:[%s325 + $0xbc] sm:$0xf]
        %v380 = vld [vmem:[%s325 + $0xc0] sm:$0xf]
        %v381 = vld [vmem:[%s325 + $0xc4] sm:$0xf]
        %v382 = vld [vmem:[%s325 + $0xc8] sm:$0xf]
        %v383 = vld [vmem:[%s325 + $0xcc] sm:$0xf]
        %v384 = vld [vmem:[%s325 + $0xd0] sm:$0xf]
        %v385 = vld [vmem:[%s325 + $0xd4] sm:$0xf]
        %v386 = vld [vmem:[%s325 + $0xd8] sm:$0xf]
        %v387 = vld [vmem:[%s325 + $0xdc] sm:$0xf]
        %v388 = vld [vmem:[%s325 + $0xe0] sm:$0xf]
        %v389 = vld [vmem:[%s325 + $0xe4] sm:$0xf]
        %v390 = vld [vmem:[%s325 + $0xe8] sm:$0xf]
        %v391 = vld [vmem:[%s325 + $0xec] sm:$0xf]
        %v392 = vld [vmem:[%s325 + $0xf0] sm:$0xf]
        %v393 = vld [vmem:[%s325 + $0xf4] sm:$0xf]
        %v394 = vld [vmem:[%s325 + $0xf8] sm:$0xf]
        %v395 = vld [vmem:[%s325 + $0xfc] sm:$0xf]
        %v396 = vld [vmem:[%s325 + $0x100] sm:$0xf]
        %v397 = vld [vmem:[%s325 + $0x104] sm:$0xf]
        %v398 = vld [vmem:[%s325 + $0x108] sm:$0xf]
        %v399 = vld [vmem:[%s325 + $0x10c] sm:$0xf]
        %v400 = vld [vmem:[%s325 + $0x110] sm:$0xf]
        %v401 = vld [vmem:[%s325 + $0x114] sm:$0xf]
        %v402 = vld [vmem:[%s325 + $0x118] sm:$0xf]
        %v403 = vld [vmem:[%s325 + $0x11c] sm:$0xf]
        %v404 = vld [vmem:[%s325 + $0x120] sm:$0xf]
        %v405 = vld [vmem:[%s325 + $0x124] sm:$0xf]
        %v406 = vld [vmem:[%s325 + $0x128] sm:$0xf]
        %v407 = vld [vmem:[%s325 + $0x12c] sm:$0xf]
        %v408 = vld [vmem:[%s325 + $0x130] sm:$0xf]
        %v409 = vld [vmem:[%s325 + $0x134] sm:$0xf]
        %v410 = vld [vmem:[%s325 + $0x138] sm:$0xf]
        %v411 = vld [vmem:[%s325 + $0x13c] sm:$0xf]
        %v412 = vld [vmem:[%s325 + $0x140] sm:$0xf]
        %v413 = vld [vmem:[%s325 + $0x144] sm:$0xf]
        %v414 = vld [vmem:[%s325 + $0x148] sm:$0xf]
        %v415 = vld [vmem:[%s325 + $0x14c] sm:$0xf]
        %v416 = vld [vmem:[%s325 + $0x150] sm:$0xf]
        %v417 = vld [vmem:[%s325 + $0x154] sm:$0xf]
        %v418 = vld [vmem:[%s325 + $0x158] sm:$0xf]
        %v419 = vld [vmem:[%s325 + $0x15c] sm:$0x7]
        %v420 = vld [vmem:[#allocation3] sm:$0xff]
        %v421 = vld [vmem:[#allocation3 + $0x8] sm:$0xff]
        %v422 = vld [vmem:[#allocation3 + $0x10] sm:$0xff]
        %v423 = vld [vmem:[#allocation3 + $0x18] sm:$0xff]
        %v424 = vld [vmem:[#allocation3 + $0x20] sm:$0xff]
        %v425 = vld [vmem:[#allocation3 + $0x28] sm:$0xff]
        %v426 = vld [vmem:[#allocation3 + $0x30] sm:$0xff]
        %v427 = vld [vmem:[#allocation3 + $0x38] sm:$0xff]
        %v428 = vld [vmem:[#allocation3 + $0x40] sm:$0x33]
        %v429 = vld [vmem:[#allocation3 + $0x48] sm:$0x33]
        %v518 = vunpack.c.l.b16 %v332
        %v519 = vunpack.c.l.b16 %v333
        %v520 = vunpack.c.l.b16 %v334
        %v521 = vunpack.c.l.b16 %v335
        %v522 = vunpack.c.l.b16 %v336
        %v523 = vunpack.c.l.b16 %v337
        %v524 = vunpack.c.l.b16 %v338
        %v525 = vunpack.c.l.b16 %v339
        %v526 = vunpack.c.l.b16 %v340
        %v527 = vunpack.c.l.b16 %v341
        %v528 = vunpack.c.l.b16 %v342
        %v529 = vunpack.c.l.b16 %v343
        %v530 = vunpack.c.l.b16 %v344
        %v531 = vunpack.c.l.b16 %v345
        %v532 = vunpack.c.l.b16 %v346
        %v533 = vunpack.c.l.b16 %v347
        %v534 = vunpack.c.l.b16 %v348
        %v535 = vunpack.c.l.b16 %v349
        %v536 = vunpack.c.l.b16 %v350
        %v537 = vunpack.c.l.b16 %v351
        %v538 = vunpack.c.l.b16 %v352
        %v539 = vunpack.c.l.b16 %v353
        %v540 = vunpack.c.l.b16 %v354
        %v541 = vunpack.c.l.b16 %v355
        %v542 = vunpack.c.l.b16 %v356
        %v543 = vunpack.c.l.b16 %v357
        %v544 = vunpack.c.l.b16 %v358
        %v545 = vunpack.c.l.b16 %v359
        %v546 = vunpack.c.l.b16 %v360
        %v547 = vunpack.c.l.b16 %v361
        %v548 = vunpack.c.l.b16 %v362
        %v549 = vunpack.c.l.b16 %v363
        %v550 = vunpack.c.l.b16 %v364
        %v551 = vunpack.c.l.b16 %v365
        %v552 = vunpack.c.l.b16 %v366
        %v553 = vunpack.c.l.b16 %v367
        %v554 = vunpack.c.l.b16 %v368
        %v555 = vunpack.c.l.b16 %v369
        %v556 = vunpack.c.l.b16 %v370
        %v557 = vunpack.c.l.b16 %v371
        %v558 = vunpack.c.l.b16 %v372
        %v559 = vunpack.c.l.b16 %v373
        %v560 = vunpack.c.l.b16 %v374
        %v561 = vunpack.c.l.b16 %v375
        %v562 = vunpack.c.l.b16 %v376
        %v563 = vunpack.c.l.b16 %v377
        %v564 = vunpack.c.l.b16 %v378
        %v565 = vunpack.c.l.b16 %v379
        %v566 = vunpack.c.l.b16 %v380
        %v567 = vunpack.c.l.b16 %v381
        %v568 = vunpack.c.l.b16 %v382
        %v569 = vunpack.c.l.b16 %v383
        %v570 = vunpack.c.l.b16 %v384
        %v571 = vunpack.c.l.b16 %v385
        %v572 = vunpack.c.l.b16 %v386
        %v573 = vunpack.c.l.b16 %v387
        %v574 = vunpack.c.l.b16 %v388
        %v575 = vunpack.c.l.b16 %v389
        %v576 = vunpack.c.l.b16 %v390
        %v577 = vunpack.c.l.b16 %v391
        %v578 = vunpack.c.l.b16 %v392
        %v579 = vunpack.c.l.b16 %v393
        %v580 = vunpack.c.l.b16 %v394
        %v581 = vunpack.c.l.b16 %v395
        %v582 = vunpack.c.l.b16 %v396
        %v583 = vunpack.c.l.b16 %v397
        %v584 = vunpack.c.l.b16 %v398
        %v585 = vunpack.c.l.b16 %v399
        %v586 = vunpack.c.l.b16 %v400
        %v587 = vunpack.c.l.b16 %v401
        %v588 = vunpack.c.l.b16 %v402
        %v589 = vunpack.c.l.b16 %v403
        %v590 = vunpack.c.l.b16 %v404
        %v591 = vunpack.c.l.b16 %v405
        %v592 = vunpack.c.l.b16 %v406
        %v593 = vunpack.c.l.b16 %v407
        %v594 = vunpack.c.l.b16 %v408
        %v595 = vunpack.c.l.b16 %v409
        %v596 = vunpack.c.l.b16 %v410
        %v597 = vunpack.c.l.b16 %v411
        %v598 = vunpack.c.l.b16 %v412
        %v599 = vunpack.c.l.b16 %v413
        %v600 = vunpack.c.l.b16 %v414
        %v601 = vunpack.c.l.b16 %v415
        %v602 = vunpack.c.l.b16 %v416
        %v603 = vunpack.c.l.b16 %v417
        %v604 = vunpack.c.l.b16 %v418
        %v605 = vunpack.c.l.b16 %v419
        %v606 = vpack.c.b16 %v519, %v518
        %v607 = vpack.c.b16 %v521, %v520
        %v608 = vpack.c.b16 %v523, %v522
        %v609 = vpack.c.b16 %v525, %v524
        %v610 = vpack.c.b16 %v527, %v526
        %v611 = vpack.c.b16 %v529, %v528
        %v612 = vpack.c.b16 %v531, %v530
        %v613 = vpack.c.b16 %v533, %v532
        %v614 = vpack.c.b16 %v535, %v534
        %v615 = vpack.c.b16 %v537, %v536
        %v616 = vpack.c.b16 %v539, %v538
        %v617 = vpack.c.b16 %v541, %v540
        %v618 = vpack.c.b16 %v543, %v542
        %v619 = vpack.c.b16 %v545, %v544
        %v620 = vpack.c.b16 %v547, %v546
        %v621 = vpack.c.b16 %v549, %v548
        %v622 = vpack.c.b16 %v551, %v550
        %v623 = vpack.c.b16 %v553, %v552
        %v624 = vpack.c.b16 %v555, %v554
        %v625 = vpack.c.b16 %v557, %v556
        %v626 = vpack.c.b16 %v559, %v558
        %v627 = vpack.c.b16 %v561, %v560
        %v628 = vpack.c.b16 %v563, %v562
        %v629 = vpack.c.b16 %v565, %v564
        %v630 = vpack.c.b16 %v567, %v566
        %v631 = vpack.c.b16 %v569, %v568
        %v632 = vpack.c.b16 %v571, %v570
        %v633 = vpack.c.b16 %v573, %v572
        %v634 = vpack.c.b16 %v575, %v574
        %v635 = vpack.c.b16 %v577, %v576
        %v636 = vpack.c.b16 %v579, %v578
        %v637 = vpack.c.b16 %v581, %v580
        %v638 = vpack.c.b16 %v583, %v582
        %v639 = vpack.c.b16 %v585, %v584
        %v640 = vpack.c.b16 %v587, %v586
        %v641 = vpack.c.b16 %v589, %v588
        %v642 = vpack.c.b16 %v591, %v590
        %v643 = vpack.c.b16 %v593, %v592
        %v644 = vpack.c.b16 %v595, %v594
        %v645 = vpack.c.b16 %v597, %v596
        %v646 = vpack.c.b16 %v599, %v598
        %v647 = vpack.c.b16 %v601, %v600
        %v648 = vpack.c.b16 %v603, %v602
        %v649 = vpack.c.b16 %v605, %v604
        %v660 = vunpack.c.l.b16 %v420
        %v661 = vunpack.c.h.b16 %v420
        %v662 = vunpack.c.l.b16 %v421
        %v663 = vunpack.c.h.b16 %v421
        %v664 = vunpack.c.l.b16 %v422
        %v665 = vunpack.c.h.b16 %v422
        %v666 = vunpack.c.l.b16 %v423
        %v667 = vunpack.c.h.b16 %v423
        %v668 = vunpack.c.l.b16 %v424
        %v669 = vunpack.c.h.b16 %v424
        %v670 = vunpack.c.l.b16 %v425
        %v671 = vunpack.c.h.b16 %v425
        %v672 = vunpack.c.l.b16 %v426
        %v673 = vunpack.c.h.b16 %v426
        %v674 = vunpack.c.l.b16 %v427
        %v675 = vunpack.c.h.b16 %v427
        %v676 = vunpack.c.l.b16 %v428
        %v677 = vunpack.c.h.b16 %v428
        %v678 = vunpack.c.l.b16 %v429
        %v679 = vunpack.c.h.b16 %v429
        %v680 = vpack.c.b16 %v664, %v660
        %v681 = vpack.c.b16 %v665, %v661
        %v682 = vpack.c.b16 %v666, %v662
        %v683 = vpack.c.b16 %v667, %v663
        %v684 = vpack.c.b16 %v672, %v668
        %v685 = vpack.c.b16 %v673, %v669
        %v686 = vpack.c.b16 %v674, %v670
        %v687 = vpack.c.b16 %v675, %v671
        %v688 = vpack.c.b16 %v676, %v676
        %v689 = vpack.c.b16 %v677, %v677
        %v690 = vpack.c.b16 %v678, %v678
        %v691 = vpack.c.b16 %v679, %v679
        %vm700 = vcmask 293888
        %v702 = vsel %vm700, %v606, 0
        %v705 = vsel %vm700, %v607, 0
        %v708 = vsel %vm700, %v608, 0
        %v711 = vsel %vm700, %v609, 0
        %v714 = vsel %vm700, %v610, 0
        %v717 = vsel %vm700, %v611, 0
        %v720 = vsel %vm700, %v612, 0
        %v723 = vsel %vm700, %v613, 0
        %v726 = vsel %vm700, %v614, 0
        %v729 = vsel %vm700, %v615, 0
        %v732 = vsel %vm700, %v616, 0
        %v735 = vsel %vm700, %v617, 0
        %v738 = vsel %vm700, %v618, 0
        %v741 = vsel %vm700, %v619, 0
        %v744 = vsel %vm700, %v620, 0
        %v747 = vsel %vm700, %v621, 0
        %v750 = vsel %vm700, %v622, 0
        %v753 = vsel %vm700, %v623, 0
        %v756 = vsel %vm700, %v624, 0
        %v759 = vsel %vm700, %v625, 0
        %v762 = vsel %vm700, %v626, 0
        %v765 = vsel %vm700, %v627, 0
        %v768 = vsel %vm700, %v628, 0
        %v771 = vsel %vm700, %v629, 0
        %v774 = vsel %vm700, %v630, 0
        %v777 = vsel %vm700, %v631, 0
        %v780 = vsel %vm700, %v632, 0
        %v783 = vsel %vm700, %v633, 0
        %v786 = vsel %vm700, %v634, 0
        %v789 = vsel %vm700, %v635, 0
        %v792 = vsel %vm700, %v636, 0
        %v795 = vsel %vm700, %v637, 0
        %v798 = vsel %vm700, %v638, 0
        %v801 = vsel %vm700, %v639, 0
        %v804 = vsel %vm700, %v640, 0
        %v807 = vsel %vm700, %v641, 0
        %v810 = vsel %vm700, %v642, 0
        %v813 = vsel %vm700, %v643, 0
        %v816 = vsel %vm700, %v644, 0
        %v819 = vsel %vm700, %v645, 0
        %v822 = vsel %vm700, %v646, 0
        %v825 = vsel %vm700, %v647, 0
        %v828 = vsel %vm700, %v648, 0
        %v831 = vsel %vm700, %v649, 0
        %vm833 = vcmask 1041408
        %v835 = vsel %vm833, %v688, 0
        %v838 = vsel %vm833, %v689, 0
        %v841 = vsel %vm833, %v690, 0
        %v844 = vsel %vm833, %v691, 0
        %846 = vmatpush.bf16.msra.mxu0 0
        %847 = vmatpush.bf16.msra.mxu0 0
        %848 = vmatpush.bf16.msra.mxu0 0
        %849 = vmatpush.bf16.msra.mxu0 0
        %850 = vmatpush.bf16.msra.mxu0 0
        %851 = vmatpush.bf16.msra.mxu0 %v835
        %852 = vmatpush.bf16.msra.mxu0 %v684
        %853 = vmatpush.bf16.msra.mxu0 %v680
        %854 = vmatmul.bf16.gmra.mxu0 %v702
        %v855 = vpop.f32.mrf.mxu0
        %v856 = vadd.f32 0.0, %v855
        %v857 = vpop.f32.mrf.mxu0
        %v858 = vadd.f32 0.0, %v857
        %859 = vmatmul.bf16.gmra.mxu0 %v705
        %v860 = vpop.f32.mrf.mxu0
        %v861 = vadd.f32 0.0, %v860
        %v862 = vpop.f32.mrf.mxu0
        %v863 = vadd.f32 0.0, %v862
        %864 = vmatmul.bf16.gmra.mxu0 %v708
        %v865 = vpop.f32.mrf.mxu0
        %v866 = vadd.f32 0.0, %v865
        %v867 = vpop.f32.mrf.mxu0
        %v868 = vadd.f32 0.0, %v867
        %869 = vmatmul.bf16.gmra.mxu0 %v711
        %v870 = vpop.f32.mrf.mxu0
        %v871 = vadd.f32 0.0, %v870
        %v872 = vpop.f32.mrf.mxu0
        %v873 = vadd.f32 0.0, %v872
        %874 = vmatmul.bf16.gmra.mxu0 %v714
        %v875 = vpop.f32.mrf.mxu0
        %v876 = vadd.f32 0.0, %v875
        %v877 = vpop.f32.mrf.mxu0
        %v878 = vadd.f32 0.0, %v877
        %879 = vmatmul.bf16.gmra.mxu0 %v717
        %v880 = vpop.f32.mrf.mxu0
        %v881 = vadd.f32 0.0, %v880
        %v882 = vpop.f32.mrf.mxu0
        %v883 = vadd.f32 0.0, %v882
        %884 = vmatmul.bf16.gmra.mxu0 %v720
        %v885 = vpop.f32.mrf.mxu0
        %v886 = vadd.f32 0.0, %v885
        %v887 = vpop.f32.mrf.mxu0
        %v888 = vadd.f32 0.0, %v887
        %889 = vmatmul.bf16.gmra.mxu0 %v723
        %v890 = vpop.f32.mrf.mxu0
        %v891 = vadd.f32 0.0, %v890
        %v892 = vpop.f32.mrf.mxu0
        %v893 = vadd.f32 0.0, %v892
        %894 = vmatmul.bf16.gmra.mxu0 %v726
        %v895 = vpop.f32.mrf.mxu0
        %v896 = vadd.f32 0.0, %v895
        %v897 = vpop.f32.mrf.mxu0
        %v898 = vadd.f32 0.0, %v897
        %899 = vmatmul.bf16.gmra.mxu0 %v729
        %v900 = vpop.f32.mrf.mxu0
        %v901 = vadd.f32 0.0, %v900
        %v902 = vpop.f32.mrf.mxu0
        %v903 = vadd.f32 0.0, %v902
        %904 = vmatmul.bf16.gmra.mxu0 %v732
        %v905 = vpop.f32.mrf.mxu0
        %v906 = vadd.f32 0.0, %v905
        %v907 = vpop.f32.mrf.mxu0
        %v908 = vadd.f32 0.0, %v907
        %909 = vmatmul.bf16.gmra.mxu0 %v735
        %v910 = vpop.f32.mrf.mxu0
        %v911 = vadd.f32 0.0, %v910
        %v912 = vpop.f32.mrf.mxu0
        %v913 = vadd.f32 0.0, %v912
        %914 = vmatmul.bf16.gmra.mxu0 %v738
        %v915 = vpop.f32.mrf.mxu0
        %v916 = vadd.f32 0.0, %v915
        %v917 = vpop.f32.mrf.mxu0
        %v918 = vadd.f32 0.0, %v917
        %919 = vmatmul.bf16.gmra.mxu0 %v741
        %v920 = vpop.f32.mrf.mxu0
        %v921 = vadd.f32 0.0, %v920
        %v922 = vpop.f32.mrf.mxu0
        %v923 = vadd.f32 0.0, %v922
        %924 = vmatmul.bf16.gmra.mxu0 %v744
        %v925 = vpop.f32.mrf.mxu0
        %v926 = vadd.f32 0.0, %v925
        %v927 = vpop.f32.mrf.mxu0
        %v928 = vadd.f32 0.0, %v927
        %929 = vmatmul.bf16.gmra.mxu0 %v747
        %v930 = vpop.f32.mrf.mxu0
        %v931 = vadd.f32 0.0, %v930
        %v932 = vpop.f32.mrf.mxu0
        %v933 = vadd.f32 0.0, %v932
        %934 = vmatmul.bf16.gmra.mxu0 %v750
        %v935 = vpop.f32.mrf.mxu0
        %v936 = vadd.f32 0.0, %v935
        %v937 = vpop.f32.mrf.mxu0
        %v938 = vadd.f32 0.0, %v937
        %939 = vmatmul.bf16.gmra.mxu0 %v753
        %v940 = vpop.f32.mrf.mxu0
        %v941 = vadd.f32 0.0, %v940
        %v942 = vpop.f32.mrf.mxu0
        %v943 = vadd.f32 0.0, %v942
        %944 = vmatmul.bf16.gmra.mxu0 %v756
        %v945 = vpop.f32.mrf.mxu0
        %v946 = vadd.f32 0.0, %v945
        %v947 = vpop.f32.mrf.mxu0
        %v948 = vadd.f32 0.0, %v947
        %949 = vmatmul.bf16.gmra.mxu0 %v759
        %v950 = vpop.f32.mrf.mxu0
        %v951 = vadd.f32 0.0, %v950
        %v952 = vpop.f32.mrf.mxu0
        %v953 = vadd.f32 0.0, %v952
        %954 = vmatmul.bf16.gmra.mxu0 %v762
        %v955 = vpop.f32.mrf.mxu0
        %v956 = vadd.f32 0.0, %v955
        %v957 = vpop.f32.mrf.mxu0
        %v958 = vadd.f32 0.0, %v957
        %959 = vmatmul.bf16.gmra.mxu0 %v765
        %v960 = vpop.f32.mrf.mxu0
        %v961 = vadd.f32 0.0, %v960
        %v962 = vpop.f32.mrf.mxu0
        %v963 = vadd.f32 0.0, %v962
        %964 = vmatmul.bf16.gmra.mxu0 %v768
        %v965 = vpop.f32.mrf.mxu0
        %v966 = vadd.f32 0.0, %v965
        %v967 = vpop.f32.mrf.mxu0
        %v968 = vadd.f32 0.0, %v967
        %969 = vmatmul.bf16.gmra.mxu0 %v771
        %v970 = vpop.f32.mrf.mxu0
        %v971 = vadd.f32 0.0, %v970
        %v972 = vpop.f32.mrf.mxu0
        %v973 = vadd.f32 0.0, %v972
        %974 = vmatmul.bf16.gmra.mxu0 %v774
        %v975 = vpop.f32.mrf.mxu0
        %v976 = vadd.f32 0.0, %v975
        %v977 = vpop.f32.mrf.mxu0
        %v978 = vadd.f32 0.0, %v977
        %979 = vmatmul.bf16.gmra.mxu0 %v777
        %v980 = vpop.f32.mrf.mxu0
        %v981 = vadd.f32 0.0, %v980
        %v982 = vpop.f32.mrf.mxu0
        %v983 = vadd.f32 0.0, %v982
        %984 = vmatmul.bf16.gmra.mxu0 %v780
        %v985 = vpop.f32.mrf.mxu0
        %v986 = vadd.f32 0.0, %v985
        %v987 = vpop.f32.mrf.mxu0
        %v988 = vadd.f32 0.0, %v987
        %989 = vmatmul.bf16.gmra.mxu0 %v783
        %v990 = vpop.f32.mrf.mxu0
        %v991 = vadd.f32 0.0, %v990
        %v992 = vpop.f32.mrf.mxu0
        %v993 = vadd.f32 0.0, %v992
        %994 = vmatmul.bf16.gmra.mxu0 %v786
        %v995 = vpop.f32.mrf.mxu0
        %v996 = vadd.f32 0.0, %v995
        %v997 = vpop.f32.mrf.mxu0
        %v998 = vadd.f32 0.0, %v997
        %999 = vmatmul.bf16.gmra.mxu0 %v789
        %v1000 = vpop.f32.mrf.mxu0
        %v1001 = vadd.f32 0.0, %v1000
        %v1002 = vpop.f32.mrf.mxu0
        %v1003 = vadd.f32 0.0, %v1002
        %1004 = vmatmul.bf16.gmra.mxu0 %v792
        %v1005 = vpop.f32.mrf.mxu0
        %v1006 = vadd.f32 0.0, %v1005
        %v1007 = vpop.f32.mrf.mxu0
        %v1008 = vadd.f32 0.0, %v1007
        %1009 = vmatmul.bf16.gmra.mxu0 %v795
        %v1010 = vpop.f32.mrf.mxu0
        %v1011 = vadd.f32 0.0, %v1010
        %v1012 = vpop.f32.mrf.mxu0
        %v1013 = vadd.f32 0.0, %v1012
        %1014 = vmatmul.bf16.gmra.mxu0 %v798
        %v1015 = vpop.f32.mrf.mxu0
        %v1016 = vadd.f32 0.0, %v1015
        %v1017 = vpop.f32.mrf.mxu0
        %v1018 = vadd.f32 0.0, %v1017
        %1019 = vmatmul.bf16.gmra.mxu0 %v801
        %v1020 = vpop.f32.mrf.mxu0
        %v1021 = vadd.f32 0.0, %v1020
        %v1022 = vpop.f32.mrf.mxu0
        %v1023 = vadd.f32 0.0, %v1022
        %1024 = vmatmul.bf16.gmra.mxu0 %v804
        %v1025 = vpop.f32.mrf.mxu0
        %v1026 = vadd.f32 0.0, %v1025
        %v1027 = vpop.f32.mrf.mxu0
        %v1028 = vadd.f32 0.0, %v1027
        %1029 = vmatmul.bf16.gmra.mxu0 %v807
        %v1030 = vpop.f32.mrf.mxu0
        %v1031 = vadd.f32 0.0, %v1030
        %v1032 = vpop.f32.mrf.mxu0
        %v1033 = vadd.f32 0.0, %v1032
        %1034 = vmatmul.bf16.gmra.mxu0 %v810
        %v1035 = vpop.f32.mrf.mxu0
        %v1036 = vadd.f32 0.0, %v1035
        %v1037 = vpop.f32.mrf.mxu0
        %v1038 = vadd.f32 0.0, %v1037
        %1039 = vmatmul.bf16.gmra.mxu0 %v813
        %v1040 = vpop.f32.mrf.mxu0
        %v1041 = vadd.f32 0.0, %v1040
        %v1042 = vpop.f32.mrf.mxu0
        %v1043 = vadd.f32 0.0, %v1042
        %1044 = vmatmul.bf16.gmra.mxu0 %v816
        %v1045 = vpop.f32.mrf.mxu0
        %v1046 = vadd.f32 0.0, %v1045
        %v1047 = vpop.f32.mrf.mxu0
        %v1048 = vadd.f32 0.0, %v1047
        %1049 = vmatmul.bf16.gmra.mxu0 %v819
        %v1050 = vpop.f32.mrf.mxu0
        %v1051 = vadd.f32 0.0, %v1050
        %v1052 = vpop.f32.mrf.mxu0
        %v1053 = vadd.f32 0.0, %v1052
        %1054 = vmatmul.bf16.gmra.mxu0 %v822
        %v1055 = vpop.f32.mrf.mxu0
        %v1056 = vadd.f32 0.0, %v1055
        %v1057 = vpop.f32.mrf.mxu0
        %v1058 = vadd.f32 0.0, %v1057
        %1059 = vmatmul.bf16.gmra.mxu0 %v825
        %v1060 = vpop.f32.mrf.mxu0
        %v1061 = vadd.f32 0.0, %v1060
        %v1062 = vpop.f32.mrf.mxu0
        %v1063 = vadd.f32 0.0, %v1062
        %1064 = vmatmul.bf16.gmra.mxu0 %v828
        %v1065 = vpop.f32.mrf.mxu0
        %v1066 = vadd.f32 0.0, %v1065
        %v1067 = vpop.f32.mrf.mxu0
        %v1068 = vadd.f32 0.0, %v1067
        %1069 = vmatmul.bf16.gmra.mxu0 %v831
        %v1070 = vpop.f32.mrf.mxu0
        %v1071 = vadd.f32 0.0, %v1070
        %v1072 = vpop.f32.mrf.mxu0
        %v1073 = vadd.f32 0.0, %v1072
        %1074 = vdwg.mxu0
        %1075 = vmatpush.bf16.msra.mxu0 0
        %1076 = vmatpush.bf16.msra.mxu0 0
        %1077 = vmatpush.bf16.msra.mxu0 0
        %1078 = vmatpush.bf16.msra.mxu0 0
        %1079 = vmatpush.bf16.msra.mxu0 0
        %1080 = vmatpush.bf16.msra.mxu0 %v838
        %1081 = vmatpush.bf16.msra.mxu0 %v685
        %1082 = vmatpush.bf16.msra.mxu0 %v681
        %1083 = vmatmul.bf16.gmra.mxu0 %v702
        %v1084 = vpop.f32.mrf.mxu0
        %v1085 = vadd.f32 0.0, %v1084
        %v1086 = vpop.f32.mrf.mxu0
        %v1087 = vadd.f32 0.0, %v1086
        %1088 = vmatmul.bf16.gmra.mxu0 %v705
        %v1089 = vpop.f32.mrf.mxu0
        %v1090 = vadd.f32 0.0, %v1089
        %v1091 = vpop.f32.mrf.mxu0
        %v1092 = vadd.f32 0.0, %v1091
        %1093 = vmatmul.bf16.gmra.mxu0 %v708
        %v1094 = vpop.f32.mrf.mxu0
        %v1095 = vadd.f32 0.0, %v1094
        %v1096 = vpop.f32.mrf.mxu0
        %v1097 = vadd.f32 0.0, %v1096
        %1098 = vmatmul.bf16.gmra.mxu0 %v711
        %v1099 = vpop.f32.mrf.mxu0
        %v1100 = vadd.f32 0.0, %v1099
        %v1101 = vpop.f32.mrf.mxu0
        %v1102 = vadd.f32 0.0, %v1101
        %1103 = vmatmul.bf16.gmra.mxu0 %v714
        %v1104 = vpop.f32.mrf.mxu0
        %v1105 = vadd.f32 0.0, %v1104
        %v1106 = vpop.f32.mrf.mxu0
        %v1107 = vadd.f32 0.0, %v1106
        %1108 = vmatmul.bf16.gmra.mxu0 %v717
        %v1109 = vpop.f32.mrf.mxu0
        %v1110 = vadd.f32 0.0, %v1109
        %v1111 = vpop.f32.mrf.mxu0
        %v1112 = vadd.f32 0.0, %v1111
        %1113 = vmatmul.bf16.gmra.mxu0 %v720
        %v1114 = vpop.f32.mrf.mxu0
        %v1115 = vadd.f32 0.0, %v1114
        %v1116 = vpop.f32.mrf.mxu0
        %v1117 = vadd.f32 0.0, %v1116
        %1118 = vmatmul.bf16.gmra.mxu0 %v723
        %v1119 = vpop.f32.mrf.mxu0
        %v1120 = vadd.f32 0.0, %v1119
        %v1121 = vpop.f32.mrf.mxu0
        %v1122 = vadd.f32 0.0, %v1121
        %1123 = vmatmul.bf16.gmra.mxu0 %v726
        %v1124 = vpop.f32.mrf.mxu0
        %v1125 = vadd.f32 0.0, %v1124
        %v1126 = vpop.f32.mrf.mxu0
        %v1127 = vadd.f32 0.0, %v1126
        %1128 = vmatmul.bf16.gmra.mxu0 %v729
        %v1129 = vpop.f32.mrf.mxu0
        %v1130 = vadd.f32 0.0, %v1129
        %v1131 = vpop.f32.mrf.mxu0
        %v1132 = vadd.f32 0.0, %v1131
        %1133 = vmatmul.bf16.gmra.mxu0 %v732
        %v1134 = vpop.f32.mrf.mxu0
        %v1135 = vadd.f32 0.0, %v1134
        %v1136 = vpop.f32.mrf.mxu0
        %v1137 = vadd.f32 0.0, %v1136
        %1138 = vmatmul.bf16.gmra.mxu0 %v735
        %v1139 = vpop.f32.mrf.mxu0
        %v1140 = vadd.f32 0.0, %v1139
        %v1141 = vpop.f32.mrf.mxu0
        %v1142 = vadd.f32 0.0, %v1141
        %1143 = vmatmul.bf16.gmra.mxu0 %v738
        %v1144 = vpop.f32.mrf.mxu0
        %v1145 = vadd.f32 0.0, %v1144
        %v1146 = vpop.f32.mrf.mxu0
        %v1147 = vadd.f32 0.0, %v1146
        %1148 = vmatmul.bf16.gmra.mxu0 %v741
        %v1149 = vpop.f32.mrf.mxu0
        %v1150 = vadd.f32 0.0, %v1149
        %v1151 = vpop.f32.mrf.mxu0
        %v1152 = vadd.f32 0.0, %v1151
        %1153 = vmatmul.bf16.gmra.mxu0 %v744
        %v1154 = vpop.f32.mrf.mxu0
        %v1155 = vadd.f32 0.0, %v1154
        %v1156 = vpop.f32.mrf.mxu0
        %v1157 = vadd.f32 0.0, %v1156
        %1158 = vmatmul.bf16.gmra.mxu0 %v747
        %v1159 = vpop.f32.mrf.mxu0
        %v1160 = vadd.f32 0.0, %v1159
        %v1161 = vpop.f32.mrf.mxu0
        %v1162 = vadd.f32 0.0, %v1161
        %1163 = vmatmul.bf16.gmra.mxu0 %v750
        %v1164 = vpop.f32.mrf.mxu0
        %v1165 = vadd.f32 0.0, %v1164
        %v1166 = vpop.f32.mrf.mxu0
        %v1167 = vadd.f32 0.0, %v1166
        %1168 = vmatmul.bf16.gmra.mxu0 %v753
        %v1169 = vpop.f32.mrf.mxu0
        %v1170 = vadd.f32 0.0, %v1169
        %v1171 = vpop.f32.mrf.mxu0
        %v1172 = vadd.f32 0.0, %v1171
        %1173 = vmatmul.bf16.gmra.mxu0 %v756
        %v1174 = vpop.f32.mrf.mxu0
        %v1175 = vadd.f32 0.0, %v1174
        %v1176 = vpop.f32.mrf.mxu0
        %v1177 = vadd.f32 0.0, %v1176
        %1178 = vmatmul.bf16.gmra.mxu0 %v759
        %v1179 = vpop.f32.mrf.mxu0
        %v1180 = vadd.f32 0.0, %v1179
        %v1181 = vpop.f32.mrf.mxu0
        %v1182 = vadd.f32 0.0, %v1181
        %1183 = vmatmul.bf16.gmra.mxu0 %v762
        %v1184 = vpop.f32.mrf.mxu0
        %v1185 = vadd.f32 0.0, %v1184
        %v1186 = vpop.f32.mrf.mxu0
        %v1187 = vadd.f32 0.0, %v1186
        %1188 = vmatmul.bf16.gmra.mxu0 %v765
        %v1189 = vpop.f32.mrf.mxu0
        %v1190 = vadd.f32 0.0, %v1189
        %v1191 = vpop.f32.mrf.mxu0
        %v1192 = vadd.f32 0.0, %v1191
        %1193 = vmatmul.bf16.gmra.mxu0 %v768
        %v1194 = vpop.f32.mrf.mxu0
        %v1195 = vadd.f32 0.0, %v1194
        %v1196 = vpop.f32.mrf.mxu0
        %v1197 = vadd.f32 0.0, %v1196
        %1198 = vmatmul.bf16.gmra.mxu0 %v771
        %v1199 = vpop.f32.mrf.mxu0
        %v1200 = vadd.f32 0.0, %v1199
        %v1201 = vpop.f32.mrf.mxu0
        %v1202 = vadd.f32 0.0, %v1201
        %1203 = vmatmul.bf16.gmra.mxu0 %v774
        %v1204 = vpop.f32.mrf.mxu0
        %v1205 = vadd.f32 0.0, %v1204
        %v1206 = vpop.f32.mrf.mxu0
        %v1207 = vadd.f32 0.0, %v1206
        %1208 = vmatmul.bf16.gmra.mxu0 %v777
        %v1209 = vpop.f32.mrf.mxu0
        %v1210 = vadd.f32 0.0, %v1209
        %v1211 = vpop.f32.mrf.mxu0
        %v1212 = vadd.f32 0.0, %v1211
        %1213 = vmatmul.bf16.gmra.mxu0 %v780
        %v1214 = vpop.f32.mrf.mxu0
        %v1215 = vadd.f32 0.0, %v1214
        %v1216 = vpop.f32.mrf.mxu0
        %v1217 = vadd.f32 0.0, %v1216
        %1218 = vmatmul.bf16.gmra.mxu0 %v783
        %v1219 = vpop.f32.mrf.mxu0
        %v1220 = vadd.f32 0.0, %v1219
        %v1221 = vpop.f32.mrf.mxu0
        %v1222 = vadd.f32 0.0, %v1221
        %1223 = vmatmul.bf16.gmra.mxu0 %v786
        %v1224 = vpop.f32.mrf.mxu0
        %v1225 = vadd.f32 0.0, %v1224
        %v1226 = vpop.f32.mrf.mxu0
        %v1227 = vadd.f32 0.0, %v1226
        %1228 = vmatmul.bf16.gmra.mxu0 %v789
        %v1229 = vpop.f32.mrf.mxu0
        %v1230 = vadd.f32 0.0, %v1229
        %v1231 = vpop.f32.mrf.mxu0
        %v1232 = vadd.f32 0.0, %v1231
        %1233 = vmatmul.bf16.gmra.mxu0 %v792
        %v1234 = vpop.f32.mrf.mxu0
        %v1235 = vadd.f32 0.0, %v1234
        %v1236 = vpop.f32.mrf.mxu0
        %v1237 = vadd.f32 0.0, %v1236
        %1238 = vmatmul.bf16.gmra.mxu0 %v795
        %v1239 = vpop.f32.mrf.mxu0
        %v1240 = vadd.f32 0.0, %v1239
        %v1241 = vpop.f32.mrf.mxu0
        %v1242 = vadd.f32 0.0, %v1241
        %1243 = vmatmul.bf16.gmra.mxu0 %v798
        %v1244 = vpop.f32.mrf.mxu0
        %v1245 = vadd.f32 0.0, %v1244
        %v1246 = vpop.f32.mrf.mxu0
        %v1247 = vadd.f32 0.0, %v1246
        %1248 = vmatmul.bf16.gmra.mxu0 %v801
        %v1249 = vpop.f32.mrf.mxu0
        %v1250 = vadd.f32 0.0, %v1249
        %v1251 = vpop.f32.mrf.mxu0
        %v1252 = vadd.f32 0.0, %v1251
        %1253 = vmatmul.bf16.gmra.mxu0 %v804
        %v1254 = vpop.f32.mrf.mxu0
        %v1255 = vadd.f32 0.0, %v1254
        %v1256 = vpop.f32.mrf.mxu0
        %v1257 = vadd.f32 0.0, %v1256
        %1258 = vmatmul.bf16.gmra.mxu0 %v807
        %v1259 = vpop.f32.mrf.mxu0
        %v1260 = vadd.f32 0.0, %v1259
        %v1261 = vpop.f32.mrf.mxu0
        %v1262 = vadd.f32 0.0, %v1261
        %1263 = vmatmul.bf16.gmra.mxu0 %v810
        %v1264 = vpop.f32.mrf.mxu0
        %v1265 = vadd.f32 0.0, %v1264
        %v1266 = vpop.f32.mrf.mxu0
        %v1267 = vadd.f32 0.0, %v1266
        %1268 = vmatmul.bf16.gmra.mxu0 %v813
        %v1269 = vpop.f32.mrf.mxu0
        %v1270 = vadd.f32 0.0, %v1269
        %v1271 = vpop.f32.mrf.mxu0
        %v1272 = vadd.f32 0.0, %v1271
        %1273 = vmatmul.bf16.gmra.mxu0 %v816
        %v1274 = vpop.f32.mrf.mxu0
        %v1275 = vadd.f32 0.0, %v1274
        %v1276 = vpop.f32.mrf.mxu0
        %v1277 = vadd.f32 0.0, %v1276
        %1278 = vmatmul.bf16.gmra.mxu0 %v819
        %v1279 = vpop.f32.mrf.mxu0
        %v1280 = vadd.f32 0.0, %v1279
        %v1281 = vpop.f32.mrf.mxu0
        %v1282 = vadd.f32 0.0, %v1281
        %1283 = vmatmul.bf16.gmra.mxu0 %v822
        %v1284 = vpop.f32.mrf.mxu0
        %v1285 = vadd.f32 0.0, %v1284
        %v1286 = vpop.f32.mrf.mxu0
        %v1287 = vadd.f32 0.0, %v1286
        %1288 = vmatmul.bf16.gmra.mxu0 %v825
        %v1289 = vpop.f32.mrf.mxu0
        %v1290 = vadd.f32 0.0, %v1289
        %v1291 = vpop.f32.mrf.mxu0
        %v1292 = vadd.f32 0.0, %v1291
        %1293 = vmatmul.bf16.gmra.mxu0 %v828
        %v1294 = vpop.f32.mrf.mxu0
        %v1295 = vadd.f32 0.0, %v1294
        %v1296 = vpop.f32.mrf.mxu0
        %v1297 = vadd.f32 0.0, %v1296
        %1298 = vmatmul.bf16.gmra.mxu0 %v831
        %v1299 = vpop.f32.mrf.mxu0
        %v1300 = vadd.f32 0.0, %v1299
        %v1301 = vpop.f32.mrf.mxu0
        %v1302 = vadd.f32 0.0, %v1301
        %1303 = vdwg.mxu0
        %1304 = vmatpush.bf16.msra.mxu0 0
        %1305 = vmatpush.bf16.msra.mxu0 0
        %1306 = vmatpush.bf16.msra.mxu0 0
        %1307 = vmatpush.bf16.msra.mxu0 0
        %1308 = vmatpush.bf16.msra.mxu0 0
        %1309 = vmatpush.bf16.msra.mxu0 %v841
        %1310 = vmatpush.bf16.msra.mxu0 %v686
        %1311 = vmatpush.bf16.msra.mxu0 %v682
        %1312 = vmatmul.bf16.gmra.mxu0 %v702
        %v1313 = vpop.f32.mrf.mxu0
        %v1314 = vadd.f32 0.0, %v1313
        %v1315 = vpop.f32.mrf.mxu0
        %v1316 = vadd.f32 0.0, %v1315
        %1317 = vmatmul.bf16.gmra.mxu0 %v705
        %v1318 = vpop.f32.mrf.mxu0
        %v1319 = vadd.f32 0.0, %v1318
        %v1320 = vpop.f32.mrf.mxu0
        %v1321 = vadd.f32 0.0, %v1320
        %1322 = vmatmul.bf16.gmra.mxu0 %v708
        %v1323 = vpop.f32.mrf.mxu0
        %v1324 = vadd.f32 0.0, %v1323
        %v1325 = vpop.f32.mrf.mxu0
        %v1326 = vadd.f32 0.0, %v1325
        %1327 = vmatmul.bf16.gmra.mxu0 %v711
        %v1328 = vpop.f32.mrf.mxu0
        %v1329 = vadd.f32 0.0, %v1328
        %v1330 = vpop.f32.mrf.mxu0
        %v1331 = vadd.f32 0.0, %v1330
        %1332 = vmatmul.bf16.gmra.mxu0 %v714
        %v1333 = vpop.f32.mrf.mxu0
        %v1334 = vadd.f32 0.0, %v1333
        %v1335 = vpop.f32.mrf.mxu0
        %v1336 = vadd.f32 0.0, %v1335
        %1337 = vmatmul.bf16.gmra.mxu0 %v717
        %v1338 = vpop.f32.mrf.mxu0
        %v1339 = vadd.f32 0.0, %v1338
        %v1340 = vpop.f32.mrf.mxu0
        %v1341 = vadd.f32 0.0, %v1340
        %1342 = vmatmul.bf16.gmra.mxu0 %v720
        %v1343 = vpop.f32.mrf.mxu0
        %v1344 = vadd.f32 0.0, %v1343
        %v1345 = vpop.f32.mrf.mxu0
        %v1346 = vadd.f32 0.0, %v1345
        %1347 = vmatmul.bf16.gmra.mxu0 %v723
        %v1348 = vpop.f32.mrf.mxu0
        %v1349 = vadd.f32 0.0, %v1348
        %v1350 = vpop.f32.mrf.mxu0
        %v1351 = vadd.f32 0.0, %v1350
        %1352 = vmatmul.bf16.gmra.mxu0 %v726
        %v1353 = vpop.f32.mrf.mxu0
        %v1354 = vadd.f32 0.0, %v1353
        %v1355 = vpop.f32.mrf.mxu0
        %v1356 = vadd.f32 0.0, %v1355
        %1357 = vmatmul.bf16.gmra.mxu0 %v729
        %v1358 = vpop.f32.mrf.mxu0
        %v1359 = vadd.f32 0.0, %v1358
        %v1360 = vpop.f32.mrf.mxu0
        %v1361 = vadd.f32 0.0, %v1360
        %1362 = vmatmul.bf16.gmra.mxu0 %v732
        %v1363 = vpop.f32.mrf.mxu0
        %v1364 = vadd.f32 0.0, %v1363
        %v1365 = vpop.f32.mrf.mxu0
        %v1366 = vadd.f32 0.0, %v1365
        %1367 = vmatmul.bf16.gmra.mxu0 %v735
        %v1368 = vpop.f32.mrf.mxu0
        %v1369 = vadd.f32 0.0, %v1368
        %v1370 = vpop.f32.mrf.mxu0
        %v1371 = vadd.f32 0.0, %v1370
        %1372 = vmatmul.bf16.gmra.mxu0 %v738
        %v1373 = vpop.f32.mrf.mxu0
        %v1374 = vadd.f32 0.0, %v1373
        %v1375 = vpop.f32.mrf.mxu0
        %v1376 = vadd.f32 0.0, %v1375
        %1377 = vmatmul.bf16.gmra.mxu0 %v741
        %v1378 = vpop.f32.mrf.mxu0
        %v1379 = vadd.f32 0.0, %v1378
        %v1380 = vpop.f32.mrf.mxu0
        %v1381 = vadd.f32 0.0, %v1380
        %1382 = vmatmul.bf16.gmra.mxu0 %v744
        %v1383 = vpop.f32.mrf.mxu0
        %v1384 = vadd.f32 0.0, %v1383
        %v1385 = vpop.f32.mrf.mxu0
        %v1386 = vadd.f32 0.0, %v1385
        %1387 = vmatmul.bf16.gmra.mxu0 %v747
        %v1388 = vpop.f32.mrf.mxu0
        %v1389 = vadd.f32 0.0, %v1388
        %v1390 = vpop.f32.mrf.mxu0
        %v1391 = vadd.f32 0.0, %v1390
        %1392 = vmatmul.bf16.gmra.mxu0 %v750
        %v1393 = vpop.f32.mrf.mxu0
        %v1394 = vadd.f32 0.0, %v1393
        %v1395 = vpop.f32.mrf.mxu0
        %v1396 = vadd.f32 0.0, %v1395
        %1397 = vmatmul.bf16.gmra.mxu0 %v753
        %v1398 = vpop.f32.mrf.mxu0
        %v1399 = vadd.f32 0.0, %v1398
        %v1400 = vpop.f32.mrf.mxu0
        %v1401 = vadd.f32 0.0, %v1400
        %1402 = vmatmul.bf16.gmra.mxu0 %v756
        %v1403 = vpop.f32.mrf.mxu0
        %v1404 = vadd.f32 0.0, %v1403
        %v1405 = vpop.f32.mrf.mxu0
        %v1406 = vadd.f32 0.0, %v1405
        %1407 = vmatmul.bf16.gmra.mxu0 %v759
        %v1408 = vpop.f32.mrf.mxu0
        %v1409 = vadd.f32 0.0, %v1408
        %v1410 = vpop.f32.mrf.mxu0
        %v1411 = vadd.f32 0.0, %v1410
        %1412 = vmatmul.bf16.gmra.mxu0 %v762
        %v1413 = vpop.f32.mrf.mxu0
        %v1414 = vadd.f32 0.0, %v1413
        %v1415 = vpop.f32.mrf.mxu0
        %v1416 = vadd.f32 0.0, %v1415
        %1417 = vmatmul.bf16.gmra.mxu0 %v765
        %v1418 = vpop.f32.mrf.mxu0
        %v1419 = vadd.f32 0.0, %v1418
        %v1420 = vpop.f32.mrf.mxu0
        %v1421 = vadd.f32 0.0, %v1420
        %1422 = vmatmul.bf16.gmra.mxu0 %v768
        %v1423 = vpop.f32.mrf.mxu0
        %v1424 = vadd.f32 0.0, %v1423
        %v1425 = vpop.f32.mrf.mxu0
        %v1426 = vadd.f32 0.0, %v1425
        %1427 = vmatmul.bf16.gmra.mxu0 %v771
        %v1428 = vpop.f32.mrf.mxu0
        %v1429 = vadd.f32 0.0, %v1428
        %v1430 = vpop.f32.mrf.mxu0
        %v1431 = vadd.f32 0.0, %v1430
        %1432 = vmatmul.bf16.gmra.mxu0 %v774
        %v1433 = vpop.f32.mrf.mxu0
        %v1434 = vadd.f32 0.0, %v1433
        %v1435 = vpop.f32.mrf.mxu0
        %v1436 = vadd.f32 0.0, %v1435
        %1437 = vmatmul.bf16.gmra.mxu0 %v777
        %v1438 = vpop.f32.mrf.mxu0
        %v1439 = vadd.f32 0.0, %v1438
        %v1440 = vpop.f32.mrf.mxu0
        %v1441 = vadd.f32 0.0, %v1440
        %1442 = vmatmul.bf16.gmra.mxu0 %v780
        %v1443 = vpop.f32.mrf.mxu0
        %v1444 = vadd.f32 0.0, %v1443
        %v1445 = vpop.f32.mrf.mxu0
        %v1446 = vadd.f32 0.0, %v1445
        %1447 = vmatmul.bf16.gmra.mxu0 %v783
        %v1448 = vpop.f32.mrf.mxu0
        %v1449 = vadd.f32 0.0, %v1448
        %v1450 = vpop.f32.mrf.mxu0
        %v1451 = vadd.f32 0.0, %v1450
        %1452 = vmatmul.bf16.gmra.mxu0 %v786
        %v1453 = vpop.f32.mrf.mxu0
        %v1454 = vadd.f32 0.0, %v1453
        %v1455 = vpop.f32.mrf.mxu0
        %v1456 = vadd.f32 0.0, %v1455
        %1457 = vmatmul.bf16.gmra.mxu0 %v789
        %v1458 = vpop.f32.mrf.mxu0
        %v1459 = vadd.f32 0.0, %v1458
        %v1460 = vpop.f32.mrf.mxu0
        %v1461 = vadd.f32 0.0, %v1460
        %1462 = vmatmul.bf16.gmra.mxu0 %v792
        %v1463 = vpop.f32.mrf.mxu0
        %v1464 = vadd.f32 0.0, %v1463
        %v1465 = vpop.f32.mrf.mxu0
        %v1466 = vadd.f32 0.0, %v1465
        %1467 = vmatmul.bf16.gmra.mxu0 %v795
        %v1468 = vpop.f32.mrf.mxu0
        %v1469 = vadd.f32 0.0, %v1468
        %v1470 = vpop.f32.mrf.mxu0
        %v1471 = vadd.f32 0.0, %v1470
        %1472 = vmatmul.bf16.gmra.mxu0 %v798
        %v1473 = vpop.f32.mrf.mxu0
        %v1474 = vadd.f32 0.0, %v1473
        %v1475 = vpop.f32.mrf.mxu0
        %v1476 = vadd.f32 0.0, %v1475
        %1477 = vmatmul.bf16.gmra.mxu0 %v801
        %v1478 = vpop.f32.mrf.mxu0
        %v1479 = vadd.f32 0.0, %v1478
        %v1480 = vpop.f32.mrf.mxu0
        %v1481 = vadd.f32 0.0, %v1480
        %1482 = vmatmul.bf16.gmra.mxu0 %v804
        %v1483 = vpop.f32.mrf.mxu0
        %v1484 = vadd.f32 0.0, %v1483
        %v1485 = vpop.f32.mrf.mxu0
        %v1486 = vadd.f32 0.0, %v1485
        %1487 = vmatmul.bf16.gmra.mxu0 %v807
        %v1488 = vpop.f32.mrf.mxu0
        %v1489 = vadd.f32 0.0, %v1488
        %v1490 = vpop.f32.mrf.mxu0
        %v1491 = vadd.f32 0.0, %v1490
        %1492 = vmatmul.bf16.gmra.mxu0 %v810
        %v1493 = vpop.f32.mrf.mxu0
        %v1494 = vadd.f32 0.0, %v1493
        %v1495 = vpop.f32.mrf.mxu0
        %v1496 = vadd.f32 0.0, %v1495
        %1497 = vmatmul.bf16.gmra.mxu0 %v813
        %v1498 = vpop.f32.mrf.mxu0
        %v1499 = vadd.f32 0.0, %v1498
        %v1500 = vpop.f32.mrf.mxu0
        %v1501 = vadd.f32 0.0, %v1500
        %1502 = vmatmul.bf16.gmra.mxu0 %v816
        %v1503 = vpop.f32.mrf.mxu0
        %v1504 = vadd.f32 0.0, %v1503
        %v1505 = vpop.f32.mrf.mxu0
        %v1506 = vadd.f32 0.0, %v1505
        %1507 = vmatmul.bf16.gmra.mxu0 %v819
        %v1508 = vpop.f32.mrf.mxu0
        %v1509 = vadd.f32 0.0, %v1508
        %v1510 = vpop.f32.mrf.mxu0
        %v1511 = vadd.f32 0.0, %v1510
        %1512 = vmatmul.bf16.gmra.mxu0 %v822
        %v1513 = vpop.f32.mrf.mxu0
        %v1514 = vadd.f32 0.0, %v1513
        %v1515 = vpop.f32.mrf.mxu0
        %v1516 = vadd.f32 0.0, %v1515
        %1517 = vmatmul.bf16.gmra.mxu0 %v825
        %v1518 = vpop.f32.mrf.mxu0
        %v1519 = vadd.f32 0.0, %v1518
        %v1520 = vpop.f32.mrf.mxu0
        %v1521 = vadd.f32 0.0, %v1520
        %1522 = vmatmul.bf16.gmra.mxu0 %v828
        %v1523 = vpop.f32.mrf.mxu0
        %v1524 = vadd.f32 0.0, %v1523
        %v1525 = vpop.f32.mrf.mxu0
        %v1526 = vadd.f32 0.0, %v1525
        %1527 = vmatmul.bf16.gmra.mxu0 %v831
        %v1528 = vpop.f32.mrf.mxu0
        %v1529 = vadd.f32 0.0, %v1528
        %v1530 = vpop.f32.mrf.mxu0
        %v1531 = vadd.f32 0.0, %v1530
        %1532 = vdwg.mxu0
        %1533 = vmatpush.bf16.msra.mxu0 0
        %1534 = vmatpush.bf16.msra.mxu0 0
        %1535 = vmatpush.bf16.msra.mxu0 0
        %1536 = vmatpush.bf16.msra.mxu0 0
        %1537 = vmatpush.bf16.msra.mxu0 0
        %1538 = vmatpush.bf16.msra.mxu0 %v844
        %1539 = vmatpush.bf16.msra.mxu0 %v687
        %1540 = vmatpush.bf16.msra.mxu0 %v683
        %1541 = vmatmul.bf16.gmra.mxu0 %v702
        %v1542 = vpop.f32.mrf.mxu0
        %v1543 = vadd.f32 0.0, %v1542
        %v1544 = vpop.f32.mrf.mxu0
        %v1545 = vadd.f32 0.0, %v1544
        %1546 = vmatmul.bf16.gmra.mxu0 %v705
        %v1547 = vpop.f32.mrf.mxu0
        %v1548 = vadd.f32 0.0, %v1547
        %v1549 = vpop.f32.mrf.mxu0
        %v1550 = vadd.f32 0.0, %v1549
        %1551 = vmatmul.bf16.gmra.mxu0 %v708
        %v1552 = vpop.f32.mrf.mxu0
        %v1553 = vadd.f32 0.0, %v1552
        %v1554 = vpop.f32.mrf.mxu0
        %v1555 = vadd.f32 0.0, %v1554
        %1556 = vmatmul.bf16.gmra.mxu0 %v711
        %v1557 = vpop.f32.mrf.mxu0
        %v1558 = vadd.f32 0.0, %v1557
        %v1559 = vpop.f32.mrf.mxu0
        %v1560 = vadd.f32 0.0, %v1559
        %1561 = vmatmul.bf16.gmra.mxu0 %v714
        %v1562 = vpop.f32.mrf.mxu0
        %v1563 = vadd.f32 0.0, %v1562
        %v1564 = vpop.f32.mrf.mxu0
        %v1565 = vadd.f32 0.0, %v1564
        %1566 = vmatmul.bf16.gmra.mxu0 %v717
        %v1567 = vpop.f32.mrf.mxu0
        %v1568 = vadd.f32 0.0, %v1567
        %v1569 = vpop.f32.mrf.mxu0
        %v1570 = vadd.f32 0.0, %v1569
        %1571 = vmatmul.bf16.gmra.mxu0 %v720
        %v1572 = vpop.f32.mrf.mxu0
        %v1573 = vadd.f32 0.0, %v1572
        %v1574 = vpop.f32.mrf.mxu0
        %v1575 = vadd.f32 0.0, %v1574
        %1576 = vmatmul.bf16.gmra.mxu0 %v723
        %v1577 = vpop.f32.mrf.mxu0
        %v1578 = vadd.f32 0.0, %v1577
        %v1579 = vpop.f32.mrf.mxu0
        %v1580 = vadd.f32 0.0, %v1579
        %1581 = vmatmul.bf16.gmra.mxu0 %v726
        %v1582 = vpop.f32.mrf.mxu0
        %v1583 = vadd.f32 0.0, %v1582
        %v1584 = vpop.f32.mrf.mxu0
        %v1585 = vadd.f32 0.0, %v1584
        %1586 = vmatmul.bf16.gmra.mxu0 %v729
        %v1587 = vpop.f32.mrf.mxu0
        %v1588 = vadd.f32 0.0, %v1587
        %v1589 = vpop.f32.mrf.mxu0
        %v1590 = vadd.f32 0.0, %v1589
        %1591 = vmatmul.bf16.gmra.mxu0 %v732
        %v1592 = vpop.f32.mrf.mxu0
        %v1593 = vadd.f32 0.0, %v1592
        %v1594 = vpop.f32.mrf.mxu0
        %v1595 = vadd.f32 0.0, %v1594
        %1596 = vmatmul.bf16.gmra.mxu0 %v735
        %v1597 = vpop.f32.mrf.mxu0
        %v1598 = vadd.f32 0.0, %v1597
        %v1599 = vpop.f32.mrf.mxu0
        %v1600 = vadd.f32 0.0, %v1599
        %1601 = vmatmul.bf16.gmra.mxu0 %v738
        %v1602 = vpop.f32.mrf.mxu0
        %v1603 = vadd.f32 0.0, %v1602
        %v1604 = vpop.f32.mrf.mxu0
        %v1605 = vadd.f32 0.0, %v1604
        %1606 = vmatmul.bf16.gmra.mxu0 %v741
        %v1607 = vpop.f32.mrf.mxu0
        %v1608 = vadd.f32 0.0, %v1607
        %v1609 = vpop.f32.mrf.mxu0
        %v1610 = vadd.f32 0.0, %v1609
        %1611 = vmatmul.bf16.gmra.mxu0 %v744
        %v1612 = vpop.f32.mrf.mxu0
        %v1613 = vadd.f32 0.0, %v1612
        %v1614 = vpop.f32.mrf.mxu0
        %v1615 = vadd.f32 0.0, %v1614
        %1616 = vmatmul.bf16.gmra.mxu0 %v747
        %v1617 = vpop.f32.mrf.mxu0
        %v1618 = vadd.f32 0.0, %v1617
        %v1619 = vpop.f32.mrf.mxu0
        %v1620 = vadd.f32 0.0, %v1619
        %1621 = vmatmul.bf16.gmra.mxu0 %v750
        %v1622 = vpop.f32.mrf.mxu0
        %v1623 = vadd.f32 0.0, %v1622
        %v1624 = vpop.f32.mrf.mxu0
        %v1625 = vadd.f32 0.0, %v1624
        %1626 = vmatmul.bf16.gmra.mxu0 %v753
        %v1627 = vpop.f32.mrf.mxu0
        %v1628 = vadd.f32 0.0, %v1627
        %v1629 = vpop.f32.mrf.mxu0
        %v1630 = vadd.f32 0.0, %v1629
        %1631 = vmatmul.bf16.gmra.mxu0 %v756
        %v1632 = vpop.f32.mrf.mxu0
        %v1633 = vadd.f32 0.0, %v1632
        %v1634 = vpop.f32.mrf.mxu0
        %v1635 = vadd.f32 0.0, %v1634
        %1636 = vmatmul.bf16.gmra.mxu0 %v759
        %v1637 = vpop.f32.mrf.mxu0
        %v1638 = vadd.f32 0.0, %v1637
        %v1639 = vpop.f32.mrf.mxu0
        %v1640 = vadd.f32 0.0, %v1639
        %1641 = vmatmul.bf16.gmra.mxu0 %v762
        %v1642 = vpop.f32.mrf.mxu0
        %v1643 = vadd.f32 0.0, %v1642
        %v1644 = vpop.f32.mrf.mxu0
        %v1645 = vadd.f32 0.0, %v1644
        %1646 = vmatmul.bf16.gmra.mxu0 %v765
        %v1647 = vpop.f32.mrf.mxu0
        %v1648 = vadd.f32 0.0, %v1647
        %v1649 = vpop.f32.mrf.mxu0
        %v1650 = vadd.f32 0.0, %v1649
        %1651 = vmatmul.bf16.gmra.mxu0 %v768
        %v1652 = vpop.f32.mrf.mxu0
        %v1653 = vadd.f32 0.0, %v1652
        %v1654 = vpop.f32.mrf.mxu0
        %v1655 = vadd.f32 0.0, %v1654
        %1656 = vmatmul.bf16.gmra.mxu0 %v771
        %v1657 = vpop.f32.mrf.mxu0
        %v1658 = vadd.f32 0.0, %v1657
        %v1659 = vpop.f32.mrf.mxu0
        %v1660 = vadd.f32 0.0, %v1659
        %1661 = vmatmul.bf16.gmra.mxu0 %v774
        %v1662 = vpop.f32.mrf.mxu0
        %v1663 = vadd.f32 0.0, %v1662
        %v1664 = vpop.f32.mrf.mxu0
        %v1665 = vadd.f32 0.0, %v1664
        %1666 = vmatmul.bf16.gmra.mxu0 %v777
        %v1667 = vpop.f32.mrf.mxu0
        %v1668 = vadd.f32 0.0, %v1667
        %v1669 = vpop.f32.mrf.mxu0
        %v1670 = vadd.f32 0.0, %v1669
        %1671 = vmatmul.bf16.gmra.mxu0 %v780
        %v1672 = vpop.f32.mrf.mxu0
        %v1673 = vadd.f32 0.0, %v1672
        %v1674 = vpop.f32.mrf.mxu0
        %v1675 = vadd.f32 0.0, %v1674
        %1676 = vmatmul.bf16.gmra.mxu0 %v783
        %v1677 = vpop.f32.mrf.mxu0
        %v1678 = vadd.f32 0.0, %v1677
        %v1679 = vpop.f32.mrf.mxu0
        %v1680 = vadd.f32 0.0, %v1679
        %1681 = vmatmul.bf16.gmra.mxu0 %v786
        %v1682 = vpop.f32.mrf.mxu0
        %v1683 = vadd.f32 0.0, %v1682
        %v1684 = vpop.f32.mrf.mxu0
        %v1685 = vadd.f32 0.0, %v1684
        %1686 = vmatmul.bf16.gmra.mxu0 %v789
        %v1687 = vpop.f32.mrf.mxu0
        %v1688 = vadd.f32 0.0, %v1687
        %v1689 = vpop.f32.mrf.mxu0
        %v1690 = vadd.f32 0.0, %v1689
        %1691 = vmatmul.bf16.gmra.mxu0 %v792
        %v1692 = vpop.f32.mrf.mxu0
        %v1693 = vadd.f32 0.0, %v1692
        %v1694 = vpop.f32.mrf.mxu0
        %v1695 = vadd.f32 0.0, %v1694
        %1696 = vmatmul.bf16.gmra.mxu0 %v795
        %v1697 = vpop.f32.mrf.mxu0
        %v1698 = vadd.f32 0.0, %v1697
        %v1699 = vpop.f32.mrf.mxu0
        %v1700 = vadd.f32 0.0, %v1699
        %1701 = vmatmul.bf16.gmra.mxu0 %v798
        %v1702 = vpop.f32.mrf.mxu0
        %v1703 = vadd.f32 0.0, %v1702
        %v1704 = vpop.f32.mrf.mxu0
        %v1705 = vadd.f32 0.0, %v1704
        %1706 = vmatmul.bf16.gmra.mxu0 %v801
        %v1707 = vpop.f32.mrf.mxu0
        %v1708 = vadd.f32 0.0, %v1707
        %v1709 = vpop.f32.mrf.mxu0
        %v1710 = vadd.f32 0.0, %v1709
        %1711 = vmatmul.bf16.gmra.mxu0 %v804
        %v1712 = vpop.f32.mrf.mxu0
        %v1713 = vadd.f32 0.0, %v1712
        %v1714 = vpop.f32.mrf.mxu0
        %v1715 = vadd.f32 0.0, %v1714
        %1716 = vmatmul.bf16.gmra.mxu0 %v807
        %v1717 = vpop.f32.mrf.mxu0
        %v1718 = vadd.f32 0.0, %v1717
        %v1719 = vpop.f32.mrf.mxu0
        %v1720 = vadd.f32 0.0, %v1719
        %1721 = vmatmul.bf16.gmra.mxu0 %v810
        %v1722 = vpop.f32.mrf.mxu0
        %v1723 = vadd.f32 0.0, %v1722
        %v1724 = vpop.f32.mrf.mxu0
        %v1725 = vadd.f32 0.0, %v1724
        %1726 = vmatmul.bf16.gmra.mxu0 %v813
        %v1727 = vpop.f32.mrf.mxu0
        %v1728 = vadd.f32 0.0, %v1727
        %v1729 = vpop.f32.mrf.mxu0
        %v1730 = vadd.f32 0.0, %v1729
        %1731 = vmatmul.bf16.gmra.mxu0 %v816
        %v1732 = vpop.f32.mrf.mxu0
        %v1733 = vadd.f32 0.0, %v1732
        %v1734 = vpop.f32.mrf.mxu0
        %v1735 = vadd.f32 0.0, %v1734
        %1736 = vmatmul.bf16.gmra.mxu0 %v819
        %v1737 = vpop.f32.mrf.mxu0
        %v1738 = vadd.f32 0.0, %v1737
        %v1739 = vpop.f32.mrf.mxu0
        %v1740 = vadd.f32 0.0, %v1739
        %1741 = vmatmul.bf16.gmra.mxu0 %v822
        %v1742 = vpop.f32.mrf.mxu0
        %v1743 = vadd.f32 0.0, %v1742
        %v1744 = vpop.f32.mrf.mxu0
        %v1745 = vadd.f32 0.0, %v1744
        %1746 = vmatmul.bf16.gmra.mxu0 %v825
        %v1747 = vpop.f32.mrf.mxu0
        %v1748 = vadd.f32 0.0, %v1747
        %v1749 = vpop.f32.mrf.mxu0
        %v1750 = vadd.f32 0.0, %v1749
        %1751 = vmatmul.bf16.gmra.mxu0 %v828
        %v1752 = vpop.f32.mrf.mxu0
        %v1753 = vadd.f32 0.0, %v1752
        %v1754 = vpop.f32.mrf.mxu0
        %v1755 = vadd.f32 0.0, %v1754
        %1756 = vmatmul.bf16.gmra.mxu0 %v831
        %v1757 = vpop.f32.mrf.mxu0
        %v1758 = vadd.f32 0.0, %v1757
        %v1759 = vpop.f32.mrf.mxu0
        %v1760 = vadd.f32 0.0, %v1759
        %1761 = vdwg.mxu0
        %v1762 = vmax.f32 %v856, %v1085
        %v1763 = vmax.f32 %v858, %v1087
        %v1764 = vmax.f32 %v861, %v1090
        %v1765 = vmax.f32 %v863, %v1092
        %v1766 = vmax.f32 %v866, %v1095
        %v1767 = vmax.f32 %v868, %v1097
        %v1768 = vmax.f32 %v871, %v1100
        %v1769 = vmax.f32 %v873, %v1102
        %v1770 = vmax.f32 %v876, %v1105
        %v1771 = vmax.f32 %v878, %v1107
        %v1772 = vmax.f32 %v881, %v1110
        %v1773 = vmax.f32 %v883, %v1112
        %v1774 = vmax.f32 %v886, %v1115
        %v1775 = vmax.f32 %v888, %v1117
        %v1776 = vmax.f32 %v891, %v1120
        %v1777 = vmax.f32 %v893, %v1122
        %v1778 = vmax.f32 %v896, %v1125
        %v1779 = vmax.f32 %v898, %v1127
        %v1780 = vmax.f32 %v901, %v1130
        %v1781 = vmax.f32 %v903, %v1132
        %v1782 = vmax.f32 %v906, %v1135
        %v1783 = vmax.f32 %v908, %v1137
        %v1784 = vmax.f32 %v911, %v1140
        %v1785 = vmax.f32 %v913, %v1142
        %v1786 = vmax.f32 %v916, %v1145
        %v1787 = vmax.f32 %v918, %v1147
        %v1788 = vmax.f32 %v921, %v1150
        %v1789 = vmax.f32 %v923, %v1152
        %v1790 = vmax.f32 %v926, %v1155
        %v1791 = vmax.f32 %v928, %v1157
        %v1792 = vmax.f32 %v931, %v1160
        %v1793 = vmax.f32 %v933, %v1162
        %v1794 = vmax.f32 %v936, %v1165
        %v1795 = vmax.f32 %v938, %v1167
        %v1796 = vmax.f32 %v941, %v1170
        %v1797 = vmax.f32 %v943, %v1172
        %v1798 = vmax.f32 %v946, %v1175
        %v1799 = vmax.f32 %v948, %v1177
        %v1800 = vmax.f32 %v951, %v1180
        %v1801 = vmax.f32 %v953, %v1182
        %v1802 = vmax.f32 %v956, %v1185
        %v1803 = vmax.f32 %v958, %v1187
        %v1804 = vmax.f32 %v961, %v1190
        %v1805 = vmax.f32 %v963, %v1192
        %v1806 = vmax.f32 %v966, %v1195
        %v1807 = vmax.f32 %v968, %v1197
        %v1808 = vmax.f32 %v971, %v1200
        %v1809 = vmax.f32 %v973, %v1202
        %v1810 = vmax.f32 %v976, %v1205
        %v1811 = vmax.f32 %v978, %v1207
        %v1812 = vmax.f32 %v981, %v1210
        %v1813 = vmax.f32 %v983, %v1212
        %v1814 = vmax.f32 %v986, %v1215
        %v1815 = vmax.f32 %v988, %v1217
        %v1816 = vmax.f32 %v991, %v1220
        %v1817 = vmax.f32 %v993, %v1222
        %v1818 = vmax.f32 %v996, %v1225
        %v1819 = vmax.f32 %v998, %v1227
        %v1820 = vmax.f32 %v1001, %v1230
        %v1821 = vmax.f32 %v1003, %v1232
        %v1822 = vmax.f32 %v1006, %v1235
        %v1823 = vmax.f32 %v1008, %v1237
        %v1824 = vmax.f32 %v1011, %v1240
        %v1825 = vmax.f32 %v1013, %v1242
        %v1826 = vmax.f32 %v1016, %v1245
        %v1827 = vmax.f32 %v1018, %v1247
        %v1828 = vmax.f32 %v1021, %v1250
        %v1829 = vmax.f32 %v1023, %v1252
        %v1830 = vmax.f32 %v1026, %v1255
        %v1831 = vmax.f32 %v1028, %v1257
        %v1832 = vmax.f32 %v1031, %v1260
        %v1833 = vmax.f32 %v1033, %v1262
        %v1834 = vmax.f32 %v1036, %v1265
        %v1835 = vmax.f32 %v1038, %v1267
        %v1836 = vmax.f32 %v1041, %v1270
        %v1837 = vmax.f32 %v1043, %v1272
        %v1838 = vmax.f32 %v1046, %v1275
        %v1839 = vmax.f32 %v1048, %v1277
        %v1840 = vmax.f32 %v1051, %v1280
        %v1841 = vmax.f32 %v1053, %v1282
        %v1842 = vmax.f32 %v1056, %v1285
        %v1843 = vmax.f32 %v1058, %v1287
        %v1844 = vmax.f32 %v1061, %v1290
        %v1845 = vmax.f32 %v1063, %v1292
        %v1846 = vmax.f32 %v1066, %v1295
        %v1847 = vmax.f32 %v1068, %v1297
        %v1848 = vmax.f32 %v1071, %v1300
        %v1849 = vmax.f32 %v1073, %v1302
        %v1850 = vmax.f32 %v1314, %v1543
        %v1851 = vmax.f32 %v1316, %v1545
        %v1852 = vmax.f32 %v1319, %v1548
        %v1853 = vmax.f32 %v1321, %v1550
        %v1854 = vmax.f32 %v1324, %v1553
        %v1855 = vmax.f32 %v1326, %v1555
        %v1856 = vmax.f32 %v1329, %v1558
        %v1857 = vmax.f32 %v1331, %v1560
        %v1858 = vmax.f32 %v1334, %v1563
        %v1859 = vmax.f32 %v1336, %v1565
        %v1860 = vmax.f32 %v1339, %v1568
        %v1861 = vmax.f32 %v1341, %v1570
        %v1862 = vmax.f32 %v1344, %v1573
        %v1863 = vmax.f32 %v1346, %v1575
        %v1864 = vmax.f32 %v1349, %v1578
        %v1865 = vmax.f32 %v1351, %v1580
        %v1866 = vmax.f32 %v1354, %v1583
        %v1867 = vmax.f32 %v1356, %v1585
        %v1868 = vmax.f32 %v1359, %v1588
        %v1869 = vmax.f32 %v1361, %v1590
        %v1870 = vmax.f32 %v1364, %v1593
        %v1871 = vmax.f32 %v1366, %v1595
        %v1872 = vmax.f32 %v1369, %v1598
        %v1873 = vmax.f32 %v1371, %v1600
        %v1874 = vmax.f32 %v1374, %v1603
        %v1875 = vmax.f32 %v1376, %v1605
        %v1876 = vmax.f32 %v1379, %v1608
        %v1877 = vmax.f32 %v1381, %v1610
        %v1878 = vmax.f32 %v1384, %v1613
        %v1879 = vmax.f32 %v1386, %v1615
        %v1880 = vmax.f32 %v1389, %v1618
        %v1881 = vmax.f32 %v1391, %v1620
        %v1882 = vmax.f32 %v1394, %v1623
        %v1883 = vmax.f32 %v1396, %v1625
        %v1884 = vmax.f32 %v1399, %v1628
        %v1885 = vmax.f32 %v1401, %v1630
        %v1886 = vmax.f32 %v1404, %v1633
        %v1887 = vmax.f32 %v1406, %v1635
        %v1888 = vmax.f32 %v1409, %v1638
        %v1889 = vmax.f32 %v1411, %v1640
        %v1890 = vmax.f32 %v1414, %v1643
        %v1891 = vmax.f32 %v1416, %v1645
        %v1892 = vmax.f32 %v1419, %v1648
        %v1893 = vmax.f32 %v1421, %v1650
        %v1894 = vmax.f32 %v1424, %v1653
        %v1895 = vmax.f32 %v1426, %v1655
        %v1896 = vmax.f32 %v1429, %v1658
        %v1897 = vmax.f32 %v1431, %v1660
        %v1898 = vmax.f32 %v1434, %v1663
        %v1899 = vmax.f32 %v1436, %v1665
        %v1900 = vmax.f32 %v1439, %v1668
        %v1901 = vmax.f32 %v1441, %v1670
        %v1902 = vmax.f32 %v1444, %v1673
        %v1903 = vmax.f32 %v1446, %v1675
        %v1904 = vmax.f32 %v1449, %v1678
        %v1905 = vmax.f32 %v1451, %v1680
        %v1906 = vmax.f32 %v1454, %v1683
        %v1907 = vmax.f32 %v1456, %v1685
        %v1908 = vmax.f32 %v1459, %v1688
        %v1909 = vmax.f32 %v1461, %v1690
        %v1910 = vmax.f32 %v1464, %v1693
        %v1911 = vmax.f32 %v1466, %v1695
        %v1912 = vmax.f32 %v1469, %v1698
        %v1913 = vmax.f32 %v1471, %v1700
        %v1914 = vmax.f32 %v1474, %v1703
        %v1915 = vmax.f32 %v1476, %v1705
        %v1916 = vmax.f32 %v1479, %v1708
        %v1917 = vmax.f32 %v1481, %v1710
        %v1918 = vmax.f32 %v1484, %v1713
        %v1919 = vmax.f32 %v1486, %v1715
        %v1920 = vmax.f32 %v1489, %v1718
        %v1921 = vmax.f32 %v1491, %v1720
        %v1922 = vmax.f32 %v1494, %v1723
        %v1923 = vmax.f32 %v1496, %v1725
        %v1924 = vmax.f32 %v1499, %v1728
        %v1925 = vmax.f32 %v1501, %v1730
        %v1926 = vmax.f32 %v1504, %v1733
        %v1927 = vmax.f32 %v1506, %v1735
        %v1928 = vmax.f32 %v1509, %v1738
        %v1929 = vmax.f32 %v1511, %v1740
        %v1930 = vmax.f32 %v1514, %v1743
        %v1931 = vmax.f32 %v1516, %v1745
        %v1932 = vmax.f32 %v1519, %v1748
        %v1933 = vmax.f32 %v1521, %v1750
        %v1934 = vmax.f32 %v1524, %v1753
        %v1935 = vmax.f32 %v1526, %v1755
        %v1936 = vmax.f32 %v1529, %v1758
        %v1937 = vmax.f32 %v1531, %v1760
        %v1938 = vmax.f32 %v1762, %v1850
        %v1939 = vmax.f32 %v1763, %v1851
        %v1940 = vmax.f32 %v1764, %v1852
        %v1941 = vmax.f32 %v1765, %v1853
        %v1942 = vmax.f32 %v1766, %v1854
        %v1943 = vmax.f32 %v1767, %v1855
        %v1944 = vmax.f32 %v1768, %v1856
        %v1945 = vmax.f32 %v1769, %v1857
        %v1946 = vmax.f32 %v1770, %v1858
        %v1947 = vmax.f32 %v1771, %v1859
        %v1948 = vmax.f32 %v1772, %v1860
        %v1949 = vmax.f32 %v1773, %v1861
        %v1950 = vmax.f32 %v1774, %v1862
        %v1951 = vmax.f32 %v1775, %v1863
        %v1952 = vmax.f32 %v1776, %v1864
        %v1953 = vmax.f32 %v1777, %v1865
        %v1954 = vmax.f32 %v1778, %v1866
        %v1955 = vmax.f32 %v1779, %v1867
        %v1956 = vmax.f32 %v1780, %v1868
        %v1957 = vmax.f32 %v1781, %v1869
        %v1958 = vmax.f32 %v1782, %v1870
        %v1959 = vmax.f32 %v1783, %v1871
        %v1960 = vmax.f32 %v1784, %v1872
        %v1961 = vmax.f32 %v1785, %v1873
        %v1962 = vmax.f32 %v1786, %v1874
        %v1963 = vmax.f32 %v1787, %v1875
        %v1964 = vmax.f32 %v1788, %v1876
        %v1965 = vmax.f32 %v1789, %v1877
        %v1966 = vmax.f32 %v1790, %v1878
        %v1967 = vmax.f32 %v1791, %v1879
        %v1968 = vmax.f32 %v1792, %v1880
        %v1969 = vmax.f32 %v1793, %v1881
        %v1970 = vmax.f32 %v1794, %v1882
        %v1971 = vmax.f32 %v1795, %v1883
        %v1972 = vmax.f32 %v1796, %v1884
        %v1973 = vmax.f32 %v1797, %v1885
        %v1974 = vmax.f32 %v1798, %v1886
        %v1975 = vmax.f32 %v1799, %v1887
        %v1976 = vmax.f32 %v1800, %v1888
        %v1977 = vmax.f32 %v1801, %v1889
        %v1978 = vmax.f32 %v1802, %v1890
        %v1979 = vmax.f32 %v1803, %v1891
        %v1980 = vmax.f32 %v1804, %v1892
        %v1981 = vmax.f32 %v1805, %v1893
        %v1982 = vmax.f32 %v1806, %v1894
        %v1983 = vmax.f32 %v1807, %v1895
        %v1984 = vmax.f32 %v1808, %v1896
        %v1985 = vmax.f32 %v1809, %v1897
        %v1986 = vmax.f32 %v1810, %v1898
        %v1987 = vmax.f32 %v1811, %v1899
        %v1988 = vmax.f32 %v1812, %v1900
        %v1989 = vmax.f32 %v1813, %v1901
        %v1990 = vmax.f32 %v1814, %v1902
        %v1991 = vmax.f32 %v1815, %v1903
        %v1992 = vmax.f32 %v1816, %v1904
        %v1993 = vmax.f32 %v1817, %v1905
        %v1994 = vmax.f32 %v1818, %v1906
        %v1995 = vmax.f32 %v1819, %v1907
        %v1996 = vmax.f32 %v1820, %v1908
        %v1997 = vmax.f32 %v1821, %v1909
        %v1998 = vmax.f32 %v1822, %v1910
        %v1999 = vmax.f32 %v1823, %v1911
        %v2000 = vmax.f32 %v1824, %v1912
        %v2001 = vmax.f32 %v1825, %v1913
        %v2002 = vmax.f32 %v1826, %v1914
        %v2003 = vmax.f32 %v1827, %v1915
        %v2004 = vmax.f32 %v1828, %v1916
        %v2005 = vmax.f32 %v1829, %v1917
        %v2006 = vmax.f32 %v1830, %v1918
        %v2007 = vmax.f32 %v1831, %v1919
        %v2008 = vmax.f32 %v1832, %v1920
        %v2009 = vmax.f32 %v1833, %v1921
        %v2010 = vmax.f32 %v1834, %v1922
        %v2011 = vmax.f32 %v1835, %v1923
        %v2012 = vmax.f32 %v1836, %v1924
        %v2013 = vmax.f32 %v1837, %v1925
        %v2014 = vmax.f32 %v1838, %v1926
        %v2015 = vmax.f32 %v1839, %v1927
        %v2016 = vmax.f32 %v1840, %v1928
        %v2017 = vmax.f32 %v1841, %v1929
        %v2018 = vmax.f32 %v1842, %v1930
        %v2019 = vmax.f32 %v1843, %v1931
        %v2020 = vmax.f32 %v1844, %v1932
        %v2021 = vmax.f32 %v1845, %v1933
        %v2022 = vmax.f32 %v1846, %v1934
        %v2023 = vmax.f32 %v1847, %v1935
        %v2024 = vmax.f32 %v1848, %v1936
        %v2025 = vmax.f32 %v1849, %v1937
        %v2026 = vld [vmem:[#allocation5] sm:$0x1]
        %v2028 = vperm.slane %v2026, 0
        %v2030 = vadd.f32 %v1938, %v2028
        %v2031 = vadd.f32 %v1939, %v2028
        %v2032 = vadd.f32 %v1940, %v2028
        %v2033 = vadd.f32 %v1941, %v2028
        %v2034 = vadd.f32 %v1942, %v2028
        %v2035 = vadd.f32 %v1943, %v2028
        %v2036 = vadd.f32 %v1944, %v2028
        %v2037 = vadd.f32 %v1945, %v2028
        %v2038 = vadd.f32 %v1946, %v2028
        %v2039 = vadd.f32 %v1947, %v2028
        %v2040 = vadd.f32 %v1948, %v2028
        %v2041 = vadd.f32 %v1949, %v2028
        %v2042 = vadd.f32 %v1950, %v2028
        %v2043 = vadd.f32 %v1951, %v2028
        %v2044 = vadd.f32 %v1952, %v2028
        %v2045 = vadd.f32 %v1953, %v2028
        %v2046 = vadd.f32 %v1954, %v2028
        %v2047 = vadd.f32 %v1955, %v2028
        %v2048 = vadd.f32 %v1956, %v2028
        %v2049 = vadd.f32 %v1957, %v2028
        %v2050 = vadd.f32 %v1958, %v2028
        %v2051 = vadd.f32 %v1959, %v2028
        %v2052 = vadd.f32 %v1960, %v2028
        %v2053 = vadd.f32 %v1961, %v2028
        %v2054 = vadd.f32 %v1962, %v2028
        %v2055 = vadd.f32 %v1963, %v2028
        %v2056 = vadd.f32 %v1964, %v2028
        %v2057 = vadd.f32 %v1965, %v2028
        %v2058 = vadd.f32 %v1966, %v2028
        %v2059 = vadd.f32 %v1967, %v2028
        %v2060 = vadd.f32 %v1968, %v2028
        %v2061 = vadd.f32 %v1969, %v2028
        %v2062 = vadd.f32 %v1970, %v2028
        %v2063 = vadd.f32 %v1971, %v2028
        %v2064 = vadd.f32 %v1972, %v2028
        %v2065 = vadd.f32 %v1973, %v2028
        %v2066 = vadd.f32 %v1974, %v2028
        %v2067 = vadd.f32 %v1975, %v2028
        %v2068 = vadd.f32 %v1976, %v2028
        %v2069 = vadd.f32 %v1977, %v2028
        %v2070 = vadd.f32 %v1978, %v2028
        %v2071 = vadd.f32 %v1979, %v2028
        %v2072 = vadd.f32 %v1980, %v2028
        %v2073 = vadd.f32 %v1981, %v2028
        %v2074 = vadd.f32 %v1982, %v2028
        %v2075 = vadd.f32 %v1983, %v2028
        %v2076 = vadd.f32 %v1984, %v2028
        %v2077 = vadd.f32 %v1985, %v2028
        %v2078 = vadd.f32 %v1986, %v2028
        %v2079 = vadd.f32 %v1987, %v2028
        %v2080 = vadd.f32 %v1988, %v2028
        %v2081 = vadd.f32 %v1989, %v2028
        %v2082 = vadd.f32 %v1990, %v2028
        %v2083 = vadd.f32 %v1991, %v2028
        %v2084 = vadd.f32 %v1992, %v2028
        %v2085 = vadd.f32 %v1993, %v2028
        %v2086 = vadd.f32 %v1994, %v2028
        %v2087 = vadd.f32 %v1995, %v2028
        %v2088 = vadd.f32 %v1996, %v2028
        %v2089 = vadd.f32 %v1997, %v2028
        %v2090 = vadd.f32 %v1998, %v2028
        %v2091 = vadd.f32 %v1999, %v2028
        %v2092 = vadd.f32 %v2000, %v2028
        %v2093 = vadd.f32 %v2001, %v2028
        %v2094 = vadd.f32 %v2002, %v2028
        %v2095 = vadd.f32 %v2003, %v2028
        %v2096 = vadd.f32 %v2004, %v2028
        %v2097 = vadd.f32 %v2005, %v2028
        %v2098 = vadd.f32 %v2006, %v2028
        %v2099 = vadd.f32 %v2007, %v2028
        %v2100 = vadd.f32 %v2008, %v2028
        %v2101 = vadd.f32 %v2009, %v2028
        %v2102 = vadd.f32 %v2010, %v2028
        %v2103 = vadd.f32 %v2011, %v2028
        %v2104 = vadd.f32 %v2012, %v2028
        %v2105 = vadd.f32 %v2013, %v2028
        %v2106 = vadd.f32 %v2014, %v2028
        %v2107 = vadd.f32 %v2015, %v2028
        %v2108 = vadd.f32 %v2016, %v2028
        %v2109 = vadd.f32 %v2017, %v2028
        %v2110 = vadd.f32 %v2018, %v2028
        %v2111 = vadd.f32 %v2019, %v2028
        %v2112 = vadd.f32 %v2020, %v2028
        %v2113 = vadd.f32 %v2021, %v2028
        %v2114 = vadd.f32 %v2022, %v2028
        %v2115 = vadd.f32 %v2023, %v2028
        %v2116 = vadd.f32 %v2024, %v2028
        %v2117 = vadd.f32 %v2025, %v2028
        %v2118 = vmax.f32 %v2030, 0.0
        %v2119 = vmax.f32 %v2031, 0.0
        %v2120 = vmax.f32 %v2032, 0.0
        %v2121 = vmax.f32 %v2033, 0.0
        %v2122 = vmax.f32 %v2034, 0.0
        %v2123 = vmax.f32 %v2035, 0.0
        %v2124 = vmax.f32 %v2036, 0.0
        %v2125 = vmax.f32 %v2037, 0.0
        %v2126 = vmax.f32 %v2038, 0.0
        %v2127 = vmax.f32 %v2039, 0.0
        %v2128 = vmax.f32 %v2040, 0.0
        %v2129 = vmax.f32 %v2041, 0.0
        %v2130 = vmax.f32 %v2042, 0.0
        %v2131 = vmax.f32 %v2043, 0.0
        %v2132 = vmax.f32 %v2044, 0.0
        %v2133 = vmax.f32 %v2045, 0.0
        %v2134 = vmax.f32 %v2046, 0.0
        %v2135 = vmax.f32 %v2047, 0.0
        %v2136 = vmax.f32 %v2048, 0.0
        %v2137 = vmax.f32 %v2049, 0.0
        %v2138 = vmax.f32 %v2050, 0.0
        %v2139 = vmax.f32 %v2051, 0.0
        %v2140 = vmax.f32 %v2052, 0.0
        %v2141 = vmax.f32 %v2053, 0.0
        %v2142 = vmax.f32 %v2054, 0.0
        %v2143 = vmax.f32 %v2055, 0.0
        %v2144 = vmax.f32 %v2056, 0.0
        %v2145 = vmax.f32 %v2057, 0.0
        %v2146 = vmax.f32 %v2058, 0.0
        %v2147 = vmax.f32 %v2059, 0.0
        %v2148 = vmax.f32 %v2060, 0.0
        %v2149 = vmax.f32 %v2061, 0.0
        %v2150 = vmax.f32 %v2062, 0.0
        %v2151 = vmax.f32 %v2063, 0.0
        %v2152 = vmax.f32 %v2064, 0.0
        %v2153 = vmax.f32 %v2065, 0.0
        %v2154 = vmax.f32 %v2066, 0.0
        %v2155 = vmax.f32 %v2067, 0.0
        %v2156 = vmax.f32 %v2068, 0.0
        %v2157 = vmax.f32 %v2069, 0.0
        %v2158 = vmax.f32 %v2070, 0.0
        %v2159 = vmax.f32 %v2071, 0.0
        %v2160 = vmax.f32 %v2072, 0.0
        %v2161 = vmax.f32 %v2073, 0.0
        %v2162 = vmax.f32 %v2074, 0.0
        %v2163 = vmax.f32 %v2075, 0.0
        %v2164 = vmax.f32 %v2076, 0.0
        %v2165 = vmax.f32 %v2077, 0.0
        %v2166 = vmax.f32 %v2078, 0.0
        %v2167 = vmax.f32 %v2079, 0.0
        %v2168 = vmax.f32 %v2080, 0.0
        %v2169 = vmax.f32 %v2081, 0.0
        %v2170 = vmax.f32 %v2082, 0.0
        %v2171 = vmax.f32 %v2083, 0.0
        %v2172 = vmax.f32 %v2084, 0.0
        %v2173 = vmax.f32 %v2085, 0.0
        %v2174 = vmax.f32 %v2086, 0.0
        %v2175 = vmax.f32 %v2087, 0.0
        %v2176 = vmax.f32 %v2088, 0.0
        %v2177 = vmax.f32 %v2089, 0.0
        %v2178 = vmax.f32 %v2090, 0.0
        %v2179 = vmax.f32 %v2091, 0.0
        %v2180 = vmax.f32 %v2092, 0.0
        %v2181 = vmax.f32 %v2093, 0.0
        %v2182 = vmax.f32 %v2094, 0.0
        %v2183 = vmax.f32 %v2095, 0.0
        %v2184 = vmax.f32 %v2096, 0.0
        %v2185 = vmax.f32 %v2097, 0.0
        %v2186 = vmax.f32 %v2098, 0.0
        %v2187 = vmax.f32 %v2099, 0.0
        %v2188 = vmax.f32 %v2100, 0.0
        %v2189 = vmax.f32 %v2101, 0.0
        %v2190 = vmax.f32 %v2102, 0.0
        %v2191 = vmax.f32 %v2103, 0.0
        %v2192 = vmax.f32 %v2104, 0.0
        %v2193 = vmax.f32 %v2105, 0.0
        %v2194 = vmax.f32 %v2106, 0.0
        %v2195 = vmax.f32 %v2107, 0.0
        %v2196 = vmax.f32 %v2108, 0.0
        %v2197 = vmax.f32 %v2109, 0.0
        %v2198 = vmax.f32 %v2110, 0.0
        %v2199 = vmax.f32 %v2111, 0.0
        %v2200 = vmax.f32 %v2112, 0.0
        %v2201 = vmax.f32 %v2113, 0.0
        %v2202 = vmax.f32 %v2114, 0.0
        %v2203 = vmax.f32 %v2115, 0.0
        %v2204 = vmax.f32 %v2116, 0.0
        %v2205 = vmax.f32 %v2117, 0.0
        %v2206 = vpack.c.bf16 %v2118, %v2118
        %v2207 = vpack.c.bf16 %v2119, %v2119
        %v2208 = vpack.c.bf16 %v2120, %v2120
        %v2209 = vpack.c.bf16 %v2121, %v2121
        %v2210 = vpack.c.bf16 %v2122, %v2122
        %v2211 = vpack.c.bf16 %v2123, %v2123
        %v2212 = vpack.c.bf16 %v2124, %v2124
        %v2213 = vpack.c.bf16 %v2125, %v2125
        %v2214 = vpack.c.bf16 %v2126, %v2126
        %v2215 = vpack.c.bf16 %v2127, %v2127
        %v2216 = vpack.c.bf16 %v2128, %v2128
        %v2217 = vpack.c.bf16 %v2129, %v2129
        %v2218 = vpack.c.bf16 %v2130, %v2130
        %v2219 = vpack.c.bf16 %v2131, %v2131
        %v2220 = vpack.c.bf16 %v2132, %v2132
        %v2221 = vpack.c.bf16 %v2133, %v2133
        %v2222 = vpack.c.bf16 %v2134, %v2134
        %v2223 = vpack.c.bf16 %v2135, %v2135
        %v2224 = vpack.c.bf16 %v2136, %v2136
        %v2225 = vpack.c.bf16 %v2137, %v2137
        %v2226 = vpack.c.bf16 %v2138, %v2138
        %v2227 = vpack.c.bf16 %v2139, %v2139
        %v2228 = vpack.c.bf16 %v2140, %v2140
        %v2229 = vpack.c.bf16 %v2141, %v2141
        %v2230 = vpack.c.bf16 %v2142, %v2142
        %v2231 = vpack.c.bf16 %v2143, %v2143
        %v2232 = vpack.c.bf16 %v2144, %v2144
        %v2233 = vpack.c.bf16 %v2145, %v2145
        %v2234 = vpack.c.bf16 %v2146, %v2146
        %v2235 = vpack.c.bf16 %v2147, %v2147
        %v2236 = vpack.c.bf16 %v2148, %v2148
        %v2237 = vpack.c.bf16 %v2149, %v2149
        %v2238 = vpack.c.bf16 %v2150, %v2150
        %v2239 = vpack.c.bf16 %v2151, %v2151
        %v2240 = vpack.c.bf16 %v2152, %v2152
        %v2241 = vpack.c.bf16 %v2153, %v2153
        %v2242 = vpack.c.bf16 %v2154, %v2154
        %v2243 = vpack.c.bf16 %v2155, %v2155
        %v2244 = vpack.c.bf16 %v2156, %v2156
        %v2245 = vpack.c.bf16 %v2157, %v2157
        %v2246 = vpack.c.bf16 %v2158, %v2158
        %v2247 = vpack.c.bf16 %v2159, %v2159
        %v2248 = vpack.c.bf16 %v2160, %v2160
        %v2249 = vpack.c.bf16 %v2161, %v2161
        %v2250 = vpack.c.bf16 %v2162, %v2162
        %v2251 = vpack.c.bf16 %v2163, %v2163
        %v2252 = vpack.c.bf16 %v2164, %v2164
        %v2253 = vpack.c.bf16 %v2165, %v2165
        %v2254 = vpack.c.bf16 %v2166, %v2166
        %v2255 = vpack.c.bf16 %v2167, %v2167
        %v2256 = vpack.c.bf16 %v2168, %v2168
        %v2257 = vpack.c.bf16 %v2169, %v2169
        %v2258 = vpack.c.bf16 %v2170, %v2170
        %v2259 = vpack.c.bf16 %v2171, %v2171
        %v2260 = vpack.c.bf16 %v2172, %v2172
        %v2261 = vpack.c.bf16 %v2173, %v2173
        %v2262 = vpack.c.bf16 %v2174, %v2174
        %v2263 = vpack.c.bf16 %v2175, %v2175
        %v2264 = vpack.c.bf16 %v2176, %v2176
        %v2265 = vpack.c.bf16 %v2177, %v2177
        %v2266 = vpack.c.bf16 %v2178, %v2178
        %v2267 = vpack.c.bf16 %v2179, %v2179
        %v2268 = vpack.c.bf16 %v2180, %v2180
        %v2269 = vpack.c.bf16 %v2181, %v2181
        %v2270 = vpack.c.bf16 %v2182, %v2182
        %v2271 = vpack.c.bf16 %v2183, %v2183
        %v2272 = vpack.c.bf16 %v2184, %v2184
        %v2273 = vpack.c.bf16 %v2185, %v2185
        %v2274 = vpack.c.bf16 %v2186, %v2186
        %v2275 = vpack.c.bf16 %v2187, %v2187
        %v2276 = vpack.c.bf16 %v2188, %v2188
        %v2277 = vpack.c.bf16 %v2189, %v2189
        %v2278 = vpack.c.bf16 %v2190, %v2190
        %v2279 = vpack.c.bf16 %v2191, %v2191
        %v2280 = vpack.c.bf16 %v2192, %v2192
        %v2281 = vpack.c.bf16 %v2193, %v2193
        %v2282 = vpack.c.bf16 %v2194, %v2194
        %v2283 = vpack.c.bf16 %v2195, %v2195
        %v2284 = vpack.c.bf16 %v2196, %v2196
        %v2285 = vpack.c.bf16 %v2197, %v2197
        %v2286 = vpack.c.bf16 %v2198, %v2198
        %v2287 = vpack.c.bf16 %v2199, %v2199
        %v2288 = vpack.c.bf16 %v2200, %v2200
        %v2289 = vpack.c.bf16 %v2201, %v2201
        %v2290 = vpack.c.bf16 %v2202, %v2202
        %v2291 = vpack.c.bf16 %v2203, %v2203
        %v2292 = vpack.c.bf16 %v2204, %v2204
        %v2293 = vpack.c.bf16 %v2205, %v2205
        %v2294 = vld [vmem:[#allocation7] sm:$0xf]
        %v2295 = vld [vmem:[#allocation7 + $0x4] sm:$0xf]
        %v2296 = vld [vmem:[#allocation7 + $0x8] sm:$0xf]
        %v2297 = vld [vmem:[#allocation7 + $0xc] sm:$0xf]
        %v2298 = vld [vmem:[#allocation7 + $0x10] sm:$0xf]
        %v2299 = vld [vmem:[#allocation7 + $0x14] sm:$0xf]
        %v2300 = vld [vmem:[#allocation7 + $0x18] sm:$0xf]
        %v2301 = vld [vmem:[#allocation7 + $0x1c] sm:$0xf]
        %v2302 = vld [vmem:[#allocation7 + $0x20] sm:$0xf]
        %v2303 = vld [vmem:[#allocation7 + $0x24] sm:$0xf]
        %v2304 = vld [vmem:[#allocation7 + $0x28] sm:$0xf]
        %v2305 = vld [vmem:[#allocation7 + $0x2c] sm:$0xf]
        %v2306 = vld [vmem:[#allocation7 + $0x30] sm:$0xf]
        %v2307 = vld [vmem:[#allocation7 + $0x34] sm:$0xf]
        %v2308 = vld [vmem:[#allocation7 + $0x38] sm:$0xf]
        %v2309 = vld [vmem:[#allocation7 + $0x3c] sm:$0xf]
        %v2310 = vld [vmem:[#allocation7 + $0x40] sm:$0xf]
        %v2311 = vld [vmem:[#allocation7 + $0x44] sm:$0xf]
        %v2312 = vld [vmem:[#allocation7 + $0x48] sm:$0xf]
        %v2313 = vld [vmem:[#allocation7 + $0x4c] sm:$0xf]
        %v2314 = vld [vmem:[#allocation7 + $0x50] sm:$0xf]
        %v2315 = vld [vmem:[#allocation7 + $0x54] sm:$0xf]
        %v2316 = vld [vmem:[#allocation7 + $0x58] sm:$0xf]
        %v2317 = vld [vmem:[#allocation7 + $0x5c] sm:$0xf]
        %v2318 = vld [vmem:[#allocation7 + $0x60] sm:$0xf]
        %v2319 = vld [vmem:[#allocation7 + $0x64] sm:$0xf]
        %v2320 = vld [vmem:[#allocation7 + $0x68] sm:$0xf]
        %v2321 = vld [vmem:[#allocation7 + $0x6c] sm:$0xf]
        %v2322 = vld [vmem:[#allocation7 + $0x70] sm:$0xf]
        %v2323 = vld [vmem:[#allocation7 + $0x74] sm:$0xf]
        %v2324 = vld [vmem:[#allocation7 + $0x78] sm:$0xf]
        %v2325 = vld [vmem:[#allocation7 + $0x7c] sm:$0xf]
        %v2326 = vld [vmem:[#allocation7 + $0x80] sm:$0xf]
        %v2327 = vld [vmem:[#allocation7 + $0x84] sm:$0xf]
        %v2328 = vld [vmem:[#allocation7 + $0x88] sm:$0xf]
        %v2329 = vld [vmem:[#allocation7 + $0x8c] sm:$0xf]
        %v2330 = vld [vmem:[#allocation7 + $0x90] sm:$0xf]
        %v2331 = vld [vmem:[#allocation7 + $0x94] sm:$0xf]
        %v2332 = vld [vmem:[#allocation7 + $0x98] sm:$0xf]
        %v2333 = vld [vmem:[#allocation7 + $0x9c] sm:$0xf]
        %v2334 = vld [vmem:[#allocation7 + $0xa0] sm:$0xf]
        %v2335 = vld [vmem:[#allocation7 + $0xa4] sm:$0xf]
        %v2336 = vld [vmem:[#allocation7 + $0xa8] sm:$0xf]
        %v2337 = vld [vmem:[#allocation7 + $0xac] sm:$0xf]
        %v2338 = vld [vmem:[#allocation7 + $0xb0] sm:$0xf]
        %v2339 = vld [vmem:[#allocation7 + $0xb4] sm:$0xf]
        %v2340 = vld [vmem:[#allocation7 + $0xb8] sm:$0xf]
        %v2341 = vld [vmem:[#allocation7 + $0xbc] sm:$0xf]
        %v2342 = vld [vmem:[#allocation7 + $0xc0] sm:$0xf]
        %v2343 = vld [vmem:[#allocation7 + $0xc4] sm:$0xf]
        %v2344 = vld [vmem:[#allocation7 + $0xc8] sm:$0xf]
        %v2345 = vld [vmem:[#allocation7 + $0xcc] sm:$0xf]
        %v2346 = vld [vmem:[#allocation7 + $0xd0] sm:$0xf]
        %v2347 = vld [vmem:[#allocation7 + $0xd4] sm:$0xf]
        %v2348 = vld [vmem:[#allocation7 + $0xd8] sm:$0xf]
        %v2349 = vld [vmem:[#allocation7 + $0xdc] sm:$0xf]
        %v2350 = vld [vmem:[#allocation7 + $0xe0] sm:$0xf]
        %v2351 = vld [vmem:[#allocation7 + $0xe4] sm:$0xf]
        %v2352 = vld [vmem:[#allocation7 + $0xe8] sm:$0xf]
        %v2353 = vld [vmem:[#allocation7 + $0xec] sm:$0xf]
        %v2354 = vld [vmem:[#allocation7 + $0xf0] sm:$0xf]
        %v2355 = vld [vmem:[#allocation7 + $0xf4] sm:$0xf]
        %v2356 = vld [vmem:[#allocation7 + $0xf8] sm:$0xf]
        %v2357 = vld [vmem:[#allocation7 + $0xfc] sm:$0xf]
        %v2358 = vld [vmem:[#allocation7 + $0x100] sm:$0xf]
        %v2359 = vld [vmem:[#allocation7 + $0x104] sm:$0xf]
        %v2360 = vld [vmem:[#allocation7 + $0x108] sm:$0xf]
        %v2361 = vld [vmem:[#allocation7 + $0x10c] sm:$0xf]
        %v2362 = vld [vmem:[#allocation7 + $0x110] sm:$0xf]
        %v2363 = vld [vmem:[#allocation7 + $0x114] sm:$0xf]
        %v2364 = vld [vmem:[#allocation7 + $0x118] sm:$0xf]
        %v2365 = vld [vmem:[#allocation7 + $0x11c] sm:$0xf]
        %v2366 = vld [vmem:[#allocation7 + $0x120] sm:$0xf]
        %v2367 = vld [vmem:[#allocation7 + $0x124] sm:$0xf]
        %v2368 = vld [vmem:[#allocation7 + $0x128] sm:$0xf]
        %v2369 = vld [vmem:[#allocation7 + $0x12c] sm:$0xf]
        %v2370 = vld [vmem:[#allocation7 + $0x130] sm:$0xf]
        %v2371 = vld [vmem:[#allocation7 + $0x134] sm:$0xf]
        %v2372 = vld [vmem:[#allocation7 + $0x138] sm:$0xf]
        %v2373 = vld [vmem:[#allocation7 + $0x13c] sm:$0xf]
        %v2374 = vld [vmem:[#allocation7 + $0x140] sm:$0xf]
        %v2375 = vld [vmem:[#allocation7 + $0x144] sm:$0xf]
        %v2376 = vld [vmem:[#allocation7 + $0x148] sm:$0xf]
        %v2377 = vld [vmem:[#allocation7 + $0x14c] sm:$0xf]
        %v2378 = vld [vmem:[#allocation7 + $0x150] sm:$0xf]
        %v2379 = vld [vmem:[#allocation7 + $0x154] sm:$0xf]
        %v2380 = vld [vmem:[#allocation7 + $0x158] sm:$0xf]
        %v2381 = vld [vmem:[#allocation7 + $0x15c] sm:$0x7]
        %v2382 = vunpack.c.l.bf16 %v2206
        %v2383 = vunpack.c.l.bf16 %v2207
        %v2384 = vunpack.c.l.bf16 %v2208
        %v2385 = vunpack.c.l.bf16 %v2209
        %v2386 = vunpack.c.l.bf16 %v2210
        %v2387 = vunpack.c.l.bf16 %v2211
        %v2388 = vunpack.c.l.bf16 %v2212
        %v2389 = vunpack.c.l.bf16 %v2213
        %v2390 = vunpack.c.l.bf16 %v2214
        %v2391 = vunpack.c.l.bf16 %v2215
        %v2392 = vunpack.c.l.bf16 %v2216
        %v2393 = vunpack.c.l.bf16 %v2217
        %v2394 = vunpack.c.l.bf16 %v2218
        %v2395 = vunpack.c.l.bf16 %v2219
        %v2396 = vunpack.c.l.bf16 %v2220
        %v2397 = vunpack.c.l.bf16 %v2221
        %v2398 = vunpack.c.l.bf16 %v2222
        %v2399 = vunpack.c.l.bf16 %v2223
        %v2400 = vunpack.c.l.bf16 %v2224
        %v2401 = vunpack.c.l.bf16 %v2225
        %v2402 = vunpack.c.l.bf16 %v2226
        %v2403 = vunpack.c.l.bf16 %v2227
        %v2404 = vunpack.c.l.bf16 %v2228
        %v2405 = vunpack.c.l.bf16 %v2229
        %v2406 = vunpack.c.l.bf16 %v2230
        %v2407 = vunpack.c.l.bf16 %v2231
        %v2408 = vunpack.c.l.bf16 %v2232
        %v2409 = vunpack.c.l.bf16 %v2233
        %v2410 = vunpack.c.l.bf16 %v2234
        %v2411 = vunpack.c.l.bf16 %v2235
        %v2412 = vunpack.c.l.bf16 %v2236
        %v2413 = vunpack.c.l.bf16 %v2237
        %v2414 = vunpack.c.l.bf16 %v2238
        %v2415 = vunpack.c.l.bf16 %v2239
        %v2416 = vunpack.c.l.bf16 %v2240
        %v2417 = vunpack.c.l.bf16 %v2241
        %v2418 = vunpack.c.l.bf16 %v2242
        %v2419 = vunpack.c.l.bf16 %v2243
        %v2420 = vunpack.c.l.bf16 %v2244
        %v2421 = vunpack.c.l.bf16 %v2245
        %v2422 = vunpack.c.l.bf16 %v2246
        %v2423 = vunpack.c.l.bf16 %v2247
        %v2424 = vunpack.c.l.bf16 %v2248
        %v2425 = vunpack.c.l.bf16 %v2249
        %v2426 = vunpack.c.l.bf16 %v2250
        %v2427 = vunpack.c.l.bf16 %v2251
        %v2428 = vunpack.c.l.bf16 %v2252
        %v2429 = vunpack.c.l.bf16 %v2253
        %v2430 = vunpack.c.l.bf16 %v2254
        %v2431 = vunpack.c.l.bf16 %v2255
        %v2432 = vunpack.c.l.bf16 %v2256
        %v2433 = vunpack.c.l.bf16 %v2257
        %v2434 = vunpack.c.l.bf16 %v2258
        %v2435 = vunpack.c.l.bf16 %v2259
        %v2436 = vunpack.c.l.bf16 %v2260
        %v2437 = vunpack.c.l.bf16 %v2261
        %v2438 = vunpack.c.l.bf16 %v2262
        %v2439 = vunpack.c.l.bf16 %v2263
        %v2440 = vunpack.c.l.bf16 %v2264
        %v2441 = vunpack.c.l.bf16 %v2265
        %v2442 = vunpack.c.l.bf16 %v2266
        %v2443 = vunpack.c.l.bf16 %v2267
        %v2444 = vunpack.c.l.bf16 %v2268
        %v2445 = vunpack.c.l.bf16 %v2269
        %v2446 = vunpack.c.l.bf16 %v2270
        %v2447 = vunpack.c.l.bf16 %v2271
        %v2448 = vunpack.c.l.bf16 %v2272
        %v2449 = vunpack.c.l.bf16 %v2273
        %v2450 = vunpack.c.l.bf16 %v2274
        %v2451 = vunpack.c.l.bf16 %v2275
        %v2452 = vunpack.c.l.bf16 %v2276
        %v2453 = vunpack.c.l.bf16 %v2277
        %v2454 = vunpack.c.l.bf16 %v2278
        %v2455 = vunpack.c.l.bf16 %v2279
        %v2456 = vunpack.c.l.bf16 %v2280
        %v2457 = vunpack.c.l.bf16 %v2281
        %v2458 = vunpack.c.l.bf16 %v2282
        %v2459 = vunpack.c.l.bf16 %v2283
        %v2460 = vunpack.c.l.bf16 %v2284
        %v2461 = vunpack.c.l.bf16 %v2285
        %v2462 = vunpack.c.l.bf16 %v2286
        %v2463 = vunpack.c.l.bf16 %v2287
        %v2464 = vunpack.c.l.bf16 %v2288
        %v2465 = vunpack.c.l.bf16 %v2289
        %v2466 = vunpack.c.l.bf16 %v2290
        %v2467 = vunpack.c.l.bf16 %v2291
        %v2468 = vunpack.c.l.bf16 %v2292
        %v2469 = vunpack.c.l.bf16 %v2293
        %v2470 = vunpack.c.l.bf16 %v2294
        %v2471 = vunpack.c.l.bf16 %v2295
        %v2472 = vunpack.c.l.bf16 %v2296
        %v2473 = vunpack.c.l.bf16 %v2297
        %v2474 = vunpack.c.l.bf16 %v2298
        %v2475 = vunpack.c.l.bf16 %v2299
        %v2476 = vunpack.c.l.bf16 %v2300
        %v2477 = vunpack.c.l.bf16 %v2301
        %v2478 = vunpack.c.l.bf16 %v2302
        %v2479 = vunpack.c.l.bf16 %v2303
        %v2480 = vunpack.c.l.bf16 %v2304
        %v2481 = vunpack.c.l.bf16 %v2305
        %v2482 = vunpack.c.l.bf16 %v2306
        %v2483 = vunpack.c.l.bf16 %v2307
        %v2484 = vunpack.c.l.bf16 %v2308
        %v2485 = vunpack.c.l.bf16 %v2309
        %v2486 = vunpack.c.l.bf16 %v2310
        %v2487 = vunpack.c.l.bf16 %v2311
        %v2488 = vunpack.c.l.bf16 %v2312
        %v2489 = vunpack.c.l.bf16 %v2313
        %v2490 = vunpack.c.l.bf16 %v2314
        %v2491 = vunpack.c.l.bf16 %v2315
        %v2492 = vunpack.c.l.bf16 %v2316
        %v2493 = vunpack.c.l.bf16 %v2317
        %v2494 = vunpack.c.l.bf16 %v2318
        %v2495 = vunpack.c.l.bf16 %v2319
        %v2496 = vunpack.c.l.bf16 %v2320
        %v2497 = vunpack.c.l.bf16 %v2321
        %v2498 = vunpack.c.l.bf16 %v2322
        %v2499 = vunpack.c.l.bf16 %v2323
        %v2500 = vunpack.c.l.bf16 %v2324
        %v2501 = vunpack.c.l.bf16 %v2325
        %v2502 = vunpack.c.l.bf16 %v2326
        %v2503 = vunpack.c.l.bf16 %v2327
        %v2504 = vunpack.c.l.bf16 %v2328
        %v2505 = vunpack.c.l.bf16 %v2329
        %v2506 = vunpack.c.l.bf16 %v2330
        %v2507 = vunpack.c.l.bf16 %v2331
        %v2508 = vunpack.c.l.bf16 %v2332
        %v2509 = vunpack.c.l.bf16 %v2333
        %v2510 = vunpack.c.l.bf16 %v2334
        %v2511 = vunpack.c.l.bf16 %v2335
        %v2512 = vunpack.c.l.bf16 %v2336
        %v2513 = vunpack.c.l.bf16 %v2337
        %v2514 = vunpack.c.l.bf16 %v2338
        %v2515 = vunpack.c.l.bf16 %v2339
        %v2516 = vunpack.c.l.bf16 %v2340
        %v2517 = vunpack.c.l.bf16 %v2341
        %v2518 = vunpack.c.l.bf16 %v2342
        %v2519 = vunpack.c.l.bf16 %v2343
        %v2520 = vunpack.c.l.bf16 %v2344
        %v2521 = vunpack.c.l.bf16 %v2345
        %v2522 = vunpack.c.l.bf16 %v2346
        %v2523 = vunpack.c.l.bf16 %v2347
        %v2524 = vunpack.c.l.bf16 %v2348
        %v2525 = vunpack.c.l.bf16 %v2349
        %v2526 = vunpack.c.l.bf16 %v2350
        %v2527 = vunpack.c.l.bf16 %v2351
        %v2528 = vunpack.c.l.bf16 %v2352
        %v2529 = vunpack.c.l.bf16 %v2353
        %v2530 = vunpack.c.l.bf16 %v2354
        %v2531 = vunpack.c.l.bf16 %v2355
        %v2532 = vunpack.c.l.bf16 %v2356
        %v2533 = vunpack.c.l.bf16 %v2357
        %v2534 = vunpack.c.l.bf16 %v2358
        %v2535 = vunpack.c.l.bf16 %v2359
        %v2536 = vunpack.c.l.bf16 %v2360
        %v2537 = vunpack.c.l.bf16 %v2361
        %v2538 = vunpack.c.l.bf16 %v2362
        %v2539 = vunpack.c.l.bf16 %v2363
        %v2540 = vunpack.c.l.bf16 %v2364
        %v2541 = vunpack.c.l.bf16 %v2365
        %v2542 = vunpack.c.l.bf16 %v2366
        %v2543 = vunpack.c.l.bf16 %v2367
        %v2544 = vunpack.c.l.bf16 %v2368
        %v2545 = vunpack.c.l.bf16 %v2369
        %v2546 = vunpack.c.l.bf16 %v2370
        %v2547 = vunpack.c.l.bf16 %v2371
        %v2548 = vunpack.c.l.bf16 %v2372
        %v2549 = vunpack.c.l.bf16 %v2373
        %v2550 = vunpack.c.l.bf16 %v2374
        %v2551 = vunpack.c.l.bf16 %v2375
        %v2552 = vunpack.c.l.bf16 %v2376
        %v2553 = vunpack.c.l.bf16 %v2377
        %v2554 = vunpack.c.l.bf16 %v2378
        %v2555 = vunpack.c.l.bf16 %v2379
        %v2556 = vunpack.c.l.bf16 %v2380
        %v2557 = vunpack.c.l.bf16 %v2381
        %v2558 = vmul.f32 %v2382, %v2470
        %v2559 = vmul.f32 %v2383, %v2471
        %v2560 = vmul.f32 %v2384, %v2472
        %v2561 = vmul.f32 %v2385, %v2473
        %v2562 = vmul.f32 %v2386, %v2474
        %v2563 = vmul.f32 %v2387, %v2475
        %v2564 = vmul.f32 %v2388, %v2476
        %v2565 = vmul.f32 %v2389, %v2477
        %v2566 = vmul.f32 %v2390, %v2478
        %v2567 = vmul.f32 %v2391, %v2479
        %v2568 = vmul.f32 %v2392, %v2480
        %v2569 = vmul.f32 %v2393, %v2481
        %v2570 = vmul.f32 %v2394, %v2482
        %v2571 = vmul.f32 %v2395, %v2483
        %v2572 = vmul.f32 %v2396, %v2484
        %v2573 = vmul.f32 %v2397, %v2485
        %v2574 = vmul.f32 %v2398, %v2486
        %v2575 = vmul.f32 %v2399, %v2487
        %v2576 = vmul.f32 %v2400, %v2488
        %v2577 = vmul.f32 %v2401, %v2489
        %v2578 = vmul.f32 %v2402, %v2490
        %v2579 = vmul.f32 %v2403, %v2491
        %v2580 = vmul.f32 %v2404, %v2492
        %v2581 = vmul.f32 %v2405, %v2493
        %v2582 = vmul.f32 %v2406, %v2494
        %v2583 = vmul.f32 %v2407, %v2495
        %v2584 = vmul.f32 %v2408, %v2496
        %v2585 = vmul.f32 %v2409, %v2497
        %v2586 = vmul.f32 %v2410, %v2498
        %v2587 = vmul.f32 %v2411, %v2499
        %v2588 = vmul.f32 %v2412, %v2500
        %v2589 = vmul.f32 %v2413, %v2501
        %v2590 = vmul.f32 %v2414, %v2502
        %v2591 = vmul.f32 %v2415, %v2503
        %v2592 = vmul.f32 %v2416, %v2504
        %v2593 = vmul.f32 %v2417, %v2505
        %v2594 = vmul.f32 %v2418, %v2506
        %v2595 = vmul.f32 %v2419, %v2507
        %v2596 = vmul.f32 %v2420, %v2508
        %v2597 = vmul.f32 %v2421, %v2509
        %v2598 = vmul.f32 %v2422, %v2510
        %v2599 = vmul.f32 %v2423, %v2511
        %v2600 = vmul.f32 %v2424, %v2512
        %v2601 = vmul.f32 %v2425, %v2513
        %v2602 = vmul.f32 %v2426, %v2514
        %v2603 = vmul.f32 %v2427, %v2515
        %v2604 = vmul.f32 %v2428, %v2516
        %v2605 = vmul.f32 %v2429, %v2517
        %v2606 = vmul.f32 %v2430, %v2518
        %v2607 = vmul.f32 %v2431, %v2519
        %v2608 = vmul.f32 %v2432, %v2520
        %v2609 = vmul.f32 %v2433, %v2521
        %v2610 = vmul.f32 %v2434, %v2522
        %v2611 = vmul.f32 %v2435, %v2523
        %v2612 = vmul.f32 %v2436, %v2524
        %v2613 = vmul.f32 %v2437, %v2525
        %v2614 = vmul.f32 %v2438, %v2526
        %v2615 = vmul.f32 %v2439, %v2527
        %v2616 = vmul.f32 %v2440, %v2528
        %v2617 = vmul.f32 %v2441, %v2529
        %v2618 = vmul.f32 %v2442, %v2530
        %v2619 = vmul.f32 %v2443, %v2531
        %v2620 = vmul.f32 %v2444, %v2532
        %v2621 = vmul.f32 %v2445, %v2533
        %v2622 = vmul.f32 %v2446, %v2534
        %v2623 = vmul.f32 %v2447, %v2535
        %v2624 = vmul.f32 %v2448, %v2536
        %v2625 = vmul.f32 %v2449, %v2537
        %v2626 = vmul.f32 %v2450, %v2538
        %v2627 = vmul.f32 %v2451, %v2539
        %v2628 = vmul.f32 %v2452, %v2540
        %v2629 = vmul.f32 %v2453, %v2541
        %v2630 = vmul.f32 %v2454, %v2542
        %v2631 = vmul.f32 %v2455, %v2543
        %v2632 = vmul.f32 %v2456, %v2544
        %v2633 = vmul.f32 %v2457, %v2545
        %v2634 = vmul.f32 %v2458, %v2546
        %v2635 = vmul.f32 %v2459, %v2547
        %v2636 = vmul.f32 %v2460, %v2548
        %v2637 = vmul.f32 %v2461, %v2549
        %v2638 = vmul.f32 %v2462, %v2550
        %v2639 = vmul.f32 %v2463, %v2551
        %v2640 = vmul.f32 %v2464, %v2552
        %v2641 = vmul.f32 %v2465, %v2553
        %v2642 = vmul.f32 %v2466, %v2554
        %v2643 = vmul.f32 %v2467, %v2555
        %v2644 = vmul.f32 %v2468, %v2556
        %v2645 = vmul.f32 %v2469, %v2557
        %v2646 = vpack.c.bf16 %v2558, %v2558
        %v2647 = vpack.c.bf16 %v2559, %v2559
        %v2648 = vpack.c.bf16 %v2560, %v2560
        %v2649 = vpack.c.bf16 %v2561, %v2561
        %v2650 = vpack.c.bf16 %v2562, %v2562
        %v2651 = vpack.c.bf16 %v2563, %v2563
        %v2652 = vpack.c.bf16 %v2564, %v2564
        %v2653 = vpack.c.bf16 %v2565, %v2565
        %v2654 = vpack.c.bf16 %v2566, %v2566
        %v2655 = vpack.c.bf16 %v2567, %v2567
        %v2656 = vpack.c.bf16 %v2568, %v2568
        %v2657 = vpack.c.bf16 %v2569, %v2569
        %v2658 = vpack.c.bf16 %v2570, %v2570
        %v2659 = vpack.c.bf16 %v2571, %v2571
        %v2660 = vpack.c.bf16 %v2572, %v2572
        %v2661 = vpack.c.bf16 %v2573, %v2573
        %v2662 = vpack.c.bf16 %v2574, %v2574
        %v2663 = vpack.c.bf16 %v2575, %v2575
        %v2664 = vpack.c.bf16 %v2576, %v2576
        %v2665 = vpack.c.bf16 %v2577, %v2577
        %v2666 = vpack.c.bf16 %v2578, %v2578
        %v2667 = vpack.c.bf16 %v2579, %v2579
        %v2668 = vpack.c.bf16 %v2580, %v2580
        %v2669 = vpack.c.bf16 %v2581, %v2581
        %v2670 = vpack.c.bf16 %v2582, %v2582
        %v2671 = vpack.c.bf16 %v2583, %v2583
        %v2672 = vpack.c.bf16 %v2584, %v2584
        %v2673 = vpack.c.bf16 %v2585, %v2585
        %v2674 = vpack.c.bf16 %v2586, %v2586
        %v2675 = vpack.c.bf16 %v2587, %v2587
        %v2676 = vpack.c.bf16 %v2588, %v2588
        %v2677 = vpack.c.bf16 %v2589, %v2589
        %v2678 = vpack.c.bf16 %v2590, %v2590
        %v2679 = vpack.c.bf16 %v2591, %v2591
        %v2680 = vpack.c.bf16 %v2592, %v2592
        %v2681 = vpack.c.bf16 %v2593, %v2593
        %v2682 = vpack.c.bf16 %v2594, %v2594
        %v2683 = vpack.c.bf16 %v2595, %v2595
        %v2684 = vpack.c.bf16 %v2596, %v2596
        %v2685 = vpack.c.bf16 %v2597, %v2597
        %v2686 = vpack.c.bf16 %v2598, %v2598
        %v2687 = vpack.c.bf16 %v2599, %v2599
        %v2688 = vpack.c.bf16 %v2600, %v2600
        %v2689 = vpack.c.bf16 %v2601, %v2601
        %v2690 = vpack.c.bf16 %v2602, %v2602
        %v2691 = vpack.c.bf16 %v2603, %v2603
        %v2692 = vpack.c.bf16 %v2604, %v2604
        %v2693 = vpack.c.bf16 %v2605, %v2605
        %v2694 = vpack.c.bf16 %v2606, %v2606
        %v2695 = vpack.c.bf16 %v2607, %v2607
        %v2696 = vpack.c.bf16 %v2608, %v2608
        %v2697 = vpack.c.bf16 %v2609, %v2609
        %v2698 = vpack.c.bf16 %v2610, %v2610
        %v2699 = vpack.c.bf16 %v2611, %v2611
        %v2700 = vpack.c.bf16 %v2612, %v2612
        %v2701 = vpack.c.bf16 %v2613, %v2613
        %v2702 = vpack.c.bf16 %v2614, %v2614
        %v2703 = vpack.c.bf16 %v2615, %v2615
        %v2704 = vpack.c.bf16 %v2616, %v2616
        %v2705 = vpack.c.bf16 %v2617, %v2617
        %v2706 = vpack.c.bf16 %v2618, %v2618
        %v2707 = vpack.c.bf16 %v2619, %v2619
        %v2708 = vpack.c.bf16 %v2620, %v2620
        %v2709 = vpack.c.bf16 %v2621, %v2621
        %v2710 = vpack.c.bf16 %v2622, %v2622
        %v2711 = vpack.c.bf16 %v2623, %v2623
        %v2712 = vpack.c.bf16 %v2624, %v2624
        %v2713 = vpack.c.bf16 %v2625, %v2625
        %v2714 = vpack.c.bf16 %v2626, %v2626
        %v2715 = vpack.c.bf16 %v2627, %v2627
        %v2716 = vpack.c.bf16 %v2628, %v2628
        %v2717 = vpack.c.bf16 %v2629, %v2629
        %v2718 = vpack.c.bf16 %v2630, %v2630
        %v2719 = vpack.c.bf16 %v2631, %v2631
        %v2720 = vpack.c.bf16 %v2632, %v2632
        %v2721 = vpack.c.bf16 %v2633, %v2633
        %v2722 = vpack.c.bf16 %v2634, %v2634
        %v2723 = vpack.c.bf16 %v2635, %v2635
        %v2724 = vpack.c.bf16 %v2636, %v2636
        %v2725 = vpack.c.bf16 %v2637, %v2637
        %v2726 = vpack.c.bf16 %v2638, %v2638
        %v2727 = vpack.c.bf16 %v2639, %v2639
        %v2728 = vpack.c.bf16 %v2640, %v2640
        %v2729 = vpack.c.bf16 %v2641, %v2641
        %v2730 = vpack.c.bf16 %v2642, %v2642
        %v2731 = vpack.c.bf16 %v2643, %v2643
        %v2732 = vpack.c.bf16 %v2644, %v2644
        %v2733 = vpack.c.bf16 %v2645, %v2645
        %2734 = vst [vmem:[#allocation2] sm:$0xf] %v2646
        %2735 = vst [vmem:[#allocation2 + $0x4] sm:$0xf] %v2647
        %2736 = vst [vmem:[#allocation2 + $0x8] sm:$0xf] %v2648
        %2737 = vst [vmem:[#allocation2 + $0xc] sm:$0xf] %v2649
        %2738 = vst [vmem:[#allocation2 + $0x10] sm:$0xf] %v2650
        %2739 = vst [vmem:[#allocation2 + $0x14] sm:$0xf] %v2651
        %2740 = vst [vmem:[#allocation2 + $0x18] sm:$0xf] %v2652
        %2741 = vst [vmem:[#allocation2 + $0x1c] sm:$0xf] %v2653
        %2742 = vst [vmem:[#allocation2 + $0x20] sm:$0xf] %v2654
        %2743 = vst [vmem:[#allocation2 + $0x24] sm:$0xf] %v2655
        %2744 = vst [vmem:[#allocation2 + $0x28] sm:$0xf] %v2656
        %2745 = vst [vmem:[#allocation2 + $0x2c] sm:$0xf] %v2657
        %2746 = vst [vmem:[#allocation2 + $0x30] sm:$0xf] %v2658
        %2747 = vst [vmem:[#allocation2 + $0x34] sm:$0xf] %v2659
        %2748 = vst [vmem:[#allocation2 + $0x38] sm:$0xf] %v2660
        %2749 = vst [vmem:[#allocation2 + $0x3c] sm:$0xf] %v2661
        %2750 = vst [vmem:[#allocation2 + $0x40] sm:$0xf] %v2662
        %2751 = vst [vmem:[#allocation2 + $0x44] sm:$0xf] %v2663
        %2752 = vst [vmem:[#allocation2 + $0x48] sm:$0xf] %v2664
        %2753 = vst [vmem:[#allocation2 + $0x4c] sm:$0xf] %v2665
        %2754 = vst [vmem:[#allocation2 + $0x50] sm:$0xf] %v2666
        %2755 = vst [vmem:[#allocation2 + $0x54] sm:$0xf] %v2667
        %2756 = vst [vmem:[#allocation2 + $0x58] sm:$0xf] %v2668
        %2757 = vst [vmem:[#allocation2 + $0x5c] sm:$0xf] %v2669
        %2758 = vst [vmem:[#allocation2 + $0x60] sm:$0xf] %v2670
        %2759 = vst [vmem:[#allocation2 + $0x64] sm:$0xf] %v2671
        %2760 = vst [vmem:[#allocation2 + $0x68] sm:$0xf] %v2672
        %2761 = vst [vmem:[#allocation2 + $0x6c] sm:$0xf] %v2673
        %2762 = vst [vmem:[#allocation2 + $0x70] sm:$0xf] %v2674
        %2763 = vst [vmem:[#allocation2 + $0x74] sm:$0xf] %v2675
        %2764 = vst [vmem:[#allocation2 + $0x78] sm:$0xf] %v2676
        %2765 = vst [vmem:[#allocation2 + $0x7c] sm:$0xf] %v2677
        %2766 = vst [vmem:[#allocation2 + $0x80] sm:$0xf] %v2678
        %2767 = vst [vmem:[#allocation2 + $0x84] sm:$0xf] %v2679
        %2768 = vst [vmem:[#allocation2 + $0x88] sm:$0xf] %v2680
        %2769 = vst [vmem:[#allocation2 + $0x8c] sm:$0xf] %v2681
        %2770 = vst [vmem:[#allocation2 + $0x90] sm:$0xf] %v2682
        %2771 = vst [vmem:[#allocation2 + $0x94] sm:$0xf] %v2683
        %2772 = vst [vmem:[#allocation2 + $0x98] sm:$0xf] %v2684
        %2773 = vst [vmem:[#allocation2 + $0x9c] sm:$0xf] %v2685
        %2774 = vst [vmem:[#allocation2 + $0xa0] sm:$0xf] %v2686
        %2775 = vst [vmem:[#allocation2 + $0xa4] sm:$0xf] %v2687
        %2776 = vst [vmem:[#allocation2 + $0xa8] sm:$0xf] %v2688
        %2777 = vst [vmem:[#allocation2 + $0xac] sm:$0xf] %v2689
        %2778 = vst [vmem:[#allocation2 + $0xb0] sm:$0xf] %v2690
        %2779 = vst [vmem:[#allocation2 + $0xb4] sm:$0xf] %v2691
        %2780 = vst [vmem:[#allocation2 + $0xb8] sm:$0xf] %v2692
        %2781 = vst [vmem:[#allocation2 + $0xbc] sm:$0xf] %v2693
        %2782 = vst [vmem:[#allocation2 + $0xc0] sm:$0xf] %v2694
        %2783 = vst [vmem:[#allocation2 + $0xc4] sm:$0xf] %v2695
        %2784 = vst [vmem:[#allocation2 + $0xc8] sm:$0xf] %v2696
        %2785 = vst [vmem:[#allocation2 + $0xcc] sm:$0xf] %v2697
        %2786 = vst [vmem:[#allocation2 + $0xd0] sm:$0xf] %v2698
        %2787 = vst [vmem:[#allocation2 + $0xd4] sm:$0xf] %v2699
        %2788 = vst [vmem:[#allocation2 + $0xd8] sm:$0xf] %v2700
        %2789 = vst [vmem:[#allocation2 + $0xdc] sm:$0xf] %v2701
        %2790 = vst [vmem:[#allocation2 + $0xe0] sm:$0xf] %v2702
        %2791 = vst [vmem:[#allocation2 + $0xe4] sm:$0xf] %v2703
        %2792 = vst [vmem:[#allocation2 + $0xe8] sm:$0xf] %v2704
        %2793 = vst [vmem:[#allocation2 + $0xec] sm:$0xf] %v2705
        %2794 = vst [vmem:[#allocation2 + $0xf0] sm:$0xf] %v2706
        %2795 = vst [vmem:[#allocation2 + $0xf4] sm:$0xf] %v2707
        %2796 = vst [vmem:[#allocation2 + $0xf8] sm:$0xf] %v2708
        %2797 = vst [vmem:[#allocation2 + $0xfc] sm:$0xf] %v2709
        %2798 = vst [vmem:[#allocation2 + $0x100] sm:$0xf] %v2710
        %2799 = vst [vmem:[#allocation2 + $0x104] sm:$0xf] %v2711
        %2800 = vst [vmem:[#allocation2 + $0x108] sm:$0xf] %v2712
        %2801 = vst [vmem:[#allocation2 + $0x10c] sm:$0xf] %v2713
        %2802 = vst [vmem:[#allocation2 + $0x110] sm:$0xf] %v2714
        %2803 = vst [vmem:[#allocation2 + $0x114] sm:$0xf] %v2715
        %2804 = vst [vmem:[#allocation2 + $0x118] sm:$0xf] %v2716
        %2805 = vst [vmem:[#allocation2 + $0x11c] sm:$0xf] %v2717
        %2806 = vst [vmem:[#allocation2 + $0x120] sm:$0xf] %v2718
        %2807 = vst [vmem:[#allocation2 + $0x124] sm:$0xf] %v2719
        %2808 = vst [vmem:[#allocation2 + $0x128] sm:$0xf] %v2720
        %2809 = vst [vmem:[#allocation2 + $0x12c] sm:$0xf] %v2721
        %2810 = vst [vmem:[#allocation2 + $0x130] sm:$0xf] %v2722
        %2811 = vst [vmem:[#allocation2 + $0x134] sm:$0xf] %v2723
        %2812 = vst [vmem:[#allocation2 + $0x138] sm:$0xf] %v2724
        %2813 = vst [vmem:[#allocation2 + $0x13c] sm:$0xf] %v2725
        %2814 = vst [vmem:[#allocation2 + $0x140] sm:$0xf] %v2726
        %2815 = vst [vmem:[#allocation2 + $0x144] sm:$0xf] %v2727
        %2816 = vst [vmem:[#allocation2 + $0x148] sm:$0xf] %v2728
        %2817 = vst [vmem:[#allocation2 + $0x14c] sm:$0xf] %v2729
        %2818 = vst [vmem:[#allocation2 + $0x150] sm:$0xf] %v2730
        %2819 = vst [vmem:[#allocation2 + $0x154] sm:$0xf] %v2731
        %2820 = vst [vmem:[#allocation2 + $0x158] sm:$0xf] %v2732
        %2821 = vst [vmem:[#allocation2 + $0x15c] sm:$0x7] %v2733
        %v2822 = vld [vmem:[#allocation2] sm:$0xf]
        %v2823 = vld [vmem:[#allocation2 + $0x4] sm:$0xf]
        %v2824 = vld [vmem:[#allocation2 + $0x8] sm:$0xf]
        %v2825 = vld [vmem:[#allocation2 + $0xc] sm:$0xf]
        %v2826 = vld [vmem:[#allocation2 + $0x10] sm:$0xf]
        %v2827 = vld [vmem:[#allocation2 + $0x14] sm:$0xf]
        %v2828 = vld [vmem:[#allocation2 + $0x18] sm:$0xf]
        %v2829 = vld [vmem:[#allocation2 + $0x1c] sm:$0xf]
        %v2830 = vld [vmem:[#allocation2 + $0x20] sm:$0xf]
        %v2831 = vld [vmem:[#allocation2 + $0x24] sm:$0xf]
        %v2832 = vld [vmem:[#allocation2 + $0x28] sm:$0xf]
        %v2833 = vld [vmem:[#allocation2 + $0x2c] sm:$0xf]
        %v2834 = vld [vmem:[#allocation2 + $0x30] sm:$0xf]
        %v2835 = vld [vmem:[#allocation2 + $0x34] sm:$0xf]
        %v2836 = vld [vmem:[#allocation2 + $0x38] sm:$0xf]
        %v2837 = vld [vmem:[#allocation2 + $0x3c] sm:$0xf]
        %v2838 = vld [vmem:[#allocation2 + $0x40] sm:$0xf]
        %v2839 = vld [vmem:[#allocation2 + $0x44] sm:$0xf]
        %v2840 = vld [vmem:[#allocation2 + $0x48] sm:$0xf]
        %v2841 = vld [vmem:[#allocation2 + $0x4c] sm:$0xf]
        %v2842 = vld [vmem:[#allocation2 + $0x50] sm:$0xf]
        %v2843 = vld [vmem:[#allocation2 + $0x54] sm:$0xf]
        %v2844 = vld [vmem:[#allocation2 + $0x58] sm:$0xf]
        %v2845 = vld [vmem:[#allocation2 + $0x5c] sm:$0xf]
        %v2846 = vld [vmem:[#allocation2 + $0x60] sm:$0xf]
        %v2847 = vld [vmem:[#allocation2 + $0x64] sm:$0xf]
        %v2848 = vld [vmem:[#allocation2 + $0x68] sm:$0xf]
        %v2849 = vld [vmem:[#allocation2 + $0x6c] sm:$0xf]
        %v2850 = vld [vmem:[#allocation2 + $0x70] sm:$0xf]
        %v2851 = vld [vmem:[#allocation2 + $0x74] sm:$0xf]
        %v2852 = vld [vmem:[#allocation2 + $0x78] sm:$0xf]
        %v2853 = vld [vmem:[#allocation2 + $0x7c] sm:$0xf]
        %v2854 = vld [vmem:[#allocation2 + $0x80] sm:$0xf]
        %v2855 = vld [vmem:[#allocation2 + $0x84] sm:$0xf]
        %v2856 = vld [vmem:[#allocation2 + $0x88] sm:$0xf]
        %v2857 = vld [vmem:[#allocation2 + $0x8c] sm:$0xf]
        %v2858 = vld [vmem:[#allocation2 + $0x90] sm:$0xf]
        %v2859 = vld [vmem:[#allocation2 + $0x94] sm:$0xf]
        %v2860 = vld [vmem:[#allocation2 + $0x98] sm:$0xf]
        %v2861 = vld [vmem:[#allocation2 + $0x9c] sm:$0xf]
        %v2862 = vld [vmem:[#allocation2 + $0xa0] sm:$0xf]
        %v2863 = vld [vmem:[#allocation2 + $0xa4] sm:$0xf]
        %v2864 = vld [vmem:[#allocation2 + $0xa8] sm:$0xf]
        %v2865 = vld [vmem:[#allocation2 + $0xac] sm:$0xf]
        %v2866 = vld [vmem:[#allocation2 + $0xb0] sm:$0xf]
        %v2867 = vld [vmem:[#allocation2 + $0xb4] sm:$0xf]
        %v2868 = vld [vmem:[#allocation2 + $0xb8] sm:$0xf]
        %v2869 = vld [vmem:[#allocation2 + $0xbc] sm:$0xf]
        %v2870 = vld [vmem:[#allocation2 + $0xc0] sm:$0xf]
        %v2871 = vld [vmem:[#allocation2 + $0xc4] sm:$0xf]
        %v2872 = vld [vmem:[#allocation2 + $0xc8] sm:$0xf]
        %v2873 = vld [vmem:[#allocation2 + $0xcc] sm:$0xf]
        %v2874 = vld [vmem:[#allocation2 + $0xd0] sm:$0xf]
        %v2875 = vld [vmem:[#allocation2 + $0xd4] sm:$0xf]
        %v2876 = vld [vmem:[#allocation2 + $0xd8] sm:$0xf]
        %v2877 = vld [vmem:[#allocation2 + $0xdc] sm:$0xf]
        %v2878 = vld [vmem:[#allocation2 + $0xe0] sm:$0xf]
        %v2879 = vld [vmem:[#allocation2 + $0xe4] sm:$0xf]
        %v2880 = vld [vmem:[#allocation2 + $0xe8] sm:$0xf]
        %v2881 = vld [vmem:[#allocation2 + $0xec] sm:$0xf]
        %v2882 = vld [vmem:[#allocation2 + $0xf0] sm:$0xf]
        %v2883 = vld [vmem:[#allocation2 + $0xf4] sm:$0xf]
        %v2884 = vld [vmem:[#allocation2 + $0xf8] sm:$0xf]
        %v2885 = vld [vmem:[#allocation2 + $0xfc] sm:$0xf]
        %v2886 = vld [vmem:[#allocation2 + $0x100] sm:$0xf]
        %v2887 = vld [vmem:[#allocation2 + $0x104] sm:$0xf]
        %v2888 = vld [vmem:[#allocation2 + $0x108] sm:$0xf]
        %v2889 = vld [vmem:[#allocation2 + $0x10c] sm:$0xf]
        %v2890 = vld [vmem:[#allocation2 + $0x110] sm:$0xf]
        %v2891 = vld [vmem:[#allocation2 + $0x114] sm:$0xf]
        %v2892 = vld [vmem:[#allocation2 + $0x118] sm:$0xf]
        %v2893 = vld [vmem:[#allocation2 + $0x11c] sm:$0xf]
        %v2894 = vld [vmem:[#allocation2 + $0x120] sm:$0xf]
        %v2895 = vld [vmem:[#allocation2 + $0x124] sm:$0xf]
        %v2896 = vld [vmem:[#allocation2 + $0x128] sm:$0xf]
        %v2897 = vld [vmem:[#allocation2 + $0x12c] sm:$0xf]
        %v2898 = vld [vmem:[#allocation2 + $0x130] sm:$0xf]
        %v2899 = vld [vmem:[#allocation2 + $0x134] sm:$0xf]
        %v2900 = vld [vmem:[#allocation2 + $0x138] sm:$0xf]
        %v2901 = vld [vmem:[#allocation2 + $0x13c] sm:$0xf]
        %v2902 = vld [vmem:[#allocation2 + $0x140] sm:$0xf]
        %v2903 = vld [vmem:[#allocation2 + $0x144] sm:$0x1]
        %v2904 = vld [vmem:[#allocation8] sm:$0xff]
        %v2905 = vld [vmem:[#allocation8 + $0x8] sm:$0xff]
        %v2906 = vld [vmem:[#allocation8 + $0x10] sm:$0xff]
        %v2907 = vld [vmem:[#allocation8 + $0x18] sm:$0xff]
        %v2908 = vld [vmem:[#allocation8 + $0x20] sm:$0xff]
        %v2909 = vld [vmem:[#allocation8 + $0x28] sm:$0xff]
        %v2910 = vld [vmem:[#allocation8 + $0x30] sm:$0xff]
        %v2911 = vld [vmem:[#allocation8 + $0x38] sm:$0xff]
        %v2912 = vld [vmem:[#allocation8 + $0x40] sm:$0xff]
        %v2913 = vld [vmem:[#allocation8 + $0x48] sm:$0xff]
        %v2914 = vld [vmem:[#allocation8 + $0x50] sm:$0xff]
        %v2915 = vld [vmem:[#allocation8 + $0x58] sm:$0xff]
        %v2916 = vld [vmem:[#allocation8 + $0x60] sm:$0xff]
        %v2917 = vld [vmem:[#allocation8 + $0x68] sm:$0xff]
        %v2918 = vld [vmem:[#allocation8 + $0x70] sm:$0xff]
        %v2919 = vld [vmem:[#allocation8 + $0x78] sm:$0xff]
        %v2920 = vld [vmem:[#allocation2 + $0x144] sm:$0x3]
        %s2921 = scalar_lea.vmem [#allocation8], 128
        %v2922 = vld [vmem:[%s2921] sm:$0xff]
        %v2923 = vld [vmem:[%s2921 + $0x8] sm:$0xff]
        %v2924 = vld [vmem:[%s2921 + $0x10] sm:$0xff]
        %v2925 = vld [vmem:[%s2921 + $0x18] sm:$0xff]
        %v2926 = vld [vmem:[%s2921 + $0x20] sm:$0xff]
        %v2927 = vld [vmem:[%s2921 + $0x28] sm:$0xff]
        %v2928 = vld [vmem:[%s2921 + $0x30] sm:$0xff]
        %v2929 = vld [vmem:[%s2921 + $0x38] sm:$0xff]
        %v2930 = vld [vmem:[%s2921 + $0x40] sm:$0xff]
        %v2931 = vld [vmem:[%s2921 + $0x48] sm:$0xff]
        %v2932 = vld [vmem:[%s2921 + $0x50] sm:$0xff]
        %v2933 = vld [vmem:[%s2921 + $0x58] sm:$0xff]
        %v2934 = vld [vmem:[%s2921 + $0x60] sm:$0xff]
        %v2935 = vld [vmem:[%s2921 + $0x68] sm:$0xff]
        %v2936 = vld [vmem:[%s2921 + $0x70] sm:$0xff]
        %v2937 = vld [vmem:[%s2921 + $0x78] sm:$0xff]
        %v3020 = vunpack.c.l.b16 %v2822
        %v3021 = vunpack.c.l.b16 %v2823
        %v3022 = vunpack.c.l.b16 %v2824
        %v3023 = vunpack.c.l.b16 %v2825
        %v3024 = vunpack.c.l.b16 %v2826
        %v3025 = vunpack.c.l.b16 %v2827
        %v3026 = vunpack.c.l.b16 %v2828
        %v3027 = vunpack.c.l.b16 %v2829
        %v3028 = vunpack.c.l.b16 %v2830
        %v3029 = vunpack.c.l.b16 %v2831
        %v3030 = vunpack.c.l.b16 %v2832
        %v3031 = vunpack.c.l.b16 %v2833
        %v3032 = vunpack.c.l.b16 %v2834
        %v3033 = vunpack.c.l.b16 %v2835
        %v3034 = vunpack.c.l.b16 %v2836
        %v3035 = vunpack.c.l.b16 %v2837
        %v3036 = vunpack.c.l.b16 %v2838
        %v3037 = vunpack.c.l.b16 %v2839
        %v3038 = vunpack.c.l.b16 %v2840
        %v3039 = vunpack.c.l.b16 %v2841
        %v3040 = vunpack.c.l.b16 %v2842
        %v3041 = vunpack.c.l.b16 %v2843
        %v3042 = vunpack.c.l.b16 %v2844
        %v3043 = vunpack.c.l.b16 %v2845
        %v3044 = vunpack.c.l.b16 %v2846
        %v3045 = vunpack.c.l.b16 %v2847
        %v3046 = vunpack.c.l.b16 %v2848
        %v3047 = vunpack.c.l.b16 %v2849
        %v3048 = vunpack.c.l.b16 %v2850
        %v3049 = vunpack.c.l.b16 %v2851
        %v3050 = vunpack.c.l.b16 %v2852
        %v3051 = vunpack.c.l.b16 %v2853
        %v3052 = vunpack.c.l.b16 %v2854
        %v3053 = vunpack.c.l.b16 %v2855
        %v3054 = vunpack.c.l.b16 %v2856
        %v3055 = vunpack.c.l.b16 %v2857
        %v3056 = vunpack.c.l.b16 %v2858
        %v3057 = vunpack.c.l.b16 %v2859
        %v3058 = vunpack.c.l.b16 %v2860
        %v3059 = vunpack.c.l.b16 %v2861
        %v3060 = vunpack.c.l.b16 %v2862
        %v3061 = vunpack.c.l.b16 %v2863
        %v3062 = vunpack.c.l.b16 %v2864
        %v3063 = vunpack.c.l.b16 %v2865
        %v3064 = vunpack.c.l.b16 %v2866
        %v3065 = vunpack.c.l.b16 %v2867
        %v3066 = vunpack.c.l.b16 %v2868
        %v3067 = vunpack.c.l.b16 %v2869
        %v3068 = vunpack.c.l.b16 %v2870
        %v3069 = vunpack.c.l.b16 %v2871
        %v3070 = vunpack.c.l.b16 %v2872
        %v3071 = vunpack.c.l.b16 %v2873
        %v3072 = vunpack.c.l.b16 %v2874
        %v3073 = vunpack.c.l.b16 %v2875
        %v3074 = vunpack.c.l.b16 %v2876
        %v3075 = vunpack.c.l.b16 %v2877
        %v3076 = vunpack.c.l.b16 %v2878
        %v3077 = vunpack.c.l.b16 %v2879
        %v3078 = vunpack.c.l.b16 %v2880
        %v3079 = vunpack.c.l.b16 %v2881
        %v3080 = vunpack.c.l.b16 %v2882
        %v3081 = vunpack.c.l.b16 %v2883
        %v3082 = vunpack.c.l.b16 %v2884
        %v3083 = vunpack.c.l.b16 %v2885
        %v3084 = vunpack.c.l.b16 %v2886
        %v3085 = vunpack.c.l.b16 %v2887
        %v3086 = vunpack.c.l.b16 %v2888
        %v3087 = vunpack.c.l.b16 %v2889
        %v3088 = vunpack.c.l.b16 %v2890
        %v3089 = vunpack.c.l.b16 %v2891
        %v3090 = vunpack.c.l.b16 %v2892
        %v3091 = vunpack.c.l.b16 %v2893
        %v3092 = vunpack.c.l.b16 %v2894
        %v3093 = vunpack.c.l.b16 %v2895
        %v3094 = vunpack.c.l.b16 %v2896
        %v3095 = vunpack.c.l.b16 %v2897
        %v3096 = vunpack.c.l.b16 %v2898
        %v3097 = vunpack.c.l.b16 %v2899
        %v3098 = vunpack.c.l.b16 %v2900
        %v3099 = vunpack.c.l.b16 %v2901
        %v3100 = vunpack.c.l.b16 %v2902
        %v3101 = vunpack.c.l.b16 %v2920
        %v3102 = vpack.c.b16 %v3021, %v3020
        %v3103 = vpack.c.b16 %v3023, %v3022
        %v3104 = vpack.c.b16 %v3025, %v3024
        %v3105 = vpack.c.b16 %v3027, %v3026
        %v3106 = vpack.c.b16 %v3029, %v3028
        %v3107 = vpack.c.b16 %v3031, %v3030
        %v3108 = vpack.c.b16 %v3033, %v3032
        %v3109 = vpack.c.b16 %v3035, %v3034
        %v3110 = vpack.c.b16 %v3037, %v3036
        %v3111 = vpack.c.b16 %v3039, %v3038
        %v3112 = vpack.c.b16 %v3041, %v3040
        %v3113 = vpack.c.b16 %v3043, %v3042
        %v3114 = vpack.c.b16 %v3045, %v3044
        %v3115 = vpack.c.b16 %v3047, %v3046
        %v3116 = vpack.c.b16 %v3049, %v3048
        %v3117 = vpack.c.b16 %v3051, %v3050
        %v3118 = vpack.c.b16 %v3053, %v3052
        %v3119 = vpack.c.b16 %v3055, %v3054
        %v3120 = vpack.c.b16 %v3057, %v3056
        %v3121 = vpack.c.b16 %v3059, %v3058
        %v3122 = vpack.c.b16 %v3061, %v3060
        %v3123 = vpack.c.b16 %v3063, %v3062
        %v3124 = vpack.c.b16 %v3065, %v3064
        %v3125 = vpack.c.b16 %v3067, %v3066
        %v3126 = vpack.c.b16 %v3069, %v3068
        %v3127 = vpack.c.b16 %v3071, %v3070
        %v3128 = vpack.c.b16 %v3073, %v3072
        %v3129 = vpack.c.b16 %v3075, %v3074
        %v3130 = vpack.c.b16 %v3077, %v3076
        %v3131 = vpack.c.b16 %v3079, %v3078
        %v3132 = vpack.c.b16 %v3081, %v3080
        %v3133 = vpack.c.b16 %v3083, %v3082
        %v3134 = vpack.c.b16 %v3085, %v3084
        %v3135 = vpack.c.b16 %v3087, %v3086
        %v3136 = vpack.c.b16 %v3089, %v3088
        %v3137 = vpack.c.b16 %v3091, %v3090
        %v3138 = vpack.c.b16 %v3093, %v3092
        %v3139 = vpack.c.b16 %v3095, %v3094
        %v3140 = vpack.c.b16 %v3097, %v3096
        %v3141 = vpack.c.b16 %v3099, %v3098
        %v3142 = vpack.c.b16 %v3101, %v3100
        %vm3143 = vsmask.f32 7424
        %v3145 = vshrl.u32 %v3102, 16
        %v3147 = vshll.u32 %v3102, 16
        %v3149 = vrot.slane %v3147, 1
        %v3150 = vor.u32 %v3145, %v3149
        %v3152 = vshll.u32 %v3103, 16
        %v3154 = vrot.slane %v3152, 1
        %v3155 = vsel %vm3143, %v3150, %v3154
        %v3156 = vshrl.u32 %v3103, 16
        %v3158 = vor.u32 %v3156, %v3154
        %v3160 = vshll.u32 %v3104, 16
        %v3162 = vrot.slane %v3160, 1
        %v3163 = vsel %vm3143, %v3158, %v3162
        %v3164 = vshrl.u32 %v3104, 16
        %v3166 = vor.u32 %v3164, %v3162
        %v3168 = vshll.u32 %v3105, 16
        %v3170 = vrot.slane %v3168, 1
        %v3171 = vsel %vm3143, %v3166, %v3170
        %v3172 = vshrl.u32 %v3105, 16
        %v3174 = vor.u32 %v3172, %v3170
        %v3176 = vshll.u32 %v3106, 16
        %v3178 = vrot.slane %v3176, 1
        %v3179 = vsel %vm3143, %v3174, %v3178
        %v3180 = vshrl.u32 %v3106, 16
        %v3182 = vor.u32 %v3180, %v3178
        %v3184 = vshll.u32 %v3107, 16
        %v3186 = vrot.slane %v3184, 1
        %v3187 = vsel %vm3143, %v3182, %v3186
        %v3188 = vshrl.u32 %v3107, 16
        %v3190 = vor.u32 %v3188, %v3186
        %v3192 = vshll.u32 %v3108, 16
        %v3194 = vrot.slane %v3192, 1
        %v3195 = vsel %vm3143, %v3190, %v3194
        %v3196 = vshrl.u32 %v3108, 16
        %v3198 = vor.u32 %v3196, %v3194
        %v3200 = vshll.u32 %v3109, 16
        %v3202 = vrot.slane %v3200, 1
        %v3203 = vsel %vm3143, %v3198, %v3202
        %v3204 = vshrl.u32 %v3109, 16
        %v3206 = vor.u32 %v3204, %v3202
        %v3208 = vshll.u32 %v3110, 16
        %v3210 = vrot.slane %v3208, 1
        %v3211 = vsel %vm3143, %v3206, %v3210
        %v3212 = vshrl.u32 %v3110, 16
        %v3214 = vor.u32 %v3212, %v3210
        %v3216 = vshll.u32 %v3111, 16
        %v3218 = vrot.slane %v3216, 1
        %v3219 = vsel %vm3143, %v3214, %v3218
        %v3220 = vshrl.u32 %v3111, 16
        %v3222 = vor.u32 %v3220, %v3218
        %v3224 = vshll.u32 %v3112, 16
        %v3226 = vrot.slane %v3224, 1
        %v3227 = vsel %vm3143, %v3222, %v3226
        %v3228 = vshrl.u32 %v3112, 16
        %v3230 = vor.u32 %v3228, %v3226
        %v3232 = vshll.u32 %v3113, 16
        %v3234 = vrot.slane %v3232, 1
        %v3235 = vsel %vm3143, %v3230, %v3234
        %v3236 = vshrl.u32 %v3113, 16
        %v3238 = vor.u32 %v3236, %v3234
        %v3240 = vshll.u32 %v3114, 16
        %v3242 = vrot.slane %v3240, 1
        %v3243 = vsel %vm3143, %v3238, %v3242
        %v3244 = vshrl.u32 %v3114, 16
        %v3246 = vor.u32 %v3244, %v3242
        %v3248 = vshll.u32 %v3115, 16
        %v3250 = vrot.slane %v3248, 1
        %v3251 = vsel %vm3143, %v3246, %v3250
        %v3252 = vshrl.u32 %v3115, 16
        %v3254 = vor.u32 %v3252, %v3250
        %v3256 = vshll.u32 %v3116, 16
        %v3258 = vrot.slane %v3256, 1
        %v3259 = vsel %vm3143, %v3254, %v3258
        %v3260 = vshrl.u32 %v3116, 16
        %v3262 = vor.u32 %v3260, %v3258
        %v3264 = vshll.u32 %v3117, 16
        %v3266 = vrot.slane %v3264, 1
        %v3267 = vsel %vm3143, %v3262, %v3266
        %v3268 = vshrl.u32 %v3117, 16
        %v3270 = vor.u32 %v3268, %v3266
        %v3272 = vshll.u32 %v3118, 16
        %v3274 = vrot.slane %v3272, 1
        %v3275 = vsel %vm3143, %v3270, %v3274
        %v3276 = vshrl.u32 %v3118, 16
        %v3278 = vor.u32 %v3276, %v3274
        %v3280 = vshll.u32 %v3119, 16
        %v3282 = vrot.slane %v3280, 1
        %v3283 = vsel %vm3143, %v3278, %v3282
        %v3284 = vshrl.u32 %v3119, 16
        %v3286 = vor.u32 %v3284, %v3282
        %v3288 = vshll.u32 %v3120, 16
        %v3290 = vrot.slane %v3288, 1
        %v3291 = vsel %vm3143, %v3286, %v3290
        %v3292 = vshrl.u32 %v3120, 16
        %v3294 = vor.u32 %v3292, %v3290
        %v3296 = vshll.u32 %v3121, 16
        %v3298 = vrot.slane %v3296, 1
        %v3299 = vsel %vm3143, %v3294, %v3298
        %v3300 = vshrl.u32 %v3121, 16
        %v3302 = vor.u32 %v3300, %v3298
        %v3304 = vshll.u32 %v3122, 16
        %v3306 = vrot.slane %v3304, 1
        %v3307 = vsel %vm3143, %v3302, %v3306
        %v3308 = vshrl.u32 %v3122, 16
        %v3310 = vor.u32 %v3308, %v3306
        %v3312 = vshll.u32 %v3123, 16
        %v3314 = vrot.slane %v3312, 1
        %v3315 = vsel %vm3143, %v3310, %v3314
        %v3316 = vshrl.u32 %v3123, 16
        %v3318 = vor.u32 %v3316, %v3314
        %v3320 = vshll.u32 %v3124, 16
        %v3322 = vrot.slane %v3320, 1
        %v3323 = vsel %vm3143, %v3318, %v3322
        %v3324 = vshrl.u32 %v3124, 16
        %v3326 = vor.u32 %v3324, %v3322
        %v3328 = vshll.u32 %v3125, 16
        %v3330 = vrot.slane %v3328, 1
        %v3331 = vsel %vm3143, %v3326, %v3330
        %v3332 = vshrl.u32 %v3125, 16
        %v3334 = vor.u32 %v3332, %v3330
        %v3336 = vshll.u32 %v3126, 16
        %v3338 = vrot.slane %v3336, 1
        %v3339 = vsel %vm3143, %v3334, %v3338
        %v3340 = vshrl.u32 %v3126, 16
        %v3342 = vor.u32 %v3340, %v3338
        %v3344 = vshll.u32 %v3127, 16
        %v3346 = vrot.slane %v3344, 1
        %v3347 = vsel %vm3143, %v3342, %v3346
        %v3348 = vshrl.u32 %v3127, 16
        %v3350 = vor.u32 %v3348, %v3346
        %v3352 = vshll.u32 %v3128, 16
        %v3354 = vrot.slane %v3352, 1
        %v3355 = vsel %vm3143, %v3350, %v3354
        %v3356 = vshrl.u32 %v3128, 16
        %v3358 = vor.u32 %v3356, %v3354
        %v3360 = vshll.u32 %v3129, 16
        %v3362 = vrot.slane %v3360, 1
        %v3363 = vsel %vm3143, %v3358, %v3362
        %v3364 = vshrl.u32 %v3129, 16
        %v3366 = vor.u32 %v3364, %v3362
        %v3368 = vshll.u32 %v3130, 16
        %v3370 = vrot.slane %v3368, 1
        %v3371 = vsel %vm3143, %v3366, %v3370
        %v3372 = vshrl.u32 %v3130, 16
        %v3374 = vor.u32 %v3372, %v3370
        %v3376 = vshll.u32 %v3131, 16
        %v3378 = vrot.slane %v3376, 1
        %v3379 = vsel %vm3143, %v3374, %v3378
        %v3380 = vshrl.u32 %v3131, 16
        %v3382 = vor.u32 %v3380, %v3378
        %v3384 = vshll.u32 %v3132, 16
        %v3386 = vrot.slane %v3384, 1
        %v3387 = vsel %vm3143, %v3382, %v3386
        %v3388 = vshrl.u32 %v3132, 16
        %v3390 = vor.u32 %v3388, %v3386
        %v3392 = vshll.u32 %v3133, 16
        %v3394 = vrot.slane %v3392, 1
        %v3395 = vsel %vm3143, %v3390, %v3394
        %v3396 = vshrl.u32 %v3133, 16
        %v3398 = vor.u32 %v3396, %v3394
        %v3400 = vshll.u32 %v3134, 16
        %v3402 = vrot.slane %v3400, 1
        %v3403 = vsel %vm3143, %v3398, %v3402
        %v3404 = vshrl.u32 %v3134, 16
        %v3406 = vor.u32 %v3404, %v3402
        %v3408 = vshll.u32 %v3135, 16
        %v3410 = vrot.slane %v3408, 1
        %v3411 = vsel %vm3143, %v3406, %v3410
        %v3412 = vshrl.u32 %v3135, 16
        %v3414 = vor.u32 %v3412, %v3410
        %v3416 = vshll.u32 %v3136, 16
        %v3418 = vrot.slane %v3416, 1
        %v3419 = vsel %vm3143, %v3414, %v3418
        %v3420 = vshrl.u32 %v3136, 16
        %v3422 = vor.u32 %v3420, %v3418
        %v3424 = vshll.u32 %v3137, 16
        %v3426 = vrot.slane %v3424, 1
        %v3427 = vsel %vm3143, %v3422, %v3426
        %v3428 = vshrl.u32 %v3137, 16
        %v3430 = vor.u32 %v3428, %v3426
        %v3432 = vshll.u32 %v3138, 16
        %v3434 = vrot.slane %v3432, 1
        %v3435 = vsel %vm3143, %v3430, %v3434
        %v3436 = vshrl.u32 %v3138, 16
        %v3438 = vor.u32 %v3436, %v3434
        %v3440 = vshll.u32 %v3139, 16
        %v3442 = vrot.slane %v3440, 1
        %v3443 = vsel %vm3143, %v3438, %v3442
        %v3444 = vshrl.u32 %v3139, 16
        %v3446 = vor.u32 %v3444, %v3442
        %v3448 = vshll.u32 %v3140, 16
        %v3450 = vrot.slane %v3448, 1
        %v3451 = vsel %vm3143, %v3446, %v3450
        %v3452 = vshrl.u32 %v3140, 16
        %v3454 = vor.u32 %v3452, %v3450
        %v3456 = vshll.u32 %v3141, 16
        %v3458 = vrot.slane %v3456, 1
        %v3459 = vsel %vm3143, %v3454, %v3458
        %v3460 = vshrl.u32 %v3141, 16
        %v3462 = vor.u32 %v3460, %v3458
        %v3464 = vshll.u32 %v3142, 16
        %v3466 = vrot.slane %v3464, 1
        %v3467 = vsel %vm3143, %v3462, %v3466
        %v3468 = vshrl.u32 %v3142, 16
        %v3470 = vor.u32 %v3468, %v3466
        %v3528 = vunpack.c.l.b16 %v2922
        %v3529 = vunpack.c.h.b16 %v2922
        %v3530 = vunpack.c.l.b16 %v2923
        %v3531 = vunpack.c.h.b16 %v2923
        %v3532 = vunpack.c.l.b16 %v2924
        %v3533 = vunpack.c.h.b16 %v2924
        %v3534 = vunpack.c.l.b16 %v2925
        %v3535 = vunpack.c.h.b16 %v2925
        %v3536 = vunpack.c.l.b16 %v2926
        %v3537 = vunpack.c.h.b16 %v2926
        %v3538 = vunpack.c.l.b16 %v2927
        %v3539 = vunpack.c.h.b16 %v2927
        %v3540 = vunpack.c.l.b16 %v2928
        %v3541 = vunpack.c.h.b16 %v2928
        %v3542 = vunpack.c.l.b16 %v2929
        %v3543 = vunpack.c.h.b16 %v2929
        %v3544 = vunpack.c.l.b16 %v2930
        %v3545 = vunpack.c.h.b16 %v2930
        %v3546 = vunpack.c.l.b16 %v2931
        %v3547 = vunpack.c.h.b16 %v2931
        %v3548 = vunpack.c.l.b16 %v2932
        %v3549 = vunpack.c.h.b16 %v2932
        %v3550 = vunpack.c.l.b16 %v2933
        %v3551 = vunpack.c.h.b16 %v2933
        %v3552 = vunpack.c.l.b16 %v2934
        %v3553 = vunpack.c.h.b16 %v2934
        %v3554 = vunpack.c.l.b16 %v2935
        %v3555 = vunpack.c.h.b16 %v2935
        %v3556 = vunpack.c.l.b16 %v2936
        %v3557 = vunpack.c.h.b16 %v2936
        %v3558 = vunpack.c.l.b16 %v2937
        %v3559 = vunpack.c.h.b16 %v2937
        %v3560 = vpack.c.b16 %v3530, %v3528
        %v3561 = vpack.c.b16 %v3531, %v3529
        %v3562 = vpack.c.b16 %v3534, %v3532
        %v3563 = vpack.c.b16 %v3535, %v3533
        %v3564 = vpack.c.b16 %v3538, %v3536
        %v3565 = vpack.c.b16 %v3539, %v3537
        %v3566 = vpack.c.b16 %v3542, %v3540
        %v3567 = vpack.c.b16 %v3543, %v3541
        %v3568 = vpack.c.b16 %v3546, %v3544
        %v3569 = vpack.c.b16 %v3547, %v3545
        %v3570 = vpack.c.b16 %v3550, %v3548
        %v3571 = vpack.c.b16 %v3551, %v3549
        %v3572 = vpack.c.b16 %v3554, %v3552
        %v3573 = vpack.c.b16 %v3555, %v3553
        %v3574 = vpack.c.b16 %v3558, %v3556
        %v3575 = vpack.c.b16 %v3559, %v3557
        %3592 = vmatpush.bf16.msra.mxu0 %v3574
        %3593 = vmatpush.bf16.msra.mxu0 %v3572
        %3594 = vmatpush.bf16.msra.mxu0 %v3570
        %3595 = vmatpush.bf16.msra.mxu0 %v3568
        %3596 = vmatpush.bf16.msra.mxu0 %v3566
        %3597 = vmatpush.bf16.msra.mxu0 %v3564
        %3598 = vmatpush.bf16.msra.mxu0 %v3562
        %3599 = vmatpush.bf16.msra.mxu0 %v3560
        %3600 = vmatmul.bf16.gmra.mxu0 %v3155
        %v3601 = vpop.f32.mrf.mxu0
        %v3602 = vadd.f32 0.0, %v3601
        %v3603 = vpop.f32.mrf.mxu0
        %v3604 = vadd.f32 0.0, %v3603
        %3605 = vmatmul.bf16.gmra.mxu0 %v3163
        %v3606 = vpop.f32.mrf.mxu0
        %v3607 = vadd.f32 0.0, %v3606
        %v3608 = vpop.f32.mrf.mxu0
        %v3609 = vadd.f32 0.0, %v3608
        %3610 = vmatmul.bf16.gmra.mxu0 %v3171
        %v3611 = vpop.f32.mrf.mxu0
        %v3612 = vadd.f32 0.0, %v3611
        %v3613 = vpop.f32.mrf.mxu0
        %v3614 = vadd.f32 0.0, %v3613
        %3615 = vmatmul.bf16.gmra.mxu0 %v3179
        %v3616 = vpop.f32.mrf.mxu0
        %v3617 = vadd.f32 0.0, %v3616
        %v3618 = vpop.f32.mrf.mxu0
        %v3619 = vadd.f32 0.0, %v3618
        %3620 = vmatmul.bf16.gmra.mxu0 %v3187
        %v3621 = vpop.f32.mrf.mxu0
        %v3622 = vadd.f32 0.0, %v3621
        %v3623 = vpop.f32.mrf.mxu0
        %v3624 = vadd.f32 0.0, %v3623
        %3625 = vmatmul.bf16.gmra.mxu0 %v3195
        %v3626 = vpop.f32.mrf.mxu0
        %v3627 = vadd.f32 0.0, %v3626
        %v3628 = vpop.f32.mrf.mxu0
        %v3629 = vadd.f32 0.0, %v3628
        %3630 = vmatmul.bf16.gmra.mxu0 %v3203
        %v3631 = vpop.f32.mrf.mxu0
        %v3632 = vadd.f32 0.0, %v3631
        %v3633 = vpop.f32.mrf.mxu0
        %v3634 = vadd.f32 0.0, %v3633
        %3635 = vmatmul.bf16.gmra.mxu0 %v3211
        %v3636 = vpop.f32.mrf.mxu0
        %v3637 = vadd.f32 0.0, %v3636
        %v3638 = vpop.f32.mrf.mxu0
        %v3639 = vadd.f32 0.0, %v3638
        %3640 = vmatmul.bf16.gmra.mxu0 %v3219
        %v3641 = vpop.f32.mrf.mxu0
        %v3642 = vadd.f32 0.0, %v3641
        %v3643 = vpop.f32.mrf.mxu0
        %v3644 = vadd.f32 0.0, %v3643
        %3645 = vmatmul.bf16.gmra.mxu0 %v3227
        %v3646 = vpop.f32.mrf.mxu0
        %v3647 = vadd.f32 0.0, %v3646
        %v3648 = vpop.f32.mrf.mxu0
        %v3649 = vadd.f32 0.0, %v3648
        %3650 = vmatmul.bf16.gmra.mxu0 %v3235
        %v3651 = vpop.f32.mrf.mxu0
        %v3652 = vadd.f32 0.0, %v3651
        %v3653 = vpop.f32.mrf.mxu0
        %v3654 = vadd.f32 0.0, %v3653
        %3655 = vmatmul.bf16.gmra.mxu0 %v3243
        %v3656 = vpop.f32.mrf.mxu0
        %v3657 = vadd.f32 0.0, %v3656
        %v3658 = vpop.f32.mrf.mxu0
        %v3659 = vadd.f32 0.0, %v3658
        %3660 = vmatmul.bf16.gmra.mxu0 %v3251
        %v3661 = vpop.f32.mrf.mxu0
        %v3662 = vadd.f32 0.0, %v3661
        %v3663 = vpop.f32.mrf.mxu0
        %v3664 = vadd.f32 0.0, %v3663
        %3665 = vmatmul.bf16.gmra.mxu0 %v3259
        %v3666 = vpop.f32.mrf.mxu0
        %v3667 = vadd.f32 0.0, %v3666
        %v3668 = vpop.f32.mrf.mxu0
        %v3669 = vadd.f32 0.0, %v3668
        %3670 = vmatmul.bf16.gmra.mxu0 %v3267
        %v3671 = vpop.f32.mrf.mxu0
        %v3672 = vadd.f32 0.0, %v3671
        %v3673 = vpop.f32.mrf.mxu0
        %v3674 = vadd.f32 0.0, %v3673
        %3675 = vmatmul.bf16.gmra.mxu0 %v3275
        %v3676 = vpop.f32.mrf.mxu0
        %v3677 = vadd.f32 0.0, %v3676
        %v3678 = vpop.f32.mrf.mxu0
        %v3679 = vadd.f32 0.0, %v3678
        %3680 = vmatmul.bf16.gmra.mxu0 %v3283
        %v3681 = vpop.f32.mrf.mxu0
        %v3682 = vadd.f32 0.0, %v3681
        %v3683 = vpop.f32.mrf.mxu0
        %v3684 = vadd.f32 0.0, %v3683
        %3685 = vmatmul.bf16.gmra.mxu0 %v3291
        %v3686 = vpop.f32.mrf.mxu0
        %v3687 = vadd.f32 0.0, %v3686
        %v3688 = vpop.f32.mrf.mxu0
        %v3689 = vadd.f32 0.0, %v3688
        %3690 = vmatmul.bf16.gmra.mxu0 %v3299
        %v3691 = vpop.f32.mrf.mxu0
        %v3692 = vadd.f32 0.0, %v3691
        %v3693 = vpop.f32.mrf.mxu0
        %v3694 = vadd.f32 0.0, %v3693
        %3695 = vmatmul.bf16.gmra.mxu0 %v3307
        %v3696 = vpop.f32.mrf.mxu0
        %v3697 = vadd.f32 0.0, %v3696
        %v3698 = vpop.f32.mrf.mxu0
        %v3699 = vadd.f32 0.0, %v3698
        %3700 = vmatmul.bf16.gmra.mxu0 %v3315
        %v3701 = vpop.f32.mrf.mxu0
        %v3702 = vadd.f32 0.0, %v3701
        %v3703 = vpop.f32.mrf.mxu0
        %v3704 = vadd.f32 0.0, %v3703
        %3705 = vmatmul.bf16.gmra.mxu0 %v3323
        %v3706 = vpop.f32.mrf.mxu0
        %v3707 = vadd.f32 0.0, %v3706
        %v3708 = vpop.f32.mrf.mxu0
        %v3709 = vadd.f32 0.0, %v3708
        %3710 = vmatmul.bf16.gmra.mxu0 %v3331
        %v3711 = vpop.f32.mrf.mxu0
        %v3712 = vadd.f32 0.0, %v3711
        %v3713 = vpop.f32.mrf.mxu0
        %v3714 = vadd.f32 0.0, %v3713
        %3715 = vmatmul.bf16.gmra.mxu0 %v3339
        %v3716 = vpop.f32.mrf.mxu0
        %v3717 = vadd.f32 0.0, %v3716
        %v3718 = vpop.f32.mrf.mxu0
        %v3719 = vadd.f32 0.0, %v3718
        %3720 = vmatmul.bf16.gmra.mxu0 %v3347
        %v3721 = vpop.f32.mrf.mxu0
        %v3722 = vadd.f32 0.0, %v3721
        %v3723 = vpop.f32.mrf.mxu0
        %v3724 = vadd.f32 0.0, %v3723
        %3725 = vmatmul.bf16.gmra.mxu0 %v3355
        %v3726 = vpop.f32.mrf.mxu0
        %v3727 = vadd.f32 0.0, %v3726
        %v3728 = vpop.f32.mrf.mxu0
        %v3729 = vadd.f32 0.0, %v3728
        %3730 = vmatmul.bf16.gmra.mxu0 %v3363
        %v3731 = vpop.f32.mrf.mxu0
        %v3732 = vadd.f32 0.0, %v3731
        %v3733 = vpop.f32.mrf.mxu0
        %v3734 = vadd.f32 0.0, %v3733
        %3735 = vmatmul.bf16.gmra.mxu0 %v3371
        %v3736 = vpop.f32.mrf.mxu0
        %v3737 = vadd.f32 0.0, %v3736
        %v3738 = vpop.f32.mrf.mxu0
        %v3739 = vadd.f32 0.0, %v3738
        %3740 = vmatmul.bf16.gmra.mxu0 %v3379
        %v3741 = vpop.f32.mrf.mxu0
        %v3742 = vadd.f32 0.0, %v3741
        %v3743 = vpop.f32.mrf.mxu0
        %v3744 = vadd.f32 0.0, %v3743
        %3745 = vmatmul.bf16.gmra.mxu0 %v3387
        %v3746 = vpop.f32.mrf.mxu0
        %v3747 = vadd.f32 0.0, %v3746
        %v3748 = vpop.f32.mrf.mxu0
        %v3749 = vadd.f32 0.0, %v3748
        %3750 = vmatmul.bf16.gmra.mxu0 %v3395
        %v3751 = vpop.f32.mrf.mxu0
        %v3752 = vadd.f32 0.0, %v3751
        %v3753 = vpop.f32.mrf.mxu0
        %v3754 = vadd.f32 0.0, %v3753
        %3755 = vmatmul.bf16.gmra.mxu0 %v3403
        %v3756 = vpop.f32.mrf.mxu0
        %v3757 = vadd.f32 0.0, %v3756
        %v3758 = vpop.f32.mrf.mxu0
        %v3759 = vadd.f32 0.0, %v3758
        %3760 = vmatmul.bf16.gmra.mxu0 %v3411
        %v3761 = vpop.f32.mrf.mxu0
        %v3762 = vadd.f32 0.0, %v3761
        %v3763 = vpop.f32.mrf.mxu0
        %v3764 = vadd.f32 0.0, %v3763
        %3765 = vmatmul.bf16.gmra.mxu0 %v3419
        %v3766 = vpop.f32.mrf.mxu0
        %v3767 = vadd.f32 0.0, %v3766
        %v3768 = vpop.f32.mrf.mxu0
        %v3769 = vadd.f32 0.0, %v3768
        %3770 = vmatmul.bf16.gmra.mxu0 %v3427
        %v3771 = vpop.f32.mrf.mxu0
        %v3772 = vadd.f32 0.0, %v3771
        %v3773 = vpop.f32.mrf.mxu0
        %v3774 = vadd.f32 0.0, %v3773
        %3775 = vmatmul.bf16.gmra.mxu0 %v3435
        %v3776 = vpop.f32.mrf.mxu0
        %v3777 = vadd.f32 0.0, %v3776
        %v3778 = vpop.f32.mrf.mxu0
        %v3779 = vadd.f32 0.0, %v3778
        %3780 = vmatmul.bf16.gmra.mxu0 %v3443
        %v3781 = vpop.f32.mrf.mxu0
        %v3782 = vadd.f32 0.0, %v3781
        %v3783 = vpop.f32.mrf.mxu0
        %v3784 = vadd.f32 0.0, %v3783
        %3785 = vmatmul.bf16.gmra.mxu0 %v3451
        %v3786 = vpop.f32.mrf.mxu0
        %v3787 = vadd.f32 0.0, %v3786
        %v3788 = vpop.f32.mrf.mxu0
        %v3789 = vadd.f32 0.0, %v3788
        %3790 = vmatmul.bf16.gmra.mxu0 %v3459
        %v3791 = vpop.f32.mrf.mxu0
        %v3792 = vadd.f32 0.0, %v3791
        %v3793 = vpop.f32.mrf.mxu0
        %v3794 = vadd.f32 0.0, %v3793
        %3795 = vmatmul.bf16.gmra.mxu0 %v3467
        %v3796 = vpop.f32.mrf.mxu0
        %v3797 = vadd.f32 0.0, %v3796
        %v3798 = vpop.f32.mrf.mxu0
        %v3799 = vadd.f32 0.0, %v3798
        %3800 = vmatmul.bf16.gmra.mxu0 %v3470
        %v3801 = vpop.f32.mrf.mxu0
        %v3802 = vadd.f32 0.0, %v3801
        %v3803 = vpop.f32.mrf.mxu0
        %v3804 = vadd.f32 0.0, %v3803
        %3805 = vdwg.mxu0
        %3806 = vmatpush.bf16.msra.mxu0 %v3575
        %3807 = vmatpush.bf16.msra.mxu0 %v3573
        %3808 = vmatpush.bf16.msra.mxu0 %v3571
        %3809 = vmatpush.bf16.msra.mxu0 %v3569
        %3810 = vmatpush.bf16.msra.mxu0 %v3567
        %3811 = vmatpush.bf16.msra.mxu0 %v3565
        %3812 = vmatpush.bf16.msra.mxu0 %v3563
        %3813 = vmatpush.bf16.msra.mxu0 %v3561
        %3814 = vmatmul.bf16.gmra.mxu0 %v3155
        %v3815 = vpop.f32.mrf.mxu0
        %v3816 = vadd.f32 0.0, %v3815
        %v3817 = vpop.f32.mrf.mxu0
        %v3818 = vadd.f32 0.0, %v3817
        %3819 = vmatmul.bf16.gmra.mxu0 %v3163
        %v3820 = vpop.f32.mrf.mxu0
        %v3821 = vadd.f32 0.0, %v3820
        %v3822 = vpop.f32.mrf.mxu0
        %v3823 = vadd.f32 0.0, %v3822
        %3824 = vmatmul.bf16.gmra.mxu0 %v3171
        %v3825 = vpop.f32.mrf.mxu0
        %v3826 = vadd.f32 0.0, %v3825
        %v3827 = vpop.f32.mrf.mxu0
        %v3828 = vadd.f32 0.0, %v3827
        %3829 = vmatmul.bf16.gmra.mxu0 %v3179
        %v3830 = vpop.f32.mrf.mxu0
        %v3831 = vadd.f32 0.0, %v3830
        %v3832 = vpop.f32.mrf.mxu0
        %v3833 = vadd.f32 0.0, %v3832
        %3834 = vmatmul.bf16.gmra.mxu0 %v3187
        %v3835 = vpop.f32.mrf.mxu0
        %v3836 = vadd.f32 0.0, %v3835
        %v3837 = vpop.f32.mrf.mxu0
        %v3838 = vadd.f32 0.0, %v3837
        %3839 = vmatmul.bf16.gmra.mxu0 %v3195
        %v3840 = vpop.f32.mrf.mxu0
        %v3841 = vadd.f32 0.0, %v3840
        %v3842 = vpop.f32.mrf.mxu0
        %v3843 = vadd.f32 0.0, %v3842
        %3844 = vmatmul.bf16.gmra.mxu0 %v3203
        %v3845 = vpop.f32.mrf.mxu0
        %v3846 = vadd.f32 0.0, %v3845
        %v3847 = vpop.f32.mrf.mxu0
        %v3848 = vadd.f32 0.0, %v3847
        %3849 = vmatmul.bf16.gmra.mxu0 %v3211
        %v3850 = vpop.f32.mrf.mxu0
        %v3851 = vadd.f32 0.0, %v3850
        %v3852 = vpop.f32.mrf.mxu0
        %v3853 = vadd.f32 0.0, %v3852
        %3854 = vmatmul.bf16.gmra.mxu0 %v3219
        %v3855 = vpop.f32.mrf.mxu0
        %v3856 = vadd.f32 0.0, %v3855
        %v3857 = vpop.f32.mrf.mxu0
        %v3858 = vadd.f32 0.0, %v3857
        %3859 = vmatmul.bf16.gmra.mxu0 %v3227
        %v3860 = vpop.f32.mrf.mxu0
        %v3861 = vadd.f32 0.0, %v3860
        %v3862 = vpop.f32.mrf.mxu0
        %v3863 = vadd.f32 0.0, %v3862
        %3864 = vmatmul.bf16.gmra.mxu0 %v3235
        %v3865 = vpop.f32.mrf.mxu0
        %v3866 = vadd.f32 0.0, %v3865
        %v3867 = vpop.f32.mrf.mxu0
        %v3868 = vadd.f32 0.0, %v3867
        %3869 = vmatmul.bf16.gmra.mxu0 %v3243
        %v3870 = vpop.f32.mrf.mxu0
        %v3871 = vadd.f32 0.0, %v3870
        %v3872 = vpop.f32.mrf.mxu0
        %v3873 = vadd.f32 0.0, %v3872
        %3874 = vmatmul.bf16.gmra.mxu0 %v3251
        %v3875 = vpop.f32.mrf.mxu0
        %v3876 = vadd.f32 0.0, %v3875
        %v3877 = vpop.f32.mrf.mxu0
        %v3878 = vadd.f32 0.0, %v3877
        %3879 = vmatmul.bf16.gmra.mxu0 %v3259
        %v3880 = vpop.f32.mrf.mxu0
        %v3881 = vadd.f32 0.0, %v3880
        %v3882 = vpop.f32.mrf.mxu0
        %v3883 = vadd.f32 0.0, %v3882
        %3884 = vmatmul.bf16.gmra.mxu0 %v3267
        %v3885 = vpop.f32.mrf.mxu0
        %v3886 = vadd.f32 0.0, %v3885
        %v3887 = vpop.f32.mrf.mxu0
        %v3888 = vadd.f32 0.0, %v3887
        %3889 = vmatmul.bf16.gmra.mxu0 %v3275
        %v3890 = vpop.f32.mrf.mxu0
        %v3891 = vadd.f32 0.0, %v3890
        %v3892 = vpop.f32.mrf.mxu0
        %v3893 = vadd.f32 0.0, %v3892
        %3894 = vmatmul.bf16.gmra.mxu0 %v3283
        %v3895 = vpop.f32.mrf.mxu0
        %v3896 = vadd.f32 0.0, %v3895
        %v3897 = vpop.f32.mrf.mxu0
        %v3898 = vadd.f32 0.0, %v3897
        %3899 = vmatmul.bf16.gmra.mxu0 %v3291
        %v3900 = vpop.f32.mrf.mxu0
        %v3901 = vadd.f32 0.0, %v3900
        %v3902 = vpop.f32.mrf.mxu0
        %v3903 = vadd.f32 0.0, %v3902
        %3904 = vmatmul.bf16.gmra.mxu0 %v3299
        %v3905 = vpop.f32.mrf.mxu0
        %v3906 = vadd.f32 0.0, %v3905
        %v3907 = vpop.f32.mrf.mxu0
        %v3908 = vadd.f32 0.0, %v3907
        %3909 = vmatmul.bf16.gmra.mxu0 %v3307
        %v3910 = vpop.f32.mrf.mxu0
        %v3911 = vadd.f32 0.0, %v3910
        %v3912 = vpop.f32.mrf.mxu0
        %v3913 = vadd.f32 0.0, %v3912
        %3914 = vmatmul.bf16.gmra.mxu0 %v3315
        %v3915 = vpop.f32.mrf.mxu0
        %v3916 = vadd.f32 0.0, %v3915
        %v3917 = vpop.f32.mrf.mxu0
        %v3918 = vadd.f32 0.0, %v3917
        %3919 = vmatmul.bf16.gmra.mxu0 %v3323
        %v3920 = vpop.f32.mrf.mxu0
        %v3921 = vadd.f32 0.0, %v3920
        %v3922 = vpop.f32.mrf.mxu0
        %v3923 = vadd.f32 0.0, %v3922
        %3924 = vmatmul.bf16.gmra.mxu0 %v3331
        %v3925 = vpop.f32.mrf.mxu0
        %v3926 = vadd.f32 0.0, %v3925
        %v3927 = vpop.f32.mrf.mxu0
        %v3928 = vadd.f32 0.0, %v3927
        %3929 = vmatmul.bf16.gmra.mxu0 %v3339
        %v3930 = vpop.f32.mrf.mxu0
        %v3931 = vadd.f32 0.0, %v3930
        %v3932 = vpop.f32.mrf.mxu0
        %v3933 = vadd.f32 0.0, %v3932
        %3934 = vmatmul.bf16.gmra.mxu0 %v3347
        %v3935 = vpop.f32.mrf.mxu0
        %v3936 = vadd.f32 0.0, %v3935
        %v3937 = vpop.f32.mrf.mxu0
        %v3938 = vadd.f32 0.0, %v3937
        %3939 = vmatmul.bf16.gmra.mxu0 %v3355
        %v3940 = vpop.f32.mrf.mxu0
        %v3941 = vadd.f32 0.0, %v3940
        %v3942 = vpop.f32.mrf.mxu0
        %v3943 = vadd.f32 0.0, %v3942
        %3944 = vmatmul.bf16.gmra.mxu0 %v3363
        %v3945 = vpop.f32.mrf.mxu0
        %v3946 = vadd.f32 0.0, %v3945
        %v3947 = vpop.f32.mrf.mxu0
        %v3948 = vadd.f32 0.0, %v3947
        %3949 = vmatmul.bf16.gmra.mxu0 %v3371
        %v3950 = vpop.f32.mrf.mxu0
        %v3951 = vadd.f32 0.0, %v3950
        %v3952 = vpop.f32.mrf.mxu0
        %v3953 = vadd.f32 0.0, %v3952
        %3954 = vmatmul.bf16.gmra.mxu0 %v3379
        %v3955 = vpop.f32.mrf.mxu0
        %v3956 = vadd.f32 0.0, %v3955
        %v3957 = vpop.f32.mrf.mxu0
        %v3958 = vadd.f32 0.0, %v3957
        %3959 = vmatmul.bf16.gmra.mxu0 %v3387
        %v3960 = vpop.f32.mrf.mxu0
        %v3961 = vadd.f32 0.0, %v3960
        %v3962 = vpop.f32.mrf.mxu0
        %v3963 = vadd.f32 0.0, %v3962
        %3964 = vmatmul.bf16.gmra.mxu0 %v3395
        %v3965 = vpop.f32.mrf.mxu0
        %v3966 = vadd.f32 0.0, %v3965
        %v3967 = vpop.f32.mrf.mxu0
        %v3968 = vadd.f32 0.0, %v3967
        %3969 = vmatmul.bf16.gmra.mxu0 %v3403
        %v3970 = vpop.f32.mrf.mxu0
        %v3971 = vadd.f32 0.0, %v3970
        %v3972 = vpop.f32.mrf.mxu0
        %v3973 = vadd.f32 0.0, %v3972
        %3974 = vmatmul.bf16.gmra.mxu0 %v3411
        %v3975 = vpop.f32.mrf.mxu0
        %v3976 = vadd.f32 0.0, %v3975
        %v3977 = vpop.f32.mrf.mxu0
        %v3978 = vadd.f32 0.0, %v3977
        %3979 = vmatmul.bf16.gmra.mxu0 %v3419
        %v3980 = vpop.f32.mrf.mxu0
        %v3981 = vadd.f32 0.0, %v3980
        %v3982 = vpop.f32.mrf.mxu0
        %v3983 = vadd.f32 0.0, %v3982
        %3984 = vmatmul.bf16.gmra.mxu0 %v3427
        %v3985 = vpop.f32.mrf.mxu0
        %v3986 = vadd.f32 0.0, %v3985
        %v3987 = vpop.f32.mrf.mxu0
        %v3988 = vadd.f32 0.0, %v3987
        %3989 = vmatmul.bf16.gmra.mxu0 %v3435
        %v3990 = vpop.f32.mrf.mxu0
        %v3991 = vadd.f32 0.0, %v3990
        %v3992 = vpop.f32.mrf.mxu0
        %v3993 = vadd.f32 0.0, %v3992
        %3994 = vmatmul.bf16.gmra.mxu0 %v3443
        %v3995 = vpop.f32.mrf.mxu0
        %v3996 = vadd.f32 0.0, %v3995
        %v3997 = vpop.f32.mrf.mxu0
        %v3998 = vadd.f32 0.0, %v3997
        %3999 = vmatmul.bf16.gmra.mxu0 %v3451
        %v4000 = vpop.f32.mrf.mxu0
        %v4001 = vadd.f32 0.0, %v4000
        %v4002 = vpop.f32.mrf.mxu0
        %v4003 = vadd.f32 0.0, %v4002
        %4004 = vmatmul.bf16.gmra.mxu0 %v3459
        %v4005 = vpop.f32.mrf.mxu0
        %v4006 = vadd.f32 0.0, %v4005
        %v4007 = vpop.f32.mrf.mxu0
        %v4008 = vadd.f32 0.0, %v4007
        %4009 = vmatmul.bf16.gmra.mxu0 %v3467
        %v4010 = vpop.f32.mrf.mxu0
        %v4011 = vadd.f32 0.0, %v4010
        %v4012 = vpop.f32.mrf.mxu0
        %v4013 = vadd.f32 0.0, %v4012
        %4014 = vmatmul.bf16.gmra.mxu0 %v3470
        %v4015 = vpop.f32.mrf.mxu0
        %v4016 = vadd.f32 0.0, %v4015
        %v4017 = vpop.f32.mrf.mxu0
        %v4018 = vadd.f32 0.0, %v4017
        %4019 = vdwg.mxu0
        %v4021 = vunpack.c.l.b16 %v2903
        %v4022 = vpack.c.b16 %v4021, %v3100
        %v4080 = vunpack.c.l.b16 %v2904
        %v4081 = vunpack.c.h.b16 %v2904
        %v4082 = vunpack.c.l.b16 %v2905
        %v4083 = vunpack.c.h.b16 %v2905
        %v4084 = vunpack.c.l.b16 %v2906
        %v4085 = vunpack.c.h.b16 %v2906
        %v4086 = vunpack.c.l.b16 %v2907
        %v4087 = vunpack.c.h.b16 %v2907
        %v4088 = vunpack.c.l.b16 %v2908
        %v4089 = vunpack.c.h.b16 %v2908
        %v4090 = vunpack.c.l.b16 %v2909
        %v4091 = vunpack.c.h.b16 %v2909
        %v4092 = vunpack.c.l.b16 %v2910
        %v4093 = vunpack.c.h.b16 %v2910
        %v4094 = vunpack.c.l.b16 %v2911
        %v4095 = vunpack.c.h.b16 %v2911
        %v4096 = vunpack.c.l.b16 %v2912
        %v4097 = vunpack.c.h.b16 %v2912
        %v4098 = vunpack.c.l.b16 %v2913
        %v4099 = vunpack.c.h.b16 %v2913
        %v4100 = vunpack.c.l.b16 %v2914
        %v4101 = vunpack.c.h.b16 %v2914
        %v4102 = vunpack.c.l.b16 %v2915
        %v4103 = vunpack.c.h.b16 %v2915
        %v4104 = vunpack.c.l.b16 %v2916
        %v4105 = vunpack.c.h.b16 %v2916
        %v4106 = vunpack.c.l.b16 %v2917
        %v4107 = vunpack.c.h.b16 %v2917
        %v4108 = vunpack.c.l.b16 %v2918
        %v4109 = vunpack.c.h.b16 %v2918
        %v4110 = vunpack.c.l.b16 %v2919
        %v4111 = vunpack.c.h.b16 %v2919
        %v4112 = vpack.c.b16 %v4082, %v4080
        %v4113 = vpack.c.b16 %v4083, %v4081
        %v4114 = vpack.c.b16 %v4086, %v4084
        %v4115 = vpack.c.b16 %v4087, %v4085
        %v4116 = vpack.c.b16 %v4090, %v4088
        %v4117 = vpack.c.b16 %v4091, %v4089
        %v4118 = vpack.c.b16 %v4094, %v4092
        %v4119 = vpack.c.b16 %v4095, %v4093
        %v4120 = vpack.c.b16 %v4098, %v4096
        %v4121 = vpack.c.b16 %v4099, %v4097
        %v4122 = vpack.c.b16 %v4102, %v4100
        %v4123 = vpack.c.b16 %v4103, %v4101
        %v4124 = vpack.c.b16 %v4106, %v4104
        %v4125 = vpack.c.b16 %v4107, %v4105
        %v4126 = vpack.c.b16 %v4110, %v4108
        %v4127 = vpack.c.b16 %v4111, %v4109
        %4144 = vmatpush.bf16.msra.mxu0 %v4126
        %4145 = vmatpush.bf16.msra.mxu0 %v4124
        %4146 = vmatpush.bf16.msra.mxu0 %v4122
        %4147 = vmatpush.bf16.msra.mxu0 %v4120
        %4148 = vmatpush.bf16.msra.mxu0 %v4118
        %4149 = vmatpush.bf16.msra.mxu0 %v4116
        %4150 = vmatpush.bf16.msra.mxu0 %v4114
        %4151 = vmatpush.bf16.msra.mxu0 %v4112
        %4152 = vmatmul.bf16.gmra.mxu0 %v3102
        %v4153 = vpop.f32.mrf.mxu0
        %v4154 = vadd.f32 %v3602, %v4153
        %v4155 = vpop.f32.mrf.mxu0
        %v4156 = vadd.f32 %v3604, %v4155
        %4157 = vmatmul.bf16.gmra.mxu0 %v3103
        %v4158 = vpop.f32.mrf.mxu0
        %v4159 = vadd.f32 %v3607, %v4158
        %v4160 = vpop.f32.mrf.mxu0
        %v4161 = vadd.f32 %v3609, %v4160
        %4162 = vmatmul.bf16.gmra.mxu0 %v3104
        %v4163 = vpop.f32.mrf.mxu0
        %v4164 = vadd.f32 %v3612, %v4163
        %v4165 = vpop.f32.mrf.mxu0
        %v4166 = vadd.f32 %v3614, %v4165
        %4167 = vmatmul.bf16.gmra.mxu0 %v3105
        %v4168 = vpop.f32.mrf.mxu0
        %v4169 = vadd.f32 %v3617, %v4168
        %v4170 = vpop.f32.mrf.mxu0
        %v4171 = vadd.f32 %v3619, %v4170
        %4172 = vmatmul.bf16.gmra.mxu0 %v3106
        %v4173 = vpop.f32.mrf.mxu0
        %v4174 = vadd.f32 %v3622, %v4173
        %v4175 = vpop.f32.mrf.mxu0
        %v4176 = vadd.f32 %v3624, %v4175
        %4177 = vmatmul.bf16.gmra.mxu0 %v3107
        %v4178 = vpop.f32.mrf.mxu0
        %v4179 = vadd.f32 %v3627, %v4178
        %v4180 = vpop.f32.mrf.mxu0
        %v4181 = vadd.f32 %v3629, %v4180
        %4182 = vmatmul.bf16.gmra.mxu0 %v3108
        %v4183 = vpop.f32.mrf.mxu0
        %v4184 = vadd.f32 %v3632, %v4183
        %v4185 = vpop.f32.mrf.mxu0
        %v4186 = vadd.f32 %v3634, %v4185
        %4187 = vmatmul.bf16.gmra.mxu0 %v3109
        %v4188 = vpop.f32.mrf.mxu0
        %v4189 = vadd.f32 %v3637, %v4188
        %v4190 = vpop.f32.mrf.mxu0
        %v4191 = vadd.f32 %v3639, %v4190
        %4192 = vmatmul.bf16.gmra.mxu0 %v3110
        %v4193 = vpop.f32.mrf.mxu0
        %v4194 = vadd.f32 %v3642, %v4193
        %v4195 = vpop.f32.mrf.mxu0
        %v4196 = vadd.f32 %v3644, %v4195
        %4197 = vmatmul.bf16.gmra.mxu0 %v3111
        %v4198 = vpop.f32.mrf.mxu0
        %v4199 = vadd.f32 %v3647, %v4198
        %v4200 = vpop.f32.mrf.mxu0
        %v4201 = vadd.f32 %v3649, %v4200
        %4202 = vmatmul.bf16.gmra.mxu0 %v3112
        %v4203 = vpop.f32.mrf.mxu0
        %v4204 = vadd.f32 %v3652, %v4203
        %v4205 = vpop.f32.mrf.mxu0
        %v4206 = vadd.f32 %v3654, %v4205
        %4207 = vmatmul.bf16.gmra.mxu0 %v3113
        %v4208 = vpop.f32.mrf.mxu0
        %v4209 = vadd.f32 %v3657, %v4208
        %v4210 = vpop.f32.mrf.mxu0
        %v4211 = vadd.f32 %v3659, %v4210
        %4212 = vmatmul.bf16.gmra.mxu0 %v3114
        %v4213 = vpop.f32.mrf.mxu0
        %v4214 = vadd.f32 %v3662, %v4213
        %v4215 = vpop.f32.mrf.mxu0
        %v4216 = vadd.f32 %v3664, %v4215
        %4217 = vmatmul.bf16.gmra.mxu0 %v3115
        %v4218 = vpop.f32.mrf.mxu0
        %v4219 = vadd.f32 %v3667, %v4218
        %v4220 = vpop.f32.mrf.mxu0
        %v4221 = vadd.f32 %v3669, %v4220
        %4222 = vmatmul.bf16.gmra.mxu0 %v3116
        %v4223 = vpop.f32.mrf.mxu0
        %v4224 = vadd.f32 %v3672, %v4223
        %v4225 = vpop.f32.mrf.mxu0
        %v4226 = vadd.f32 %v3674, %v4225
        %4227 = vmatmul.bf16.gmra.mxu0 %v3117
        %v4228 = vpop.f32.mrf.mxu0
        %v4229 = vadd.f32 %v3677, %v4228
        %v4230 = vpop.f32.mrf.mxu0
        %v4231 = vadd.f32 %v3679, %v4230
        %4232 = vmatmul.bf16.gmra.mxu0 %v3118
        %v4233 = vpop.f32.mrf.mxu0
        %v4234 = vadd.f32 %v3682, %v4233
        %v4235 = vpop.f32.mrf.mxu0
        %v4236 = vadd.f32 %v3684, %v4235
        %4237 = vmatmul.bf16.gmra.mxu0 %v3119
        %v4238 = vpop.f32.mrf.mxu0
        %v4239 = vadd.f32 %v3687, %v4238
        %v4240 = vpop.f32.mrf.mxu0
        %v4241 = vadd.f32 %v3689, %v4240
        %4242 = vmatmul.bf16.gmra.mxu0 %v3120
        %v4243 = vpop.f32.mrf.mxu0
        %v4244 = vadd.f32 %v3692, %v4243
        %v4245 = vpop.f32.mrf.mxu0
        %v4246 = vadd.f32 %v3694, %v4245
        %4247 = vmatmul.bf16.gmra.mxu0 %v3121
        %v4248 = vpop.f32.mrf.mxu0
        %v4249 = vadd.f32 %v3697, %v4248
        %v4250 = vpop.f32.mrf.mxu0
        %v4251 = vadd.f32 %v3699, %v4250
        %4252 = vmatmul.bf16.gmra.mxu0 %v3122
        %v4253 = vpop.f32.mrf.mxu0
        %v4254 = vadd.f32 %v3702, %v4253
        %v4255 = vpop.f32.mrf.mxu0
        %v4256 = vadd.f32 %v3704, %v4255
        %4257 = vmatmul.bf16.gmra.mxu0 %v3123
        %v4258 = vpop.f32.mrf.mxu0
        %v4259 = vadd.f32 %v3707, %v4258
        %v4260 = vpop.f32.mrf.mxu0
        %v4261 = vadd.f32 %v3709, %v4260
        %4262 = vmatmul.bf16.gmra.mxu0 %v3124
        %v4263 = vpop.f32.mrf.mxu0
        %v4264 = vadd.f32 %v3712, %v4263
        %v4265 = vpop.f32.mrf.mxu0
        %v4266 = vadd.f32 %v3714, %v4265
        %4267 = vmatmul.bf16.gmra.mxu0 %v3125
        %v4268 = vpop.f32.mrf.mxu0
        %v4269 = vadd.f32 %v3717, %v4268
        %v4270 = vpop.f32.mrf.mxu0
        %v4271 = vadd.f32 %v3719, %v4270
        %4272 = vmatmul.bf16.gmra.mxu0 %v3126
        %v4273 = vpop.f32.mrf.mxu0
        %v4274 = vadd.f32 %v3722, %v4273
        %v4275 = vpop.f32.mrf.mxu0
        %v4276 = vadd.f32 %v3724, %v4275
        %4277 = vmatmul.bf16.gmra.mxu0 %v3127
        %v4278 = vpop.f32.mrf.mxu0
        %v4279 = vadd.f32 %v3727, %v4278
        %v4280 = vpop.f32.mrf.mxu0
        %v4281 = vadd.f32 %v3729, %v4280
        %4282 = vmatmul.bf16.gmra.mxu0 %v3128
        %v4283 = vpop.f32.mrf.mxu0
        %v4284 = vadd.f32 %v3732, %v4283
        %v4285 = vpop.f32.mrf.mxu0
        %v4286 = vadd.f32 %v3734, %v4285
        %4287 = vmatmul.bf16.gmra.mxu0 %v3129
        %v4288 = vpop.f32.mrf.mxu0
        %v4289 = vadd.f32 %v3737, %v4288
        %v4290 = vpop.f32.mrf.mxu0
        %v4291 = vadd.f32 %v3739, %v4290
        %4292 = vmatmul.bf16.gmra.mxu0 %v3130
        %v4293 = vpop.f32.mrf.mxu0
        %v4294 = vadd.f32 %v3742, %v4293
        %v4295 = vpop.f32.mrf.mxu0
        %v4296 = vadd.f32 %v3744, %v4295
        %4297 = vmatmul.bf16.gmra.mxu0 %v3131
        %v4298 = vpop.f32.mrf.mxu0
        %v4299 = vadd.f32 %v3747, %v4298
        %v4300 = vpop.f32.mrf.mxu0
        %v4301 = vadd.f32 %v3749, %v4300
        %4302 = vmatmul.bf16.gmra.mxu0 %v3132
        %v4303 = vpop.f32.mrf.mxu0
        %v4304 = vadd.f32 %v3752, %v4303
        %v4305 = vpop.f32.mrf.mxu0
        %v4306 = vadd.f32 %v3754, %v4305
        %4307 = vmatmul.bf16.gmra.mxu0 %v3133
        %v4308 = vpop.f32.mrf.mxu0
        %v4309 = vadd.f32 %v3757, %v4308
        %v4310 = vpop.f32.mrf.mxu0
        %v4311 = vadd.f32 %v3759, %v4310
        %4312 = vmatmul.bf16.gmra.mxu0 %v3134
        %v4313 = vpop.f32.mrf.mxu0
        %v4314 = vadd.f32 %v3762, %v4313
        %v4315 = vpop.f32.mrf.mxu0
        %v4316 = vadd.f32 %v3764, %v4315
        %4317 = vmatmul.bf16.gmra.mxu0 %v3135
        %v4318 = vpop.f32.mrf.mxu0
        %v4319 = vadd.f32 %v3767, %v4318
        %v4320 = vpop.f32.mrf.mxu0
        %v4321 = vadd.f32 %v3769, %v4320
        %4322 = vmatmul.bf16.gmra.mxu0 %v3136
        %v4323 = vpop.f32.mrf.mxu0
        %v4324 = vadd.f32 %v3772, %v4323
        %v4325 = vpop.f32.mrf.mxu0
        %v4326 = vadd.f32 %v3774, %v4325
        %4327 = vmatmul.bf16.gmra.mxu0 %v3137
        %v4328 = vpop.f32.mrf.mxu0
        %v4329 = vadd.f32 %v3777, %v4328
        %v4330 = vpop.f32.mrf.mxu0
        %v4331 = vadd.f32 %v3779, %v4330
        %4332 = vmatmul.bf16.gmra.mxu0 %v3138
        %v4333 = vpop.f32.mrf.mxu0
        %v4334 = vadd.f32 %v3782, %v4333
        %v4335 = vpop.f32.mrf.mxu0
        %v4336 = vadd.f32 %v3784, %v4335
        %4337 = vmatmul.bf16.gmra.mxu0 %v3139
        %v4338 = vpop.f32.mrf.mxu0
        %v4339 = vadd.f32 %v3787, %v4338
        %v4340 = vpop.f32.mrf.mxu0
        %v4341 = vadd.f32 %v3789, %v4340
        %4342 = vmatmul.bf16.gmra.mxu0 %v3140
        %v4343 = vpop.f32.mrf.mxu0
        %v4344 = vadd.f32 %v3792, %v4343
        %v4345 = vpop.f32.mrf.mxu0
        %v4346 = vadd.f32 %v3794, %v4345
        %4347 = vmatmul.bf16.gmra.mxu0 %v3141
        %v4348 = vpop.f32.mrf.mxu0
        %v4349 = vadd.f32 %v3797, %v4348
        %v4350 = vpop.f32.mrf.mxu0
        %v4351 = vadd.f32 %v3799, %v4350
        %4352 = vmatmul.bf16.gmra.mxu0 %v4022
        %v4353 = vpop.f32.mrf.mxu0
        %v4354 = vadd.f32 %v3802, %v4353
        %v4355 = vpop.f32.mrf.mxu0
        %v4356 = vadd.f32 %v3804, %v4355
        %4357 = vdwg.mxu0
        %4358 = vmatpush.bf16.msra.mxu0 %v4127
        %4359 = vmatpush.bf16.msra.mxu0 %v4125
        %4360 = vmatpush.bf16.msra.mxu0 %v4123
        %4361 = vmatpush.bf16.msra.mxu0 %v4121
        %4362 = vmatpush.bf16.msra.mxu0 %v4119
        %4363 = vmatpush.bf16.msra.mxu0 %v4117
        %4364 = vmatpush.bf16.msra.mxu0 %v4115
        %4365 = vmatpush.bf16.msra.mxu0 %v4113
        %4366 = vmatmul.bf16.gmra.mxu0 %v3102
        %v4367 = vpop.f32.mrf.mxu0
        %v4368 = vadd.f32 %v3816, %v4367
        %v4369 = vpop.f32.mrf.mxu0
        %v4370 = vadd.f32 %v3818, %v4369
        %4371 = vmatmul.bf16.gmra.mxu0 %v3103
        %v4372 = vpop.f32.mrf.mxu0
        %v4373 = vadd.f32 %v3821, %v4372
        %v4374 = vpop.f32.mrf.mxu0
        %v4375 = vadd.f32 %v3823, %v4374
        %4376 = vmatmul.bf16.gmra.mxu0 %v3104
        %v4377 = vpop.f32.mrf.mxu0
        %v4378 = vadd.f32 %v3826, %v4377
        %v4379 = vpop.f32.mrf.mxu0
        %v4380 = vadd.f32 %v3828, %v4379
        %4381 = vmatmul.bf16.gmra.mxu0 %v3105
        %v4382 = vpop.f32.mrf.mxu0
        %v4383 = vadd.f32 %v3831, %v4382
        %v4384 = vpop.f32.mrf.mxu0
        %v4385 = vadd.f32 %v3833, %v4384
        %4386 = vmatmul.bf16.gmra.mxu0 %v3106
        %v4387 = vpop.f32.mrf.mxu0
        %v4388 = vadd.f32 %v3836, %v4387
        %v4389 = vpop.f32.mrf.mxu0
        %v4390 = vadd.f32 %v3838, %v4389
        %4391 = vmatmul.bf16.gmra.mxu0 %v3107
        %v4392 = vpop.f32.mrf.mxu0
        %v4393 = vadd.f32 %v3841, %v4392
        %v4394 = vpop.f32.mrf.mxu0
        %v4395 = vadd.f32 %v3843, %v4394
        %4396 = vmatmul.bf16.gmra.mxu0 %v3108
        %v4397 = vpop.f32.mrf.mxu0
        %v4398 = vadd.f32 %v3846, %v4397
        %v4399 = vpop.f32.mrf.mxu0
        %v4400 = vadd.f32 %v3848, %v4399
        %4401 = vmatmul.bf16.gmra.mxu0 %v3109
        %v4402 = vpop.f32.mrf.mxu0
        %v4403 = vadd.f32 %v3851, %v4402
        %v4404 = vpop.f32.mrf.mxu0
        %v4405 = vadd.f32 %v3853, %v4404
        %4406 = vmatmul.bf16.gmra.mxu0 %v3110
        %v4407 = vpop.f32.mrf.mxu0
        %v4408 = vadd.f32 %v3856, %v4407
        %v4409 = vpop.f32.mrf.mxu0
        %v4410 = vadd.f32 %v3858, %v4409
        %4411 = vmatmul.bf16.gmra.mxu0 %v3111
        %v4412 = vpop.f32.mrf.mxu0
        %v4413 = vadd.f32 %v3861, %v4412
        %v4414 = vpop.f32.mrf.mxu0
        %v4415 = vadd.f32 %v3863, %v4414
        %4416 = vmatmul.bf16.gmra.mxu0 %v3112
        %v4417 = vpop.f32.mrf.mxu0
        %v4418 = vadd.f32 %v3866, %v4417
        %v4419 = vpop.f32.mrf.mxu0
        %v4420 = vadd.f32 %v3868, %v4419
        %4421 = vmatmul.bf16.gmra.mxu0 %v3113
        %v4422 = vpop.f32.mrf.mxu0
        %v4423 = vadd.f32 %v3871, %v4422
        %v4424 = vpop.f32.mrf.mxu0
        %v4425 = vadd.f32 %v3873, %v4424
        %4426 = vmatmul.bf16.gmra.mxu0 %v3114
        %v4427 = vpop.f32.mrf.mxu0
        %v4428 = vadd.f32 %v3876, %v4427
        %v4429 = vpop.f32.mrf.mxu0
        %v4430 = vadd.f32 %v3878, %v4429
        %4431 = vmatmul.bf16.gmra.mxu0 %v3115
        %v4432 = vpop.f32.mrf.mxu0
        %v4433 = vadd.f32 %v3881, %v4432
        %v4434 = vpop.f32.mrf.mxu0
        %v4435 = vadd.f32 %v3883, %v4434
        %4436 = vmatmul.bf16.gmra.mxu0 %v3116
        %v4437 = vpop.f32.mrf.mxu0
        %v4438 = vadd.f32 %v3886, %v4437
        %v4439 = vpop.f32.mrf.mxu0
        %v4440 = vadd.f32 %v3888, %v4439
        %4441 = vmatmul.bf16.gmra.mxu0 %v3117
        %v4442 = vpop.f32.mrf.mxu0
        %v4443 = vadd.f32 %v3891, %v4442
        %v4444 = vpop.f32.mrf.mxu0
        %v4445 = vadd.f32 %v3893, %v4444
        %4446 = vmatmul.bf16.gmra.mxu0 %v3118
        %v4447 = vpop.f32.mrf.mxu0
        %v4448 = vadd.f32 %v3896, %v4447
        %v4449 = vpop.f32.mrf.mxu0
        %v4450 = vadd.f32 %v3898, %v4449
        %4451 = vmatmul.bf16.gmra.mxu0 %v3119
        %v4452 = vpop.f32.mrf.mxu0
        %v4453 = vadd.f32 %v3901, %v4452
        %v4454 = vpop.f32.mrf.mxu0
        %v4455 = vadd.f32 %v3903, %v4454
        %4456 = vmatmul.bf16.gmra.mxu0 %v3120
        %v4457 = vpop.f32.mrf.mxu0
        %v4458 = vadd.f32 %v3906, %v4457
        %v4459 = vpop.f32.mrf.mxu0
        %v4460 = vadd.f32 %v3908, %v4459
        %4461 = vmatmul.bf16.gmra.mxu0 %v3121
        %v4462 = vpop.f32.mrf.mxu0
        %v4463 = vadd.f32 %v3911, %v4462
        %v4464 = vpop.f32.mrf.mxu0
        %v4465 = vadd.f32 %v3913, %v4464
        %4466 = vmatmul.bf16.gmra.mxu0 %v3122
        %v4467 = vpop.f32.mrf.mxu0
        %v4468 = vadd.f32 %v3916, %v4467
        %v4469 = vpop.f32.mrf.mxu0
        %v4470 = vadd.f32 %v3918, %v4469
        %4471 = vmatmul.bf16.gmra.mxu0 %v3123
        %v4472 = vpop.f32.mrf.mxu0
        %v4473 = vadd.f32 %v3921, %v4472
        %v4474 = vpop.f32.mrf.mxu0
        %v4475 = vadd.f32 %v3923, %v4474
        %4476 = vmatmul.bf16.gmra.mxu0 %v3124
        %v4477 = vpop.f32.mrf.mxu0
        %v4478 = vadd.f32 %v3926, %v4477
        %v4479 = vpop.f32.mrf.mxu0
        %v4480 = vadd.f32 %v3928, %v4479
        %4481 = vmatmul.bf16.gmra.mxu0 %v3125
        %v4482 = vpop.f32.mrf.mxu0
        %v4483 = vadd.f32 %v3931, %v4482
        %v4484 = vpop.f32.mrf.mxu0
        %v4485 = vadd.f32 %v3933, %v4484
        %4486 = vmatmul.bf16.gmra.mxu0 %v3126
        %v4487 = vpop.f32.mrf.mxu0
        %v4488 = vadd.f32 %v3936, %v4487
        %v4489 = vpop.f32.mrf.mxu0
        %v4490 = vadd.f32 %v3938, %v4489
        %4491 = vmatmul.bf16.gmra.mxu0 %v3127
        %v4492 = vpop.f32.mrf.mxu0
        %v4493 = vadd.f32 %v3941, %v4492
        %v4494 = vpop.f32.mrf.mxu0
        %v4495 = vadd.f32 %v3943, %v4494
        %4496 = vmatmul.bf16.gmra.mxu0 %v3128
        %v4497 = vpop.f32.mrf.mxu0
        %v4498 = vadd.f32 %v3946, %v4497
        %v4499 = vpop.f32.mrf.mxu0
        %v4500 = vadd.f32 %v3948, %v4499
        %4501 = vmatmul.bf16.gmra.mxu0 %v3129
        %v4502 = vpop.f32.mrf.mxu0
        %v4503 = vadd.f32 %v3951, %v4502
        %v4504 = vpop.f32.mrf.mxu0
        %v4505 = vadd.f32 %v3953, %v4504
        %4506 = vmatmul.bf16.gmra.mxu0 %v3130
        %v4507 = vpop.f32.mrf.mxu0
        %v4508 = vadd.f32 %v3956, %v4507
        %v4509 = vpop.f32.mrf.mxu0
        %v4510 = vadd.f32 %v3958, %v4509
        %4511 = vmatmul.bf16.gmra.mxu0 %v3131
        %v4512 = vpop.f32.mrf.mxu0
        %v4513 = vadd.f32 %v3961, %v4512
        %v4514 = vpop.f32.mrf.mxu0
        %v4515 = vadd.f32 %v3963, %v4514
        %4516 = vmatmul.bf16.gmra.mxu0 %v3132
        %v4517 = vpop.f32.mrf.mxu0
        %v4518 = vadd.f32 %v3966, %v4517
        %v4519 = vpop.f32.mrf.mxu0
        %v4520 = vadd.f32 %v3968, %v4519
        %4521 = vmatmul.bf16.gmra.mxu0 %v3133
        %v4522 = vpop.f32.mrf.mxu0
        %v4523 = vadd.f32 %v3971, %v4522
        %v4524 = vpop.f32.mrf.mxu0
        %v4525 = vadd.f32 %v3973, %v4524
        %4526 = vmatmul.bf16.gmra.mxu0 %v3134
        %v4527 = vpop.f32.mrf.mxu0
        %v4528 = vadd.f32 %v3976, %v4527
        %v4529 = vpop.f32.mrf.mxu0
        %v4530 = vadd.f32 %v3978, %v4529
        %4531 = vmatmul.bf16.gmra.mxu0 %v3135
        %v4532 = vpop.f32.mrf.mxu0
        %v4533 = vadd.f32 %v3981, %v4532
        %v4534 = vpop.f32.mrf.mxu0
        %v4535 = vadd.f32 %v3983, %v4534
        %4536 = vmatmul.bf16.gmra.mxu0 %v3136
        %v4537 = vpop.f32.mrf.mxu0
        %v4538 = vadd.f32 %v3986, %v4537
        %v4539 = vpop.f32.mrf.mxu0
        %v4540 = vadd.f32 %v3988, %v4539
        %4541 = vmatmul.bf16.gmra.mxu0 %v3137
        %v4542 = vpop.f32.mrf.mxu0
        %v4543 = vadd.f32 %v3991, %v4542
        %v4544 = vpop.f32.mrf.mxu0
        %v4545 = vadd.f32 %v3993, %v4544
        %4546 = vmatmul.bf16.gmra.mxu0 %v3138
        %v4547 = vpop.f32.mrf.mxu0
        %v4548 = vadd.f32 %v3996, %v4547
        %v4549 = vpop.f32.mrf.mxu0
        %v4550 = vadd.f32 %v3998, %v4549
        %4551 = vmatmul.bf16.gmra.mxu0 %v3139
        %v4552 = vpop.f32.mrf.mxu0
        %v4553 = vadd.f32 %v4001, %v4552
        %v4554 = vpop.f32.mrf.mxu0
        %v4555 = vadd.f32 %v4003, %v4554
        %4556 = vmatmul.bf16.gmra.mxu0 %v3140
        %v4557 = vpop.f32.mrf.mxu0
        %v4558 = vadd.f32 %v4006, %v4557
        %v4559 = vpop.f32.mrf.mxu0
        %v4560 = vadd.f32 %v4008, %v4559
        %4561 = vmatmul.bf16.gmra.mxu0 %v3141
        %v4562 = vpop.f32.mrf.mxu0
        %v4563 = vadd.f32 %v4011, %v4562
        %v4564 = vpop.f32.mrf.mxu0
        %v4565 = vadd.f32 %v4013, %v4564
        %4566 = vmatmul.bf16.gmra.mxu0 %v4022
        %v4567 = vpop.f32.mrf.mxu0
        %v4568 = vadd.f32 %v4016, %v4567
        %v4569 = vpop.f32.mrf.mxu0
        %v4570 = vadd.f32 %v4018, %v4569
        %4571 = vdwg.mxu0
        %v4572 = vld [vmem:[#allocation2 + $0xc] sm:$0xe]
        %v4573 = vld [vmem:[#allocation2 + $0x10] sm:$0xf]
        %v4574 = vld [vmem:[#allocation2 + $0x14] sm:$0xf]
        %v4575 = vld [vmem:[#allocation2 + $0x18] sm:$0xf]
        %v4576 = vld [vmem:[#allocation2 + $0x1c] sm:$0xf]
        %v4577 = vld [vmem:[#allocation2 + $0x20] sm:$0xf]
        %v4578 = vld [vmem:[#allocation2 + $0x24] sm:$0xf]
        %v4579 = vld [vmem:[#allocation2 + $0x28] sm:$0xf]
        %v4580 = vld [vmem:[#allocation2 + $0x2c] sm:$0xf]
        %v4581 = vld [vmem:[#allocation2 + $0x30] sm:$0xf]
        %v4582 = vld [vmem:[#allocation2 + $0x34] sm:$0xf]
        %v4583 = vld [vmem:[#allocation2 + $0x38] sm:$0xf]
        %v4584 = vld [vmem:[#allocation2 + $0x3c] sm:$0xf]
        %v4585 = vld [vmem:[#allocation2 + $0x40] sm:$0xf]
        %v4586 = vld [vmem:[#allocation2 + $0x44] sm:$0xf]
        %v4587 = vld [vmem:[#allocation2 + $0x48] sm:$0xf]
        %v4588 = vld [vmem:[#allocation2 + $0x4c] sm:$0xf]
        %v4589 = vld [vmem:[#allocation2 + $0x50] sm:$0xf]
        %v4590 = vld [vmem:[#allocation2 + $0x54] sm:$0xf]
        %v4591 = vld [vmem:[#allocation2 + $0x58] sm:$0xf]
        %v4592 = vld [vmem:[#allocation2 + $0x5c] sm:$0xf]
        %v4593 = vld [vmem:[#allocation2 + $0x60] sm:$0xf]
        %v4594 = vld [vmem:[#allocation2 + $0x64] sm:$0xf]
        %v4595 = vld [vmem:[#allocation2 + $0x68] sm:$0xf]
        %v4596 = vld [vmem:[#allocation2 + $0x6c] sm:$0xf]
        %v4597 = vld [vmem:[#allocation2 + $0x70] sm:$0xf]
        %v4598 = vld [vmem:[#allocation2 + $0x74] sm:$0xf]
        %v4599 = vld [vmem:[#allocation2 + $0x78] sm:$0xf]
        %v4600 = vld [vmem:[#allocation2 + $0x7c] sm:$0xf]
        %v4601 = vld [vmem:[#allocation2 + $0x80] sm:$0xf]
        %v4602 = vld [vmem:[#allocation2 + $0x84] sm:$0xf]
        %v4603 = vld [vmem:[#allocation2 + $0x88] sm:$0xf]
        %v4604 = vld [vmem:[#allocation2 + $0x8c] sm:$0xf]
        %v4605 = vld [vmem:[#allocation2 + $0x90] sm:$0xf]
        %v4606 = vld [vmem:[#allocation2 + $0x94] sm:$0xf]
        %v4607 = vld [vmem:[#allocation2 + $0x98] sm:$0xf]
        %v4608 = vld [vmem:[#allocation2 + $0x9c] sm:$0xf]
        %v4609 = vld [vmem:[#allocation2 + $0xa0] sm:$0xf]
        %v4610 = vld [vmem:[#allocation2 + $0xa4] sm:$0xf]
        %v4611 = vld [vmem:[#allocation2 + $0xa8] sm:$0xf]
        %v4612 = vld [vmem:[#allocation2 + $0xac] sm:$0xf]
        %v4613 = vld [vmem:[#allocation2 + $0xb0] sm:$0xf]
        %v4614 = vld [vmem:[#allocation2 + $0xb4] sm:$0xf]
        %v4615 = vld [vmem:[#allocation2 + $0xb8] sm:$0xf]
        %v4616 = vld [vmem:[#allocation2 + $0xbc] sm:$0xf]
        %v4617 = vld [vmem:[#allocation2 + $0xc0] sm:$0xf]
        %v4618 = vld [vmem:[#allocation2 + $0xc4] sm:$0xf]
        %v4619 = vld [vmem:[#allocation2 + $0xc8] sm:$0xf]
        %v4620 = vld [vmem:[#allocation2 + $0xcc] sm:$0xf]
        %v4621 = vld [vmem:[#allocation2 + $0xd0] sm:$0xf]
        %v4622 = vld [vmem:[#allocation2 + $0xd4] sm:$0xf]
        %v4623 = vld [vmem:[#allocation2 + $0xd8] sm:$0xf]
        %v4624 = vld [vmem:[#allocation2 + $0xdc] sm:$0xf]
        %v4625 = vld [vmem:[#allocation2 + $0xe0] sm:$0xf]
        %v4626 = vld [vmem:[#allocation2 + $0xe4] sm:$0xf]
        %v4627 = vld [vmem:[#allocation2 + $0xe8] sm:$0xf]
        %v4628 = vld [vmem:[#allocation2 + $0xec] sm:$0xf]
        %v4629 = vld [vmem:[#allocation2 + $0xf0] sm:$0xf]
        %v4630 = vld [vmem:[#allocation2 + $0xf4] sm:$0xf]
        %v4631 = vld [vmem:[#allocation2 + $0xf8] sm:$0xf]
        %v4632 = vld [vmem:[#allocation2 + $0xfc] sm:$0xf]
        %v4633 = vld [vmem:[#allocation2 + $0x100] sm:$0xf]
        %v4634 = vld [vmem:[#allocation2 + $0x104] sm:$0xf]
        %v4635 = vld [vmem:[#allocation2 + $0x108] sm:$0xf]
        %v4636 = vld [vmem:[#allocation2 + $0x10c] sm:$0xf]
        %v4637 = vld [vmem:[#allocation2 + $0x110] sm:$0xf]
        %v4638 = vld [vmem:[#allocation2 + $0x114] sm:$0xf]
        %v4639 = vld [vmem:[#allocation2 + $0x118] sm:$0xf]
        %v4640 = vld [vmem:[#allocation2 + $0x11c] sm:$0xf]
        %v4641 = vld [vmem:[#allocation2 + $0x120] sm:$0xf]
        %v4642 = vld [vmem:[#allocation2 + $0x124] sm:$0xf]
        %v4643 = vld [vmem:[#allocation2 + $0x128] sm:$0xf]
        %v4644 = vld [vmem:[#allocation2 + $0x12c] sm:$0xf]
        %v4645 = vld [vmem:[#allocation2 + $0x130] sm:$0xf]
        %v4646 = vld [vmem:[#allocation2 + $0x134] sm:$0xf]
        %v4647 = vld [vmem:[#allocation2 + $0x138] sm:$0xf]
        %v4648 = vld [vmem:[#allocation2 + $0x13c] sm:$0xf]
        %v4649 = vld [vmem:[#allocation2 + $0x140] sm:$0xf]
        %v4650 = vld [vmem:[#allocation2 + $0x144] sm:$0xf]
        %v4651 = vld [vmem:[#allocation2 + $0x148] sm:$0xf]
        %v4652 = vld [vmem:[#allocation2 + $0x14c] sm:$0xf]
        %v4653 = vld [vmem:[#allocation2 + $0x150] sm:$0x3]
        %s4654 = scalar_lea.vmem [#allocation8], 256
        %v4655 = vld [vmem:[%s4654] sm:$0xff]
        %v4656 = vld [vmem:[%s4654 + $0x8] sm:$0xff]
        %v4657 = vld [vmem:[%s4654 + $0x10] sm:$0xff]
        %v4658 = vld [vmem:[%s4654 + $0x18] sm:$0xff]
        %v4659 = vld [vmem:[%s4654 + $0x20] sm:$0xff]
        %v4660 = vld [vmem:[%s4654 + $0x28] sm:$0xff]
        %v4661 = vld [vmem:[%s4654 + $0x30] sm:$0xff]
        %v4662 = vld [vmem:[%s4654 + $0x38] sm:$0xff]
        %v4663 = vld [vmem:[%s4654 + $0x40] sm:$0xff]
        %v4664 = vld [vmem:[%s4654 + $0x48] sm:$0xff]
        %v4665 = vld [vmem:[%s4654 + $0x50] sm:$0xff]
        %v4666 = vld [vmem:[%s4654 + $0x58] sm:$0xff]
        %v4667 = vld [vmem:[%s4654 + $0x60] sm:$0xff]
        %v4668 = vld [vmem:[%s4654 + $0x68] sm:$0xff]
        %v4669 = vld [vmem:[%s4654 + $0x70] sm:$0xff]
        %v4670 = vld [vmem:[%s4654 + $0x78] sm:$0xff]
        %v4753 = vunpack.c.l.b16 %v4572
        %v4754 = vunpack.c.l.b16 %v4573
        %v4755 = vunpack.c.l.b16 %v4574
        %v4756 = vunpack.c.l.b16 %v4575
        %v4757 = vunpack.c.l.b16 %v4576
        %v4758 = vunpack.c.l.b16 %v4577
        %v4759 = vunpack.c.l.b16 %v4578
        %v4760 = vunpack.c.l.b16 %v4579
        %v4761 = vunpack.c.l.b16 %v4580
        %v4762 = vunpack.c.l.b16 %v4581
        %v4763 = vunpack.c.l.b16 %v4582
        %v4764 = vunpack.c.l.b16 %v4583
        %v4765 = vunpack.c.l.b16 %v4584
        %v4766 = vunpack.c.l.b16 %v4585
        %v4767 = vunpack.c.l.b16 %v4586
        %v4768 = vunpack.c.l.b16 %v4587
        %v4769 = vunpack.c.l.b16 %v4588
        %v4770 = vunpack.c.l.b16 %v4589
        %v4771 = vunpack.c.l.b16 %v4590
        %v4772 = vunpack.c.l.b16 %v4591
        %v4773 = vunpack.c.l.b16 %v4592
        %v4774 = vunpack.c.l.b16 %v4593
        %v4775 = vunpack.c.l.b16 %v4594
        %v4776 = vunpack.c.l.b16 %v4595
        %v4777 = vunpack.c.l.b16 %v4596
        %v4778 = vunpack.c.l.b16 %v4597
        %v4779 = vunpack.c.l.b16 %v4598
        %v4780 = vunpack.c.l.b16 %v4599
        %v4781 = vunpack.c.l.b16 %v4600
        %v4782 = vunpack.c.l.b16 %v4601
        %v4783 = vunpack.c.l.b16 %v4602
        %v4784 = vunpack.c.l.b16 %v4603
        %v4785 = vunpack.c.l.b16 %v4604
        %v4786 = vunpack.c.l.b16 %v4605
        %v4787 = vunpack.c.l.b16 %v4606
        %v4788 = vunpack.c.l.b16 %v4607
        %v4789 = vunpack.c.l.b16 %v4608
        %v4790 = vunpack.c.l.b16 %v4609
        %v4791 = vunpack.c.l.b16 %v4610
        %v4792 = vunpack.c.l.b16 %v4611
        %v4793 = vunpack.c.l.b16 %v4612
        %v4794 = vunpack.c.l.b16 %v4613
        %v4795 = vunpack.c.l.b16 %v4614
        %v4796 = vunpack.c.l.b16 %v4615
        %v4797 = vunpack.c.l.b16 %v4616
        %v4798 = vunpack.c.l.b16 %v4617
        %v4799 = vunpack.c.l.b16 %v4618
        %v4800 = vunpack.c.l.b16 %v4619
        %v4801 = vunpack.c.l.b16 %v4620
        %v4802 = vunpack.c.l.b16 %v4621
        %v4803 = vunpack.c.l.b16 %v4622
        %v4804 = vunpack.c.l.b16 %v4623
        %v4805 = vunpack.c.l.b16 %v4624
        %v4806 = vunpack.c.l.b16 %v4625
        %v4807 = vunpack.c.l.b16 %v4626
        %v4808 = vunpack.c.l.b16 %v4627
        %v4809 = vunpack.c.l.b16 %v4628
        %v4810 = vunpack.c.l.b16 %v4629
        %v4811 = vunpack.c.l.b16 %v4630
        %v4812 = vunpack.c.l.b16 %v4631
        %v4813 = vunpack.c.l.b16 %v4632
        %v4814 = vunpack.c.l.b16 %v4633
        %v4815 = vunpack.c.l.b16 %v4634
        %v4816 = vunpack.c.l.b16 %v4635
        %v4817 = vunpack.c.l.b16 %v4636
        %v4818 = vunpack.c.l.b16 %v4637
        %v4819 = vunpack.c.l.b16 %v4638
        %v4820 = vunpack.c.l.b16 %v4639
        %v4821 = vunpack.c.l.b16 %v4640
        %v4822 = vunpack.c.l.b16 %v4641
        %v4823 = vunpack.c.l.b16 %v4642
        %v4824 = vunpack.c.l.b16 %v4643
        %v4825 = vunpack.c.l.b16 %v4644
        %v4826 = vunpack.c.l.b16 %v4645
        %v4827 = vunpack.c.l.b16 %v4646
        %v4828 = vunpack.c.l.b16 %v4647
        %v4829 = vunpack.c.l.b16 %v4648
        %v4830 = vunpack.c.l.b16 %v4649
        %v4831 = vunpack.c.l.b16 %v4650
        %v4832 = vunpack.c.l.b16 %v4651
        %v4833 = vunpack.c.l.b16 %v4652
        %v4834 = vunpack.c.l.b16 %v4653
        %v4835 = vpack.c.b16 %v4754, %v4753
        %v4836 = vpack.c.b16 %v4756, %v4755
        %v4837 = vpack.c.b16 %v4758, %v4757
        %v4838 = vpack.c.b16 %v4760, %v4759
        %v4839 = vpack.c.b16 %v4762, %v4761
        %v4840 = vpack.c.b16 %v4764, %v4763
        %v4841 = vpack.c.b16 %v4766, %v4765
        %v4842 = vpack.c.b16 %v4768, %v4767
        %v4843 = vpack.c.b16 %v4770, %v4769
        %v4844 = vpack.c.b16 %v4772, %v4771
        %v4845 = vpack.c.b16 %v4774, %v4773
        %v4846 = vpack.c.b16 %v4776, %v4775
        %v4847 = vpack.c.b16 %v4778, %v4777
        %v4848 = vpack.c.b16 %v4780, %v4779
        %v4849 = vpack.c.b16 %v4782, %v4781
        %v4850 = vpack.c.b16 %v4784, %v4783
        %v4851 = vpack.c.b16 %v4786, %v4785
        %v4852 = vpack.c.b16 %v4788, %v4787
        %v4853 = vpack.c.b16 %v4790, %v4789
        %v4854 = vpack.c.b16 %v4792, %v4791
        %v4855 = vpack.c.b16 %v4794, %v4793
        %v4856 = vpack.c.b16 %v4796, %v4795
        %v4857 = vpack.c.b16 %v4798, %v4797
        %v4858 = vpack.c.b16 %v4800, %v4799
        %v4859 = vpack.c.b16 %v4802, %v4801
        %v4860 = vpack.c.b16 %v4804, %v4803
        %v4861 = vpack.c.b16 %v4806, %v4805
        %v4862 = vpack.c.b16 %v4808, %v4807
        %v4863 = vpack.c.b16 %v4810, %v4809
        %v4864 = vpack.c.b16 %v4812, %v4811
        %v4865 = vpack.c.b16 %v4814, %v4813
        %v4866 = vpack.c.b16 %v4816, %v4815
        %v4867 = vpack.c.b16 %v4818, %v4817
        %v4868 = vpack.c.b16 %v4820, %v4819
        %v4869 = vpack.c.b16 %v4822, %v4821
        %v4870 = vpack.c.b16 %v4824, %v4823
        %v4871 = vpack.c.b16 %v4826, %v4825
        %v4872 = vpack.c.b16 %v4828, %v4827
        %v4873 = vpack.c.b16 %v4830, %v4829
        %v4874 = vpack.c.b16 %v4832, %v4831
        %v4875 = vpack.c.b16 %v4834, %v4833
        %vm4876 = vcmask 1046528
        %v4877 = vrot.slane %v4835, 1
        %v4878 = vrot.slane %v4836, 1
        %v4879 = vsel %vm4876, %v4877, %v4878
        %v4880 = vrot.slane %v4837, 1
        %v4881 = vsel %vm4876, %v4878, %v4880
        %v4882 = vrot.slane %v4838, 1
        %v4883 = vsel %vm4876, %v4880, %v4882
        %v4884 = vrot.slane %v4839, 1
        %v4885 = vsel %vm4876, %v4882, %v4884
        %v4886 = vrot.slane %v4840, 1
        %v4887 = vsel %vm4876, %v4884, %v4886
        %v4888 = vrot.slane %v4841, 1
        %v4889 = vsel %vm4876, %v4886, %v4888
        %v4890 = vrot.slane %v4842, 1
        %v4891 = vsel %vm4876, %v4888, %v4890
        %v4892 = vrot.slane %v4843, 1
        %v4893 = vsel %vm4876, %v4890, %v4892
        %v4894 = vrot.slane %v4844, 1
        %v4895 = vsel %vm4876, %v4892, %v4894
        %v4896 = vrot.slane %v4845, 1
        %v4897 = vsel %vm4876, %v4894, %v4896
        %v4898 = vrot.slane %v4846, 1
        %v4899 = vsel %vm4876, %v4896, %v4898
        %v4900 = vrot.slane %v4847, 1
        %v4901 = vsel %vm4876, %v4898, %v4900
        %v4902 = vrot.slane %v4848, 1
        %v4903 = vsel %vm4876, %v4900, %v4902
        %v4904 = vrot.slane %v4849, 1
        %v4905 = vsel %vm4876, %v4902, %v4904
        %v4906 = vrot.slane %v4850, 1
        %v4907 = vsel %vm4876, %v4904, %v4906
        %v4908 = vrot.slane %v4851, 1
        %v4909 = vsel %vm4876, %v4906, %v4908
        %v4910 = vrot.slane %v4852, 1
        %v4911 = vsel %vm4876, %v4908, %v4910
        %v4912 = vrot.slane %v4853, 1
        %v4913 = vsel %vm4876, %v4910, %v4912
        %v4914 = vrot.slane %v4854, 1
        %v4915 = vsel %vm4876, %v4912, %v4914
        %v4916 = vrot.slane %v4855, 1
        %v4917 = vsel %vm4876, %v4914, %v4916
        %v4918 = vrot.slane %v4856, 1
        %v4919 = vsel %vm4876, %v4916, %v4918
        %v4920 = vrot.slane %v4857, 1
        %v4921 = vsel %vm4876, %v4918, %v4920
        %v4922 = vrot.slane %v4858, 1
        %v4923 = vsel %vm4876, %v4920, %v4922
        %v4924 = vrot.slane %v4859, 1
        %v4925 = vsel %vm4876, %v4922, %v4924
        %v4926 = vrot.slane %v4860, 1
        %v4927 = vsel %vm4876, %v4924, %v4926
        %v4928 = vrot.slane %v4861, 1
        %v4929 = vsel %vm4876, %v4926, %v4928
        %v4930 = vrot.slane %v4862, 1
        %v4931 = vsel %vm4876, %v4928, %v4930
        %v4932 = vrot.slane %v4863, 1
        %v4933 = vsel %vm4876, %v4930, %v4932
        %v4934 = vrot.slane %v4864, 1
        %v4935 = vsel %vm4876, %v4932, %v4934
        %v4936 = vrot.slane %v4865, 1
        %v4937 = vsel %vm4876, %v4934, %v4936
        %v4938 = vrot.slane %v4866, 1
        %v4939 = vsel %vm4876, %v4936, %v4938
        %v4940 = vrot.slane %v4867, 1
        %v4941 = vsel %vm4876, %v4938, %v4940
        %v4942 = vrot.slane %v4868, 1
        %v4943 = vsel %vm4876, %v4940, %v4942
        %v4944 = vrot.slane %v4869, 1
        %v4945 = vsel %vm4876, %v4942, %v4944
        %v4946 = vrot.slane %v4870, 1
        %v4947 = vsel %vm4876, %v4944, %v4946
        %v4948 = vrot.slane %v4871, 1
        %v4949 = vsel %vm4876, %v4946, %v4948
        %v4950 = vrot.slane %v4872, 1
        %v4951 = vsel %vm4876, %v4948, %v4950
        %v4952 = vrot.slane %v4873, 1
        %v4953 = vsel %vm4876, %v4950, %v4952
        %v4954 = vrot.slane %v4874, 1
        %v4955 = vsel %vm4876, %v4952, %v4954
        %v4956 = vrot.slane %v4875, 1
        %v4957 = vsel %vm4876, %v4954, %v4956
        %v5015 = vunpack.c.l.b16 %v4655
        %v5016 = vunpack.c.h.b16 %v4655
        %v5017 = vunpack.c.l.b16 %v4656
        %v5018 = vunpack.c.h.b16 %v4656
        %v5019 = vunpack.c.l.b16 %v4657
        %v5020 = vunpack.c.h.b16 %v4657
        %v5021 = vunpack.c.l.b16 %v4658
        %v5022 = vunpack.c.h.b16 %v4658
        %v5023 = vunpack.c.l.b16 %v4659
        %v5024 = vunpack.c.h.b16 %v4659
        %v5025 = vunpack.c.l.b16 %v4660
        %v5026 = vunpack.c.h.b16 %v4660
        %v5027 = vunpack.c.l.b16 %v4661
        %v5028 = vunpack.c.h.b16 %v4661
        %v5029 = vunpack.c.l.b16 %v4662
        %v5030 = vunpack.c.h.b16 %v4662
        %v5031 = vunpack.c.l.b16 %v4663
        %v5032 = vunpack.c.h.b16 %v4663
        %v5033 = vunpack.c.l.b16 %v4664
        %v5034 = vunpack.c.h.b16 %v4664
        %v5035 = vunpack.c.l.b16 %v4665
        %v5036 = vunpack.c.h.b16 %v4665
        %v5037 = vunpack.c.l.b16 %v4666
        %v5038 = vunpack.c.h.b16 %v4666
        %v5039 = vunpack.c.l.b16 %v4667
        %v5040 = vunpack.c.h.b16 %v4667
        %v5041 = vunpack.c.l.b16 %v4668
        %v5042 = vunpack.c.h.b16 %v4668
        %v5043 = vunpack.c.l.b16 %v4669
        %v5044 = vunpack.c.h.b16 %v4669
        %v5045 = vunpack.c.l.b16 %v4670
        %v5046 = vunpack.c.h.b16 %v4670
        %v5047 = vpack.c.b16 %v5017, %v5015
        %v5048 = vpack.c.b16 %v5018, %v5016
        %v5049 = vpack.c.b16 %v5021, %v5019
        %v5050 = vpack.c.b16 %v5022, %v5020
        %v5051 = vpack.c.b16 %v5025, %v5023
        %v5052 = vpack.c.b16 %v5026, %v5024
        %v5053 = vpack.c.b16 %v5029, %v5027
        %v5054 = vpack.c.b16 %v5030, %v5028
        %v5055 = vpack.c.b16 %v5033, %v5031
        %v5056 = vpack.c.b16 %v5034, %v5032
        %v5057 = vpack.c.b16 %v5037, %v5035
        %v5058 = vpack.c.b16 %v5038, %v5036
        %v5059 = vpack.c.b16 %v5041, %v5039
        %v5060 = vpack.c.b16 %v5042, %v5040
        %v5061 = vpack.c.b16 %v5045, %v5043
        %v5062 = vpack.c.b16 %v5046, %v5044
        %5079 = vmatpush.bf16.msra.mxu0 %v5061
        %5080 = vmatpush.bf16.msra.mxu0 %v5059
        %5081 = vmatpush.bf16.msra.mxu0 %v5057
        %5082 = vmatpush.bf16.msra.mxu0 %v5055
        %5083 = vmatpush.bf16.msra.mxu0 %v5053
        %5084 = vmatpush.bf16.msra.mxu0 %v5051
        %5085 = vmatpush.bf16.msra.mxu0 %v5049
        %5086 = vmatpush.bf16.msra.mxu0 %v5047
        %5087 = vmatmul.bf16.gmra.mxu0 %v4879
        %v5088 = vpop.f32.mrf.mxu0
        %v5089 = vadd.f32 0.0, %v5088
        %v5090 = vpop.f32.mrf.mxu0
        %v5091 = vadd.f32 0.0, %v5090
        %5092 = vmatmul.bf16.gmra.mxu0 %v4881
        %v5093 = vpop.f32.mrf.mxu0
        %v5094 = vadd.f32 0.0, %v5093
        %v5095 = vpop.f32.mrf.mxu0
        %v5096 = vadd.f32 0.0, %v5095
        %5097 = vmatmul.bf16.gmra.mxu0 %v4883
        %v5098 = vpop.f32.mrf.mxu0
        %v5099 = vadd.f32 0.0, %v5098
        %v5100 = vpop.f32.mrf.mxu0
        %v5101 = vadd.f32 0.0, %v5100
        %5102 = vmatmul.bf16.gmra.mxu0 %v4885
        %v5103 = vpop.f32.mrf.mxu0
        %v5104 = vadd.f32 0.0, %v5103
        %v5105 = vpop.f32.mrf.mxu0
        %v5106 = vadd.f32 0.0, %v5105
        %5107 = vmatmul.bf16.gmra.mxu0 %v4887
        %v5108 = vpop.f32.mrf.mxu0
        %v5109 = vadd.f32 0.0, %v5108
        %v5110 = vpop.f32.mrf.mxu0
        %v5111 = vadd.f32 0.0, %v5110
        %5112 = vmatmul.bf16.gmra.mxu0 %v4889
        %v5113 = vpop.f32.mrf.mxu0
        %v5114 = vadd.f32 0.0, %v5113
        %v5115 = vpop.f32.mrf.mxu0
        %v5116 = vadd.f32 0.0, %v5115
        %5117 = vmatmul.bf16.gmra.mxu0 %v4891
        %v5118 = vpop.f32.mrf.mxu0
        %v5119 = vadd.f32 0.0, %v5118
        %v5120 = vpop.f32.mrf.mxu0
        %v5121 = vadd.f32 0.0, %v5120
        %5122 = vmatmul.bf16.gmra.mxu0 %v4893
        %v5123 = vpop.f32.mrf.mxu0
        %v5124 = vadd.f32 0.0, %v5123
        %v5125 = vpop.f32.mrf.mxu0
        %v5126 = vadd.f32 0.0, %v5125
        %5127 = vmatmul.bf16.gmra.mxu0 %v4895
        %v5128 = vpop.f32.mrf.mxu0
        %v5129 = vadd.f32 0.0, %v5128
        %v5130 = vpop.f32.mrf.mxu0
        %v5131 = vadd.f32 0.0, %v5130
        %5132 = vmatmul.bf16.gmra.mxu0 %v4897
        %v5133 = vpop.f32.mrf.mxu0
        %v5134 = vadd.f32 0.0, %v5133
        %v5135 = vpop.f32.mrf.mxu0
        %v5136 = vadd.f32 0.0, %v5135
        %5137 = vmatmul.bf16.gmra.mxu0 %v4899
        %v5138 = vpop.f32.mrf.mxu0
        %v5139 = vadd.f32 0.0, %v5138
        %v5140 = vpop.f32.mrf.mxu0
        %v5141 = vadd.f32 0.0, %v5140
        %5142 = vmatmul.bf16.gmra.mxu0 %v4901
        %v5143 = vpop.f32.mrf.mxu0
        %v5144 = vadd.f32 0.0, %v5143
        %v5145 = vpop.f32.mrf.mxu0
        %v5146 = vadd.f32 0.0, %v5145
        %5147 = vmatmul.bf16.gmra.mxu0 %v4903
        %v5148 = vpop.f32.mrf.mxu0
        %v5149 = vadd.f32 0.0, %v5148
        %v5150 = vpop.f32.mrf.mxu0
        %v5151 = vadd.f32 0.0, %v5150
        %5152 = vmatmul.bf16.gmra.mxu0 %v4905
        %v5153 = vpop.f32.mrf.mxu0
        %v5154 = vadd.f32 0.0, %v5153
        %v5155 = vpop.f32.mrf.mxu0
        %v5156 = vadd.f32 0.0, %v5155
        %5157 = vmatmul.bf16.gmra.mxu0 %v4907
        %v5158 = vpop.f32.mrf.mxu0
        %v5159 = vadd.f32 0.0, %v5158
        %v5160 = vpop.f32.mrf.mxu0
        %v5161 = vadd.f32 0.0, %v5160
        %5162 = vmatmul.bf16.gmra.mxu0 %v4909
        %v5163 = vpop.f32.mrf.mxu0
        %v5164 = vadd.f32 0.0, %v5163
        %v5165 = vpop.f32.mrf.mxu0
        %v5166 = vadd.f32 0.0, %v5165
        %5167 = vmatmul.bf16.gmra.mxu0 %v4911
        %v5168 = vpop.f32.mrf.mxu0
        %v5169 = vadd.f32 0.0, %v5168
        %v5170 = vpop.f32.mrf.mxu0
        %v5171 = vadd.f32 0.0, %v5170
        %5172 = vmatmul.bf16.gmra.mxu0 %v4913
        %v5173 = vpop.f32.mrf.mxu0
        %v5174 = vadd.f32 0.0, %v5173
        %v5175 = vpop.f32.mrf.mxu0
        %v5176 = vadd.f32 0.0, %v5175
        %5177 = vmatmul.bf16.gmra.mxu0 %v4915
        %v5178 = vpop.f32.mrf.mxu0
        %v5179 = vadd.f32 0.0, %v5178
        %v5180 = vpop.f32.mrf.mxu0
        %v5181 = vadd.f32 0.0, %v5180
        %5182 = vmatmul.bf16.gmra.mxu0 %v4917
        %v5183 = vpop.f32.mrf.mxu0
        %v5184 = vadd.f32 0.0, %v5183
        %v5185 = vpop.f32.mrf.mxu0
        %v5186 = vadd.f32 0.0, %v5185
        %5187 = vmatmul.bf16.gmra.mxu0 %v4919
        %v5188 = vpop.f32.mrf.mxu0
        %v5189 = vadd.f32 0.0, %v5188
        %v5190 = vpop.f32.mrf.mxu0
        %v5191 = vadd.f32 0.0, %v5190
        %5192 = vmatmul.bf16.gmra.mxu0 %v4921
        %v5193 = vpop.f32.mrf.mxu0
        %v5194 = vadd.f32 0.0, %v5193
        %v5195 = vpop.f32.mrf.mxu0
        %v5196 = vadd.f32 0.0, %v5195
        %5197 = vmatmul.bf16.gmra.mxu0 %v4923
        %v5198 = vpop.f32.mrf.mxu0
        %v5199 = vadd.f32 0.0, %v5198
        %v5200 = vpop.f32.mrf.mxu0
        %v5201 = vadd.f32 0.0, %v5200
        %5202 = vmatmul.bf16.gmra.mxu0 %v4925
        %v5203 = vpop.f32.mrf.mxu0
        %v5204 = vadd.f32 0.0, %v5203
        %v5205 = vpop.f32.mrf.mxu0
        %v5206 = vadd.f32 0.0, %v5205
        %5207 = vmatmul.bf16.gmra.mxu0 %v4927
        %v5208 = vpop.f32.mrf.mxu0
        %v5209 = vadd.f32 0.0, %v5208
        %v5210 = vpop.f32.mrf.mxu0
        %v5211 = vadd.f32 0.0, %v5210
        %5212 = vmatmul.bf16.gmra.mxu0 %v4929
        %v5213 = vpop.f32.mrf.mxu0
        %v5214 = vadd.f32 0.0, %v5213
        %v5215 = vpop.f32.mrf.mxu0
        %v5216 = vadd.f32 0.0, %v5215
        %5217 = vmatmul.bf16.gmra.mxu0 %v4931
        %v5218 = vpop.f32.mrf.mxu0
        %v5219 = vadd.f32 0.0, %v5218
        %v5220 = vpop.f32.mrf.mxu0
        %v5221 = vadd.f32 0.0, %v5220
        %5222 = vmatmul.bf16.gmra.mxu0 %v4933
        %v5223 = vpop.f32.mrf.mxu0
        %v5224 = vadd.f32 0.0, %v5223
        %v5225 = vpop.f32.mrf.mxu0
        %v5226 = vadd.f32 0.0, %v5225
        %5227 = vmatmul.bf16.gmra.mxu0 %v4935
        %v5228 = vpop.f32.mrf.mxu0
        %v5229 = vadd.f32 0.0, %v5228
        %v5230 = vpop.f32.mrf.mxu0
        %v5231 = vadd.f32 0.0, %v5230
        %5232 = vmatmul.bf16.gmra.mxu0 %v4937
        %v5233 = vpop.f32.mrf.mxu0
        %v5234 = vadd.f32 0.0, %v5233
        %v5235 = vpop.f32.mrf.mxu0
        %v5236 = vadd.f32 0.0, %v5235
        %5237 = vmatmul.bf16.gmra.mxu0 %v4939
        %v5238 = vpop.f32.mrf.mxu0
        %v5239 = vadd.f32 0.0, %v5238
        %v5240 = vpop.f32.mrf.mxu0
        %v5241 = vadd.f32 0.0, %v5240
        %5242 = vmatmul.bf16.gmra.mxu0 %v4941
        %v5243 = vpop.f32.mrf.mxu0
        %v5244 = vadd.f32 0.0, %v5243
        %v5245 = vpop.f32.mrf.mxu0
        %v5246 = vadd.f32 0.0, %v5245
        %5247 = vmatmul.bf16.gmra.mxu0 %v4943
        %v5248 = vpop.f32.mrf.mxu0
        %v5249 = vadd.f32 0.0, %v5248
        %v5250 = vpop.f32.mrf.mxu0
        %v5251 = vadd.f32 0.0, %v5250
        %5252 = vmatmul.bf16.gmra.mxu0 %v4945
        %v5253 = vpop.f32.mrf.mxu0
        %v5254 = vadd.f32 0.0, %v5253
        %v5255 = vpop.f32.mrf.mxu0
        %v5256 = vadd.f32 0.0, %v5255
        %5257 = vmatmul.bf16.gmra.mxu0 %v4947
        %v5258 = vpop.f32.mrf.mxu0
        %v5259 = vadd.f32 0.0, %v5258
        %v5260 = vpop.f32.mrf.mxu0
        %v5261 = vadd.f32 0.0, %v5260
        %5262 = vmatmul.bf16.gmra.mxu0 %v4949
        %v5263 = vpop.f32.mrf.mxu0
        %v5264 = vadd.f32 0.0, %v5263
        %v5265 = vpop.f32.mrf.mxu0
        %v5266 = vadd.f32 0.0, %v5265
        %5267 = vmatmul.bf16.gmra.mxu0 %v4951
        %v5268 = vpop.f32.mrf.mxu0
        %v5269 = vadd.f32 0.0, %v5268
        %v5270 = vpop.f32.mrf.mxu0
        %v5271 = vadd.f32 0.0, %v5270
        %5272 = vmatmul.bf16.gmra.mxu0 %v4953
        %v5273 = vpop.f32.mrf.mxu0
        %v5274 = vadd.f32 0.0, %v5273
        %v5275 = vpop.f32.mrf.mxu0
        %v5276 = vadd.f32 0.0, %v5275
        %5277 = vmatmul.bf16.gmra.mxu0 %v4955
        %v5278 = vpop.f32.mrf.mxu0
        %v5279 = vadd.f32 0.0, %v5278
        %v5280 = vpop.f32.mrf.mxu0
        %v5281 = vadd.f32 0.0, %v5280
        %5282 = vmatmul.bf16.gmra.mxu0 %v4957
        %v5283 = vpop.f32.mrf.mxu0
        %v5284 = vadd.f32 0.0, %v5283
        %v5285 = vpop.f32.mrf.mxu0
        %v5286 = vadd.f32 0.0, %v5285
        %5287 = vmatmul.bf16.gmra.mxu0 %v4956
        %v5288 = vpop.f32.mrf.mxu0
        %v5289 = vadd.f32 0.0, %v5288
        %v5290 = vpop.f32.mrf.mxu0
        %v5291 = vadd.f32 0.0, %v5290
        %5292 = vdwg.mxu0
        %5293 = vmatpush.bf16.msra.mxu0 %v5062
        %5294 = vmatpush.bf16.msra.mxu0 %v5060
        %5295 = vmatpush.bf16.msra.mxu0 %v5058
        %5296 = vmatpush.bf16.msra.mxu0 %v5056
        %5297 = vmatpush.bf16.msra.mxu0 %v5054
        %5298 = vmatpush.bf16.msra.mxu0 %v5052
        %5299 = vmatpush.bf16.msra.mxu0 %v5050
        %5300 = vmatpush.bf16.msra.mxu0 %v5048
        %5301 = vmatmul.bf16.gmra.mxu0 %v4879
        %v5302 = vpop.f32.mrf.mxu0
        %v5303 = vadd.f32 0.0, %v5302
        %v5304 = vpop.f32.mrf.mxu0
        %v5305 = vadd.f32 0.0, %v5304
        %5306 = vmatmul.bf16.gmra.mxu0 %v4881
        %v5307 = vpop.f32.mrf.mxu0
        %v5308 = vadd.f32 0.0, %v5307
        %v5309 = vpop.f32.mrf.mxu0
        %v5310 = vadd.f32 0.0, %v5309
        %5311 = vmatmul.bf16.gmra.mxu0 %v4883
        %v5312 = vpop.f32.mrf.mxu0
        %v5313 = vadd.f32 0.0, %v5312
        %v5314 = vpop.f32.mrf.mxu0
        %v5315 = vadd.f32 0.0, %v5314
        %5316 = vmatmul.bf16.gmra.mxu0 %v4885
        %v5317 = vpop.f32.mrf.mxu0
        %v5318 = vadd.f32 0.0, %v5317
        %v5319 = vpop.f32.mrf.mxu0
        %v5320 = vadd.f32 0.0, %v5319
        %5321 = vmatmul.bf16.gmra.mxu0 %v4887
        %v5322 = vpop.f32.mrf.mxu0
        %v5323 = vadd.f32 0.0, %v5322
        %v5324 = vpop.f32.mrf.mxu0
        %v5325 = vadd.f32 0.0, %v5324
        %5326 = vmatmul.bf16.gmra.mxu0 %v4889
        %v5327 = vpop.f32.mrf.mxu0
        %v5328 = vadd.f32 0.0, %v5327
        %v5329 = vpop.f32.mrf.mxu0
        %v5330 = vadd.f32 0.0, %v5329
        %5331 = vmatmul.bf16.gmra.mxu0 %v4891
        %v5332 = vpop.f32.mrf.mxu0
        %v5333 = vadd.f32 0.0, %v5332
        %v5334 = vpop.f32.mrf.mxu0
        %v5335 = vadd.f32 0.0, %v5334
        %5336 = vmatmul.bf16.gmra.mxu0 %v4893
        %v5337 = vpop.f32.mrf.mxu0
        %v5338 = vadd.f32 0.0, %v5337
        %v5339 = vpop.f32.mrf.mxu0
        %v5340 = vadd.f32 0.0, %v5339
        %5341 = vmatmul.bf16.gmra.mxu0 %v4895
        %v5342 = vpop.f32.mrf.mxu0
        %v5343 = vadd.f32 0.0, %v5342
        %v5344 = vpop.f32.mrf.mxu0
        %v5345 = vadd.f32 0.0, %v5344
        %5346 = vmatmul.bf16.gmra.mxu0 %v4897
        %v5347 = vpop.f32.mrf.mxu0
        %v5348 = vadd.f32 0.0, %v5347
        %v5349 = vpop.f32.mrf.mxu0
        %v5350 = vadd.f32 0.0, %v5349
        %5351 = vmatmul.bf16.gmra.mxu0 %v4899
        %v5352 = vpop.f32.mrf.mxu0
        %v5353 = vadd.f32 0.0, %v5352
        %v5354 = vpop.f32.mrf.mxu0
        %v5355 = vadd.f32 0.0, %v5354
        %5356 = vmatmul.bf16.gmra.mxu0 %v4901
        %v5357 = vpop.f32.mrf.mxu0
        %v5358 = vadd.f32 0.0, %v5357
        %v5359 = vpop.f32.mrf.mxu0
        %v5360 = vadd.f32 0.0, %v5359
        %5361 = vmatmul.bf16.gmra.mxu0 %v4903
        %v5362 = vpop.f32.mrf.mxu0
        %v5363 = vadd.f32 0.0, %v5362
        %v5364 = vpop.f32.mrf.mxu0
        %v5365 = vadd.f32 0.0, %v5364
        %5366 = vmatmul.bf16.gmra.mxu0 %v4905
        %v5367 = vpop.f32.mrf.mxu0
        %v5368 = vadd.f32 0.0, %v5367
        %v5369 = vpop.f32.mrf.mxu0
        %v5370 = vadd.f32 0.0, %v5369
        %5371 = vmatmul.bf16.gmra.mxu0 %v4907
        %v5372 = vpop.f32.mrf.mxu0
        %v5373 = vadd.f32 0.0, %v5372
        %v5374 = vpop.f32.mrf.mxu0
        %v5375 = vadd.f32 0.0, %v5374
        %5376 = vmatmul.bf16.gmra.mxu0 %v4909
        %v5377 = vpop.f32.mrf.mxu0
        %v5378 = vadd.f32 0.0, %v5377
        %v5379 = vpop.f32.mrf.mxu0
        %v5380 = vadd.f32 0.0, %v5379
        %5381 = vmatmul.bf16.gmra.mxu0 %v4911
        %v5382 = vpop.f32.mrf.mxu0
        %v5383 = vadd.f32 0.0, %v5382
        %v5384 = vpop.f32.mrf.mxu0
        %v5385 = vadd.f32 0.0, %v5384
        %5386 = vmatmul.bf16.gmra.mxu0 %v4913
        %v5387 = vpop.f32.mrf.mxu0
        %v5388 = vadd.f32 0.0, %v5387
        %v5389 = vpop.f32.mrf.mxu0
        %v5390 = vadd.f32 0.0, %v5389
        %5391 = vmatmul.bf16.gmra.mxu0 %v4915
        %v5392 = vpop.f32.mrf.mxu0
        %v5393 = vadd.f32 0.0, %v5392
        %v5394 = vpop.f32.mrf.mxu0
        %v5395 = vadd.f32 0.0, %v5394
        %5396 = vmatmul.bf16.gmra.mxu0 %v4917
        %v5397 = vpop.f32.mrf.mxu0
        %v5398 = vadd.f32 0.0, %v5397
        %v5399 = vpop.f32.mrf.mxu0
        %v5400 = vadd.f32 0.0, %v5399
        %5401 = vmatmul.bf16.gmra.mxu0 %v4919
        %v5402 = vpop.f32.mrf.mxu0
        %v5403 = vadd.f32 0.0, %v5402
        %v5404 = vpop.f32.mrf.mxu0
        %v5405 = vadd.f32 0.0, %v5404
        %5406 = vmatmul.bf16.gmra.mxu0 %v4921
        %v5407 = vpop.f32.mrf.mxu0
        %v5408 = vadd.f32 0.0, %v5407
        %v5409 = vpop.f32.mrf.mxu0
        %v5410 = vadd.f32 0.0, %v5409
        %5411 = vmatmul.bf16.gmra.mxu0 %v4923
        %v5412 = vpop.f32.mrf.mxu0
        %v5413 = vadd.f32 0.0, %v5412
        %v5414 = vpop.f32.mrf.mxu0
        %v5415 = vadd.f32 0.0, %v5414
        %5416 = vmatmul.bf16.gmra.mxu0 %v4925
        %v5417 = vpop.f32.mrf.mxu0
        %v5418 = vadd.f32 0.0, %v5417
        %v5419 = vpop.f32.mrf.mxu0
        %v5420 = vadd.f32 0.0, %v5419
        %5421 = vmatmul.bf16.gmra.mxu0 %v4927
        %v5422 = vpop.f32.mrf.mxu0
        %v5423 = vadd.f32 0.0, %v5422
        %v5424 = vpop.f32.mrf.mxu0
        %v5425 = vadd.f32 0.0, %v5424
        %5426 = vmatmul.bf16.gmra.mxu0 %v4929
        %v5427 = vpop.f32.mrf.mxu0
        %v5428 = vadd.f32 0.0, %v5427
        %v5429 = vpop.f32.mrf.mxu0
        %v5430 = vadd.f32 0.0, %v5429
        %5431 = vmatmul.bf16.gmra.mxu0 %v4931
        %v5432 = vpop.f32.mrf.mxu0
        %v5433 = vadd.f32 0.0, %v5432
        %v5434 = vpop.f32.mrf.mxu0
        %v5435 = vadd.f32 0.0, %v5434
        %5436 = vmatmul.bf16.gmra.mxu0 %v4933
        %v5437 = vpop.f32.mrf.mxu0
        %v5438 = vadd.f32 0.0, %v5437
        %v5439 = vpop.f32.mrf.mxu0
        %v5440 = vadd.f32 0.0, %v5439
        %5441 = vmatmul.bf16.gmra.mxu0 %v4935
        %v5442 = vpop.f32.mrf.mxu0
        %v5443 = vadd.f32 0.0, %v5442
        %v5444 = vpop.f32.mrf.mxu0
        %v5445 = vadd.f32 0.0, %v5444
        %5446 = vmatmul.bf16.gmra.mxu0 %v4937
        %v5447 = vpop.f32.mrf.mxu0
        %v5448 = vadd.f32 0.0, %v5447
        %v5449 = vpop.f32.mrf.mxu0
        %v5450 = vadd.f32 0.0, %v5449
        %5451 = vmatmul.bf16.gmra.mxu0 %v4939
        %v5452 = vpop.f32.mrf.mxu0
        %v5453 = vadd.f32 0.0, %v5452
        %v5454 = vpop.f32.mrf.mxu0
        %v5455 = vadd.f32 0.0, %v5454
        %5456 = vmatmul.bf16.gmra.mxu0 %v4941
        %v5457 = vpop.f32.mrf.mxu0
        %v5458 = vadd.f32 0.0, %v5457
        %v5459 = vpop.f32.mrf.mxu0
        %v5460 = vadd.f32 0.0, %v5459
        %5461 = vmatmul.bf16.gmra.mxu0 %v4943
        %v5462 = vpop.f32.mrf.mxu0
        %v5463 = vadd.f32 0.0, %v5462
        %v5464 = vpop.f32.mrf.mxu0
        %v5465 = vadd.f32 0.0, %v5464
        %5466 = vmatmul.bf16.gmra.mxu0 %v4945
        %v5467 = vpop.f32.mrf.mxu0
        %v5468 = vadd.f32 0.0, %v5467
        %v5469 = vpop.f32.mrf.mxu0
        %v5470 = vadd.f32 0.0, %v5469
        %5471 = vmatmul.bf16.gmra.mxu0 %v4947
        %v5472 = vpop.f32.mrf.mxu0
        %v5473 = vadd.f32 0.0, %v5472
        %v5474 = vpop.f32.mrf.mxu0
        %v5475 = vadd.f32 0.0, %v5474
        %5476 = vmatmul.bf16.gmra.mxu0 %v4949
        %v5477 = vpop.f32.mrf.mxu0
        %v5478 = vadd.f32 0.0, %v5477
        %v5479 = vpop.f32.mrf.mxu0
        %v5480 = vadd.f32 0.0, %v5479
        %5481 = vmatmul.bf16.gmra.mxu0 %v4951
        %v5482 = vpop.f32.mrf.mxu0
        %v5483 = vadd.f32 0.0, %v5482
        %v5484 = vpop.f32.mrf.mxu0
        %v5485 = vadd.f32 0.0, %v5484
        %5486 = vmatmul.bf16.gmra.mxu0 %v4953
        %v5487 = vpop.f32.mrf.mxu0
        %v5488 = vadd.f32 0.0, %v5487
        %v5489 = vpop.f32.mrf.mxu0
        %v5490 = vadd.f32 0.0, %v5489
        %5491 = vmatmul.bf16.gmra.mxu0 %v4955
        %v5492 = vpop.f32.mrf.mxu0
        %v5493 = vadd.f32 0.0, %v5492
        %v5494 = vpop.f32.mrf.mxu0
        %v5495 = vadd.f32 0.0, %v5494
        %5496 = vmatmul.bf16.gmra.mxu0 %v4957
        %v5497 = vpop.f32.mrf.mxu0
        %v5498 = vadd.f32 0.0, %v5497
        %v5499 = vpop.f32.mrf.mxu0
        %v5500 = vadd.f32 0.0, %v5499
        %5501 = vmatmul.bf16.gmra.mxu0 %v4956
        %v5502 = vpop.f32.mrf.mxu0
        %v5503 = vadd.f32 0.0, %v5502
        %v5504 = vpop.f32.mrf.mxu0
        %v5505 = vadd.f32 0.0, %v5504
        %5506 = vdwg.mxu0
        %v5507 = vadd.f32 %v4154, %v5089
        %v5508 = vadd.f32 %v4368, %v5303
        %v5509 = vadd.f32 %v4156, %v5091
        %v5510 = vadd.f32 %v4370, %v5305
        %v5511 = vadd.f32 %v4159, %v5094
        %v5512 = vadd.f32 %v4373, %v5308
        %v5513 = vadd.f32 %v4161, %v5096
        %v5514 = vadd.f32 %v4375, %v5310
        %v5515 = vadd.f32 %v4164, %v5099
        %v5516 = vadd.f32 %v4378, %v5313
        %v5517 = vadd.f32 %v4166, %v5101
        %v5518 = vadd.f32 %v4380, %v5315
        %v5519 = vadd.f32 %v4169, %v5104
        %v5520 = vadd.f32 %v4383, %v5318
        %v5521 = vadd.f32 %v4171, %v5106
        %v5522 = vadd.f32 %v4385, %v5320
        %v5523 = vadd.f32 %v4174, %v5109
        %v5524 = vadd.f32 %v4388, %v5323
        %v5525 = vadd.f32 %v4176, %v5111
        %v5526 = vadd.f32 %v4390, %v5325
        %v5527 = vadd.f32 %v4179, %v5114
        %v5528 = vadd.f32 %v4393, %v5328
        %v5529 = vadd.f32 %v4181, %v5116
        %v5530 = vadd.f32 %v4395, %v5330
        %v5531 = vadd.f32 %v4184, %v5119
        %v5532 = vadd.f32 %v4398, %v5333
        %v5533 = vadd.f32 %v4186, %v5121
        %v5534 = vadd.f32 %v4400, %v5335
        %v5535 = vadd.f32 %v4189, %v5124
        %v5536 = vadd.f32 %v4403, %v5338
        %v5537 = vadd.f32 %v4191, %v5126
        %v5538 = vadd.f32 %v4405, %v5340
        %v5539 = vadd.f32 %v4194, %v5129
        %v5540 = vadd.f32 %v4408, %v5343
        %v5541 = vadd.f32 %v4196, %v5131
        %v5542 = vadd.f32 %v4410, %v5345
        %v5543 = vadd.f32 %v4199, %v5134
        %v5544 = vadd.f32 %v4413, %v5348
        %v5545 = vadd.f32 %v4201, %v5136
        %v5546 = vadd.f32 %v4415, %v5350
        %v5547 = vadd.f32 %v4204, %v5139
        %v5548 = vadd.f32 %v4418, %v5353
        %v5549 = vadd.f32 %v4206, %v5141
        %v5550 = vadd.f32 %v4420, %v5355
        %v5551 = vadd.f32 %v4209, %v5144
        %v5552 = vadd.f32 %v4423, %v5358
        %v5553 = vadd.f32 %v4211, %v5146
        %v5554 = vadd.f32 %v4425, %v5360
        %v5555 = vadd.f32 %v4214, %v5149
        %v5556 = vadd.f32 %v4428, %v5363
        %v5557 = vadd.f32 %v4216, %v5151
        %v5558 = vadd.f32 %v4430, %v5365
        %v5559 = vadd.f32 %v4219, %v5154
        %v5560 = vadd.f32 %v4433, %v5368
        %v5561 = vadd.f32 %v4221, %v5156
        %v5562 = vadd.f32 %v4435, %v5370
        %v5563 = vadd.f32 %v4224, %v5159
        %v5564 = vadd.f32 %v4438, %v5373
        %v5565 = vadd.f32 %v4226, %v5161
        %v5566 = vadd.f32 %v4440, %v5375
        %v5567 = vadd.f32 %v4229, %v5164
        %v5568 = vadd.f32 %v4443, %v5378
        %v5569 = vadd.f32 %v4231, %v5166
        %v5570 = vadd.f32 %v4445, %v5380
        %v5571 = vadd.f32 %v4234, %v5169
        %v5572 = vadd.f32 %v4448, %v5383
        %v5573 = vadd.f32 %v4236, %v5171
        %v5574 = vadd.f32 %v4450, %v5385
        %v5575 = vadd.f32 %v4239, %v5174
        %v5576 = vadd.f32 %v4453, %v5388
        %v5577 = vadd.f32 %v4241, %v5176
        %v5578 = vadd.f32 %v4455, %v5390
        %v5579 = vadd.f32 %v4244, %v5179
        %v5580 = vadd.f32 %v4458, %v5393
        %v5581 = vadd.f32 %v4246, %v5181
        %v5582 = vadd.f32 %v4460, %v5395
        %v5583 = vadd.f32 %v4249, %v5184
        %v5584 = vadd.f32 %v4463, %v5398
        %v5585 = vadd.f32 %v4251, %v5186
        %v5586 = vadd.f32 %v4465, %v5400
        %v5587 = vadd.f32 %v4254, %v5189
        %v5588 = vadd.f32 %v4468, %v5403
        %v5589 = vadd.f32 %v4256, %v5191
        %v5590 = vadd.f32 %v4470, %v5405
        %v5591 = vadd.f32 %v4259, %v5194
        %v5592 = vadd.f32 %v4473, %v5408
        %v5593 = vadd.f32 %v4261, %v5196
        %v5594 = vadd.f32 %v4475, %v5410
        %v5595 = vadd.f32 %v4264, %v5199
        %v5596 = vadd.f32 %v4478, %v5413
        %v5597 = vadd.f32 %v4266, %v5201
        %v5598 = vadd.f32 %v4480, %v5415
        %v5599 = vadd.f32 %v4269, %v5204
        %v5600 = vadd.f32 %v4483, %v5418
        %v5601 = vadd.f32 %v4271, %v5206
        %v5602 = vadd.f32 %v4485, %v5420
        %v5603 = vadd.f32 %v4274, %v5209
        %v5604 = vadd.f32 %v4488, %v5423
        %v5605 = vadd.f32 %v4276, %v5211
        %v5606 = vadd.f32 %v4490, %v5425
        %v5607 = vadd.f32 %v4279, %v5214
        %v5608 = vadd.f32 %v4493, %v5428
        %v5609 = vadd.f32 %v4281, %v5216
        %v5610 = vadd.f32 %v4495, %v5430
        %v5611 = vadd.f32 %v4284, %v5219
        %v5612 = vadd.f32 %v4498, %v5433
        %v5613 = vadd.f32 %v4286, %v5221
        %v5614 = vadd.f32 %v4500, %v5435
        %v5615 = vadd.f32 %v4289, %v5224
        %v5616 = vadd.f32 %v4503, %v5438
        %v5617 = vadd.f32 %v4291, %v5226
        %v5618 = vadd.f32 %v4505, %v5440
        %v5619 = vadd.f32 %v4294, %v5229
        %v5620 = vadd.f32 %v4508, %v5443
        %v5621 = vadd.f32 %v4296, %v5231
        %v5622 = vadd.f32 %v4510, %v5445
        %v5623 = vadd.f32 %v4299, %v5234
        %v5624 = vadd.f32 %v4513, %v5448
        %v5625 = vadd.f32 %v4301, %v5236
        %v5626 = vadd.f32 %v4515, %v5450
        %v5627 = vadd.f32 %v4304, %v5239
        %v5628 = vadd.f32 %v4518, %v5453
        %v5629 = vadd.f32 %v4306, %v5241
        %v5630 = vadd.f32 %v4520, %v5455
        %v5631 = vadd.f32 %v4309, %v5244
        %v5632 = vadd.f32 %v4523, %v5458
        %v5633 = vadd.f32 %v4311, %v5246
        %v5634 = vadd.f32 %v4525, %v5460
        %v5635 = vadd.f32 %v4314, %v5249
        %v5636 = vadd.f32 %v4528, %v5463
        %v5637 = vadd.f32 %v4316, %v5251
        %v5638 = vadd.f32 %v4530, %v5465
        %v5639 = vadd.f32 %v4319, %v5254
        %v5640 = vadd.f32 %v4533, %v5468
        %v5641 = vadd.f32 %v4321, %v5256
        %v5642 = vadd.f32 %v4535, %v5470
        %v5643 = vadd.f32 %v4324, %v5259
        %v5644 = vadd.f32 %v4538, %v5473
        %v5645 = vadd.f32 %v4326, %v5261
        %v5646 = vadd.f32 %v4540, %v5475
        %v5647 = vadd.f32 %v4329, %v5264
        %v5648 = vadd.f32 %v4543, %v5478
        %v5649 = vadd.f32 %v4331, %v5266
        %v5650 = vadd.f32 %v4545, %v5480
        %v5651 = vadd.f32 %v4334, %v5269
        %v5652 = vadd.f32 %v4548, %v5483
        %v5653 = vadd.f32 %v4336, %v5271
        %v5654 = vadd.f32 %v4550, %v5485
        %v5655 = vadd.f32 %v4339, %v5274
        %v5656 = vadd.f32 %v4553, %v5488
        %v5657 = vadd.f32 %v4341, %v5276
        %v5658 = vadd.f32 %v4555, %v5490
        %v5659 = vadd.f32 %v4344, %v5279
        %v5660 = vadd.f32 %v4558, %v5493
        %v5661 = vadd.f32 %v4346, %v5281
        %v5662 = vadd.f32 %v4560, %v5495
        %v5663 = vadd.f32 %v4349, %v5284
        %v5664 = vadd.f32 %v4563, %v5498
        %v5665 = vadd.f32 %v4351, %v5286
        %v5666 = vadd.f32 %v4565, %v5500
        %v5667 = vadd.f32 %v4354, %v5289
        %v5668 = vadd.f32 %v4568, %v5503
        %v5669 = vadd.f32 %v4356, %v5291
        %v5670 = vadd.f32 %v4570, %v5505
        %v5671 = vld [vmem:[#allocation2 + $0x150] sm:$0x7]
        %s5672 = scalar_lea.vmem [#allocation8], 384
        %v5673 = vld [vmem:[%s5672] sm:$0xff]
        %v5674 = vld [vmem:[%s5672 + $0x8] sm:$0xff]
        %v5675 = vld [vmem:[%s5672 + $0x10] sm:$0xff]
        %v5676 = vld [vmem:[%s5672 + $0x18] sm:$0xff]
        %v5677 = vld [vmem:[%s5672 + $0x20] sm:$0xff]
        %v5678 = vld [vmem:[%s5672 + $0x28] sm:$0xff]
        %v5679 = vld [vmem:[%s5672 + $0x30] sm:$0xff]
        %v5680 = vld [vmem:[%s5672 + $0x38] sm:$0xff]
        %v5681 = vld [vmem:[%s5672 + $0x40] sm:$0xff]
        %v5682 = vld [vmem:[%s5672 + $0x48] sm:$0xff]
        %v5683 = vld [vmem:[%s5672 + $0x50] sm:$0xff]
        %v5684 = vld [vmem:[%s5672 + $0x58] sm:$0xff]
        %v5685 = vld [vmem:[%s5672 + $0x60] sm:$0xff]
        %v5686 = vld [vmem:[%s5672 + $0x68] sm:$0xff]
        %v5687 = vld [vmem:[%s5672 + $0x70] sm:$0xff]
        %v5688 = vld [vmem:[%s5672 + $0x78] sm:$0xff]
        %v5690 = vunpack.c.l.b16 %v5671
        %v5691 = vpack.c.b16 %v5690, %v4833
        %vm5692 = vsmask.f32 6400
        %v5694 = vshrl.u32 %v4835, 16
        %v5696 = vrot.slane %v5694, 1
        %v5697 = vshll.u32 %v4835, 16
        %v5699 = vrot.slane %v5697, 2
        %v5700 = vor.u32 %v5696, %v5699
        %v5702 = vshrl.u32 %v4836, 16
        %v5704 = vrot.slane %v5702, 1
        %v5705 = vshll.u32 %v4836, 16
        %v5707 = vrot.slane %v5705, 2
        %v5708 = vor.u32 %v5704, %v5707
        %v5709 = vsel %vm5692, %v5700, %v5708
        %v5711 = vshrl.u32 %v4837, 16
        %v5713 = vrot.slane %v5711, 1
        %v5714 = vshll.u32 %v4837, 16
        %v5716 = vrot.slane %v5714, 2
        %v5717 = vor.u32 %v5713, %v5716
        %v5718 = vsel %vm5692, %v5708, %v5717
        %v5720 = vshrl.u32 %v4838, 16
        %v5722 = vrot.slane %v5720, 1
        %v5723 = vshll.u32 %v4838, 16
        %v5725 = vrot.slane %v5723, 2
        %v5726 = vor.u32 %v5722, %v5725
        %v5727 = vsel %vm5692, %v5717, %v5726
        %v5729 = vshrl.u32 %v4839, 16
        %v5731 = vrot.slane %v5729, 1
        %v5732 = vshll.u32 %v4839, 16
        %v5734 = vrot.slane %v5732, 2
        %v5735 = vor.u32 %v5731, %v5734
        %v5736 = vsel %vm5692, %v5726, %v5735
        %v5738 = vshrl.u32 %v4840, 16
        %v5740 = vrot.slane %v5738, 1
        %v5741 = vshll.u32 %v4840, 16
        %v5743 = vrot.slane %v5741, 2
        %v5744 = vor.u32 %v5740, %v5743
        %v5745 = vsel %vm5692, %v5735, %v5744
        %v5747 = vshrl.u32 %v4841, 16
        %v5749 = vrot.slane %v5747, 1
        %v5750 = vshll.u32 %v4841, 16
        %v5752 = vrot.slane %v5750, 2
        %v5753 = vor.u32 %v5749, %v5752
        %v5754 = vsel %vm5692, %v5744, %v5753
        %v5756 = vshrl.u32 %v4842, 16
        %v5758 = vrot.slane %v5756, 1
        %v5759 = vshll.u32 %v4842, 16
        %v5761 = vrot.slane %v5759, 2
        %v5762 = vor.u32 %v5758, %v5761
        %v5763 = vsel %vm5692, %v5753, %v5762
        %v5765 = vshrl.u32 %v4843, 16
        %v5767 = vrot.slane %v5765, 1
        %v5768 = vshll.u32 %v4843, 16
        %v5770 = vrot.slane %v5768, 2
        %v5771 = vor.u32 %v5767, %v5770
        %v5772 = vsel %vm5692, %v5762, %v5771
        %v5774 = vshrl.u32 %v4844, 16
        %v5776 = vrot.slane %v5774, 1
        %v5777 = vshll.u32 %v4844, 16
        %v5779 = vrot.slane %v5777, 2
        %v5780 = vor.u32 %v5776, %v5779
        %v5781 = vsel %vm5692, %v5771, %v5780
        %v5783 = vshrl.u32 %v4845, 16
        %v5785 = vrot.slane %v5783, 1
        %v5786 = vshll.u32 %v4845, 16
        %v5788 = vrot.slane %v5786, 2
        %v5789 = vor.u32 %v5785, %v5788
        %v5790 = vsel %vm5692, %v5780, %v5789
        %v5792 = vshrl.u32 %v4846, 16
        %v5794 = vrot.slane %v5792, 1
        %v5795 = vshll.u32 %v4846, 16
        %v5797 = vrot.slane %v5795, 2
        %v5798 = vor.u32 %v5794, %v5797
        %v5799 = vsel %vm5692, %v5789, %v5798
        %v5801 = vshrl.u32 %v4847, 16
        %v5803 = vrot.slane %v5801, 1
        %v5804 = vshll.u32 %v4847, 16
        %v5806 = vrot.slane %v5804, 2
        %v5807 = vor.u32 %v5803, %v5806
        %v5808 = vsel %vm5692, %v5798, %v5807
        %v5810 = vshrl.u32 %v4848, 16
        %v5812 = vrot.slane %v5810, 1
        %v5813 = vshll.u32 %v4848, 16
        %v5815 = vrot.slane %v5813, 2
        %v5816 = vor.u32 %v5812, %v5815
        %v5817 = vsel %vm5692, %v5807, %v5816
        %v5819 = vshrl.u32 %v4849, 16
        %v5821 = vrot.slane %v5819, 1
        %v5822 = vshll.u32 %v4849, 16
        %v5824 = vrot.slane %v5822, 2
        %v5825 = vor.u32 %v5821, %v5824
        %v5826 = vsel %vm5692, %v5816, %v5825
        %v5828 = vshrl.u32 %v4850, 16
        %v5830 = vrot.slane %v5828, 1
        %v5831 = vshll.u32 %v4850, 16
        %v5833 = vrot.slane %v5831, 2
        %v5834 = vor.u32 %v5830, %v5833
        %v5835 = vsel %vm5692, %v5825, %v5834
        %v5837 = vshrl.u32 %v4851, 16
        %v5839 = vrot.slane %v5837, 1
        %v5840 = vshll.u32 %v4851, 16
        %v5842 = vrot.slane %v5840, 2
        %v5843 = vor.u32 %v5839, %v5842
        %v5844 = vsel %vm5692, %v5834, %v5843
        %v5846 = vshrl.u32 %v4852, 16
        %v5848 = vrot.slane %v5846, 1
        %v5849 = vshll.u32 %v4852, 16
        %v5851 = vrot.slane %v5849, 2
        %v5852 = vor.u32 %v5848, %v5851
        %v5853 = vsel %vm5692, %v5843, %v5852
        %v5855 = vshrl.u32 %v4853, 16
        %v5857 = vrot.slane %v5855, 1
        %v5858 = vshll.u32 %v4853, 16
        %v5860 = vrot.slane %v5858, 2
        %v5861 = vor.u32 %v5857, %v5860
        %v5862 = vsel %vm5692, %v5852, %v5861
        %v5864 = vshrl.u32 %v4854, 16
        %v5866 = vrot.slane %v5864, 1
        %v5867 = vshll.u32 %v4854, 16
        %v5869 = vrot.slane %v5867, 2
        %v5870 = vor.u32 %v5866, %v5869
        %v5871 = vsel %vm5692, %v5861, %v5870
        %v5873 = vshrl.u32 %v4855, 16
        %v5875 = vrot.slane %v5873, 1
        %v5876 = vshll.u32 %v4855, 16
        %v5878 = vrot.slane %v5876, 2
        %v5879 = vor.u32 %v5875, %v5878
        %v5880 = vsel %vm5692, %v5870, %v5879
        %v5882 = vshrl.u32 %v4856, 16
        %v5884 = vrot.slane %v5882, 1
        %v5885 = vshll.u32 %v4856, 16
        %v5887 = vrot.slane %v5885, 2
        %v5888 = vor.u32 %v5884, %v5887
        %v5889 = vsel %vm5692, %v5879, %v5888
        %v5891 = vshrl.u32 %v4857, 16
        %v5893 = vrot.slane %v5891, 1
        %v5894 = vshll.u32 %v4857, 16
        %v5896 = vrot.slane %v5894, 2
        %v5897 = vor.u32 %v5893, %v5896
        %v5898 = vsel %vm5692, %v5888, %v5897
        %v5900 = vshrl.u32 %v4858, 16
        %v5902 = vrot.slane %v5900, 1
        %v5903 = vshll.u32 %v4858, 16
        %v5905 = vrot.slane %v5903, 2
        %v5906 = vor.u32 %v5902, %v5905
        %v5907 = vsel %vm5692, %v5897, %v5906
        %v5909 = vshrl.u32 %v4859, 16
        %v5911 = vrot.slane %v5909, 1
        %v5912 = vshll.u32 %v4859, 16
        %v5914 = vrot.slane %v5912, 2
        %v5915 = vor.u32 %v5911, %v5914
        %v5916 = vsel %vm5692, %v5906, %v5915
        %v5918 = vshrl.u32 %v4860, 16
        %v5920 = vrot.slane %v5918, 1
        %v5921 = vshll.u32 %v4860, 16
        %v5923 = vrot.slane %v5921, 2
        %v5924 = vor.u32 %v5920, %v5923
        %v5925 = vsel %vm5692, %v5915, %v5924
        %v5927 = vshrl.u32 %v4861, 16
        %v5929 = vrot.slane %v5927, 1
        %v5930 = vshll.u32 %v4861, 16
        %v5932 = vrot.slane %v5930, 2
        %v5933 = vor.u32 %v5929, %v5932
        %v5934 = vsel %vm5692, %v5924, %v5933
        %v5936 = vshrl.u32 %v4862, 16
        %v5938 = vrot.slane %v5936, 1
        %v5939 = vshll.u32 %v4862, 16
        %v5941 = vrot.slane %v5939, 2
        %v5942 = vor.u32 %v5938, %v5941
        %v5943 = vsel %vm5692, %v5933, %v5942
        %v5945 = vshrl.u32 %v4863, 16
        %v5947 = vrot.slane %v5945, 1
        %v5948 = vshll.u32 %v4863, 16
        %v5950 = vrot.slane %v5948, 2
        %v5951 = vor.u32 %v5947, %v5950
        %v5952 = vsel %vm5692, %v5942, %v5951
        %v5954 = vshrl.u32 %v4864, 16
        %v5956 = vrot.slane %v5954, 1
        %v5957 = vshll.u32 %v4864, 16
        %v5959 = vrot.slane %v5957, 2
        %v5960 = vor.u32 %v5956, %v5959
        %v5961 = vsel %vm5692, %v5951, %v5960
        %v5963 = vshrl.u32 %v4865, 16
        %v5965 = vrot.slane %v5963, 1
        %v5966 = vshll.u32 %v4865, 16
        %v5968 = vrot.slane %v5966, 2
        %v5969 = vor.u32 %v5965, %v5968
        %v5970 = vsel %vm5692, %v5960, %v5969
        %v5972 = vshrl.u32 %v4866, 16
        %v5974 = vrot.slane %v5972, 1
        %v5975 = vshll.u32 %v4866, 16
        %v5977 = vrot.slane %v5975, 2
        %v5978 = vor.u32 %v5974, %v5977
        %v5979 = vsel %vm5692, %v5969, %v5978
        %v5981 = vshrl.u32 %v4867, 16
        %v5983 = vrot.slane %v5981, 1
        %v5984 = vshll.u32 %v4867, 16
        %v5986 = vrot.slane %v5984, 2
        %v5987 = vor.u32 %v5983, %v5986
        %v5988 = vsel %vm5692, %v5978, %v5987
        %v5990 = vshrl.u32 %v4868, 16
        %v5992 = vrot.slane %v5990, 1
        %v5993 = vshll.u32 %v4868, 16
        %v5995 = vrot.slane %v5993, 2
        %v5996 = vor.u32 %v5992, %v5995
        %v5997 = vsel %vm5692, %v5987, %v5996
        %v5999 = vshrl.u32 %v4869, 16
        %v6001 = vrot.slane %v5999, 1
        %v6002 = vshll.u32 %v4869, 16
        %v6004 = vrot.slane %v6002, 2
        %v6005 = vor.u32 %v6001, %v6004
        %v6006 = vsel %vm5692, %v5996, %v6005
        %v6008 = vshrl.u32 %v4870, 16
        %v6010 = vrot.slane %v6008, 1
        %v6011 = vshll.u32 %v4870, 16
        %v6013 = vrot.slane %v6011, 2
        %v6014 = vor.u32 %v6010, %v6013
        %v6015 = vsel %vm5692, %v6005, %v6014
        %v6017 = vshrl.u32 %v4871, 16
        %v6019 = vrot.slane %v6017, 1
        %v6020 = vshll.u32 %v4871, 16
        %v6022 = vrot.slane %v6020, 2
        %v6023 = vor.u32 %v6019, %v6022
        %v6024 = vsel %vm5692, %v6014, %v6023
        %v6026 = vshrl.u32 %v4872, 16
        %v6028 = vrot.slane %v6026, 1
        %v6029 = vshll.u32 %v4872, 16
        %v6031 = vrot.slane %v6029, 2
        %v6032 = vor.u32 %v6028, %v6031
        %v6033 = vsel %vm5692, %v6023, %v6032
        %v6035 = vshrl.u32 %v4873, 16
        %v6037 = vrot.slane %v6035, 1
        %v6038 = vshll.u32 %v4873, 16
        %v6040 = vrot.slane %v6038, 2
        %v6041 = vor.u32 %v6037, %v6040
        %v6042 = vsel %vm5692, %v6032, %v6041
        %v6044 = vshrl.u32 %v4874, 16
        %v6046 = vrot.slane %v6044, 1
        %v6047 = vshll.u32 %v4874, 16
        %v6049 = vrot.slane %v6047, 2
        %v6050 = vor.u32 %v6046, %v6049
        %v6051 = vsel %vm5692, %v6041, %v6050
        %v6053 = vshrl.u32 %v5691, 16
        %v6055 = vrot.slane %v6053, 1
        %v6056 = vshll.u32 %v5691, 16
        %v6058 = vrot.slane %v6056, 2
        %v6059 = vor.u32 %v6055, %v6058
        %v6060 = vsel %vm5692, %v6050, %v6059
        %v6118 = vunpack.c.l.b16 %v5673
        %v6119 = vunpack.c.h.b16 %v5673
        %v6120 = vunpack.c.l.b16 %v5674
        %v6121 = vunpack.c.h.b16 %v5674
        %v6122 = vunpack.c.l.b16 %v5675
        %v6123 = vunpack.c.h.b16 %v5675
        %v6124 = vunpack.c.l.b16 %v5676
        %v6125 = vunpack.c.h.b16 %v5676
        %v6126 = vunpack.c.l.b16 %v5677
        %v6127 = vunpack.c.h.b16 %v5677
        %v6128 = vunpack.c.l.b16 %v5678
        %v6129 = vunpack.c.h.b16 %v5678
        %v6130 = vunpack.c.l.b16 %v5679
        %v6131 = vunpack.c.h.b16 %v5679
        %v6132 = vunpack.c.l.b16 %v5680
        %v6133 = vunpack.c.h.b16 %v5680
        %v6134 = vunpack.c.l.b16 %v5681
        %v6135 = vunpack.c.h.b16 %v5681
        %v6136 = vunpack.c.l.b16 %v5682
        %v6137 = vunpack.c.h.b16 %v5682
        %v6138 = vunpack.c.l.b16 %v5683
        %v6139 = vunpack.c.h.b16 %v5683
        %v6140 = vunpack.c.l.b16 %v5684
        %v6141 = vunpack.c.h.b16 %v5684
        %v6142 = vunpack.c.l.b16 %v5685
        %v6143 = vunpack.c.h.b16 %v5685
        %v6144 = vunpack.c.l.b16 %v5686
        %v6145 = vunpack.c.h.b16 %v5686
        %v6146 = vunpack.c.l.b16 %v5687
        %v6147 = vunpack.c.h.b16 %v5687
        %v6148 = vunpack.c.l.b16 %v5688
        %v6149 = vunpack.c.h.b16 %v5688
        %v6150 = vpack.c.b16 %v6120, %v6118
        %v6151 = vpack.c.b16 %v6121, %v6119
        %v6152 = vpack.c.b16 %v6124, %v6122
        %v6153 = vpack.c.b16 %v6125, %v6123
        %v6154 = vpack.c.b16 %v6128, %v6126
        %v6155 = vpack.c.b16 %v6129, %v6127
        %v6156 = vpack.c.b16 %v6132, %v6130
        %v6157 = vpack.c.b16 %v6133, %v6131
        %v6158 = vpack.c.b16 %v6136, %v6134
        %v6159 = vpack.c.b16 %v6137, %v6135
        %v6160 = vpack.c.b16 %v6140, %v6138
        %v6161 = vpack.c.b16 %v6141, %v6139
        %v6162 = vpack.c.b16 %v6144, %v6142
        %v6163 = vpack.c.b16 %v6145, %v6143
        %v6164 = vpack.c.b16 %v6148, %v6146
        %v6165 = vpack.c.b16 %v6149, %v6147
        %6182 = vmatpush.bf16.msra.mxu0 %v6164
        %6183 = vmatpush.bf16.msra.mxu0 %v6162
        %6184 = vmatpush.bf16.msra.mxu0 %v6160
        %6185 = vmatpush.bf16.msra.mxu0 %v6158
        %6186 = vmatpush.bf16.msra.mxu0 %v6156
        %6187 = vmatpush.bf16.msra.mxu0 %v6154
        %6188 = vmatpush.bf16.msra.mxu0 %v6152
        %6189 = vmatpush.bf16.msra.mxu0 %v6150
        %6190 = vmatmul.bf16.gmra.mxu0 %v5709
        %v6191 = vpop.f32.mrf.mxu0
        %v6192 = vadd.f32 0.0, %v6191
        %v6193 = vpop.f32.mrf.mxu0
        %v6194 = vadd.f32 0.0, %v6193
        %6195 = vmatmul.bf16.gmra.mxu0 %v5718
        %v6196 = vpop.f32.mrf.mxu0
        %v6197 = vadd.f32 0.0, %v6196
        %v6198 = vpop.f32.mrf.mxu0
        %v6199 = vadd.f32 0.0, %v6198
        %6200 = vmatmul.bf16.gmra.mxu0 %v5727
        %v6201 = vpop.f32.mrf.mxu0
        %v6202 = vadd.f32 0.0, %v6201
        %v6203 = vpop.f32.mrf.mxu0
        %v6204 = vadd.f32 0.0, %v6203
        %6205 = vmatmul.bf16.gmra.mxu0 %v5736
        %v6206 = vpop.f32.mrf.mxu0
        %v6207 = vadd.f32 0.0, %v6206
        %v6208 = vpop.f32.mrf.mxu0
        %v6209 = vadd.f32 0.0, %v6208
        %6210 = vmatmul.bf16.gmra.mxu0 %v5745
        %v6211 = vpop.f32.mrf.mxu0
        %v6212 = vadd.f32 0.0, %v6211
        %v6213 = vpop.f32.mrf.mxu0
        %v6214 = vadd.f32 0.0, %v6213
        %6215 = vmatmul.bf16.gmra.mxu0 %v5754
        %v6216 = vpop.f32.mrf.mxu0
        %v6217 = vadd.f32 0.0, %v6216
        %v6218 = vpop.f32.mrf.mxu0
        %v6219 = vadd.f32 0.0, %v6218
        %6220 = vmatmul.bf16.gmra.mxu0 %v5763
        %v6221 = vpop.f32.mrf.mxu0
        %v6222 = vadd.f32 0.0, %v6221
        %v6223 = vpop.f32.mrf.mxu0
        %v6224 = vadd.f32 0.0, %v6223
        %6225 = vmatmul.bf16.gmra.mxu0 %v5772
        %v6226 = vpop.f32.mrf.mxu0
        %v6227 = vadd.f32 0.0, %v6226
        %v6228 = vpop.f32.mrf.mxu0
        %v6229 = vadd.f32 0.0, %v6228
        %6230 = vmatmul.bf16.gmra.mxu0 %v5781
        %v6231 = vpop.f32.mrf.mxu0
        %v6232 = vadd.f32 0.0, %v6231
        %v6233 = vpop.f32.mrf.mxu0
        %v6234 = vadd.f32 0.0, %v6233
        %6235 = vmatmul.bf16.gmra.mxu0 %v5790
        %v6236 = vpop.f32.mrf.mxu0
        %v6237 = vadd.f32 0.0, %v6236
        %v6238 = vpop.f32.mrf.mxu0
        %v6239 = vadd.f32 0.0, %v6238
        %6240 = vmatmul.bf16.gmra.mxu0 %v5799
        %v6241 = vpop.f32.mrf.mxu0
        %v6242 = vadd.f32 0.0, %v6241
        %v6243 = vpop.f32.mrf.mxu0
        %v6244 = vadd.f32 0.0, %v6243
        %6245 = vmatmul.bf16.gmra.mxu0 %v5808
        %v6246 = vpop.f32.mrf.mxu0
        %v6247 = vadd.f32 0.0, %v6246
        %v6248 = vpop.f32.mrf.mxu0
        %v6249 = vadd.f32 0.0, %v6248
        %6250 = vmatmul.bf16.gmra.mxu0 %v5817
        %v6251 = vpop.f32.mrf.mxu0
        %v6252 = vadd.f32 0.0, %v6251
        %v6253 = vpop.f32.mrf.mxu0
        %v6254 = vadd.f32 0.0, %v6253
        %6255 = vmatmul.bf16.gmra.mxu0 %v5826
        %v6256 = vpop.f32.mrf.mxu0
        %v6257 = vadd.f32 0.0, %v6256
        %v6258 = vpop.f32.mrf.mxu0
        %v6259 = vadd.f32 0.0, %v6258
        %6260 = vmatmul.bf16.gmra.mxu0 %v5835
        %v6261 = vpop.f32.mrf.mxu0
        %v6262 = vadd.f32 0.0, %v6261
        %v6263 = vpop.f32.mrf.mxu0
        %v6264 = vadd.f32 0.0, %v6263
        %6265 = vmatmul.bf16.gmra.mxu0 %v5844
        %v6266 = vpop.f32.mrf.mxu0
        %v6267 = vadd.f32 0.0, %v6266
        %v6268 = vpop.f32.mrf.mxu0
        %v6269 = vadd.f32 0.0, %v6268
        %6270 = vmatmul.bf16.gmra.mxu0 %v5853
        %v6271 = vpop.f32.mrf.mxu0
        %v6272 = vadd.f32 0.0, %v6271
        %v6273 = vpop.f32.mrf.mxu0
        %v6274 = vadd.f32 0.0, %v6273
        %6275 = vmatmul.bf16.gmra.mxu0 %v5862
        %v6276 = vpop.f32.mrf.mxu0
        %v6277 = vadd.f32 0.0, %v6276
        %v6278 = vpop.f32.mrf.mxu0
        %v6279 = vadd.f32 0.0, %v6278
        %6280 = vmatmul.bf16.gmra.mxu0 %v5871
        %v6281 = vpop.f32.mrf.mxu0
        %v6282 = vadd.f32 0.0, %v6281
        %v6283 = vpop.f32.mrf.mxu0
        %v6284 = vadd.f32 0.0, %v6283
        %6285 = vmatmul.bf16.gmra.mxu0 %v5880
        %v6286 = vpop.f32.mrf.mxu0
        %v6287 = vadd.f32 0.0, %v6286
        %v6288 = vpop.f32.mrf.mxu0
        %v6289 = vadd.f32 0.0, %v6288
        %6290 = vmatmul.bf16.gmra.mxu0 %v5889
        %v6291 = vpop.f32.mrf.mxu0
        %v6292 = vadd.f32 0.0, %v6291
        %v6293 = vpop.f32.mrf.mxu0
        %v6294 = vadd.f32 0.0, %v6293
        %6295 = vmatmul.bf16.gmra.mxu0 %v5898
        %v6296 = vpop.f32.mrf.mxu0
        %v6297 = vadd.f32 0.0, %v6296
        %v6298 = vpop.f32.mrf.mxu0
        %v6299 = vadd.f32 0.0, %v6298
        %6300 = vmatmul.bf16.gmra.mxu0 %v5907
        %v6301 = vpop.f32.mrf.mxu0
        %v6302 = vadd.f32 0.0, %v6301
        %v6303 = vpop.f32.mrf.mxu0
        %v6304 = vadd.f32 0.0, %v6303
        %6305 = vmatmul.bf16.gmra.mxu0 %v5916
        %v6306 = vpop.f32.mrf.mxu0
        %v6307 = vadd.f32 0.0, %v6306
        %v6308 = vpop.f32.mrf.mxu0
        %v6309 = vadd.f32 0.0, %v6308
        %6310 = vmatmul.bf16.gmra.mxu0 %v5925
        %v6311 = vpop.f32.mrf.mxu0
        %v6312 = vadd.f32 0.0, %v6311
        %v6313 = vpop.f32.mrf.mxu0
        %v6314 = vadd.f32 0.0, %v6313
        %6315 = vmatmul.bf16.gmra.mxu0 %v5934
        %v6316 = vpop.f32.mrf.mxu0
        %v6317 = vadd.f32 0.0, %v6316
        %v6318 = vpop.f32.mrf.mxu0
        %v6319 = vadd.f32 0.0, %v6318
        %6320 = vmatmul.bf16.gmra.mxu0 %v5943
        %v6321 = vpop.f32.mrf.mxu0
        %v6322 = vadd.f32 0.0, %v6321
        %v6323 = vpop.f32.mrf.mxu0
        %v6324 = vadd.f32 0.0, %v6323
        %6325 = vmatmul.bf16.gmra.mxu0 %v5952
        %v6326 = vpop.f32.mrf.mxu0
        %v6327 = vadd.f32 0.0, %v6326
        %v6328 = vpop.f32.mrf.mxu0
        %v6329 = vadd.f32 0.0, %v6328
        %6330 = vmatmul.bf16.gmra.mxu0 %v5961
        %v6331 = vpop.f32.mrf.mxu0
        %v6332 = vadd.f32 0.0, %v6331
        %v6333 = vpop.f32.mrf.mxu0
        %v6334 = vadd.f32 0.0, %v6333
        %6335 = vmatmul.bf16.gmra.mxu0 %v5970
        %v6336 = vpop.f32.mrf.mxu0
        %v6337 = vadd.f32 0.0, %v6336
        %v6338 = vpop.f32.mrf.mxu0
        %v6339 = vadd.f32 0.0, %v6338
        %6340 = vmatmul.bf16.gmra.mxu0 %v5979
        %v6341 = vpop.f32.mrf.mxu0
        %v6342 = vadd.f32 0.0, %v6341
        %v6343 = vpop.f32.mrf.mxu0
        %v6344 = vadd.f32 0.0, %v6343
        %6345 = vmatmul.bf16.gmra.mxu0 %v5988
        %v6346 = vpop.f32.mrf.mxu0
        %v6347 = vadd.f32 0.0, %v6346
        %v6348 = vpop.f32.mrf.mxu0
        %v6349 = vadd.f32 0.0, %v6348
        %6350 = vmatmul.bf16.gmra.mxu0 %v5997
        %v6351 = vpop.f32.mrf.mxu0
        %v6352 = vadd.f32 0.0, %v6351
        %v6353 = vpop.f32.mrf.mxu0
        %v6354 = vadd.f32 0.0, %v6353
        %6355 = vmatmul.bf16.gmra.mxu0 %v6006
        %v6356 = vpop.f32.mrf.mxu0
        %v6357 = vadd.f32 0.0, %v6356
        %v6358 = vpop.f32.mrf.mxu0
        %v6359 = vadd.f32 0.0, %v6358
        %6360 = vmatmul.bf16.gmra.mxu0 %v6015
        %v6361 = vpop.f32.mrf.mxu0
        %v6362 = vadd.f32 0.0, %v6361
        %v6363 = vpop.f32.mrf.mxu0
        %v6364 = vadd.f32 0.0, %v6363
        %6365 = vmatmul.bf16.gmra.mxu0 %v6024
        %v6366 = vpop.f32.mrf.mxu0
        %v6367 = vadd.f32 0.0, %v6366
        %v6368 = vpop.f32.mrf.mxu0
        %v6369 = vadd.f32 0.0, %v6368
        %6370 = vmatmul.bf16.gmra.mxu0 %v6033
        %v6371 = vpop.f32.mrf.mxu0
        %v6372 = vadd.f32 0.0, %v6371
        %v6373 = vpop.f32.mrf.mxu0
        %v6374 = vadd.f32 0.0, %v6373
        %6375 = vmatmul.bf16.gmra.mxu0 %v6042
        %v6376 = vpop.f32.mrf.mxu0
        %v6377 = vadd.f32 0.0, %v6376
        %v6378 = vpop.f32.mrf.mxu0
        %v6379 = vadd.f32 0.0, %v6378
        %6380 = vmatmul.bf16.gmra.mxu0 %v6051
        %v6381 = vpop.f32.mrf.mxu0
        %v6382 = vadd.f32 0.0, %v6381
        %v6383 = vpop.f32.mrf.mxu0
        %v6384 = vadd.f32 0.0, %v6383
        %6385 = vmatmul.bf16.gmra.mxu0 %v6060
        %v6386 = vpop.f32.mrf.mxu0
        %v6387 = vadd.f32 0.0, %v6386
        %v6388 = vpop.f32.mrf.mxu0
        %v6389 = vadd.f32 0.0, %v6388
        %6390 = vmatmul.bf16.gmra.mxu0 %v6059
        %v6391 = vpop.f32.mrf.mxu0
        %v6392 = vadd.f32 0.0, %v6391
        %v6393 = vpop.f32.mrf.mxu0
        %v6394 = vadd.f32 0.0, %v6393
        %6395 = vdwg.mxu0
        %6396 = vmatpush.bf16.msra.mxu0 %v6165
        %6397 = vmatpush.bf16.msra.mxu0 %v6163
        %6398 = vmatpush.bf16.msra.mxu0 %v6161
        %6399 = vmatpush.bf16.msra.mxu0 %v6159
        %6400 = vmatpush.bf16.msra.mxu0 %v6157
        %6401 = vmatpush.bf16.msra.mxu0 %v6155
        %6402 = vmatpush.bf16.msra.mxu0 %v6153
        %6403 = vmatpush.bf16.msra.mxu0 %v6151
        %6404 = vmatmul.bf16.gmra.mxu0 %v5709
        %v6405 = vpop.f32.mrf.mxu0
        %v6406 = vadd.f32 0.0, %v6405
        %v6407 = vpop.f32.mrf.mxu0
        %v6408 = vadd.f32 0.0, %v6407
        %6409 = vmatmul.bf16.gmra.mxu0 %v5718
        %v6410 = vpop.f32.mrf.mxu0
        %v6411 = vadd.f32 0.0, %v6410
        %v6412 = vpop.f32.mrf.mxu0
        %v6413 = vadd.f32 0.0, %v6412
        %6414 = vmatmul.bf16.gmra.mxu0 %v5727
        %v6415 = vpop.f32.mrf.mxu0
        %v6416 = vadd.f32 0.0, %v6415
        %v6417 = vpop.f32.mrf.mxu0
        %v6418 = vadd.f32 0.0, %v6417
        %6419 = vmatmul.bf16.gmra.mxu0 %v5736
        %v6420 = vpop.f32.mrf.mxu0
        %v6421 = vadd.f32 0.0, %v6420
        %v6422 = vpop.f32.mrf.mxu0
        %v6423 = vadd.f32 0.0, %v6422
        %6424 = vmatmul.bf16.gmra.mxu0 %v5745
        %v6425 = vpop.f32.mrf.mxu0
        %v6426 = vadd.f32 0.0, %v6425
        %v6427 = vpop.f32.mrf.mxu0
        %v6428 = vadd.f32 0.0, %v6427
        %6429 = vmatmul.bf16.gmra.mxu0 %v5754
        %v6430 = vpop.f32.mrf.mxu0
        %v6431 = vadd.f32 0.0, %v6430
        %v6432 = vpop.f32.mrf.mxu0
        %v6433 = vadd.f32 0.0, %v6432
        %6434 = vmatmul.bf16.gmra.mxu0 %v5763
        %v6435 = vpop.f32.mrf.mxu0
        %v6436 = vadd.f32 0.0, %v6435
        %v6437 = vpop.f32.mrf.mxu0
        %v6438 = vadd.f32 0.0, %v6437
        %6439 = vmatmul.bf16.gmra.mxu0 %v5772
        %v6440 = vpop.f32.mrf.mxu0
        %v6441 = vadd.f32 0.0, %v6440
        %v6442 = vpop.f32.mrf.mxu0
        %v6443 = vadd.f32 0.0, %v6442
        %6444 = vmatmul.bf16.gmra.mxu0 %v5781
        %v6445 = vpop.f32.mrf.mxu0
        %v6446 = vadd.f32 0.0, %v6445
        %v6447 = vpop.f32.mrf.mxu0
        %v6448 = vadd.f32 0.0, %v6447
        %6449 = vmatmul.bf16.gmra.mxu0 %v5790
        %v6450 = vpop.f32.mrf.mxu0
        %v6451 = vadd.f32 0.0, %v6450
        %v6452 = vpop.f32.mrf.mxu0
        %v6453 = vadd.f32 0.0, %v6452
        %6454 = vmatmul.bf16.gmra.mxu0 %v5799
        %v6455 = vpop.f32.mrf.mxu0
        %v6456 = vadd.f32 0.0, %v6455
        %v6457 = vpop.f32.mrf.mxu0
        %v6458 = vadd.f32 0.0, %v6457
        %6459 = vmatmul.bf16.gmra.mxu0 %v5808
        %v6460 = vpop.f32.mrf.mxu0
        %v6461 = vadd.f32 0.0, %v6460
        %v6462 = vpop.f32.mrf.mxu0
        %v6463 = vadd.f32 0.0, %v6462
        %6464 = vmatmul.bf16.gmra.mxu0 %v5817
        %v6465 = vpop.f32.mrf.mxu0
        %v6466 = vadd.f32 0.0, %v6465
        %v6467 = vpop.f32.mrf.mxu0
        %v6468 = vadd.f32 0.0, %v6467
        %6469 = vmatmul.bf16.gmra.mxu0 %v5826
        %v6470 = vpop.f32.mrf.mxu0
        %v6471 = vadd.f32 0.0, %v6470
        %v6472 = vpop.f32.mrf.mxu0
        %v6473 = vadd.f32 0.0, %v6472
        %6474 = vmatmul.bf16.gmra.mxu0 %v5835
        %v6475 = vpop.f32.mrf.mxu0
        %v6476 = vadd.f32 0.0, %v6475
        %v6477 = vpop.f32.mrf.mxu0
        %v6478 = vadd.f32 0.0, %v6477
        %6479 = vmatmul.bf16.gmra.mxu0 %v5844
        %v6480 = vpop.f32.mrf.mxu0
        %v6481 = vadd.f32 0.0, %v6480
        %v6482 = vpop.f32.mrf.mxu0
        %v6483 = vadd.f32 0.0, %v6482
        %6484 = vmatmul.bf16.gmra.mxu0 %v5853
        %v6485 = vpop.f32.mrf.mxu0
        %v6486 = vadd.f32 0.0, %v6485
        %v6487 = vpop.f32.mrf.mxu0
        %v6488 = vadd.f32 0.0, %v6487
        %6489 = vmatmul.bf16.gmra.mxu0 %v5862
        %v6490 = vpop.f32.mrf.mxu0
        %v6491 = vadd.f32 0.0, %v6490
        %v6492 = vpop.f32.mrf.mxu0
        %v6493 = vadd.f32 0.0, %v6492
        %6494 = vmatmul.bf16.gmra.mxu0 %v5871
        %v6495 = vpop.f32.mrf.mxu0
        %v6496 = vadd.f32 0.0, %v6495
        %v6497 = vpop.f32.mrf.mxu0
        %v6498 = vadd.f32 0.0, %v6497
        %6499 = vmatmul.bf16.gmra.mxu0 %v5880
        %v6500 = vpop.f32.mrf.mxu0
        %v6501 = vadd.f32 0.0, %v6500
        %v6502 = vpop.f32.mrf.mxu0
        %v6503 = vadd.f32 0.0, %v6502
        %6504 = vmatmul.bf16.gmra.mxu0 %v5889
        %v6505 = vpop.f32.mrf.mxu0
        %v6506 = vadd.f32 0.0, %v6505
        %v6507 = vpop.f32.mrf.mxu0
        %v6508 = vadd.f32 0.0, %v6507
        %6509 = vmatmul.bf16.gmra.mxu0 %v5898
        %v6510 = vpop.f32.mrf.mxu0
        %v6511 = vadd.f32 0.0, %v6510
        %v6512 = vpop.f32.mrf.mxu0
        %v6513 = vadd.f32 0.0, %v6512
        %6514 = vmatmul.bf16.gmra.mxu0 %v5907
        %v6515 = vpop.f32.mrf.mxu0
        %v6516 = vadd.f32 0.0, %v6515
        %v6517 = vpop.f32.mrf.mxu0
        %v6518 = vadd.f32 0.0, %v6517
        %6519 = vmatmul.bf16.gmra.mxu0 %v5916
        %v6520 = vpop.f32.mrf.mxu0
        %v6521 = vadd.f32 0.0, %v6520
        %v6522 = vpop.f32.mrf.mxu0
        %v6523 = vadd.f32 0.0, %v6522
        %6524 = vmatmul.bf16.gmra.mxu0 %v5925
        %v6525 = vpop.f32.mrf.mxu0
        %v6526 = vadd.f32 0.0, %v6525
        %v6527 = vpop.f32.mrf.mxu0
        %v6528 = vadd.f32 0.0, %v6527
        %6529 = vmatmul.bf16.gmra.mxu0 %v5934
        %v6530 = vpop.f32.mrf.mxu0
        %v6531 = vadd.f32 0.0, %v6530
        %v6532 = vpop.f32.mrf.mxu0
        %v6533 = vadd.f32 0.0, %v6532
        %6534 = vmatmul.bf16.gmra.mxu0 %v5943
        %v6535 = vpop.f32.mrf.mxu0
        %v6536 = vadd.f32 0.0, %v6535
        %v6537 = vpop.f32.mrf.mxu0
        %v6538 = vadd.f32 0.0, %v6537
        %6539 = vmatmul.bf16.gmra.mxu0 %v5952
        %v6540 = vpop.f32.mrf.mxu0
        %v6541 = vadd.f32 0.0, %v6540
        %v6542 = vpop.f32.mrf.mxu0
        %v6543 = vadd.f32 0.0, %v6542
        %6544 = vmatmul.bf16.gmra.mxu0 %v5961
        %v6545 = vpop.f32.mrf.mxu0
        %v6546 = vadd.f32 0.0, %v6545
        %v6547 = vpop.f32.mrf.mxu0
        %v6548 = vadd.f32 0.0, %v6547
        %6549 = vmatmul.bf16.gmra.mxu0 %v5970
        %v6550 = vpop.f32.mrf.mxu0
        %v6551 = vadd.f32 0.0, %v6550
        %v6552 = vpop.f32.mrf.mxu0
        %v6553 = vadd.f32 0.0, %v6552
        %6554 = vmatmul.bf16.gmra.mxu0 %v5979
        %v6555 = vpop.f32.mrf.mxu0
        %v6556 = vadd.f32 0.0, %v6555
        %v6557 = vpop.f32.mrf.mxu0
        %v6558 = vadd.f32 0.0, %v6557
        %6559 = vmatmul.bf16.gmra.mxu0 %v5988
        %v6560 = vpop.f32.mrf.mxu0
        %v6561 = vadd.f32 0.0, %v6560
        %v6562 = vpop.f32.mrf.mxu0
        %v6563 = vadd.f32 0.0, %v6562
        %6564 = vmatmul.bf16.gmra.mxu0 %v5997
        %v6565 = vpop.f32.mrf.mxu0
        %v6566 = vadd.f32 0.0, %v6565
        %v6567 = vpop.f32.mrf.mxu0
        %v6568 = vadd.f32 0.0, %v6567
        %6569 = vmatmul.bf16.gmra.mxu0 %v6006
        %v6570 = vpop.f32.mrf.mxu0
        %v6571 = vadd.f32 0.0, %v6570
        %v6572 = vpop.f32.mrf.mxu0
        %v6573 = vadd.f32 0.0, %v6572
        %6574 = vmatmul.bf16.gmra.mxu0 %v6015
        %v6575 = vpop.f32.mrf.mxu0
        %v6576 = vadd.f32 0.0, %v6575
        %v6577 = vpop.f32.mrf.mxu0
        %v6578 = vadd.f32 0.0, %v6577
        %6579 = vmatmul.bf16.gmra.mxu0 %v6024
        %v6580 = vpop.f32.mrf.mxu0
        %v6581 = vadd.f32 0.0, %v6580
        %v6582 = vpop.f32.mrf.mxu0
        %v6583 = vadd.f32 0.0, %v6582
        %6584 = vmatmul.bf16.gmra.mxu0 %v6033
        %v6585 = vpop.f32.mrf.mxu0
        %v6586 = vadd.f32 0.0, %v6585
        %v6587 = vpop.f32.mrf.mxu0
        %v6588 = vadd.f32 0.0, %v6587
        %6589 = vmatmul.bf16.gmra.mxu0 %v6042
        %v6590 = vpop.f32.mrf.mxu0
        %v6591 = vadd.f32 0.0, %v6590
        %v6592 = vpop.f32.mrf.mxu0
        %v6593 = vadd.f32 0.0, %v6592
        %6594 = vmatmul.bf16.gmra.mxu0 %v6051
        %v6595 = vpop.f32.mrf.mxu0
        %v6596 = vadd.f32 0.0, %v6595
        %v6597 = vpop.f32.mrf.mxu0
        %v6598 = vadd.f32 0.0, %v6597
        %6599 = vmatmul.bf16.gmra.mxu0 %v6060
        %v6600 = vpop.f32.mrf.mxu0
        %v6601 = vadd.f32 0.0, %v6600
        %v6602 = vpop.f32.mrf.mxu0
        %v6603 = vadd.f32 0.0, %v6602
        %6604 = vmatmul.bf16.gmra.mxu0 %v6059
        %v6605 = vpop.f32.mrf.mxu0
        %v6606 = vadd.f32 0.0, %v6605
        %v6607 = vpop.f32.mrf.mxu0
        %v6608 = vadd.f32 0.0, %v6607
        %6609 = vdwg.mxu0
        %v6610 = vadd.f32 %v5507, %v6192
        %v6611 = vadd.f32 %v5508, %v6406
        %v6612 = vadd.f32 %v5509, %v6194
        %v6613 = vadd.f32 %v5510, %v6408
        %v6614 = vadd.f32 %v5511, %v6197
        %v6615 = vadd.f32 %v5512, %v6411
        %v6616 = vadd.f32 %v5513, %v6199
        %v6617 = vadd.f32 %v5514, %v6413
        %v6618 = vadd.f32 %v5515, %v6202
        %v6619 = vadd.f32 %v5516, %v6416
        %v6620 = vadd.f32 %v5517, %v6204
        %v6621 = vadd.f32 %v5518, %v6418
        %v6622 = vadd.f32 %v5519, %v6207
        %v6623 = vadd.f32 %v5520, %v6421
        %v6624 = vadd.f32 %v5521, %v6209
        %v6625 = vadd.f32 %v5522, %v6423
        %v6626 = vadd.f32 %v5523, %v6212
        %v6627 = vadd.f32 %v5524, %v6426
        %v6628 = vadd.f32 %v5525, %v6214
        %v6629 = vadd.f32 %v5526, %v6428
        %v6630 = vadd.f32 %v5527, %v6217
        %v6631 = vadd.f32 %v5528, %v6431
        %v6632 = vadd.f32 %v5529, %v6219
        %v6633 = vadd.f32 %v5530, %v6433
        %v6634 = vadd.f32 %v5531, %v6222
        %v6635 = vadd.f32 %v5532, %v6436
        %v6636 = vadd.f32 %v5533, %v6224
        %v6637 = vadd.f32 %v5534, %v6438
        %v6638 = vadd.f32 %v5535, %v6227
        %v6639 = vadd.f32 %v5536, %v6441
        %v6640 = vadd.f32 %v5537, %v6229
        %v6641 = vadd.f32 %v5538, %v6443
        %v6642 = vadd.f32 %v5539, %v6232
        %v6643 = vadd.f32 %v5540, %v6446
        %v6644 = vadd.f32 %v5541, %v6234
        %v6645 = vadd.f32 %v5542, %v6448
        %v6646 = vadd.f32 %v5543, %v6237
        %v6647 = vadd.f32 %v5544, %v6451
        %v6648 = vadd.f32 %v5545, %v6239
        %v6649 = vadd.f32 %v5546, %v6453
        %v6650 = vadd.f32 %v5547, %v6242
        %v6651 = vadd.f32 %v5548, %v6456
        %v6652 = vadd.f32 %v5549, %v6244
        %v6653 = vadd.f32 %v5550, %v6458
        %v6654 = vadd.f32 %v5551, %v6247
        %v6655 = vadd.f32 %v5552, %v6461
        %v6656 = vadd.f32 %v5553, %v6249
        %v6657 = vadd.f32 %v5554, %v6463
        %v6658 = vadd.f32 %v5555, %v6252
        %v6659 = vadd.f32 %v5556, %v6466
        %v6660 = vadd.f32 %v5557, %v6254
        %v6661 = vadd.f32 %v5558, %v6468
        %v6662 = vadd.f32 %v5559, %v6257
        %v6663 = vadd.f32 %v5560, %v6471
        %v6664 = vadd.f32 %v5561, %v6259
        %v6665 = vadd.f32 %v5562, %v6473
        %v6666 = vadd.f32 %v5563, %v6262
        %v6667 = vadd.f32 %v5564, %v6476
        %v6668 = vadd.f32 %v5565, %v6264
        %v6669 = vadd.f32 %v5566, %v6478
        %v6670 = vadd.f32 %v5567, %v6267
        %v6671 = vadd.f32 %v5568, %v6481
        %v6672 = vadd.f32 %v5569, %v6269
        %v6673 = vadd.f32 %v5570, %v6483
        %v6674 = vadd.f32 %v5571, %v6272
        %v6675 = vadd.f32 %v5572, %v6486
        %v6676 = vadd.f32 %v5573, %v6274
        %v6677 = vadd.f32 %v5574, %v6488
        %v6678 = vadd.f32 %v5575, %v6277
        %v6679 = vadd.f32 %v5576, %v6491
        %v6680 = vadd.f32 %v5577, %v6279
        %v6681 = vadd.f32 %v5578, %v6493
        %v6682 = vadd.f32 %v5579, %v6282
        %v6683 = vadd.f32 %v5580, %v6496
        %v6684 = vadd.f32 %v5581, %v6284
        %v6685 = vadd.f32 %v5582, %v6498
        %v6686 = vadd.f32 %v5583, %v6287
        %v6687 = vadd.f32 %v5584, %v6501
        %v6688 = vadd.f32 %v5585, %v6289
        %v6689 = vadd.f32 %v5586, %v6503
        %v6690 = vadd.f32 %v5587, %v6292
        %v6691 = vadd.f32 %v5588, %v6506
        %v6692 = vadd.f32 %v5589, %v6294
        %v6693 = vadd.f32 %v5590, %v6508
        %v6694 = vadd.f32 %v5591, %v6297
        %v6695 = vadd.f32 %v5592, %v6511
        %v6696 = vadd.f32 %v5593, %v6299
        %v6697 = vadd.f32 %v5594, %v6513
        %v6698 = vadd.f32 %v5595, %v6302
        %v6699 = vadd.f32 %v5596, %v6516
        %v6700 = vadd.f32 %v5597, %v6304
        %v6701 = vadd.f32 %v5598, %v6518
        %v6702 = vadd.f32 %v5599, %v6307
        %v6703 = vadd.f32 %v5600, %v6521
        %v6704 = vadd.f32 %v5601, %v6309
        %v6705 = vadd.f32 %v5602, %v6523
        %v6706 = vadd.f32 %v5603, %v6312
        %v6707 = vadd.f32 %v5604, %v6526
        %v6708 = vadd.f32 %v5605, %v6314
        %v6709 = vadd.f32 %v5606, %v6528
        %v6710 = vadd.f32 %v5607, %v6317
        %v6711 = vadd.f32 %v5608, %v6531
        %v6712 = vadd.f32 %v5609, %v6319
        %v6713 = vadd.f32 %v5610, %v6533
        %v6714 = vadd.f32 %v5611, %v6322
        %v6715 = vadd.f32 %v5612, %v6536
        %v6716 = vadd.f32 %v5613, %v6324
        %v6717 = vadd.f32 %v5614, %v6538
        %v6718 = vadd.f32 %v5615, %v6327
        %v6719 = vadd.f32 %v5616, %v6541
        %v6720 = vadd.f32 %v5617, %v6329
        %v6721 = vadd.f32 %v5618, %v6543
        %v6722 = vadd.f32 %v5619, %v6332
        %v6723 = vadd.f32 %v5620, %v6546
        %v6724 = vadd.f32 %v5621, %v6334
        %v6725 = vadd.f32 %v5622, %v6548
        %v6726 = vadd.f32 %v5623, %v6337
        %v6727 = vadd.f32 %v5624, %v6551
        %v6728 = vadd.f32 %v5625, %v6339
        %v6729 = vadd.f32 %v5626, %v6553
        %v6730 = vadd.f32 %v5627, %v6342
        %v6731 = vadd.f32 %v5628, %v6556
        %v6732 = vadd.f32 %v5629, %v6344
        %v6733 = vadd.f32 %v5630, %v6558
        %v6734 = vadd.f32 %v5631, %v6347
        %v6735 = vadd.f32 %v5632, %v6561
        %v6736 = vadd.f32 %v5633, %v6349
        %v6737 = vadd.f32 %v5634, %v6563
        %v6738 = vadd.f32 %v5635, %v6352
        %v6739 = vadd.f32 %v5636, %v6566
        %v6740 = vadd.f32 %v5637, %v6354
        %v6741 = vadd.f32 %v5638, %v6568
        %v6742 = vadd.f32 %v5639, %v6357
        %v6743 = vadd.f32 %v5640, %v6571
        %v6744 = vadd.f32 %v5641, %v6359
        %v6745 = vadd.f32 %v5642, %v6573
        %v6746 = vadd.f32 %v5643, %v6362
        %v6747 = vadd.f32 %v5644, %v6576
        %v6748 = vadd.f32 %v5645, %v6364
        %v6749 = vadd.f32 %v5646, %v6578
        %v6750 = vadd.f32 %v5647, %v6367
        %v6751 = vadd.f32 %v5648, %v6581
        %v6752 = vadd.f32 %v5649, %v6369
        %v6753 = vadd.f32 %v5650, %v6583
        %v6754 = vadd.f32 %v5651, %v6372
        %v6755 = vadd.f32 %v5652, %v6586
        %v6756 = vadd.f32 %v5653, %v6374
        %v6757 = vadd.f32 %v5654, %v6588
        %v6758 = vadd.f32 %v5655, %v6377
        %v6759 = vadd.f32 %v5656, %v6591
        %v6760 = vadd.f32 %v5657, %v6379
        %v6761 = vadd.f32 %v5658, %v6593
        %v6762 = vadd.f32 %v5659, %v6382
        %v6763 = vadd.f32 %v5660, %v6596
        %v6764 = vadd.f32 %v5661, %v6384
        %v6765 = vadd.f32 %v5662, %v6598
        %v6766 = vadd.f32 %v5663, %v6387
        %v6767 = vadd.f32 %v5664, %v6601
        %v6768 = vadd.f32 %v5665, %v6389
        %v6769 = vadd.f32 %v5666, %v6603
        %v6770 = vadd.f32 %v5667, %v6392
        %v6771 = vadd.f32 %v5668, %v6606
        %v6772 = vadd.f32 %v5669, %v6394
        %v6773 = vadd.f32 %v5670, %v6608
        %6856 = vrot.lane.b32.xlu0 %v6610, 64
        %v6857 = vpop.permute.xlu0 %6856
        %6858 = vrot.lane.b32.xlu0 %v6612, 64
        %v6859 = vpop.permute.xlu0 %6858
        %6860 = vrot.lane.b32.xlu0 %v6614, 64
        %v6861 = vpop.permute.xlu0 %6860
        %6862 = vrot.lane.b32.xlu0 %v6616, 64
        %v6863 = vpop.permute.xlu0 %6862
        %6864 = vrot.lane.b32.xlu0 %v6618, 64
        %v6865 = vpop.permute.xlu0 %6864
        %6866 = vrot.lane.b32.xlu0 %v6620, 64
        %v6867 = vpop.permute.xlu0 %6866
        %6868 = vrot.lane.b32.xlu0 %v6622, 64
        %v6869 = vpop.permute.xlu0 %6868
        %6870 = vrot.lane.b32.xlu0 %v6624, 64
        %v6871 = vpop.permute.xlu0 %6870
        %6872 = vrot.lane.b32.xlu0 %v6626, 64
        %v6873 = vpop.permute.xlu0 %6872
        %6874 = vrot.lane.b32.xlu0 %v6628, 64
        %v6875 = vpop.permute.xlu0 %6874
        %6876 = vrot.lane.b32.xlu0 %v6630, 64
        %v6877 = vpop.permute.xlu0 %6876
        %6878 = vrot.lane.b32.xlu0 %v6632, 64
        %v6879 = vpop.permute.xlu0 %6878
        %6880 = vrot.lane.b32.xlu0 %v6634, 64
        %v6881 = vpop.permute.xlu0 %6880
        %6882 = vrot.lane.b32.xlu0 %v6636, 64
        %v6883 = vpop.permute.xlu0 %6882
        %6884 = vrot.lane.b32.xlu0 %v6638, 64
        %v6885 = vpop.permute.xlu0 %6884
        %6886 = vrot.lane.b32.xlu0 %v6640, 64
        %v6887 = vpop.permute.xlu0 %6886
        %6888 = vrot.lane.b32.xlu0 %v6642, 64
        %v6889 = vpop.permute.xlu0 %6888
        %6890 = vrot.lane.b32.xlu0 %v6644, 64
        %v6891 = vpop.permute.xlu0 %6890
        %6892 = vrot.lane.b32.xlu0 %v6646, 64
        %v6893 = vpop.permute.xlu0 %6892
        %6894 = vrot.lane.b32.xlu0 %v6648, 64
        %v6895 = vpop.permute.xlu0 %6894
        %6896 = vrot.lane.b32.xlu0 %v6650, 64
        %v6897 = vpop.permute.xlu0 %6896
        %6898 = vrot.lane.b32.xlu0 %v6652, 64
        %v6899 = vpop.permute.xlu0 %6898
        %6900 = vrot.lane.b32.xlu0 %v6654, 64
        %v6901 = vpop.permute.xlu0 %6900
        %6902 = vrot.lane.b32.xlu0 %v6656, 64
        %v6903 = vpop.permute.xlu0 %6902
        %6904 = vrot.lane.b32.xlu0 %v6658, 64
        %v6905 = vpop.permute.xlu0 %6904
        %6906 = vrot.lane.b32.xlu0 %v6660, 64
        %v6907 = vpop.permute.xlu0 %6906
        %6908 = vrot.lane.b32.xlu0 %v6662, 64
        %v6909 = vpop.permute.xlu0 %6908
        %6910 = vrot.lane.b32.xlu0 %v6664, 64
        %v6911 = vpop.permute.xlu0 %6910
        %6912 = vrot.lane.b32.xlu0 %v6666, 64
        %v6913 = vpop.permute.xlu0 %6912
        %6914 = vrot.lane.b32.xlu0 %v6668, 64
        %v6915 = vpop.permute.xlu0 %6914
        %6916 = vrot.lane.b32.xlu0 %v6670, 64
        %v6917 = vpop.permute.xlu0 %6916
        %6918 = vrot.lane.b32.xlu0 %v6672, 64
        %v6919 = vpop.permute.xlu0 %6918
        %6920 = vrot.lane.b32.xlu0 %v6674, 64
        %v6921 = vpop.permute.xlu0 %6920
        %6922 = vrot.lane.b32.xlu0 %v6676, 64
        %v6923 = vpop.permute.xlu0 %6922
        %6924 = vrot.lane.b32.xlu0 %v6678, 64
        %v6925 = vpop.permute.xlu0 %6924
        %6926 = vrot.lane.b32.xlu0 %v6680, 64
        %v6927 = vpop.permute.xlu0 %6926
        %6928 = vrot.lane.b32.xlu0 %v6682, 64
        %v6929 = vpop.permute.xlu0 %6928
        %6930 = vrot.lane.b32.xlu0 %v6684, 64
        %v6931 = vpop.permute.xlu0 %6930
        %6932 = vrot.lane.b32.xlu0 %v6686, 64
        %v6933 = vpop.permute.xlu0 %6932
        %6934 = vrot.lane.b32.xlu0 %v6688, 64
        %v6935 = vpop.permute.xlu0 %6934
        %6936 = vrot.lane.b32.xlu0 %v6690, 64
        %v6937 = vpop.permute.xlu0 %6936
        %6938 = vrot.lane.b32.xlu0 %v6692, 64
        %v6939 = vpop.permute.xlu0 %6938
        %6940 = vrot.lane.b32.xlu0 %v6694, 64
        %v6941 = vpop.permute.xlu0 %6940
        %6942 = vrot.lane.b32.xlu0 %v6696, 64
        %v6943 = vpop.permute.xlu0 %6942
        %6944 = vrot.lane.b32.xlu0 %v6698, 64
        %v6945 = vpop.permute.xlu0 %6944
        %6946 = vrot.lane.b32.xlu0 %v6700, 64
        %v6947 = vpop.permute.xlu0 %6946
        %6948 = vrot.lane.b32.xlu0 %v6702, 64
        %v6949 = vpop.permute.xlu0 %6948
        %6950 = vrot.lane.b32.xlu0 %v6704, 64
        %v6951 = vpop.permute.xlu0 %6950
        %6952 = vrot.lane.b32.xlu0 %v6706, 64
        %v6953 = vpop.permute.xlu0 %6952
        %6954 = vrot.lane.b32.xlu0 %v6708, 64
        %v6955 = vpop.permute.xlu0 %6954
        %6956 = vrot.lane.b32.xlu0 %v6710, 64
        %v6957 = vpop.permute.xlu0 %6956
        %6958 = vrot.lane.b32.xlu0 %v6712, 64
        %v6959 = vpop.permute.xlu0 %6958
        %6960 = vrot.lane.b32.xlu0 %v6714, 64
        %v6961 = vpop.permute.xlu0 %6960
        %6962 = vrot.lane.b32.xlu0 %v6716, 64
        %v6963 = vpop.permute.xlu0 %6962
        %6964 = vrot.lane.b32.xlu0 %v6718, 64
        %v6965 = vpop.permute.xlu0 %6964
        %6966 = vrot.lane.b32.xlu0 %v6720, 64
        %v6967 = vpop.permute.xlu0 %6966
        %6968 = vrot.lane.b32.xlu0 %v6722, 64
        %v6969 = vpop.permute.xlu0 %6968
        %6970 = vrot.lane.b32.xlu0 %v6724, 64
        %v6971 = vpop.permute.xlu0 %6970
        %6972 = vrot.lane.b32.xlu0 %v6726, 64
        %v6973 = vpop.permute.xlu0 %6972
        %6974 = vrot.lane.b32.xlu0 %v6728, 64
        %v6975 = vpop.permute.xlu0 %6974
        %6976 = vrot.lane.b32.xlu0 %v6730, 64
        %v6977 = vpop.permute.xlu0 %6976
        %6978 = vrot.lane.b32.xlu0 %v6732, 64
        %v6979 = vpop.permute.xlu0 %6978
        %6980 = vrot.lane.b32.xlu0 %v6734, 64
        %v6981 = vpop.permute.xlu0 %6980
        %6982 = vrot.lane.b32.xlu0 %v6736, 64
        %v6983 = vpop.permute.xlu0 %6982
        %6984 = vrot.lane.b32.xlu0 %v6738, 64
        %v6985 = vpop.permute.xlu0 %6984
        %6986 = vrot.lane.b32.xlu0 %v6740, 64
        %v6987 = vpop.permute.xlu0 %6986
        %6988 = vrot.lane.b32.xlu0 %v6742, 64
        %v6989 = vpop.permute.xlu0 %6988
        %6990 = vrot.lane.b32.xlu0 %v6744, 64
        %v6991 = vpop.permute.xlu0 %6990
        %6992 = vrot.lane.b32.xlu0 %v6746, 64
        %v6993 = vpop.permute.xlu0 %6992
        %6994 = vrot.lane.b32.xlu0 %v6748, 64
        %v6995 = vpop.permute.xlu0 %6994
        %6996 = vrot.lane.b32.xlu0 %v6750, 64
        %v6997 = vpop.permute.xlu0 %6996
        %6998 = vrot.lane.b32.xlu0 %v6752, 64
        %v6999 = vpop.permute.xlu0 %6998
        %7000 = vrot.lane.b32.xlu0 %v6754, 64
        %v7001 = vpop.permute.xlu0 %7000
        %7002 = vrot.lane.b32.xlu0 %v6756, 64
        %v7003 = vpop.permute.xlu0 %7002
        %7004 = vrot.lane.b32.xlu0 %v6758, 64
        %v7005 = vpop.permute.xlu0 %7004
        %7006 = vrot.lane.b32.xlu0 %v6760, 64
        %v7007 = vpop.permute.xlu0 %7006
        %7008 = vrot.lane.b32.xlu0 %v6762, 64
        %v7009 = vpop.permute.xlu0 %7008
        %7010 = vrot.lane.b32.xlu0 %v6764, 64
        %v7011 = vpop.permute.xlu0 %7010
        %7012 = vrot.lane.b32.xlu0 %v6766, 64
        %v7013 = vpop.permute.xlu0 %7012
        %7014 = vrot.lane.b32.xlu0 %v6768, 64
        %v7015 = vpop.permute.xlu0 %7014
        %7016 = vrot.lane.b32.xlu0 %v6770, 64
        %v7017 = vpop.permute.xlu0 %7016
        %7018 = vrot.lane.b32.xlu0 %v6772, 64
        %v7019 = vpop.permute.xlu0 %7018
        %v7102 = vmax.f32 %v6610, %v6857
        %v7103 = vmax.f32 %v6612, %v6859
        %v7104 = vmax.f32 %v6614, %v6861
        %v7105 = vmax.f32 %v6616, %v6863
        %v7106 = vmax.f32 %v6618, %v6865
        %v7107 = vmax.f32 %v6620, %v6867
        %v7108 = vmax.f32 %v6622, %v6869
        %v7109 = vmax.f32 %v6624, %v6871
        %v7110 = vmax.f32 %v6626, %v6873
        %v7111 = vmax.f32 %v6628, %v6875
        %v7112 = vmax.f32 %v6630, %v6877
        %v7113 = vmax.f32 %v6632, %v6879
        %v7114 = vmax.f32 %v6634, %v6881
        %v7115 = vmax.f32 %v6636, %v6883
        %v7116 = vmax.f32 %v6638, %v6885
        %v7117 = vmax.f32 %v6640, %v6887
        %v7118 = vmax.f32 %v6642, %v6889
        %v7119 = vmax.f32 %v6644, %v6891
        %v7120 = vmax.f32 %v6646, %v6893
        %v7121 = vmax.f32 %v6648, %v6895
        %v7122 = vmax.f32 %v6650, %v6897
        %v7123 = vmax.f32 %v6652, %v6899
        %v7124 = vmax.f32 %v6654, %v6901
        %v7125 = vmax.f32 %v6656, %v6903
        %v7126 = vmax.f32 %v6658, %v6905
        %v7127 = vmax.f32 %v6660, %v6907
        %v7128 = vmax.f32 %v6662, %v6909
        %v7129 = vmax.f32 %v6664, %v6911
        %v7130 = vmax.f32 %v6666, %v6913
        %v7131 = vmax.f32 %v6668, %v6915
        %v7132 = vmax.f32 %v6670, %v6917
        %v7133 = vmax.f32 %v6672, %v6919
        %v7134 = vmax.f32 %v6674, %v6921
        %v7135 = vmax.f32 %v6676, %v6923
        %v7136 = vmax.f32 %v6678, %v6925
        %v7137 = vmax.f32 %v6680, %v6927
        %v7138 = vmax.f32 %v6682, %v6929
        %v7139 = vmax.f32 %v6684, %v6931
        %v7140 = vmax.f32 %v6686, %v6933
        %v7141 = vmax.f32 %v6688, %v6935
        %v7142 = vmax.f32 %v6690, %v6937
        %v7143 = vmax.f32 %v6692, %v6939
        %v7144 = vmax.f32 %v6694, %v6941
        %v7145 = vmax.f32 %v6696, %v6943
        %v7146 = vmax.f32 %v6698, %v6945
        %v7147 = vmax.f32 %v6700, %v6947
        %v7148 = vmax.f32 %v6702, %v6949
        %v7149 = vmax.f32 %v6704, %v6951
        %v7150 = vmax.f32 %v6706, %v6953
        %v7151 = vmax.f32 %v6708, %v6955
        %v7152 = vmax.f32 %v6710, %v6957
        %v7153 = vmax.f32 %v6712, %v6959
        %v7154 = vmax.f32 %v6714, %v6961
        %v7155 = vmax.f32 %v6716, %v6963
        %v7156 = vmax.f32 %v6718, %v6965
        %v7157 = vmax.f32 %v6720, %v6967
        %v7158 = vmax.f32 %v6722, %v6969
        %v7159 = vmax.f32 %v6724, %v6971
        %v7160 = vmax.f32 %v6726, %v6973
        %v7161 = vmax.f32 %v6728, %v6975
        %v7162 = vmax.f32 %v6730, %v6977
        %v7163 = vmax.f32 %v6732, %v6979
        %v7164 = vmax.f32 %v6734, %v6981
        %v7165 = vmax.f32 %v6736, %v6983
        %v7166 = vmax.f32 %v6738, %v6985
        %v7167 = vmax.f32 %v6740, %v6987
        %v7168 = vmax.f32 %v6742, %v6989
        %v7169 = vmax.f32 %v6744, %v6991
        %v7170 = vmax.f32 %v6746, %v6993
        %v7171 = vmax.f32 %v6748, %v6995
        %v7172 = vmax.f32 %v6750, %v6997
        %v7173 = vmax.f32 %v6752, %v6999
        %v7174 = vmax.f32 %v6754, %v7001
        %v7175 = vmax.f32 %v6756, %v7003
        %v7176 = vmax.f32 %v6758, %v7005
        %v7177 = vmax.f32 %v6760, %v7007
        %v7178 = vmax.f32 %v6762, %v7009
        %v7179 = vmax.f32 %v6764, %v7011
        %v7180 = vmax.f32 %v6766, %v7013
        %v7181 = vmax.f32 %v6768, %v7015
        %v7182 = vmax.f32 %v6770, %v7017
        %v7183 = vmax.f32 %v6772, %v7019
        %7266 = vrot.lane.b32.xlu0 %v6611, 64
        %v7267 = vpop.permute.xlu0 %7266
        %7268 = vrot.lane.b32.xlu0 %v6613, 64
        %v7269 = vpop.permute.xlu0 %7268
        %7270 = vrot.lane.b32.xlu0 %v6615, 64
        %v7271 = vpop.permute.xlu0 %7270
        %7272 = vrot.lane.b32.xlu0 %v6617, 64
        %v7273 = vpop.permute.xlu0 %7272
        %7274 = vrot.lane.b32.xlu0 %v6619, 64
        %v7275 = vpop.permute.xlu0 %7274
        %7276 = vrot.lane.b32.xlu0 %v6621, 64
        %v7277 = vpop.permute.xlu0 %7276
        %7278 = vrot.lane.b32.xlu0 %v6623, 64
        %v7279 = vpop.permute.xlu0 %7278
        %7280 = vrot.lane.b32.xlu0 %v6625, 64
        %v7281 = vpop.permute.xlu0 %7280
        %7282 = vrot.lane.b32.xlu0 %v6627, 64
        %v7283 = vpop.permute.xlu0 %7282
        %7284 = vrot.lane.b32.xlu0 %v6629, 64
        %v7285 = vpop.permute.xlu0 %7284
        %7286 = vrot.lane.b32.xlu0 %v6631, 64
        %v7287 = vpop.permute.xlu0 %7286
        %7288 = vrot.lane.b32.xlu0 %v6633, 64
        %v7289 = vpop.permute.xlu0 %7288
        %7290 = vrot.lane.b32.xlu0 %v6635, 64
        %v7291 = vpop.permute.xlu0 %7290
        %7292 = vrot.lane.b32.xlu0 %v6637, 64
        %v7293 = vpop.permute.xlu0 %7292
        %7294 = vrot.lane.b32.xlu0 %v6639, 64
        %v7295 = vpop.permute.xlu0 %7294
        %7296 = vrot.lane.b32.xlu0 %v6641, 64
        %v7297 = vpop.permute.xlu0 %7296
        %7298 = vrot.lane.b32.xlu0 %v6643, 64
        %v7299 = vpop.permute.xlu0 %7298
        %7300 = vrot.lane.b32.xlu0 %v6645, 64
        %v7301 = vpop.permute.xlu0 %7300
        %7302 = vrot.lane.b32.xlu0 %v6647, 64
        %v7303 = vpop.permute.xlu0 %7302
        %7304 = vrot.lane.b32.xlu0 %v6649, 64
        %v7305 = vpop.permute.xlu0 %7304
        %7306 = vrot.lane.b32.xlu0 %v6651, 64
        %v7307 = vpop.permute.xlu0 %7306
        %7308 = vrot.lane.b32.xlu0 %v6653, 64
        %v7309 = vpop.permute.xlu0 %7308
        %7310 = vrot.lane.b32.xlu0 %v6655, 64
        %v7311 = vpop.permute.xlu0 %7310
        %7312 = vrot.lane.b32.xlu0 %v6657, 64
        %v7313 = vpop.permute.xlu0 %7312
        %7314 = vrot.lane.b32.xlu0 %v6659, 64
        %v7315 = vpop.permute.xlu0 %7314
        %7316 = vrot.lane.b32.xlu0 %v6661, 64
        %v7317 = vpop.permute.xlu0 %7316
        %7318 = vrot.lane.b32.xlu0 %v6663, 64
        %v7319 = vpop.permute.xlu0 %7318
        %7320 = vrot.lane.b32.xlu0 %v6665, 64
        %v7321 = vpop.permute.xlu0 %7320
        %7322 = vrot.lane.b32.xlu0 %v6667, 64
        %v7323 = vpop.permute.xlu0 %7322
        %7324 = vrot.lane.b32.xlu0 %v6669, 64
        %v7325 = vpop.permute.xlu0 %7324
        %7326 = vrot.lane.b32.xlu0 %v6671, 64
        %v7327 = vpop.permute.xlu0 %7326
        %7328 = vrot.lane.b32.xlu0 %v6673, 64
        %v7329 = vpop.permute.xlu0 %7328
        %7330 = vrot.lane.b32.xlu0 %v6675, 64
        %v7331 = vpop.permute.xlu0 %7330
        %7332 = vrot.lane.b32.xlu0 %v6677, 64
        %v7333 = vpop.permute.xlu0 %7332
        %7334 = vrot.lane.b32.xlu0 %v6679, 64
        %v7335 = vpop.permute.xlu0 %7334
        %7336 = vrot.lane.b32.xlu0 %v6681, 64
        %v7337 = vpop.permute.xlu0 %7336
        %7338 = vrot.lane.b32.xlu0 %v6683, 64
        %v7339 = vpop.permute.xlu0 %7338
        %7340 = vrot.lane.b32.xlu0 %v6685, 64
        %v7341 = vpop.permute.xlu0 %7340
        %7342 = vrot.lane.b32.xlu0 %v6687, 64
        %v7343 = vpop.permute.xlu0 %7342
        %7344 = vrot.lane.b32.xlu0 %v6689, 64
        %v7345 = vpop.permute.xlu0 %7344
        %7346 = vrot.lane.b32.xlu0 %v6691, 64
        %v7347 = vpop.permute.xlu0 %7346
        %7348 = vrot.lane.b32.xlu0 %v6693, 64
        %v7349 = vpop.permute.xlu0 %7348
        %7350 = vrot.lane.b32.xlu0 %v6695, 64
        %v7351 = vpop.permute.xlu0 %7350
        %7352 = vrot.lane.b32.xlu0 %v6697, 64
        %v7353 = vpop.permute.xlu0 %7352
        %7354 = vrot.lane.b32.xlu0 %v6699, 64
        %v7355 = vpop.permute.xlu0 %7354
        %7356 = vrot.lane.b32.xlu0 %v6701, 64
        %v7357 = vpop.permute.xlu0 %7356
        %7358 = vrot.lane.b32.xlu0 %v6703, 64
        %v7359 = vpop.permute.xlu0 %7358
        %7360 = vrot.lane.b32.xlu0 %v6705, 64
        %v7361 = vpop.permute.xlu0 %7360
        %7362 = vrot.lane.b32.xlu0 %v6707, 64
        %v7363 = vpop.permute.xlu0 %7362
        %7364 = vrot.lane.b32.xlu0 %v6709, 64
        %v7365 = vpop.permute.xlu0 %7364
        %7366 = vrot.lane.b32.xlu0 %v6711, 64
        %v7367 = vpop.permute.xlu0 %7366
        %7368 = vrot.lane.b32.xlu0 %v6713, 64
        %v7369 = vpop.permute.xlu0 %7368
        %7370 = vrot.lane.b32.xlu0 %v6715, 64
        %v7371 = vpop.permute.xlu0 %7370
        %7372 = vrot.lane.b32.xlu0 %v6717, 64
        %v7373 = vpop.permute.xlu0 %7372
        %7374 = vrot.lane.b32.xlu0 %v6719, 64
        %v7375 = vpop.permute.xlu0 %7374
        %7376 = vrot.lane.b32.xlu0 %v6721, 64
        %v7377 = vpop.permute.xlu0 %7376
        %7378 = vrot.lane.b32.xlu0 %v6723, 64
        %v7379 = vpop.permute.xlu0 %7378
        %7380 = vrot.lane.b32.xlu0 %v6725, 64
        %v7381 = vpop.permute.xlu0 %7380
        %7382 = vrot.lane.b32.xlu0 %v6727, 64
        %v7383 = vpop.permute.xlu0 %7382
        %7384 = vrot.lane.b32.xlu0 %v6729, 64
        %v7385 = vpop.permute.xlu0 %7384
        %7386 = vrot.lane.b32.xlu0 %v6731, 64
        %v7387 = vpop.permute.xlu0 %7386
        %7388 = vrot.lane.b32.xlu0 %v6733, 64
        %v7389 = vpop.permute.xlu0 %7388
        %7390 = vrot.lane.b32.xlu0 %v6735, 64
        %v7391 = vpop.permute.xlu0 %7390
        %7392 = vrot.lane.b32.xlu0 %v6737, 64
        %v7393 = vpop.permute.xlu0 %7392
        %7394 = vrot.lane.b32.xlu0 %v6739, 64
        %v7395 = vpop.permute.xlu0 %7394
        %7396 = vrot.lane.b32.xlu0 %v6741, 64
        %v7397 = vpop.permute.xlu0 %7396
        %7398 = vrot.lane.b32.xlu0 %v6743, 64
        %v7399 = vpop.permute.xlu0 %7398
        %7400 = vrot.lane.b32.xlu0 %v6745, 64
        %v7401 = vpop.permute.xlu0 %7400
        %7402 = vrot.lane.b32.xlu0 %v6747, 64
        %v7403 = vpop.permute.xlu0 %7402
        %7404 = vrot.lane.b32.xlu0 %v6749, 64
        %v7405 = vpop.permute.xlu0 %7404
        %7406 = vrot.lane.b32.xlu0 %v6751, 64
        %v7407 = vpop.permute.xlu0 %7406
        %7408 = vrot.lane.b32.xlu0 %v6753, 64
        %v7409 = vpop.permute.xlu0 %7408
        %7410 = vrot.lane.b32.xlu0 %v6755, 64
        %v7411 = vpop.permute.xlu0 %7410
        %7412 = vrot.lane.b32.xlu0 %v6757, 64
        %v7413 = vpop.permute.xlu0 %7412
        %7414 = vrot.lane.b32.xlu0 %v6759, 64
        %v7415 = vpop.permute.xlu0 %7414
        %7416 = vrot.lane.b32.xlu0 %v6761, 64
        %v7417 = vpop.permute.xlu0 %7416
        %7418 = vrot.lane.b32.xlu0 %v6763, 64
        %v7419 = vpop.permute.xlu0 %7418
        %7420 = vrot.lane.b32.xlu0 %v6765, 64
        %v7421 = vpop.permute.xlu0 %7420
        %7422 = vrot.lane.b32.xlu0 %v6767, 64
        %v7423 = vpop.permute.xlu0 %7422
        %7424 = vrot.lane.b32.xlu0 %v6769, 64
        %v7425 = vpop.permute.xlu0 %7424
        %7426 = vrot.lane.b32.xlu0 %v6771, 64
        %v7427 = vpop.permute.xlu0 %7426
        %7428 = vrot.lane.b32.xlu0 %v6773, 64
        %v7429 = vpop.permute.xlu0 %7428
        %v7512 = vmax.f32 %v6611, %v7267
        %v7513 = vmax.f32 %v6613, %v7269
        %v7514 = vmax.f32 %v6615, %v7271
        %v7515 = vmax.f32 %v6617, %v7273
        %v7516 = vmax.f32 %v6619, %v7275
        %v7517 = vmax.f32 %v6621, %v7277
        %v7518 = vmax.f32 %v6623, %v7279
        %v7519 = vmax.f32 %v6625, %v7281
        %v7520 = vmax.f32 %v6627, %v7283
        %v7521 = vmax.f32 %v6629, %v7285
        %v7522 = vmax.f32 %v6631, %v7287
        %v7523 = vmax.f32 %v6633, %v7289
        %v7524 = vmax.f32 %v6635, %v7291
        %v7525 = vmax.f32 %v6637, %v7293
        %v7526 = vmax.f32 %v6639, %v7295
        %v7527 = vmax.f32 %v6641, %v7297
        %v7528 = vmax.f32 %v6643, %v7299
        %v7529 = vmax.f32 %v6645, %v7301
        %v7530 = vmax.f32 %v6647, %v7303
        %v7531 = vmax.f32 %v6649, %v7305
        %v7532 = vmax.f32 %v6651, %v7307
        %v7533 = vmax.f32 %v6653, %v7309
        %v7534 = vmax.f32 %v6655, %v7311
        %v7535 = vmax.f32 %v6657, %v7313
        %v7536 = vmax.f32 %v6659, %v7315
        %v7537 = vmax.f32 %v6661, %v7317
        %v7538 = vmax.f32 %v6663, %v7319
        %v7539 = vmax.f32 %v6665, %v7321
        %v7540 = vmax.f32 %v6667, %v7323
        %v7541 = vmax.f32 %v6669, %v7325
        %v7542 = vmax.f32 %v6671, %v7327
        %v7543 = vmax.f32 %v6673, %v7329
        %v7544 = vmax.f32 %v6675, %v7331
        %v7545 = vmax.f32 %v6677, %v7333
        %v7546 = vmax.f32 %v6679, %v7335
        %v7547 = vmax.f32 %v6681, %v7337
        %v7548 = vmax.f32 %v6683, %v7339
        %v7549 = vmax.f32 %v6685, %v7341
        %v7550 = vmax.f32 %v6687, %v7343
        %v7551 = vmax.f32 %v6689, %v7345
        %v7552 = vmax.f32 %v6691, %v7347
        %v7553 = vmax.f32 %v6693, %v7349
        %v7554 = vmax.f32 %v6695, %v7351
        %v7555 = vmax.f32 %v6697, %v7353
        %v7556 = vmax.f32 %v6699, %v7355
        %v7557 = vmax.f32 %v6701, %v7357
        %v7558 = vmax.f32 %v6703, %v7359
        %v7559 = vmax.f32 %v6705, %v7361
        %v7560 = vmax.f32 %v6707, %v7363
        %v7561 = vmax.f32 %v6709, %v7365
        %v7562 = vmax.f32 %v6711, %v7367
        %v7563 = vmax.f32 %v6713, %v7369
        %v7564 = vmax.f32 %v6715, %v7371
        %v7565 = vmax.f32 %v6717, %v7373
        %v7566 = vmax.f32 %v6719, %v7375
        %v7567 = vmax.f32 %v6721, %v7377
        %v7568 = vmax.f32 %v6723, %v7379
        %v7569 = vmax.f32 %v6725, %v7381
        %v7570 = vmax.f32 %v6727, %v7383
        %v7571 = vmax.f32 %v6729, %v7385
        %v7572 = vmax.f32 %v6731, %v7387
        %v7573 = vmax.f32 %v6733, %v7389
        %v7574 = vmax.f32 %v6735, %v7391
        %v7575 = vmax.f32 %v6737, %v7393
        %v7576 = vmax.f32 %v6739, %v7395
        %v7577 = vmax.f32 %v6741, %v7397
        %v7578 = vmax.f32 %v6743, %v7399
        %v7579 = vmax.f32 %v6745, %v7401
        %v7580 = vmax.f32 %v6747, %v7403
        %v7581 = vmax.f32 %v6749, %v7405
        %v7582 = vmax.f32 %v6751, %v7407
        %v7583 = vmax.f32 %v6753, %v7409
        %v7584 = vmax.f32 %v6755, %v7411
        %v7585 = vmax.f32 %v6757, %v7413
        %v7586 = vmax.f32 %v6759, %v7415
        %v7587 = vmax.f32 %v6761, %v7417
        %v7588 = vmax.f32 %v6763, %v7419
        %v7589 = vmax.f32 %v6765, %v7421
        %v7590 = vmax.f32 %v6767, %v7423
        %v7591 = vmax.f32 %v6769, %v7425
        %v7592 = vmax.f32 %v6771, %v7427
        %v7593 = vmax.f32 %v6773, %v7429
        %v7594 = vmax.f32 %v7102, %v7512
        %v7595 = vmax.f32 %v7103, %v7513
        %v7596 = vmax.f32 %v7104, %v7514
        %v7597 = vmax.f32 %v7105, %v7515
        %v7598 = vmax.f32 %v7106, %v7516
        %v7599 = vmax.f32 %v7107, %v7517
        %v7600 = vmax.f32 %v7108, %v7518
        %v7601 = vmax.f32 %v7109, %v7519
        %v7602 = vmax.f32 %v7110, %v7520
        %v7603 = vmax.f32 %v7111, %v7521
        %v7604 = vmax.f32 %v7112, %v7522
        %v7605 = vmax.f32 %v7113, %v7523
        %v7606 = vmax.f32 %v7114, %v7524
        %v7607 = vmax.f32 %v7115, %v7525
        %v7608 = vmax.f32 %v7116, %v7526
        %v7609 = vmax.f32 %v7117, %v7527
        %v7610 = vmax.f32 %v7118, %v7528
        %v7611 = vmax.f32 %v7119, %v7529
        %v7612 = vmax.f32 %v7120, %v7530
        %v7613 = vmax.f32 %v7121, %v7531
        %v7614 = vmax.f32 %v7122, %v7532
        %v7615 = vmax.f32 %v7123, %v7533
        %v7616 = vmax.f32 %v7124, %v7534
        %v7617 = vmax.f32 %v7125, %v7535
        %v7618 = vmax.f32 %v7126, %v7536
        %v7619 = vmax.f32 %v7127, %v7537
        %v7620 = vmax.f32 %v7128, %v7538
        %v7621 = vmax.f32 %v7129, %v7539
        %v7622 = vmax.f32 %v7130, %v7540
        %v7623 = vmax.f32 %v7131, %v7541
        %v7624 = vmax.f32 %v7132, %v7542
        %v7625 = vmax.f32 %v7133, %v7543
        %v7626 = vmax.f32 %v7134, %v7544
        %v7627 = vmax.f32 %v7135, %v7545
        %v7628 = vmax.f32 %v7136, %v7546
        %v7629 = vmax.f32 %v7137, %v7547
        %v7630 = vmax.f32 %v7138, %v7548
        %v7631 = vmax.f32 %v7139, %v7549
        %v7632 = vmax.f32 %v7140, %v7550
        %v7633 = vmax.f32 %v7141, %v7551
        %v7634 = vmax.f32 %v7142, %v7552
        %v7635 = vmax.f32 %v7143, %v7553
        %v7636 = vmax.f32 %v7144, %v7554
        %v7637 = vmax.f32 %v7145, %v7555
        %v7638 = vmax.f32 %v7146, %v7556
        %v7639 = vmax.f32 %v7147, %v7557
        %v7640 = vmax.f32 %v7148, %v7558
        %v7641 = vmax.f32 %v7149, %v7559
        %v7642 = vmax.f32 %v7150, %v7560
        %v7643 = vmax.f32 %v7151, %v7561
        %v7644 = vmax.f32 %v7152, %v7562
        %v7645 = vmax.f32 %v7153, %v7563
        %v7646 = vmax.f32 %v7154, %v7564
        %v7647 = vmax.f32 %v7155, %v7565
        %v7648 = vmax.f32 %v7156, %v7566
        %v7649 = vmax.f32 %v7157, %v7567
        %v7650 = vmax.f32 %v7158, %v7568
        %v7651 = vmax.f32 %v7159, %v7569
        %v7652 = vmax.f32 %v7160, %v7570
        %v7653 = vmax.f32 %v7161, %v7571
        %v7654 = vmax.f32 %v7162, %v7572
        %v7655 = vmax.f32 %v7163, %v7573
        %v7656 = vmax.f32 %v7164, %v7574
        %v7657 = vmax.f32 %v7165, %v7575
        %v7658 = vmax.f32 %v7166, %v7576
        %v7659 = vmax.f32 %v7167, %v7577
        %v7660 = vmax.f32 %v7168, %v7578
        %v7661 = vmax.f32 %v7169, %v7579
        %v7662 = vmax.f32 %v7170, %v7580
        %v7663 = vmax.f32 %v7171, %v7581
        %v7664 = vmax.f32 %v7172, %v7582
        %v7665 = vmax.f32 %v7173, %v7583
        %v7666 = vmax.f32 %v7174, %v7584
        %v7667 = vmax.f32 %v7175, %v7585
        %v7668 = vmax.f32 %v7176, %v7586
        %v7669 = vmax.f32 %v7177, %v7587
        %v7670 = vmax.f32 %v7178, %v7588
        %v7671 = vmax.f32 %v7179, %v7589
        %v7672 = vmax.f32 %v7180, %v7590
        %v7673 = vmax.f32 %v7181, %v7591
        %v7674 = vmax.f32 %v7182, %v7592
        %v7675 = vmax.f32 %v7183, %v7593
        %v7676 = vld [vmem:[#allocation10] sm:$0x1]
        %v7678 = vperm.slane %v7676, 0
        %v7680 = vadd.f32 %v7594, %v7678
        %v7681 = vadd.f32 %v7595, %v7678
        %v7682 = vadd.f32 %v7596, %v7678
        %v7683 = vadd.f32 %v7597, %v7678
        %v7684 = vadd.f32 %v7598, %v7678
        %v7685 = vadd.f32 %v7599, %v7678
        %v7686 = vadd.f32 %v7600, %v7678
        %v7687 = vadd.f32 %v7601, %v7678
        %v7688 = vadd.f32 %v7602, %v7678
        %v7689 = vadd.f32 %v7603, %v7678
        %v7690 = vadd.f32 %v7604, %v7678
        %v7691 = vadd.f32 %v7605, %v7678
        %v7692 = vadd.f32 %v7606, %v7678
        %v7693 = vadd.f32 %v7607, %v7678
        %v7694 = vadd.f32 %v7608, %v7678
        %v7695 = vadd.f32 %v7609, %v7678
        %v7696 = vadd.f32 %v7610, %v7678
        %v7697 = vadd.f32 %v7611, %v7678
        %v7698 = vadd.f32 %v7612, %v7678
        %v7699 = vadd.f32 %v7613, %v7678
        %v7700 = vadd.f32 %v7614, %v7678
        %v7701 = vadd.f32 %v7615, %v7678
        %v7702 = vadd.f32 %v7616, %v7678
        %v7703 = vadd.f32 %v7617, %v7678
        %v7704 = vadd.f32 %v7618, %v7678
        %v7705 = vadd.f32 %v7619, %v7678
        %v7706 = vadd.f32 %v7620, %v7678
        %v7707 = vadd.f32 %v7621, %v7678
        %v7708 = vadd.f32 %v7622, %v7678
        %v7709 = vadd.f32 %v7623, %v7678
        %v7710 = vadd.f32 %v7624, %v7678
        %v7711 = vadd.f32 %v7625, %v7678
        %v7712 = vadd.f32 %v7626, %v7678
        %v7713 = vadd.f32 %v7627, %v7678
        %v7714 = vadd.f32 %v7628, %v7678
        %v7715 = vadd.f32 %v7629, %v7678
        %v7716 = vadd.f32 %v7630, %v7678
        %v7717 = vadd.f32 %v7631, %v7678
        %v7718 = vadd.f32 %v7632, %v7678
        %v7719 = vadd.f32 %v7633, %v7678
        %v7720 = vadd.f32 %v7634, %v7678
        %v7721 = vadd.f32 %v7635, %v7678
        %v7722 = vadd.f32 %v7636, %v7678
        %v7723 = vadd.f32 %v7637, %v7678
        %v7724 = vadd.f32 %v7638, %v7678
        %v7725 = vadd.f32 %v7639, %v7678
        %v7726 = vadd.f32 %v7640, %v7678
        %v7727 = vadd.f32 %v7641, %v7678
        %v7728 = vadd.f32 %v7642, %v7678
        %v7729 = vadd.f32 %v7643, %v7678
        %v7730 = vadd.f32 %v7644, %v7678
        %v7731 = vadd.f32 %v7645, %v7678
        %v7732 = vadd.f32 %v7646, %v7678
        %v7733 = vadd.f32 %v7647, %v7678
        %v7734 = vadd.f32 %v7648, %v7678
        %v7735 = vadd.f32 %v7649, %v7678
        %v7736 = vadd.f32 %v7650, %v7678
        %v7737 = vadd.f32 %v7651, %v7678
        %v7738 = vadd.f32 %v7652, %v7678
        %v7739 = vadd.f32 %v7653, %v7678
        %v7740 = vadd.f32 %v7654, %v7678
        %v7741 = vadd.f32 %v7655, %v7678
        %v7742 = vadd.f32 %v7656, %v7678
        %v7743 = vadd.f32 %v7657, %v7678
        %v7744 = vadd.f32 %v7658, %v7678
        %v7745 = vadd.f32 %v7659, %v7678
        %v7746 = vadd.f32 %v7660, %v7678
        %v7747 = vadd.f32 %v7661, %v7678
        %v7748 = vadd.f32 %v7662, %v7678
        %v7749 = vadd.f32 %v7663, %v7678
        %v7750 = vadd.f32 %v7664, %v7678
        %v7751 = vadd.f32 %v7665, %v7678
        %v7752 = vadd.f32 %v7666, %v7678
        %v7753 = vadd.f32 %v7667, %v7678
        %v7754 = vadd.f32 %v7668, %v7678
        %v7755 = vadd.f32 %v7669, %v7678
        %v7756 = vadd.f32 %v7670, %v7678
        %v7757 = vadd.f32 %v7671, %v7678
        %v7758 = vadd.f32 %v7672, %v7678
        %v7759 = vadd.f32 %v7673, %v7678
        %v7760 = vadd.f32 %v7674, %v7678
        %v7761 = vadd.f32 %v7675, %v7678
        %v7762 = vmax.f32 %v7680, 0.0
        %v7763 = vmax.f32 %v7681, 0.0
        %v7764 = vmax.f32 %v7682, 0.0
        %v7765 = vmax.f32 %v7683, 0.0
        %v7766 = vmax.f32 %v7684, 0.0
        %v7767 = vmax.f32 %v7685, 0.0
        %v7768 = vmax.f32 %v7686, 0.0
        %v7769 = vmax.f32 %v7687, 0.0
        %v7770 = vmax.f32 %v7688, 0.0
        %v7771 = vmax.f32 %v7689, 0.0
        %v7772 = vmax.f32 %v7690, 0.0
        %v7773 = vmax.f32 %v7691, 0.0
        %v7774 = vmax.f32 %v7692, 0.0
        %v7775 = vmax.f32 %v7693, 0.0
        %v7776 = vmax.f32 %v7694, 0.0
        %v7777 = vmax.f32 %v7695, 0.0
        %v7778 = vmax.f32 %v7696, 0.0
        %v7779 = vmax.f32 %v7697, 0.0
        %v7780 = vmax.f32 %v7698, 0.0
        %v7781 = vmax.f32 %v7699, 0.0
        %v7782 = vmax.f32 %v7700, 0.0
        %v7783 = vmax.f32 %v7701, 0.0
        %v7784 = vmax.f32 %v7702, 0.0
        %v7785 = vmax.f32 %v7703, 0.0
        %v7786 = vmax.f32 %v7704, 0.0
        %v7787 = vmax.f32 %v7705, 0.0
        %v7788 = vmax.f32 %v7706, 0.0
        %v7789 = vmax.f32 %v7707, 0.0
        %v7790 = vmax.f32 %v7708, 0.0
        %v7791 = vmax.f32 %v7709, 0.0
        %v7792 = vmax.f32 %v7710, 0.0
        %v7793 = vmax.f32 %v7711, 0.0
        %v7794 = vmax.f32 %v7712, 0.0
        %v7795 = vmax.f32 %v7713, 0.0
        %v7796 = vmax.f32 %v7714, 0.0
        %v7797 = vmax.f32 %v7715, 0.0
        %v7798 = vmax.f32 %v7716, 0.0
        %v7799 = vmax.f32 %v7717, 0.0
        %v7800 = vmax.f32 %v7718, 0.0
        %v7801 = vmax.f32 %v7719, 0.0
        %v7802 = vmax.f32 %v7720, 0.0
        %v7803 = vmax.f32 %v7721, 0.0
        %v7804 = vmax.f32 %v7722, 0.0
        %v7805 = vmax.f32 %v7723, 0.0
        %v7806 = vmax.f32 %v7724, 0.0
        %v7807 = vmax.f32 %v7725, 0.0
        %v7808 = vmax.f32 %v7726, 0.0
        %v7809 = vmax.f32 %v7727, 0.0
        %v7810 = vmax.f32 %v7728, 0.0
        %v7811 = vmax.f32 %v7729, 0.0
        %v7812 = vmax.f32 %v7730, 0.0
        %v7813 = vmax.f32 %v7731, 0.0
        %v7814 = vmax.f32 %v7732, 0.0
        %v7815 = vmax.f32 %v7733, 0.0
        %v7816 = vmax.f32 %v7734, 0.0
        %v7817 = vmax.f32 %v7735, 0.0
        %v7818 = vmax.f32 %v7736, 0.0
        %v7819 = vmax.f32 %v7737, 0.0
        %v7820 = vmax.f32 %v7738, 0.0
        %v7821 = vmax.f32 %v7739, 0.0
        %v7822 = vmax.f32 %v7740, 0.0
        %v7823 = vmax.f32 %v7741, 0.0
        %v7824 = vmax.f32 %v7742, 0.0
        %v7825 = vmax.f32 %v7743, 0.0
        %v7826 = vmax.f32 %v7744, 0.0
        %v7827 = vmax.f32 %v7745, 0.0
        %v7828 = vmax.f32 %v7746, 0.0
        %v7829 = vmax.f32 %v7747, 0.0
        %v7830 = vmax.f32 %v7748, 0.0
        %v7831 = vmax.f32 %v7749, 0.0
        %v7832 = vmax.f32 %v7750, 0.0
        %v7833 = vmax.f32 %v7751, 0.0
        %v7834 = vmax.f32 %v7752, 0.0
        %v7835 = vmax.f32 %v7753, 0.0
        %v7836 = vmax.f32 %v7754, 0.0
        %v7837 = vmax.f32 %v7755, 0.0
        %v7838 = vmax.f32 %v7756, 0.0
        %v7839 = vmax.f32 %v7757, 0.0
        %v7840 = vmax.f32 %v7758, 0.0
        %v7841 = vmax.f32 %v7759, 0.0
        %v7842 = vmax.f32 %v7760, 0.0
        %v7843 = vmax.f32 %v7761, 0.0
        %v7844 = vpack.c.bf16 %v7762, %v7762
        %v7845 = vpack.c.bf16 %v7763, %v7763
        %v7846 = vpack.c.bf16 %v7764, %v7764
        %v7847 = vpack.c.bf16 %v7765, %v7765
        %v7848 = vpack.c.bf16 %v7766, %v7766
        %v7849 = vpack.c.bf16 %v7767, %v7767
        %v7850 = vpack.c.bf16 %v7768, %v7768
        %v7851 = vpack.c.bf16 %v7769, %v7769
        %v7852 = vpack.c.bf16 %v7770, %v7770
        %v7853 = vpack.c.bf16 %v7771, %v7771
        %v7854 = vpack.c.bf16 %v7772, %v7772
        %v7855 = vpack.c.bf16 %v7773, %v7773
        %v7856 = vpack.c.bf16 %v7774, %v7774
        %v7857 = vpack.c.bf16 %v7775, %v7775
        %v7858 = vpack.c.bf16 %v7776, %v7776
        %v7859 = vpack.c.bf16 %v7777, %v7777
        %v7860 = vpack.c.bf16 %v7778, %v7778
        %v7861 = vpack.c.bf16 %v7779, %v7779
        %v7862 = vpack.c.bf16 %v7780, %v7780
        %v7863 = vpack.c.bf16 %v7781, %v7781
        %v7864 = vpack.c.bf16 %v7782, %v7782
        %v7865 = vpack.c.bf16 %v7783, %v7783
        %v7866 = vpack.c.bf16 %v7784, %v7784
        %v7867 = vpack.c.bf16 %v7785, %v7785
        %v7868 = vpack.c.bf16 %v7786, %v7786
        %v7869 = vpack.c.bf16 %v7787, %v7787
        %v7870 = vpack.c.bf16 %v7788, %v7788
        %v7871 = vpack.c.bf16 %v7789, %v7789
        %v7872 = vpack.c.bf16 %v7790, %v7790
        %v7873 = vpack.c.bf16 %v7791, %v7791
        %v7874 = vpack.c.bf16 %v7792, %v7792
        %v7875 = vpack.c.bf16 %v7793, %v7793
        %v7876 = vpack.c.bf16 %v7794, %v7794
        %v7877 = vpack.c.bf16 %v7795, %v7795
        %v7878 = vpack.c.bf16 %v7796, %v7796
        %v7879 = vpack.c.bf16 %v7797, %v7797
        %v7880 = vpack.c.bf16 %v7798, %v7798
        %v7881 = vpack.c.bf16 %v7799, %v7799
        %v7882 = vpack.c.bf16 %v7800, %v7800
        %v7883 = vpack.c.bf16 %v7801, %v7801
        %v7884 = vpack.c.bf16 %v7802, %v7802
        %v7885 = vpack.c.bf16 %v7803, %v7803
        %v7886 = vpack.c.bf16 %v7804, %v7804
        %v7887 = vpack.c.bf16 %v7805, %v7805
        %v7888 = vpack.c.bf16 %v7806, %v7806
        %v7889 = vpack.c.bf16 %v7807, %v7807
        %v7890 = vpack.c.bf16 %v7808, %v7808
        %v7891 = vpack.c.bf16 %v7809, %v7809
        %v7892 = vpack.c.bf16 %v7810, %v7810
        %v7893 = vpack.c.bf16 %v7811, %v7811
        %v7894 = vpack.c.bf16 %v7812, %v7812
        %v7895 = vpack.c.bf16 %v7813, %v7813
        %v7896 = vpack.c.bf16 %v7814, %v7814
        %v7897 = vpack.c.bf16 %v7815, %v7815
        %v7898 = vpack.c.bf16 %v7816, %v7816
        %v7899 = vpack.c.bf16 %v7817, %v7817
        %v7900 = vpack.c.bf16 %v7818, %v7818
        %v7901 = vpack.c.bf16 %v7819, %v7819
        %v7902 = vpack.c.bf16 %v7820, %v7820
        %v7903 = vpack.c.bf16 %v7821, %v7821
        %v7904 = vpack.c.bf16 %v7822, %v7822
        %v7905 = vpack.c.bf16 %v7823, %v7823
        %v7906 = vpack.c.bf16 %v7824, %v7824
        %v7907 = vpack.c.bf16 %v7825, %v7825
        %v7908 = vpack.c.bf16 %v7826, %v7826
        %v7909 = vpack.c.bf16 %v7827, %v7827
        %v7910 = vpack.c.bf16 %v7828, %v7828
        %v7911 = vpack.c.bf16 %v7829, %v7829
        %v7912 = vpack.c.bf16 %v7830, %v7830
        %v7913 = vpack.c.bf16 %v7831, %v7831
        %v7914 = vpack.c.bf16 %v7832, %v7832
        %v7915 = vpack.c.bf16 %v7833, %v7833
        %v7916 = vpack.c.bf16 %v7834, %v7834
        %v7917 = vpack.c.bf16 %v7835, %v7835
        %v7918 = vpack.c.bf16 %v7836, %v7836
        %v7919 = vpack.c.bf16 %v7837, %v7837
        %v7920 = vpack.c.bf16 %v7838, %v7838
        %v7921 = vpack.c.bf16 %v7839, %v7839
        %v7922 = vpack.c.bf16 %v7840, %v7840
        %v7923 = vpack.c.bf16 %v7841, %v7841
        %v7924 = vpack.c.bf16 %v7842, %v7842
        %v7925 = vpack.c.bf16 %v7843, %v7843
        %vm7926 = vcmask 519168
        %7927 = vst.msk [vmem:[%s330] sm:$0xf] %vm7926, %v7844
        %7928 = vst.msk [vmem:[%s330 + $0x4] sm:$0xf] %vm7926, %v7845
        %7929 = vst.msk [vmem:[%s330 + $0x8] sm:$0xf] %vm7926, %v7846
        %7930 = vst.msk [vmem:[%s330 + $0xc] sm:$0xf] %vm7926, %v7847
        %7931 = vst.msk [vmem:[%s330 + $0x10] sm:$0xf] %vm7926, %v7848
        %7932 = vst.msk [vmem:[%s330 + $0x14] sm:$0xf] %vm7926, %v7849
        %7933 = vst.msk [vmem:[%s330 + $0x18] sm:$0xf] %vm7926, %v7850
        %7934 = vst.msk [vmem:[%s330 + $0x1c] sm:$0xf] %vm7926, %v7851
        %7935 = vst.msk [vmem:[%s330 + $0x20] sm:$0xf] %vm7926, %v7852
        %7936 = vst.msk [vmem:[%s330 + $0x24] sm:$0xf] %vm7926, %v7853
        %7937 = vst.msk [vmem:[%s330 + $0x28] sm:$0xf] %vm7926, %v7854
        %7938 = vst.msk [vmem:[%s330 + $0x2c] sm:$0xf] %vm7926, %v7855
        %7939 = vst.msk [vmem:[%s330 + $0x30] sm:$0xf] %vm7926, %v7856
        %7940 = vst.msk [vmem:[%s330 + $0x34] sm:$0xf] %vm7926, %v7857
        %7941 = vst.msk [vmem:[%s330 + $0x38] sm:$0xf] %vm7926, %v7858
        %7942 = vst.msk [vmem:[%s330 + $0x3c] sm:$0xf] %vm7926, %v7859
        %7943 = vst.msk [vmem:[%s330 + $0x40] sm:$0xf] %vm7926, %v7860
        %7944 = vst.msk [vmem:[%s330 + $0x44] sm:$0xf] %vm7926, %v7861
        %7945 = vst.msk [vmem:[%s330 + $0x48] sm:$0xf] %vm7926, %v7862
        %7946 = vst.msk [vmem:[%s330 + $0x4c] sm:$0xf] %vm7926, %v7863
        %7947 = vst.msk [vmem:[%s330 + $0x50] sm:$0xf] %vm7926, %v7864
        %7948 = vst.msk [vmem:[%s330 + $0x54] sm:$0xf] %vm7926, %v7865
        %7949 = vst.msk [vmem:[%s330 + $0x58] sm:$0xf] %vm7926, %v7866
        %7950 = vst.msk [vmem:[%s330 + $0x5c] sm:$0xf] %vm7926, %v7867
        %7951 = vst.msk [vmem:[%s330 + $0x60] sm:$0xf] %vm7926, %v7868
        %7952 = vst.msk [vmem:[%s330 + $0x64] sm:$0xf] %vm7926, %v7869
        %7953 = vst.msk [vmem:[%s330 + $0x68] sm:$0xf] %vm7926, %v7870
        %7954 = vst.msk [vmem:[%s330 + $0x6c] sm:$0xf] %vm7926, %v7871
        %7955 = vst.msk [vmem:[%s330 + $0x70] sm:$0xf] %vm7926, %v7872
        %7956 = vst.msk [vmem:[%s330 + $0x74] sm:$0xf] %vm7926, %v7873
        %7957 = vst.msk [vmem:[%s330 + $0x78] sm:$0xf] %vm7926, %v7874
        %7958 = vst.msk [vmem:[%s330 + $0x7c] sm:$0xf] %vm7926, %v7875
        %7959 = vst.msk [vmem:[%s330 + $0x80] sm:$0xf] %vm7926, %v7876
        %7960 = vst.msk [vmem:[%s330 + $0x84] sm:$0xf] %vm7926, %v7877
        %7961 = vst.msk [vmem:[%s330 + $0x88] sm:$0xf] %vm7926, %v7878
        %7962 = vst.msk [vmem:[%s330 + $0x8c] sm:$0xf] %vm7926, %v7879
        %7963 = vst.msk [vmem:[%s330 + $0x90] sm:$0xf] %vm7926, %v7880
        %7964 = vst.msk [vmem:[%s330 + $0x94] sm:$0xf] %vm7926, %v7881
        %7965 = vst.msk [vmem:[%s330 + $0x98] sm:$0xf] %vm7926, %v7882
        %7966 = vst.msk [vmem:[%s330 + $0x9c] sm:$0xf] %vm7926, %v7883
        %7967 = vst.msk [vmem:[%s330 + $0xa0] sm:$0xf] %vm7926, %v7884
        %7968 = vst.msk [vmem:[%s330 + $0xa4] sm:$0xf] %vm7926, %v7885
        %7969 = vst.msk [vmem:[%s330 + $0xa8] sm:$0xf] %vm7926, %v7886
        %7970 = vst.msk [vmem:[%s330 + $0xac] sm:$0xf] %vm7926, %v7887
        %7971 = vst.msk [vmem:[%s330 + $0xb0] sm:$0xf] %vm7926, %v7888
        %7972 = vst.msk [vmem:[%s330 + $0xb4] sm:$0xf] %vm7926, %v7889
        %7973 = vst.msk [vmem:[%s330 + $0xb8] sm:$0xf] %vm7926, %v7890
        %7974 = vst.msk [vmem:[%s330 + $0xbc] sm:$0xf] %vm7926, %v7891
        %7975 = vst.msk [vmem:[%s330 + $0xc0] sm:$0xf] %vm7926, %v7892
        %7976 = vst.msk [vmem:[%s330 + $0xc4] sm:$0xf] %vm7926, %v7893
        %7977 = vst.msk [vmem:[%s330 + $0xc8] sm:$0xf] %vm7926, %v7894
        %7978 = vst.msk [vmem:[%s330 + $0xcc] sm:$0xf] %vm7926, %v7895
        %7979 = vst.msk [vmem:[%s330 + $0xd0] sm:$0xf] %vm7926, %v7896
        %7980 = vst.msk [vmem:[%s330 + $0xd4] sm:$0xf] %vm7926, %v7897
        %7981 = vst.msk [vmem:[%s330 + $0xd8] sm:$0xf] %vm7926, %v7898
        %7982 = vst.msk [vmem:[%s330 + $0xdc] sm:$0xf] %vm7926, %v7899
        %7983 = vst.msk [vmem:[%s330 + $0xe0] sm:$0xf] %vm7926, %v7900
        %7984 = vst.msk [vmem:[%s330 + $0xe4] sm:$0xf] %vm7926, %v7901
        %7985 = vst.msk [vmem:[%s330 + $0xe8] sm:$0xf] %vm7926, %v7902
        %7986 = vst.msk [vmem:[%s330 + $0xec] sm:$0xf] %vm7926, %v7903
        %7987 = vst.msk [vmem:[%s330 + $0xf0] sm:$0xf] %vm7926, %v7904
        %7988 = vst.msk [vmem:[%s330 + $0xf4] sm:$0xf] %vm7926, %v7905
        %7989 = vst.msk [vmem:[%s330 + $0xf8] sm:$0xf] %vm7926, %v7906
        %7990 = vst.msk [vmem:[%s330 + $0xfc] sm:$0xf] %vm7926, %v7907
        %7991 = vst.msk [vmem:[%s330 + $0x100] sm:$0xf] %vm7926, %v7908
        %7992 = vst.msk [vmem:[%s330 + $0x104] sm:$0xf] %vm7926, %v7909
        %7993 = vst.msk [vmem:[%s330 + $0x108] sm:$0xf] %vm7926, %v7910
        %7994 = vst.msk [vmem:[%s330 + $0x10c] sm:$0xf] %vm7926, %v7911
        %7995 = vst.msk [vmem:[%s330 + $0x110] sm:$0xf] %vm7926, %v7912
        %7996 = vst.msk [vmem:[%s330 + $0x114] sm:$0xf] %vm7926, %v7913
        %7997 = vst.msk [vmem:[%s330 + $0x118] sm:$0xf] %vm7926, %v7914
        %7998 = vst.msk [vmem:[%s330 + $0x11c] sm:$0xf] %vm7926, %v7915
        %7999 = vst.msk [vmem:[%s330 + $0x120] sm:$0xf] %vm7926, %v7916
        %8000 = vst.msk [vmem:[%s330 + $0x124] sm:$0xf] %vm7926, %v7917
        %8001 = vst.msk [vmem:[%s330 + $0x128] sm:$0xf] %vm7926, %v7918
        %8002 = vst.msk [vmem:[%s330 + $0x12c] sm:$0xf] %vm7926, %v7919
        %8003 = vst.msk [vmem:[%s330 + $0x130] sm:$0xf] %vm7926, %v7920
        %8004 = vst.msk [vmem:[%s330 + $0x134] sm:$0xf] %vm7926, %v7921
        %8005 = vst.msk [vmem:[%s330 + $0x138] sm:$0xf] %vm7926, %v7922
        %8006 = vst.msk [vmem:[%s330 + $0x13c] sm:$0xf] %vm7926, %v7923
        %8007 = vst.msk [vmem:[%s330 + $0x140] sm:$0xf] %vm7926, %v7924
        %vm8008 = vcmask 516096
        %8009 = vst.msk [vmem:[%s330 + $0x144] sm:$0x1] %vm8008, %v7925
        %p8010 = scmp.lt.s32.totalorder %s20, 1
        %s8011 = scalar_select %p8010, %s20, 1
        %s8012 = smul.addr %s8011, 82
        %s8013 = smul.addr %s8012, 4
        %s8014 = scalar_lea.vmem %s6, %s8013
        // Predicated region
        $region65: #{mycnn_forward.2} parent=43 // pred_check
          %p8015 = pneg %p169
        $region66: #{mycnn_forward.2} parent=43 // pred_check_branch
          %8017 = sbr.rel (%p8015) target = $region68
        $region67: #{mycnn_forward.2} parent=43 // pred_region
          _
        $region68: #{mycnn_forward.2} parent=43 // pred_fallthru
          _
      $region44: #{mycnn_forward.2} parent=5 // pred_fallthru
        _
      %p8018 = scmp.le.s32.totalorder 2, %s15
      // Predicated region
      $region69: #{mycnn_forward.2} parent=5 // pred_check
        %p8019 = pneg %p8018
      $region70: #{mycnn_forward.2} parent=5 // pred_check_branch
        %8021 = sbr.rel (%p8019) target = $region72
      $region71: #{mycnn_forward.2} parent=5 // pred_region
        %s8022 = ssub.s32 %s15, 2
        // Predicated region
        $region73: #{mycnn_forward.2} parent=71 // pred_check
          %p8023 = pneg %p175
        $region74: #{mycnn_forward.2} parent=71 // pred_check_branch
          %8025 = sbr.rel (%p8023) target = $region76
        $region75: #{mycnn_forward.2} parent=71 // pred_region
          %p8026 = scmp.lt.s32.totalorder %s21, 1
          %s8027 = scalar_select %p8026, %s21, 1
          %s8028 = smul.addr %s8027, 82
          %s8029 = smul.addr %s8028, 4
          %s8030 = scalar_lea.vmem %s6, %s8029
        $region76: #{mycnn_forward.2} parent=71 // pred_fallthru
          _
      $region72: #{mycnn_forward.2} parent=5 // pred_fallthru
        _
    $region6: #{mycnn_forward.2} parent=1 // loop_footer
      %s19 = sadd.s32 1, %s15
    $region7: #{mycnn_forward.2} parent=1 // loop_footer_branch
      %14 = sbr.rel target = $region3
    $region8: #{mycnn_forward.2} parent=1 // loop_exit
      _
    %8031 = vsyncpa [#allocation4], 1
    %s8032 = scalar_lea.sflag [#allocation4], 1
    %8033 = vsyncpa %s8032, 1
    %8034 = vsyncpa [#allocation6], 1
    %8035 = vsyncpa [#allocation9], 1

// kernel: mycnn_forward.3
$region0: #{mycnn_forward.3}
  #allocation0 [shape = 'u32[]', space=smem, size = 0x4, offset = 0x4, fixed_abs, tag = 'smem constant byte address 0x4 - core index']
  #allocation1 [shape = 'u32[72,128]{1,0:T(1,128)}', space=vmem, size = 0x9000, scoped, tag = 'internal scratch']
  #allocation2 [shape = 'f32[2,64]{1,0:T(2,128)}', space=vmem, size = 0x400, scoped, tag = 'scratch operand']
  %s0 = inlined_call_operand.vmem [shape: bf16[2,41600], index: 0, kind: input, shape index: {}]
  %s1 = inlined_call_operand.vmem [shape: bf16[2,41600,64], index: 1, kind: input, shape index: {}]
  %s2 = inlined_call_operand.vmem [shape: f32[2,1,64], index: 2, kind: input, shape index: {}]
  %s3 = inlined_call_operand.vmem [shape: f32[2,64,20], index: 3, kind: input, shape index: {}]
  %s4 = inlined_call_operand.vmem [shape: f32[2,2,20], index: 4, kind: output, shape index: {}]
  %s5 = sld [smem:[#allocation0]]
  $region57: #{mycnn_forward.3} parent=0
    _
  %s7 = ssub.s32 1, %s5
  %s8 = scalar_select 0, %s7, %s5
  loop: start=0, step=1, limit=12
  $region2: #{mycnn_forward.3} parent=0 // loop_pre_header
    _
  $region3: #{mycnn_forward.3} parent=0 // loop_header
    %s10 = sphi 0, %s14
    %p11 = scmp.ge.s32.totalorder %s10, 12
    %s17 = sphi 0, %s29
    %s18 = sphi 0, %s25
    %s19 = sphi 0, %s17
    %s20 = sphi 0, %s18
    %s21 = sphi 0, %s19
    %s22 = sphi 0, %s20
    %s32 = sphi 0, %s34
    %s35 = sphi 0, %s32
    %s36 = sphi 0, %s35
    %s52 = sphi 0, %s36
    %s60 = sphi 0, %s62
    %s63 = sphi 0, %s60
    %s64 = sphi 0, %s63
    %s80 = sphi 0, %s64
    %s86 = sphi 0, %s88
    %s89 = sphi 0, %s86
    %s90 = sphi 0, %s89
    %s106 = sphi 0, %s90
    %s112 = sphi 0, %s114
    %s115 = sphi 0, %s112
    %s116 = sphi 0, %s115
    %s132 = sphi 0, %s116
    %s138 = sphi 0, %s140
    %s141 = sphi 0, %s138
    %s142 = sphi 0, %s141
    %s158 = sphi 0, %s142
  $region4: #{mycnn_forward.3} parent=0 // loop_header_branch
    %13 = sbr.rel (%p11) target = $region8
  $region5: #{mycnn_forward.3} parent=0 // loop_body
    %s15 = ssub.s32 %s10, 1
    %s16 = ssub.s32 %s10, 2
    %s23 = sadd.s32 1, %s18
    %p24 = scmp.ge.s32.totalorder %s23, 5
    %s25 = scalar_select %p24, 0, %s23
    %s26 = sadd.s32 1, %s17
    %s27 = scalar_select %p24, %s26, %s17
    %p28 = scmp.ge.s32.totalorder %s27, 2
    %s29 = scalar_select %p28, 0, %s27
    %s30 = ssub.s32 %s18, %s25
    %p31 = scmp.eq.s32.totalorder %s30, 0
    %s33 = sadd.s32 %s32, 1
    %s34 = scalar_select %p31, %s32, %s33
    %p37 = pneg %p31
    %p38 = scmp.eq.s32.totalorder %s10, 9
    %p39 = por %p37, %p38
    %p40 = scmp.ne.s32.totalorder %s32, %s35
    %p41 = scmp.eq.s32.totalorder %s10, 0
    %p42 = por %p40, %p41
    %p43 = scmp.ne.s32.totalorder %s32, %s35
    %p44 = scmp.eq.s32.totalorder %s15, 9
    %p45 = por %p43, %p44
    %p46 = scmp.ne.s32.totalorder %s35, %s36
    %p47 = scmp.eq.s32.totalorder %s15, 0
    %p48 = por %p46, %p47
    %p49 = scmp.ne.s32.totalorder %s35, %s36
    %p50 = scmp.eq.s32.totalorder %s16, 9
    %p51 = por %p49, %p50
    %p53 = scmp.ne.s32.totalorder %s36, %s52
    %p54 = scmp.eq.s32.totalorder %s16, 0
    %p55 = por %p53, %p54
    %s56 = ssub.s32 %s17, %s29
    %s57 = ssub.s32 %s18, %s25
    %s58 = sor.u32 %s56, %s57
    %p59 = scmp.eq.s32.totalorder %s58, 0
    %s61 = sadd.s32 %s60, 1
    %s62 = scalar_select %p59, %s60, %s61
    %p65 = pneg %p59
    %p66 = scmp.eq.s32.totalorder %s10, 9
    %p67 = por %p65, %p66
    %p68 = scmp.ne.s32.totalorder %s60, %s63
    %p69 = scmp.eq.s32.totalorder %s10, 0
    %p70 = por %p68, %p69
    %p71 = scmp.ne.s32.totalorder %s60, %s63
    %p72 = scmp.eq.s32.totalorder %s15, 9
    %p73 = por %p71, %p72
    %p74 = scmp.ne.s32.totalorder %s63, %s64
    %p75 = scmp.eq.s32.totalorder %s15, 0
    %p76 = por %p74, %p75
    %p77 = scmp.ne.s32.totalorder %s63, %s64
    %p78 = scmp.eq.s32.totalorder %s16, 9
    %p79 = por %p77, %p78
    %p81 = scmp.ne.s32.totalorder %s64, %s80
    %p82 = scmp.eq.s32.totalorder %s16, 0
    %p83 = por %p81, %p82
    %s84 = ssub.s32 %s17, %s29
    %p85 = scmp.eq.s32.totalorder %s84, 0
    %s87 = sadd.s32 %s86, 1
    %s88 = scalar_select %p85, %s86, %s87
    %p91 = pneg %p85
    %p92 = scmp.eq.s32.totalorder %s10, 9
    %p93 = por %p91, %p92
    %p94 = scmp.ne.s32.totalorder %s86, %s89
    %p95 = scmp.eq.s32.totalorder %s10, 0
    %p96 = por %p94, %p95
    %p97 = scmp.ne.s32.totalorder %s86, %s89
    %p98 = scmp.eq.s32.totalorder %s15, 9
    %p99 = por %p97, %p98
    %p100 = scmp.ne.s32.totalorder %s89, %s90
    %p101 = scmp.eq.s32.totalorder %s15, 0
    %p102 = por %p100, %p101
    %p103 = scmp.ne.s32.totalorder %s89, %s90
    %p104 = scmp.eq.s32.totalorder %s16, 9
    %p105 = por %p103, %p104
    %p107 = scmp.ne.s32.totalorder %s90, %s106
    %p108 = scmp.eq.s32.totalorder %s16, 0
    %p109 = por %p107, %p108
    %s110 = ssub.s32 %s17, %s29
    %p111 = scmp.eq.s32.totalorder %s110, 0
    %s113 = sadd.s32 %s112, 1
    %s114 = scalar_select %p111, %s112, %s113
    %p117 = pneg %p111
    %p118 = scmp.eq.s32.totalorder %s10, 9
    %p119 = por %p117, %p118
    %p120 = scmp.ne.s32.totalorder %s112, %s115
    %p121 = scmp.eq.s32.totalorder %s10, 0
    %p122 = por %p120, %p121
    %p123 = scmp.ne.s32.totalorder %s112, %s115
    %p124 = scmp.eq.s32.totalorder %s15, 9
    %p125 = por %p123, %p124
    %p126 = scmp.ne.s32.totalorder %s115, %s116
    %p127 = scmp.eq.s32.totalorder %s15, 0
    %p128 = por %p126, %p127
    %p129 = scmp.ne.s32.totalorder %s115, %s116
    %p130 = scmp.eq.s32.totalorder %s16, 9
    %p131 = por %p129, %p130
    %p133 = scmp.ne.s32.totalorder %s116, %s132
    %p134 = scmp.eq.s32.totalorder %s16, 0
    %p135 = por %p133, %p134
    %s136 = ssub.s32 %s17, %s29
    %p137 = scmp.eq.s32.totalorder %s136, 0
    %s139 = sadd.s32 %s138, 1
    %s140 = scalar_select %p137, %s138, %s139
    %p143 = pneg %p137
    %p144 = scmp.eq.s32.totalorder %s10, 9
    %p145 = por %p143, %p144
    %p146 = scmp.ne.s32.totalorder %s138, %s141
    %p147 = scmp.eq.s32.totalorder %s10, 0
    %p148 = por %p146, %p147
    %p149 = scmp.ne.s32.totalorder %s138, %s141
    %p150 = scmp.eq.s32.totalorder %s15, 9
    %p151 = por %p149, %p150
    %p152 = scmp.ne.s32.totalorder %s141, %s142
    %p153 = scmp.eq.s32.totalorder %s15, 0
    %p154 = por %p152, %p153
    %p155 = scmp.ne.s32.totalorder %s141, %s142
    %p156 = scmp.eq.s32.totalorder %s16, 9
    %p157 = por %p155, %p156
    %p159 = scmp.ne.s32.totalorder %s142, %s158
    %p160 = scmp.eq.s32.totalorder %s16, 0
    %p161 = por %p159, %p160
    %p162 = scmp.le.s32.totalorder 1, %s10
    %p163 = scmp.lt.s32.totalorder %s10, 11
    %p164 = pnand %p162, %p163
    %p165 = pneg %p164
    // Predicated region
    $region9: #{mycnn_forward.3} parent=5 // pred_check
      _
    $region10: #{mycnn_forward.3} parent=5 // pred_check_branch
      %167 = sbr.rel (%p164) target = $region12
    $region11: #{mycnn_forward.3} parent=5 // pred_region
      %s168 = ssub.s32 %s10, 1
    $region12: #{mycnn_forward.3} parent=5 // pred_fallthru
      _
    %p169 = scmp.lt.s32.totalorder %s10, 10
    // Predicated region
    $region13: #{mycnn_forward.3} parent=5 // pred_check
      %p170 = pneg %p169
    $region14: #{mycnn_forward.3} parent=5 // pred_check_branch
      %172 = sbr.rel (%p170) target = $region16
    $region15: #{mycnn_forward.3} parent=5 // pred_region
      // Predicated region
      $region17: #{mycnn_forward.3} parent=15 // pred_check
        %p173 = pneg %p42
      $region18: #{mycnn_forward.3} parent=15 // pred_check_branch
        %175 = sbr.rel (%p173) target = $region20
      $region19: #{mycnn_forward.3} parent=15 // pred_region
        %s176 = smul.u32 65, %s18
        %p177 = scmp.lt.s32.totalorder %s176, 324
        %s178 = scalar_select %p177, %s176, 324
        %s179 = scalar_lea.vmem %s0, %s178
        %s180 = smul.u32 65, %s18
      $region20: #{mycnn_forward.3} parent=15 // pred_fallthru
        _
      // Predicated region
      $region21: #{mycnn_forward.3} parent=15 // pred_check
        %p181 = pneg %p70
      $region22: #{mycnn_forward.3} parent=15 // pred_check_branch
        %183 = sbr.rel (%p181) target = $region24
      $region23: #{mycnn_forward.3} parent=15 // pred_region
        %s184 = smul.u32 1040, %s18
        %p185 = scmp.lt.s32.totalorder %s17, 1
        %s186 = scalar_select %p185, %s17, 1
        %p187 = scmp.lt.s32.totalorder %s184, 5199
        %s188 = scalar_select %p187, %s184, 5199
        %s189 = smul.addr %s186, 5200
        %s190 = sadd.s32 %s188, %s189
        %s191 = smul.addr %s190, 4
        %s192 = scalar_lea.vmem %s1, %s191
        %s193 = smul.u32 1040, %s18
      $region24: #{mycnn_forward.3} parent=15 // pred_fallthru
        _
      // Predicated region
      $region25: #{mycnn_forward.3} parent=15 // pred_check
        %p194 = pneg %p96
      $region26: #{mycnn_forward.3} parent=15 // pred_check_branch
        %196 = sbr.rel (%p194) target = $region28
      $region27: #{mycnn_forward.3} parent=15 // pred_region
        %p197 = scmp.lt.s32.totalorder %s17, 1
        %s198 = scalar_select %p197, %s17, 1
        %s199 = scalar_lea.vmem %s2, %s198
      $region28: #{mycnn_forward.3} parent=15 // pred_fallthru
        _
      // Predicated region
      $region29: #{mycnn_forward.3} parent=15 // pred_check
        %p200 = pneg %p122
      $region30: #{mycnn_forward.3} parent=15 // pred_check_branch
        %202 = sbr.rel (%p200) target = $region32
      $region31: #{mycnn_forward.3} parent=15 // pred_region
        %p203 = scmp.lt.s32.totalorder %s17, 1
        %s204 = scalar_select %p203, %s17, 1
        %s205 = smul.addr %s204, 8
        %s206 = smul.addr %s205, 8
        %s207 = scalar_lea.vmem %s3, %s206
      $region32: #{mycnn_forward.3} parent=15 // pred_fallthru
        _
    $region16: #{mycnn_forward.3} parent=5 // pred_fallthru
      _
    %p208 = scmp.le.s32.totalorder 1, %s10
    %p209 = scmp.lt.s32.totalorder %s10, 11
    %p210 = pnand %p208, %p209
    %p211 = pneg %p210
    // Predicated region
    $region33: #{mycnn_forward.3} parent=5 // pred_check
      _
    $region34: #{mycnn_forward.3} parent=5 // pred_check_branch
      %213 = sbr.rel (%p210) target = $region36
    $region35: #{mycnn_forward.3} parent=5 // pred_region
      %s214 = ssub.s32 %s10, 1
      %s215 = smul.u32 65, %s20
      %p216 = scmp.lt.s32.totalorder %s215, 324
      %s217 = scalar_select %p216, %s215, 324
      %s218 = scalar_lea.vmem %s0, %s217
      %p219 = pneg %p48
      %p220 = pneg %p45
      %s221 = smul.u32 1040, %s20
      %p222 = scmp.lt.s32.totalorder %s19, 1
      %s223 = scalar_select %p222, %s19, 1
      %p224 = scmp.lt.s32.totalorder %s221, 5199
      %s225 = scalar_select %p224, %s221, 5199
      %s226 = smul.addr %s223, 5200
      %s227 = sadd.s32 %s225, %s226
      %s228 = smul.addr %s227, 4
      %s229 = scalar_lea.vmem %s1, %s228
      %p230 = pneg %p76
      %p231 = pneg %p73
      %p232 = scmp.lt.s32.totalorder %s19, 1
      %s233 = scalar_select %p232, %s19, 1
      %s234 = scalar_lea.vmem %s2, %s233
      %p235 = pneg %p102
      %p236 = pneg %p99
      %p237 = scmp.lt.s32.totalorder %s19, 1
      %s238 = scalar_select %p237, %s19, 1
      %s239 = smul.addr %s238, 8
      %s240 = smul.addr %s239, 8
      %s241 = scalar_lea.vmem %s3, %s240
      %p242 = pneg %p128
      %p243 = pneg %p125
      %p244 = pneg %p154
      %p245 = pneg %p151
      %p246 = scmp.lt.s32.totalorder %s19, 1
      %s247 = scalar_select %p246, %s19, 1
      %s248 = smul.addr %s247, 2
      %s249 = scalar_lea.vmem %s4, %s248
      %s250 = smul.u32 65, %s20
      %p251 = scmp.lt.s32.totalorder %s250, 324
      %s252 = scalar_select %p251, %s250, 324
      %s253 = scalar_lea.vmem %s0, %s252
      %s254 = smul.u32 65, %s20
      %s255 = smul.u32 1040, %s20
      %p256 = scmp.lt.s32.totalorder %s19, 1
      %s257 = scalar_select %p256, %s19, 1
      %p258 = scmp.lt.s32.totalorder %s255, 5199
      %s259 = scalar_select %p258, %s255, 5199
      %s260 = smul.addr %s257, 5200
      %s261 = sadd.s32 %s259, %s260
      %s262 = smul.addr %s261, 4
      %s263 = scalar_lea.vmem %s1, %s262
      %s264 = smul.u32 1040, %s20
      %p265 = scmp.lt.s32.totalorder %s19, 1
      %s266 = scalar_select %p265, %s19, 1
      %s267 = scalar_lea.vmem %s2, %s266
      %p268 = scmp.lt.s32.totalorder %s19, 1
      %s269 = scalar_select %p268, %s19, 1
      %s270 = smul.addr %s269, 8
      %s271 = smul.addr %s270, 8
      %s272 = scalar_lea.vmem %s3, %s271
      %p273 = scmp.lt.s32.totalorder %s19, 1
      %s274 = scalar_select %p273, %s19, 1
      %s275 = smul.addr %s274, 2
      %s276 = scalar_lea.vmem %s4, %s275
      %p277 = scmp.eq.s32.totalorder %s20, 0
      // Predicated region
      $region37: #{mycnn_forward.3} parent=35 // pred_check
        %p278 = pneg %p277
      $region38: #{mycnn_forward.3} parent=35 // pred_check_branch
        %280 = sbr.rel (%p278) target = $region40
      $region39: #{mycnn_forward.3} parent=35 // pred_region
        %vm281 = vcmask 517120
        %282 = vst.msk [vmem:[#allocation2] sm:$0x3] %vm281, 0.0
      $region40: #{mycnn_forward.3} parent=35 // pred_fallthru
        _
      %v283 = vld [vmem:[#allocation2] sm:$0x3]
      %v284 = vld [vmem:[%s253] sm:$0xff]
      %v285 = vld [vmem:[%s253 + $0x8] sm:$0xff]
      %v286 = vld [vmem:[%s253 + $0x10] sm:$0xff]
      %v287 = vld [vmem:[%s253 + $0x18] sm:$0xff]
      %v288 = vld [vmem:[%s253 + $0x20] sm:$0xff]
      %v289 = vld [vmem:[%s253 + $0x28] sm:$0xff]
      %v290 = vld [vmem:[%s253 + $0x30] sm:$0xff]
      %v291 = vld [vmem:[%s253 + $0x38] sm:$0xff]
      %v292 = vld [vmem:[%s253 + $0x40] sm:$0x1]
      %v293 = vld [vmem:[%s263] sm:$0xf]
      %v294 = vld [vmem:[%s263 + $0x4] sm:$0xf]
      %v295 = vld [vmem:[%s263 + $0x8] sm:$0xf]
      %v296 = vld [vmem:[%s263 + $0xc] sm:$0xf]
      %v297 = vld [vmem:[%s263 + $0x10] sm:$0xf]
      %v298 = vld [vmem:[%s263 + $0x14] sm:$0xf]
      %v299 = vld [vmem:[%s263 + $0x18] sm:$0xf]
      %v300 = vld [vmem:[%s263 + $0x1c] sm:$0xf]
      %v301 = vld [vmem:[%s263 + $0x20] sm:$0xf]
      %v302 = vld [vmem:[%s263 + $0x24] sm:$0xf]
      %v303 = vld [vmem:[%s263 + $0x28] sm:$0xf]
      %v304 = vld [vmem:[%s263 + $0x2c] sm:$0xf]
      %v305 = vld [vmem:[%s263 + $0x30] sm:$0xf]
      %v306 = vld [vmem:[%s263 + $0x34] sm:$0xf]
      %v307 = vld [vmem:[%s263 + $0x38] sm:$0xf]
      %v308 = vld [vmem:[%s263 + $0x3c] sm:$0xf]
      %v309 = vld [vmem:[%s263 + $0x40] sm:$0xf]
      %v310 = vld [vmem:[%s263 + $0x44] sm:$0xf]
      %v311 = vld [vmem:[%s263 + $0x48] sm:$0xf]
      %v312 = vld [vmem:[%s263 + $0x4c] sm:$0xf]
      %v313 = vld [vmem:[%s263 + $0x50] sm:$0xf]
      %v314 = vld [vmem:[%s263 + $0x54] sm:$0xf]
      %v315 = vld [vmem:[%s263 + $0x58] sm:$0xf]
      %v316 = vld [vmem:[%s263 + $0x5c] sm:$0xf]
      %v317 = vld [vmem:[%s263 + $0x60] sm:$0xf]
      %v318 = vld [vmem:[%s263 + $0x64] sm:$0xf]
      %v319 = vld [vmem:[%s263 + $0x68] sm:$0xf]
      %v320 = vld [vmem:[%s263 + $0x6c] sm:$0xf]
      %v321 = vld [vmem:[%s263 + $0x70] sm:$0xf]
      %v322 = vld [vmem:[%s263 + $0x74] sm:$0xf]
      %v323 = vld [vmem:[%s263 + $0x78] sm:$0xf]
      %v324 = vld [vmem:[%s263 + $0x7c] sm:$0xf]
      %v325 = vld [vmem:[%s263 + $0x80] sm:$0xf]
      %v326 = vld [vmem:[%s263 + $0x84] sm:$0xf]
      %v327 = vld [vmem:[%s263 + $0x88] sm:$0xf]
      %v328 = vld [vmem:[%s263 + $0x8c] sm:$0xf]
      %v329 = vld [vmem:[%s263 + $0x90] sm:$0xf]
      %v330 = vld [vmem:[%s263 + $0x94] sm:$0xf]
      %v331 = vld [vmem:[%s263 + $0x98] sm:$0xf]
      %v332 = vld [vmem:[%s263 + $0x9c] sm:$0xf]
      %v333 = vld [vmem:[%s263 + $0xa0] sm:$0xf]
      %v334 = vld [vmem:[%s263 + $0xa4] sm:$0xf]
      %v335 = vld [vmem:[%s263 + $0xa8] sm:$0xf]
      %v336 = vld [vmem:[%s263 + $0xac] sm:$0xf]
      %v337 = vld [vmem:[%s263 + $0xb0] sm:$0xf]
      %v338 = vld [vmem:[%s263 + $0xb4] sm:$0xf]
      %v339 = vld [vmem:[%s263 + $0xb8] sm:$0xf]
      %v340 = vld [vmem:[%s263 + $0xbc] sm:$0xf]
      %v341 = vld [vmem:[%s263 + $0xc0] sm:$0xf]
      %v342 = vld [vmem:[%s263 + $0xc4] sm:$0xf]
      %v343 = vld [vmem:[%s263 + $0xc8] sm:$0xf]
      %v344 = vld [vmem:[%s263 + $0xcc] sm:$0xf]
      %v345 = vld [vmem:[%s263 + $0xd0] sm:$0xf]
      %v346 = vld [vmem:[%s263 + $0xd4] sm:$0xf]
      %v347 = vld [vmem:[%s263 + $0xd8] sm:$0xf]
      %v348 = vld [vmem:[%s263 + $0xdc] sm:$0xf]
      %v349 = vld [vmem:[%s263 + $0xe0] sm:$0xf]
      %v350 = vld [vmem:[%s263 + $0xe4] sm:$0xf]
      %v351 = vld [vmem:[%s263 + $0xe8] sm:$0xf]
      %v352 = vld [vmem:[%s263 + $0xec] sm:$0xf]
      %v353 = vld [vmem:[%s263 + $0xf0] sm:$0xf]
      %v354 = vld [vmem:[%s263 + $0xf4] sm:$0xf]
      %v355 = vld [vmem:[%s263 + $0xf8] sm:$0xf]
      %v356 = vld [vmem:[%s263 + $0xfc] sm:$0xf]
      %v357 = vld [vmem:[%s263 + $0x100] sm:$0xf]
      %v358 = vld [vmem:[%s263 + $0x104] sm:$0xf]
      %v359 = vld [vmem:[%s263 + $0x108] sm:$0xf]
      %v360 = vld [vmem:[%s263 + $0x10c] sm:$0xf]
      %v361 = vld [vmem:[%s263 + $0x110] sm:$0xf]
      %v362 = vld [vmem:[%s263 + $0x114] sm:$0xf]
      %v363 = vld [vmem:[%s263 + $0x118] sm:$0xf]
      %v364 = vld [vmem:[%s263 + $0x11c] sm:$0xf]
      %v365 = vld [vmem:[%s263 + $0x120] sm:$0xf]
      %v366 = vld [vmem:[%s263 + $0x124] sm:$0xf]
      %v367 = vld [vmem:[%s263 + $0x128] sm:$0xf]
      %v368 = vld [vmem:[%s263 + $0x12c] sm:$0xf]
      %v369 = vld [vmem:[%s263 + $0x130] sm:$0xf]
      %v370 = vld [vmem:[%s263 + $0x134] sm:$0xf]
      %v371 = vld [vmem:[%s263 + $0x138] sm:$0xf]
      %v372 = vld [vmem:[%s263 + $0x13c] sm:$0xf]
      %v373 = vld [vmem:[%s263 + $0x140] sm:$0xf]
      %v374 = vld [vmem:[%s263 + $0x144] sm:$0xf]
      %v375 = vld [vmem:[%s263 + $0x148] sm:$0xf]
      %v376 = vld [vmem:[%s263 + $0x14c] sm:$0xf]
      %v377 = vld [vmem:[%s263 + $0x150] sm:$0xf]
      %v378 = vld [vmem:[%s263 + $0x154] sm:$0xf]
      %v379 = vld [vmem:[%s263 + $0x158] sm:$0xf]
      %v380 = vld [vmem:[%s263 + $0x15c] sm:$0xf]
      %v381 = vld [vmem:[%s263 + $0x160] sm:$0xf]
      %v382 = vld [vmem:[%s263 + $0x164] sm:$0xf]
      %v383 = vld [vmem:[%s263 + $0x168] sm:$0xf]
      %v384 = vld [vmem:[%s263 + $0x16c] sm:$0xf]
      %v385 = vld [vmem:[%s263 + $0x170] sm:$0xf]
      %v386 = vld [vmem:[%s263 + $0x174] sm:$0xf]
      %v387 = vld [vmem:[%s263 + $0x178] sm:$0xf]
      %v388 = vld [vmem:[%s263 + $0x17c] sm:$0xf]
      %v389 = vld [vmem:[%s263 + $0x180] sm:$0xf]
      %v390 = vld [vmem:[%s263 + $0x184] sm:$0xf]
      %v391 = vld [vmem:[%s263 + $0x188] sm:$0xf]
      %v392 = vld [vmem:[%s263 + $0x18c] sm:$0xf]
      %v393 = vld [vmem:[%s263 + $0x190] sm:$0xf]
      %v394 = vld [vmem:[%s263 + $0x194] sm:$0xf]
      %v395 = vld [vmem:[%s263 + $0x198] sm:$0xf]
      %v396 = vld [vmem:[%s263 + $0x19c] sm:$0xf]
      %v397 = vld [vmem:[%s263 + $0x1a0] sm:$0xf]
      %v398 = vld [vmem:[%s263 + $0x1a4] sm:$0xf]
      %v399 = vld [vmem:[%s263 + $0x1a8] sm:$0xf]
      %v400 = vld [vmem:[%s263 + $0x1ac] sm:$0xf]
      %v401 = vld [vmem:[%s263 + $0x1b0] sm:$0xf]
      %v402 = vld [vmem:[%s263 + $0x1b4] sm:$0xf]
      %v403 = vld [vmem:[%s263 + $0x1b8] sm:$0xf]
      %v404 = vld [vmem:[%s263 + $0x1bc] sm:$0xf]
      %v405 = vld [vmem:[%s263 + $0x1c0] sm:$0xf]
      %v406 = vld [vmem:[%s263 + $0x1c4] sm:$0xf]
      %v407 = vld [vmem:[%s263 + $0x1c8] sm:$0xf]
      %v408 = vld [vmem:[%s263 + $0x1cc] sm:$0xf]
      %v409 = vld [vmem:[%s263 + $0x1d0] sm:$0xf]
      %v410 = vld [vmem:[%s263 + $0x1d4] sm:$0xf]
      %v411 = vld [vmem:[%s263 + $0x1d8] sm:$0xf]
      %v412 = vld [vmem:[%s263 + $0x1dc] sm:$0xf]
      %v413 = vld [vmem:[%s263 + $0x1e0] sm:$0xf]
      %v414 = vld [vmem:[%s263 + $0x1e4] sm:$0xf]
      %v415 = vld [vmem:[%s263 + $0x1e8] sm:$0xf]
      %v416 = vld [vmem:[%s263 + $0x1ec] sm:$0xf]
      %v417 = vld [vmem:[%s263 + $0x1f0] sm:$0xf]
      %v418 = vld [vmem:[%s263 + $0x1f4] sm:$0xf]
      %v419 = vld [vmem:[%s263 + $0x1f8] sm:$0xf]
      %v420 = vld [vmem:[%s263 + $0x1fc] sm:$0xf]
      %v421 = vld [vmem:[%s263 + $0x200] sm:$0xf]
      %v422 = vld [vmem:[%s263 + $0x204] sm:$0xf]
      %v423 = vld [vmem:[%s263 + $0x208] sm:$0xf]
      %v424 = vld [vmem:[%s263 + $0x20c] sm:$0xf]
      %v425 = vld [vmem:[%s263 + $0x210] sm:$0xf]
      %v426 = vld [vmem:[%s263 + $0x214] sm:$0xf]
      %v427 = vld [vmem:[%s263 + $0x218] sm:$0xf]
      %v428 = vld [vmem:[%s263 + $0x21c] sm:$0xf]
      %v429 = vld [vmem:[%s263 + $0x220] sm:$0xf]
      %v430 = vld [vmem:[%s263 + $0x224] sm:$0xf]
      %v431 = vld [vmem:[%s263 + $0x228] sm:$0xf]
      %v432 = vld [vmem:[%s263 + $0x22c] sm:$0xf]
      %v433 = vld [vmem:[%s263 + $0x230] sm:$0xf]
      %v434 = vld [vmem:[%s263 + $0x234] sm:$0xf]
      %v435 = vld [vmem:[%s263 + $0x238] sm:$0xf]
      %v436 = vld [vmem:[%s263 + $0x23c] sm:$0xf]
      %v437 = vld [vmem:[%s263 + $0x240] sm:$0xf]
      %v438 = vld [vmem:[%s263 + $0x244] sm:$0xf]
      %v439 = vld [vmem:[%s263 + $0x248] sm:$0xf]
      %v440 = vld [vmem:[%s263 + $0x24c] sm:$0xf]
      %v441 = vld [vmem:[%s263 + $0x250] sm:$0xf]
      %v442 = vld [vmem:[%s263 + $0x254] sm:$0xf]
      %v443 = vld [vmem:[%s263 + $0x258] sm:$0xf]
      %v444 = vld [vmem:[%s263 + $0x25c] sm:$0xf]
      %v445 = vld [vmem:[%s263 + $0x260] sm:$0xf]
      %v446 = vld [vmem:[%s263 + $0x264] sm:$0xf]
      %v447 = vld [vmem:[%s263 + $0x268] sm:$0xf]
      %v448 = vld [vmem:[%s263 + $0x26c] sm:$0xf]
      %v449 = vld [vmem:[%s263 + $0x270] sm:$0xf]
      %v450 = vld [vmem:[%s263 + $0x274] sm:$0xf]
      %v451 = vld [vmem:[%s263 + $0x278] sm:$0xf]
      %v452 = vld [vmem:[%s263 + $0x27c] sm:$0xf]
      %v453 = vld [vmem:[%s263 + $0x280] sm:$0xf]
      %v454 = vld [vmem:[%s263 + $0x284] sm:$0xf]
      %v455 = vld [vmem:[%s263 + $0x288] sm:$0xf]
      %v456 = vld [vmem:[%s263 + $0x28c] sm:$0xf]
      %v457 = vld [vmem:[%s263 + $0x290] sm:$0xf]
      %v458 = vld [vmem:[%s263 + $0x294] sm:$0xf]
      %v459 = vld [vmem:[%s263 + $0x298] sm:$0xf]
      %v460 = vld [vmem:[%s263 + $0x29c] sm:$0xf]
      %v461 = vld [vmem:[%s263 + $0x2a0] sm:$0xf]
      %v462 = vld [vmem:[%s263 + $0x2a4] sm:$0xf]
      %v463 = vld [vmem:[%s263 + $0x2a8] sm:$0xf]
      %v464 = vld [vmem:[%s263 + $0x2ac] sm:$0xf]
      %v465 = vld [vmem:[%s263 + $0x2b0] sm:$0xf]
      %v466 = vld [vmem:[%s263 + $0x2b4] sm:$0xf]
      %v467 = vld [vmem:[%s263 + $0x2b8] sm:$0xf]
      %v468 = vld [vmem:[%s263 + $0x2bc] sm:$0xf]
      %v469 = vld [vmem:[%s263 + $0x2c0] sm:$0xf]
      %v470 = vld [vmem:[%s263 + $0x2c4] sm:$0xf]
      %v471 = vld [vmem:[%s263 + $0x2c8] sm:$0xf]
      %v472 = vld [vmem:[%s263 + $0x2cc] sm:$0xf]
      %v473 = vld [vmem:[%s263 + $0x2d0] sm:$0xf]
      %v474 = vld [vmem:[%s263 + $0x2d4] sm:$0xf]
      %v475 = vld [vmem:[%s263 + $0x2d8] sm:$0xf]
      %v476 = vld [vmem:[%s263 + $0x2dc] sm:$0xf]
      %v477 = vld [vmem:[%s263 + $0x2e0] sm:$0xf]
      %v478 = vld [vmem:[%s263 + $0x2e4] sm:$0xf]
      %v479 = vld [vmem:[%s263 + $0x2e8] sm:$0xf]
      %v480 = vld [vmem:[%s263 + $0x2ec] sm:$0xf]
      %v481 = vld [vmem:[%s263 + $0x2f0] sm:$0xf]
      %v482 = vld [vmem:[%s263 + $0x2f4] sm:$0xf]
      %v483 = vld [vmem:[%s263 + $0x2f8] sm:$0xf]
      %v484 = vld [vmem:[%s263 + $0x2fc] sm:$0xf]
      %v485 = vld [vmem:[%s263 + $0x300] sm:$0xf]
      %v486 = vld [vmem:[%s263 + $0x304] sm:$0xf]
      %v487 = vld [vmem:[%s263 + $0x308] sm:$0xf]
      %v488 = vld [vmem:[%s263 + $0x30c] sm:$0xf]
      %v489 = vld [vmem:[%s263 + $0x310] sm:$0xf]
      %v490 = vld [vmem:[%s263 + $0x314] sm:$0xf]
      %v491 = vld [vmem:[%s263 + $0x318] sm:$0xf]
      %v492 = vld [vmem:[%s263 + $0x31c] sm:$0xf]
      %v493 = vld [vmem:[%s263 + $0x320] sm:$0xf]
      %v494 = vld [vmem:[%s263 + $0x324] sm:$0xf]
      %v495 = vld [vmem:[%s263 + $0x328] sm:$0xf]
      %v496 = vld [vmem:[%s263 + $0x32c] sm:$0xf]
      %v497 = vld [vmem:[%s263 + $0x330] sm:$0xf]
      %v498 = vld [vmem:[%s263 + $0x334] sm:$0xf]
      %v499 = vld [vmem:[%s263 + $0x338] sm:$0xf]
      %v500 = vld [vmem:[%s263 + $0x33c] sm:$0xf]
      %v501 = vld [vmem:[%s263 + $0x340] sm:$0xf]
      %v502 = vld [vmem:[%s263 + $0x344] sm:$0xf]
      %v503 = vld [vmem:[%s263 + $0x348] sm:$0xf]
      %v504 = vld [vmem:[%s263 + $0x34c] sm:$0xf]
      %v505 = vld [vmem:[%s263 + $0x350] sm:$0xf]
      %v506 = vld [vmem:[%s263 + $0x354] sm:$0xf]
      %v507 = vld [vmem:[%s263 + $0x358] sm:$0xf]
      %v508 = vld [vmem:[%s263 + $0x35c] sm:$0xf]
      %v509 = vld [vmem:[%s263 + $0x360] sm:$0xf]
      %v510 = vld [vmem:[%s263 + $0x364] sm:$0xf]
      %v511 = vld [vmem:[%s263 + $0x368] sm:$0xf]
      %v512 = vld [vmem:[%s263 + $0x36c] sm:$0xf]
      %v513 = vld [vmem:[%s263 + $0x370] sm:$0xf]
      %v514 = vld [vmem:[%s263 + $0x374] sm:$0xf]
      %v515 = vld [vmem:[%s263 + $0x378] sm:$0xf]
      %v516 = vld [vmem:[%s263 + $0x37c] sm:$0xf]
      %v517 = vld [vmem:[%s263 + $0x380] sm:$0xf]
      %v518 = vld [vmem:[%s263 + $0x384] sm:$0xf]
      %v519 = vld [vmem:[%s263 + $0x388] sm:$0xf]
      %v520 = vld [vmem:[%s263 + $0x38c] sm:$0xf]
      %v521 = vld [vmem:[%s263 + $0x390] sm:$0xf]
      %v522 = vld [vmem:[%s263 + $0x394] sm:$0xf]
      %v523 = vld [vmem:[%s263 + $0x398] sm:$0xf]
      %v524 = vld [vmem:[%s263 + $0x39c] sm:$0xf]
      %v525 = vld [vmem:[%s263 + $0x3a0] sm:$0xf]
      %v526 = vld [vmem:[%s263 + $0x3a4] sm:$0xf]
      %v527 = vld [vmem:[%s263 + $0x3a8] sm:$0xf]
      %v528 = vld [vmem:[%s263 + $0x3ac] sm:$0xf]
      %v529 = vld [vmem:[%s263 + $0x3b0] sm:$0xf]
      %v530 = vld [vmem:[%s263 + $0x3b4] sm:$0xf]
      %v531 = vld [vmem:[%s263 + $0x3b8] sm:$0xf]
      %v532 = vld [vmem:[%s263 + $0x3bc] sm:$0xf]
      %v533 = vld [vmem:[%s263 + $0x3c0] sm:$0xf]
      %v534 = vld [vmem:[%s263 + $0x3c4] sm:$0xf]
      %v535 = vld [vmem:[%s263 + $0x3c8] sm:$0xf]
      %v536 = vld [vmem:[%s263 + $0x3cc] sm:$0xf]
      %v537 = vld [vmem:[%s263 + $0x3d0] sm:$0xf]
      %v538 = vld [vmem:[%s263 + $0x3d4] sm:$0xf]
      %v539 = vld [vmem:[%s263 + $0x3d8] sm:$0xf]
      %v540 = vld [vmem:[%s263 + $0x3dc] sm:$0xf]
      %v541 = vld [vmem:[%s263 + $0x3e0] sm:$0xf]
      %v542 = vld [vmem:[%s263 + $0x3e4] sm:$0xf]
      %v543 = vld [vmem:[%s263 + $0x3e8] sm:$0xf]
      %v544 = vld [vmem:[%s263 + $0x3ec] sm:$0xf]
      %v545 = vld [vmem:[%s263 + $0x3f0] sm:$0xf]
      %v546 = vld [vmem:[%s263 + $0x3f4] sm:$0xf]
      %v547 = vld [vmem:[%s263 + $0x3f8] sm:$0xf]
      %v548 = vld [vmem:[%s263 + $0x3fc] sm:$0xf]
      %v549 = vld [vmem:[%s263 + $0x400] sm:$0xf]
      %v550 = vld [vmem:[%s263 + $0x404] sm:$0xf]
      %v551 = vld [vmem:[%s263 + $0x408] sm:$0xf]
      %v552 = vld [vmem:[%s263 + $0x40c] sm:$0xf]
      %v553 = vld [vmem:[%s263 + $0x410] sm:$0xf]
      %v554 = vld [vmem:[%s263 + $0x414] sm:$0xf]
      %v555 = vld [vmem:[%s263 + $0x418] sm:$0xf]
      %v556 = vld [vmem:[%s263 + $0x41c] sm:$0xf]
      %v557 = vld [vmem:[%s263 + $0x420] sm:$0xf]
      %v558 = vld [vmem:[%s263 + $0x424] sm:$0xf]
      %v559 = vld [vmem:[%s263 + $0x428] sm:$0xf]
      %v560 = vld [vmem:[%s263 + $0x42c] sm:$0xf]
      %v561 = vld [vmem:[%s263 + $0x430] sm:$0xf]
      %v562 = vld [vmem:[%s263 + $0x434] sm:$0xf]
      %v563 = vld [vmem:[%s263 + $0x438] sm:$0xf]
      %v564 = vld [vmem:[%s263 + $0x43c] sm:$0xf]
      %v565 = vld [vmem:[%s263 + $0x440] sm:$0xf]
      %v566 = vld [vmem:[%s263 + $0x444] sm:$0xf]
      %v567 = vld [vmem:[%s263 + $0x448] sm:$0xf]
      %v568 = vld [vmem:[%s263 + $0x44c] sm:$0xf]
      %v569 = vld [vmem:[%s263 + $0x450] sm:$0xf]
      %v570 = vld [vmem:[%s263 + $0x454] sm:$0xf]
      %v571 = vld [vmem:[%s263 + $0x458] sm:$0xf]
      %v572 = vld [vmem:[%s263 + $0x45c] sm:$0xf]
      %v573 = vld [vmem:[%s263 + $0x460] sm:$0xf]
      %v574 = vld [vmem:[%s263 + $0x464] sm:$0xf]
      %v575 = vld [vmem:[%s263 + $0x468] sm:$0xf]
      %v576 = vld [vmem:[%s263 + $0x46c] sm:$0xf]
      %v577 = vld [vmem:[%s263 + $0x470] sm:$0xf]
      %v578 = vld [vmem:[%s263 + $0x474] sm:$0xf]
      %v579 = vld [vmem:[%s263 + $0x478] sm:$0xf]
      %v580 = vld [vmem:[%s263 + $0x47c] sm:$0xf]
      %v581 = vld [vmem:[%s263 + $0x480] sm:$0xf]
      %v582 = vld [vmem:[%s263 + $0x484] sm:$0xf]
      %v583 = vld [vmem:[%s263 + $0x488] sm:$0xf]
      %v584 = vld [vmem:[%s263 + $0x48c] sm:$0xf]
      %v585 = vld [vmem:[%s263 + $0x490] sm:$0xf]
      %v586 = vld [vmem:[%s263 + $0x494] sm:$0xf]
      %v587 = vld [vmem:[%s263 + $0x498] sm:$0xf]
      %v588 = vld [vmem:[%s263 + $0x49c] sm:$0xf]
      %v589 = vld [vmem:[%s263 + $0x4a0] sm:$0xf]
      %v590 = vld [vmem:[%s263 + $0x4a4] sm:$0xf]
      %v591 = vld [vmem:[%s263 + $0x4a8] sm:$0xf]
      %v592 = vld [vmem:[%s263 + $0x4ac] sm:$0xf]
      %v593 = vld [vmem:[%s263 + $0x4b0] sm:$0xf]
      %v594 = vld [vmem:[%s263 + $0x4b4] sm:$0xf]
      %v595 = vld [vmem:[%s263 + $0x4b8] sm:$0xf]
      %v596 = vld [vmem:[%s263 + $0x4bc] sm:$0xf]
      %v597 = vld [vmem:[%s263 + $0x4c0] sm:$0xf]
      %v598 = vld [vmem:[%s263 + $0x4c4] sm:$0xf]
      %v599 = vld [vmem:[%s263 + $0x4c8] sm:$0xf]
      %v600 = vld [vmem:[%s263 + $0x4cc] sm:$0xf]
      %v601 = vld [vmem:[%s263 + $0x4d0] sm:$0xf]
      %v602 = vld [vmem:[%s263 + $0x4d4] sm:$0xf]
      %v603 = vld [vmem:[%s263 + $0x4d8] sm:$0xf]
      %v604 = vld [vmem:[%s263 + $0x4dc] sm:$0xf]
      %v605 = vld [vmem:[%s263 + $0x4e0] sm:$0xf]
      %v606 = vld [vmem:[%s263 + $0x4e4] sm:$0xf]
      %v607 = vld [vmem:[%s263 + $0x4e8] sm:$0xf]
      %v608 = vld [vmem:[%s263 + $0x4ec] sm:$0xf]
      %v609 = vld [vmem:[%s263 + $0x4f0] sm:$0xf]
      %v610 = vld [vmem:[%s263 + $0x4f4] sm:$0xf]
      %v611 = vld [vmem:[%s263 + $0x4f8] sm:$0xf]
      %v612 = vld [vmem:[%s263 + $0x4fc] sm:$0xf]
      %v613 = vld [vmem:[%s263 + $0x500] sm:$0xf]
      %v614 = vld [vmem:[%s263 + $0x504] sm:$0xf]
      %v615 = vld [vmem:[%s263 + $0x508] sm:$0xf]
      %v616 = vld [vmem:[%s263 + $0x50c] sm:$0xf]
      %v617 = vld [vmem:[%s263 + $0x510] sm:$0xf]
      %v618 = vld [vmem:[%s263 + $0x514] sm:$0xf]
      %v619 = vld [vmem:[%s263 + $0x518] sm:$0xf]
      %v620 = vld [vmem:[%s263 + $0x51c] sm:$0xf]
      %v621 = vld [vmem:[%s263 + $0x520] sm:$0xf]
      %v622 = vld [vmem:[%s263 + $0x524] sm:$0xf]
      %v623 = vld [vmem:[%s263 + $0x528] sm:$0xf]
      %v624 = vld [vmem:[%s263 + $0x52c] sm:$0xf]
      %v625 = vld [vmem:[%s263 + $0x530] sm:$0xf]
      %v626 = vld [vmem:[%s263 + $0x534] sm:$0xf]
      %v627 = vld [vmem:[%s263 + $0x538] sm:$0xf]
      %v628 = vld [vmem:[%s263 + $0x53c] sm:$0xf]
      %v629 = vld [vmem:[%s263 + $0x540] sm:$0xf]
      %v630 = vld [vmem:[%s263 + $0x544] sm:$0xf]
      %v631 = vld [vmem:[%s263 + $0x548] sm:$0xf]
      %v632 = vld [vmem:[%s263 + $0x54c] sm:$0xf]
      %v633 = vld [vmem:[%s263 + $0x550] sm:$0xf]
      %v634 = vld [vmem:[%s263 + $0x554] sm:$0xf]
      %v635 = vld [vmem:[%s263 + $0x558] sm:$0xf]
      %v636 = vld [vmem:[%s263 + $0x55c] sm:$0xf]
      %v637 = vld [vmem:[%s263 + $0x560] sm:$0xf]
      %v638 = vld [vmem:[%s263 + $0x564] sm:$0xf]
      %v639 = vld [vmem:[%s263 + $0x568] sm:$0xf]
      %v640 = vld [vmem:[%s263 + $0x56c] sm:$0xf]
      %v641 = vld [vmem:[%s263 + $0x570] sm:$0xf]
      %v642 = vld [vmem:[%s263 + $0x574] sm:$0xf]
      %v643 = vld [vmem:[%s263 + $0x578] sm:$0xf]
      %v644 = vld [vmem:[%s263 + $0x57c] sm:$0xf]
      %v645 = vld [vmem:[%s263 + $0x580] sm:$0xf]
      %v646 = vld [vmem:[%s263 + $0x584] sm:$0xf]
      %v647 = vld [vmem:[%s263 + $0x588] sm:$0xf]
      %v648 = vld [vmem:[%s263 + $0x58c] sm:$0xf]
      %v649 = vld [vmem:[%s263 + $0x590] sm:$0xf]
      %v650 = vld [vmem:[%s263 + $0x594] sm:$0xf]
      %v651 = vld [vmem:[%s263 + $0x598] sm:$0xf]
      %v652 = vld [vmem:[%s263 + $0x59c] sm:$0xf]
      %v653 = vld [vmem:[%s263 + $0x5a0] sm:$0xf]
      %v654 = vld [vmem:[%s263 + $0x5a4] sm:$0xf]
      %v655 = vld [vmem:[%s263 + $0x5a8] sm:$0xf]
      %v656 = vld [vmem:[%s263 + $0x5ac] sm:$0xf]
      %v657 = vld [vmem:[%s263 + $0x5b0] sm:$0xf]
      %v658 = vld [vmem:[%s263 + $0x5b4] sm:$0xf]
      %v659 = vld [vmem:[%s263 + $0x5b8] sm:$0xf]
      %v660 = vld [vmem:[%s263 + $0x5bc] sm:$0xf]
      %v661 = vld [vmem:[%s263 + $0x5c0] sm:$0xf]
      %v662 = vld [vmem:[%s263 + $0x5c4] sm:$0xf]
      %v663 = vld [vmem:[%s263 + $0x5c8] sm:$0xf]
      %v664 = vld [vmem:[%s263 + $0x5cc] sm:$0xf]
      %v665 = vld [vmem:[%s263 + $0x5d0] sm:$0xf]
      %v666 = vld [vmem:[%s263 + $0x5d4] sm:$0xf]
      %v667 = vld [vmem:[%s263 + $0x5d8] sm:$0xf]
      %v668 = vld [vmem:[%s263 + $0x5dc] sm:$0xf]
      %v669 = vld [vmem:[%s263 + $0x5e0] sm:$0xf]
      %v670 = vld [vmem:[%s263 + $0x5e4] sm:$0xf]
      %v671 = vld [vmem:[%s263 + $0x5e8] sm:$0xf]
      %v672 = vld [vmem:[%s263 + $0x5ec] sm:$0xf]
      %v673 = vld [vmem:[%s263 + $0x5f0] sm:$0xf]
      %v674 = vld [vmem:[%s263 + $0x5f4] sm:$0xf]
      %v675 = vld [vmem:[%s263 + $0x5f8] sm:$0xf]
      %v676 = vld [vmem:[%s263 + $0x5fc] sm:$0xf]
      %v677 = vld [vmem:[%s263 + $0x600] sm:$0xf]
      %v678 = vld [vmem:[%s263 + $0x604] sm:$0xf]
      %v679 = vld [vmem:[%s263 + $0x608] sm:$0xf]
      %v680 = vld [vmem:[%s263 + $0x60c] sm:$0xf]
      %v681 = vld [vmem:[%s263 + $0x610] sm:$0xf]
      %v682 = vld [vmem:[%s263 + $0x614] sm:$0xf]
      %v683 = vld [vmem:[%s263 + $0x618] sm:$0xf]
      %v684 = vld [vmem:[%s263 + $0x61c] sm:$0xf]
      %v685 = vld [vmem:[%s263 + $0x620] sm:$0xf]
      %v686 = vld [vmem:[%s263 + $0x624] sm:$0xf]
      %v687 = vld [vmem:[%s263 + $0x628] sm:$0xf]
      %v688 = vld [vmem:[%s263 + $0x62c] sm:$0xf]
      %v689 = vld [vmem:[%s263 + $0x630] sm:$0xf]
      %v690 = vld [vmem:[%s263 + $0x634] sm:$0xf]
      %v691 = vld [vmem:[%s263 + $0x638] sm:$0xf]
      %v692 = vld [vmem:[%s263 + $0x63c] sm:$0xf]
      %v693 = vld [vmem:[%s263 + $0x640] sm:$0xf]
      %v694 = vld [vmem:[%s263 + $0x644] sm:$0xf]
      %v695 = vld [vmem:[%s263 + $0x648] sm:$0xf]
      %v696 = vld [vmem:[%s263 + $0x64c] sm:$0xf]
      %v697 = vld [vmem:[%s263 + $0x650] sm:$0xf]
      %v698 = vld [vmem:[%s263 + $0x654] sm:$0xf]
      %v699 = vld [vmem:[%s263 + $0x658] sm:$0xf]
      %v700 = vld [vmem:[%s263 + $0x65c] sm:$0xf]
      %v701 = vld [vmem:[%s263 + $0x660] sm:$0xf]
      %v702 = vld [vmem:[%s263 + $0x664] sm:$0xf]
      %v703 = vld [vmem:[%s263 + $0x668] sm:$0xf]
      %v704 = vld [vmem:[%s263 + $0x66c] sm:$0xf]
      %v705 = vld [vmem:[%s263 + $0x670] sm:$0xf]
      %v706 = vld [vmem:[%s263 + $0x674] sm:$0xf]
      %v707 = vld [vmem:[%s263 + $0x678] sm:$0xf]
      %v708 = vld [vmem:[%s263 + $0x67c] sm:$0xf]
      %v709 = vld [vmem:[%s263 + $0x680] sm:$0xf]
      %v710 = vld [vmem:[%s263 + $0x684] sm:$0xf]
      %v711 = vld [vmem:[%s263 + $0x688] sm:$0xf]
      %v712 = vld [vmem:[%s263 + $0x68c] sm:$0xf]
      %v713 = vld [vmem:[%s263 + $0x690] sm:$0xf]
      %v714 = vld [vmem:[%s263 + $0x694] sm:$0xf]
      %v715 = vld [vmem:[%s263 + $0x698] sm:$0xf]
      %v716 = vld [vmem:[%s263 + $0x69c] sm:$0xf]
      %v717 = vld [vmem:[%s263 + $0x6a0] sm:$0xf]
      %v718 = vld [vmem:[%s263 + $0x6a4] sm:$0xf]
      %v719 = vld [vmem:[%s263 + $0x6a8] sm:$0xf]
      %v720 = vld [vmem:[%s263 + $0x6ac] sm:$0xf]
      %v721 = vld [vmem:[%s263 + $0x6b0] sm:$0xf]
      %v722 = vld [vmem:[%s263 + $0x6b4] sm:$0xf]
      %v723 = vld [vmem:[%s263 + $0x6b8] sm:$0xf]
      %v724 = vld [vmem:[%s263 + $0x6bc] sm:$0xf]
      %v725 = vld [vmem:[%s263 + $0x6c0] sm:$0xf]
      %v726 = vld [vmem:[%s263 + $0x6c4] sm:$0xf]
      %v727 = vld [vmem:[%s263 + $0x6c8] sm:$0xf]
      %v728 = vld [vmem:[%s263 + $0x6cc] sm:$0xf]
      %v729 = vld [vmem:[%s263 + $0x6d0] sm:$0xf]
      %v730 = vld [vmem:[%s263 + $0x6d4] sm:$0xf]
      %v731 = vld [vmem:[%s263 + $0x6d8] sm:$0xf]
      %v732 = vld [vmem:[%s263 + $0x6dc] sm:$0xf]
      %v733 = vld [vmem:[%s263 + $0x6e0] sm:$0xf]
      %v734 = vld [vmem:[%s263 + $0x6e4] sm:$0xf]
      %v735 = vld [vmem:[%s263 + $0x6e8] sm:$0xf]
      %v736 = vld [vmem:[%s263 + $0x6ec] sm:$0xf]
      %v737 = vld [vmem:[%s263 + $0x6f0] sm:$0xf]
      %v738 = vld [vmem:[%s263 + $0x6f4] sm:$0xf]
      %v739 = vld [vmem:[%s263 + $0x6f8] sm:$0xf]
      %v740 = vld [vmem:[%s263 + $0x6fc] sm:$0xf]
      %v741 = vld [vmem:[%s263 + $0x700] sm:$0xf]
      %v742 = vld [vmem:[%s263 + $0x704] sm:$0xf]
      %v743 = vld [vmem:[%s263 + $0x708] sm:$0xf]
      %v744 = vld [vmem:[%s263 + $0x70c] sm:$0xf]
      %v745 = vld [vmem:[%s263 + $0x710] sm:$0xf]
      %v746 = vld [vmem:[%s263 + $0x714] sm:$0xf]
      %v747 = vld [vmem:[%s263 + $0x718] sm:$0xf]
      %v748 = vld [vmem:[%s263 + $0x71c] sm:$0xf]
      %v749 = vld [vmem:[%s263 + $0x720] sm:$0xf]
      %v750 = vld [vmem:[%s263 + $0x724] sm:$0xf]
      %v751 = vld [vmem:[%s263 + $0x728] sm:$0xf]
      %v752 = vld [vmem:[%s263 + $0x72c] sm:$0xf]
      %v753 = vld [vmem:[%s263 + $0x730] sm:$0xf]
      %v754 = vld [vmem:[%s263 + $0x734] sm:$0xf]
      %v755 = vld [vmem:[%s263 + $0x738] sm:$0xf]
      %v756 = vld [vmem:[%s263 + $0x73c] sm:$0xf]
      %v757 = vld [vmem:[%s263 + $0x740] sm:$0xf]
      %v758 = vld [vmem:[%s263 + $0x744] sm:$0xf]
      %v759 = vld [vmem:[%s263 + $0x748] sm:$0xf]
      %v760 = vld [vmem:[%s263 + $0x74c] sm:$0xf]
      %v761 = vld [vmem:[%s263 + $0x750] sm:$0xf]
      %v762 = vld [vmem:[%s263 + $0x754] sm:$0xf]
      %v763 = vld [vmem:[%s263 + $0x758] sm:$0xf]
      %v764 = vld [vmem:[%s263 + $0x75c] sm:$0xf]
      %v765 = vld [vmem:[%s263 + $0x760] sm:$0xf]
      %v766 = vld [vmem:[%s263 + $0x764] sm:$0xf]
      %v767 = vld [vmem:[%s263 + $0x768] sm:$0xf]
      %v768 = vld [vmem:[%s263 + $0x76c] sm:$0xf]
      %v769 = vld [vmem:[%s263 + $0x770] sm:$0xf]
      %v770 = vld [vmem:[%s263 + $0x774] sm:$0xf]
      %v771 = vld [vmem:[%s263 + $0x778] sm:$0xf]
      %v772 = vld [vmem:[%s263 + $0x77c] sm:$0xf]
      %v773 = vld [vmem:[%s263 + $0x780] sm:$0xf]
      %v774 = vld [vmem:[%s263 + $0x784] sm:$0xf]
      %v775 = vld [vmem:[%s263 + $0x788] sm:$0xf]
      %v776 = vld [vmem:[%s263 + $0x78c] sm:$0xf]
      %v777 = vld [vmem:[%s263 + $0x790] sm:$0xf]
      %v778 = vld [vmem:[%s263 + $0x794] sm:$0xf]
      %v779 = vld [vmem:[%s263 + $0x798] sm:$0xf]
      %v780 = vld [vmem:[%s263 + $0x79c] sm:$0xf]
      %v781 = vld [vmem:[%s263 + $0x7a0] sm:$0xf]
      %v782 = vld [vmem:[%s263 + $0x7a4] sm:$0xf]
      %v783 = vld [vmem:[%s263 + $0x7a8] sm:$0xf]
      %v784 = vld [vmem:[%s263 + $0x7ac] sm:$0xf]
      %v785 = vld [vmem:[%s263 + $0x7b0] sm:$0xf]
      %v786 = vld [vmem:[%s263 + $0x7b4] sm:$0xf]
      %v787 = vld [vmem:[%s263 + $0x7b8] sm:$0xf]
      %v788 = vld [vmem:[%s263 + $0x7bc] sm:$0xf]
      %v789 = vld [vmem:[%s263 + $0x7c0] sm:$0xf]
      %v790 = vld [vmem:[%s263 + $0x7c4] sm:$0xf]
      %v791 = vld [vmem:[%s263 + $0x7c8] sm:$0xf]
      %v792 = vld [vmem:[%s263 + $0x7cc] sm:$0xf]
      %v793 = vld [vmem:[%s263 + $0x7d0] sm:$0xf]
      %v794 = vld [vmem:[%s263 + $0x7d4] sm:$0xf]
      %v795 = vld [vmem:[%s263 + $0x7d8] sm:$0xf]
      %v796 = vld [vmem:[%s263 + $0x7dc] sm:$0xf]
      %v797 = vld [vmem:[%s263 + $0x7e0] sm:$0xf]
      %v798 = vld [vmem:[%s263 + $0x7e4] sm:$0xf]
      %v799 = vld [vmem:[%s263 + $0x7e8] sm:$0xf]
      %v800 = vld [vmem:[%s263 + $0x7ec] sm:$0xf]
      %v801 = vld [vmem:[%s263 + $0x7f0] sm:$0xf]
      %v802 = vld [vmem:[%s263 + $0x7f4] sm:$0xf]
      %v803 = vld [vmem:[%s263 + $0x7f8] sm:$0xf]
      %v804 = vld [vmem:[%s263 + $0x7fc] sm:$0xf]
      %v805 = vld [vmem:[%s263 + $0x800] sm:$0xf]
      %v806 = vld [vmem:[%s263 + $0x804] sm:$0xf]
      %v807 = vld [vmem:[%s263 + $0x808] sm:$0xf]
      %v808 = vld [vmem:[%s263 + $0x80c] sm:$0xf]
      %v809 = vld [vmem:[%s263 + $0x810] sm:$0xf]
      %v810 = vld [vmem:[%s263 + $0x814] sm:$0xf]
      %v811 = vld [vmem:[%s263 + $0x818] sm:$0xf]
      %v812 = vld [vmem:[%s263 + $0x81c] sm:$0xf]
      %v813 = vld [vmem:[%s263 + $0x820] sm:$0xf]
      %v814 = vld [vmem:[%s263 + $0x824] sm:$0xf]
      %v815 = vld [vmem:[%s263 + $0x828] sm:$0xf]
      %v816 = vld [vmem:[%s263 + $0x82c] sm:$0xf]
      %v817 = vld [vmem:[%s263 + $0x830] sm:$0xf]
      %v818 = vld [vmem:[%s263 + $0x834] sm:$0xf]
      %v819 = vld [vmem:[%s263 + $0x838] sm:$0xf]
      %v820 = vld [vmem:[%s263 + $0x83c] sm:$0xf]
      %v821 = vld [vmem:[%s263 + $0x840] sm:$0xf]
      %v822 = vld [vmem:[%s263 + $0x844] sm:$0xf]
      %v823 = vld [vmem:[%s263 + $0x848] sm:$0xf]
      %v824 = vld [vmem:[%s263 + $0x84c] sm:$0xf]
      %v825 = vld [vmem:[%s263 + $0x850] sm:$0xf]
      %v826 = vld [vmem:[%s263 + $0x854] sm:$0xf]
      %v827 = vld [vmem:[%s263 + $0x858] sm:$0xf]
      %v828 = vld [vmem:[%s263 + $0x85c] sm:$0xf]
      %v829 = vld [vmem:[%s263 + $0x860] sm:$0xf]
      %v830 = vld [vmem:[%s263 + $0x864] sm:$0xf]
      %v831 = vld [vmem:[%s263 + $0x868] sm:$0xf]
      %v832 = vld [vmem:[%s263 + $0x86c] sm:$0xf]
      %v833 = vld [vmem:[%s263 + $0x870] sm:$0xf]
      %v834 = vld [vmem:[%s263 + $0x874] sm:$0xf]
      %v835 = vld [vmem:[%s263 + $0x878] sm:$0xf]
      %v836 = vld [vmem:[%s263 + $0x87c] sm:$0xf]
      %v837 = vld [vmem:[%s263 + $0x880] sm:$0xf]
      %v838 = vld [vmem:[%s263 + $0x884] sm:$0xf]
      %v839 = vld [vmem:[%s263 + $0x888] sm:$0xf]
      %v840 = vld [vmem:[%s263 + $0x88c] sm:$0xf]
      %v841 = vld [vmem:[%s263 + $0x890] sm:$0xf]
      %v842 = vld [vmem:[%s263 + $0x894] sm:$0xf]
      %v843 = vld [vmem:[%s263 + $0x898] sm:$0xf]
      %v844 = vld [vmem:[%s263 + $0x89c] sm:$0xf]
      %v845 = vld [vmem:[%s263 + $0x8a0] sm:$0xf]
      %v846 = vld [vmem:[%s263 + $0x8a4] sm:$0xf]
      %v847 = vld [vmem:[%s263 + $0x8a8] sm:$0xf]
      %v848 = vld [vmem:[%s263 + $0x8ac] sm:$0xf]
      %v849 = vld [vmem:[%s263 + $0x8b0] sm:$0xf]
      %v850 = vld [vmem:[%s263 + $0x8b4] sm:$0xf]
      %v851 = vld [vmem:[%s263 + $0x8b8] sm:$0xf]
      %v852 = vld [vmem:[%s263 + $0x8bc] sm:$0xf]
      %v853 = vld [vmem:[%s263 + $0x8c0] sm:$0xf]
      %v854 = vld [vmem:[%s263 + $0x8c4] sm:$0xf]
      %v855 = vld [vmem:[%s263 + $0x8c8] sm:$0xf]
      %v856 = vld [vmem:[%s263 + $0x8cc] sm:$0xf]
      %v857 = vld [vmem:[%s263 + $0x8d0] sm:$0xf]
      %v858 = vld [vmem:[%s263 + $0x8d4] sm:$0xf]
      %v859 = vld [vmem:[%s263 + $0x8d8] sm:$0xf]
      %v860 = vld [vmem:[%s263 + $0x8dc] sm:$0xf]
      %v861 = vld [vmem:[%s263 + $0x8e0] sm:$0xf]
      %v862 = vld [vmem:[%s263 + $0x8e4] sm:$0xf]
      %v863 = vld [vmem:[%s263 + $0x8e8] sm:$0xf]
      %v864 = vld [vmem:[%s263 + $0x8ec] sm:$0xf]
      %v865 = vld [vmem:[%s263 + $0x8f0] sm:$0xf]
      %v866 = vld [vmem:[%s263 + $0x8f4] sm:$0xf]
      %v867 = vld [vmem:[%s263 + $0x8f8] sm:$0xf]
      %v868 = vld [vmem:[%s263 + $0x8fc] sm:$0xf]
      %v869 = vld [vmem:[%s263 + $0x900] sm:$0xf]
      %v870 = vld [vmem:[%s263 + $0x904] sm:$0xf]
      %v871 = vld [vmem:[%s263 + $0x908] sm:$0xf]
      %v872 = vld [vmem:[%s263 + $0x90c] sm:$0xf]
      %v873 = vld [vmem:[%s263 + $0x910] sm:$0xf]
      %v874 = vld [vmem:[%s263 + $0x914] sm:$0xf]
      %v875 = vld [vmem:[%s263 + $0x918] sm:$0xf]
      %v876 = vld [vmem:[%s263 + $0x91c] sm:$0xf]
      %v877 = vld [vmem:[%s263 + $0x920] sm:$0xf]
      %v878 = vld [vmem:[%s263 + $0x924] sm:$0xf]
      %v879 = vld [vmem:[%s263 + $0x928] sm:$0xf]
      %v880 = vld [vmem:[%s263 + $0x92c] sm:$0xf]
      %v881 = vld [vmem:[%s263 + $0x930] sm:$0xf]
      %v882 = vld [vmem:[%s263 + $0x934] sm:$0xf]
      %v883 = vld [vmem:[%s263 + $0x938] sm:$0xf]
      %v884 = vld [vmem:[%s263 + $0x93c] sm:$0xf]
      %v885 = vld [vmem:[%s263 + $0x940] sm:$0xf]
      %v886 = vld [vmem:[%s263 + $0x944] sm:$0xf]
      %v887 = vld [vmem:[%s263 + $0x948] sm:$0xf]
      %v888 = vld [vmem:[%s263 + $0x94c] sm:$0xf]
      %v889 = vld [vmem:[%s263 + $0x950] sm:$0xf]
      %v890 = vld [vmem:[%s263 + $0x954] sm:$0xf]
      %v891 = vld [vmem:[%s263 + $0x958] sm:$0xf]
      %v892 = vld [vmem:[%s263 + $0x95c] sm:$0xf]
      %v893 = vld [vmem:[%s263 + $0x960] sm:$0xf]
      %v894 = vld [vmem:[%s263 + $0x964] sm:$0xf]
      %v895 = vld [vmem:[%s263 + $0x968] sm:$0xf]
      %v896 = vld [vmem:[%s263 + $0x96c] sm:$0xf]
      %v897 = vld [vmem:[%s263 + $0x970] sm:$0xf]
      %v898 = vld [vmem:[%s263 + $0x974] sm:$0xf]
      %v899 = vld [vmem:[%s263 + $0x978] sm:$0xf]
      %v900 = vld [vmem:[%s263 + $0x97c] sm:$0xf]
      %v901 = vld [vmem:[%s263 + $0x980] sm:$0xf]
      %v902 = vld [vmem:[%s263 + $0x984] sm:$0xf]
      %v903 = vld [vmem:[%s263 + $0x988] sm:$0xf]
      %v904 = vld [vmem:[%s263 + $0x98c] sm:$0xf]
      %v905 = vld [vmem:[%s263 + $0x990] sm:$0xf]
      %v906 = vld [vmem:[%s263 + $0x994] sm:$0xf]
      %v907 = vld [vmem:[%s263 + $0x998] sm:$0xf]
      %v908 = vld [vmem:[%s263 + $0x99c] sm:$0xf]
      %v909 = vld [vmem:[%s263 + $0x9a0] sm:$0xf]
      %v910 = vld [vmem:[%s263 + $0x9a4] sm:$0xf]
      %v911 = vld [vmem:[%s263 + $0x9a8] sm:$0xf]
      %v912 = vld [vmem:[%s263 + $0x9ac] sm:$0xf]
      %v913 = vld [vmem:[%s263 + $0x9b0] sm:$0xf]
      %v914 = vld [vmem:[%s263 + $0x9b4] sm:$0xf]
      %v915 = vld [vmem:[%s263 + $0x9b8] sm:$0xf]
      %v916 = vld [vmem:[%s263 + $0x9bc] sm:$0xf]
      %v917 = vld [vmem:[%s263 + $0x9c0] sm:$0xf]
      %v918 = vld [vmem:[%s263 + $0x9c4] sm:$0xf]
      %v919 = vld [vmem:[%s263 + $0x9c8] sm:$0xf]
      %v920 = vld [vmem:[%s263 + $0x9cc] sm:$0xf]
      %v921 = vld [vmem:[%s263 + $0x9d0] sm:$0xf]
      %v922 = vld [vmem:[%s263 + $0x9d4] sm:$0xf]
      %v923 = vld [vmem:[%s263 + $0x9d8] sm:$0xf]
      %v924 = vld [vmem:[%s263 + $0x9dc] sm:$0xf]
      %v925 = vld [vmem:[%s263 + $0x9e0] sm:$0xf]
      %v926 = vld [vmem:[%s263 + $0x9e4] sm:$0xf]
      %v927 = vld [vmem:[%s263 + $0x9e8] sm:$0xf]
      %v928 = vld [vmem:[%s263 + $0x9ec] sm:$0xf]
      %v929 = vld [vmem:[%s263 + $0x9f0] sm:$0xf]
      %v930 = vld [vmem:[%s263 + $0x9f4] sm:$0xf]
      %v931 = vld [vmem:[%s263 + $0x9f8] sm:$0xf]
      %v932 = vld [vmem:[%s263 + $0x9fc] sm:$0xf]
      %v933 = vld [vmem:[%s263 + $0xa00] sm:$0xf]
      %v934 = vld [vmem:[%s263 + $0xa04] sm:$0xf]
      %v935 = vld [vmem:[%s263 + $0xa08] sm:$0xf]
      %v936 = vld [vmem:[%s263 + $0xa0c] sm:$0xf]
      %v937 = vld [vmem:[%s263 + $0xa10] sm:$0xf]
      %v938 = vld [vmem:[%s263 + $0xa14] sm:$0xf]
      %v939 = vld [vmem:[%s263 + $0xa18] sm:$0xf]
      %v940 = vld [vmem:[%s263 + $0xa1c] sm:$0xf]
      %v941 = vld [vmem:[%s263 + $0xa20] sm:$0xf]
      %v942 = vld [vmem:[%s263 + $0xa24] sm:$0xf]
      %v943 = vld [vmem:[%s263 + $0xa28] sm:$0xf]
      %v944 = vld [vmem:[%s263 + $0xa2c] sm:$0xf]
      %v945 = vld [vmem:[%s263 + $0xa30] sm:$0xf]
      %v946 = vld [vmem:[%s263 + $0xa34] sm:$0xf]
      %v947 = vld [vmem:[%s263 + $0xa38] sm:$0xf]
      %v948 = vld [vmem:[%s263 + $0xa3c] sm:$0xf]
      %v949 = vld [vmem:[%s263 + $0xa40] sm:$0xf]
      %v950 = vld [vmem:[%s263 + $0xa44] sm:$0xf]
      %v951 = vld [vmem:[%s263 + $0xa48] sm:$0xf]
      %v952 = vld [vmem:[%s263 + $0xa4c] sm:$0xf]
      %v953 = vld [vmem:[%s263 + $0xa50] sm:$0xf]
      %v954 = vld [vmem:[%s263 + $0xa54] sm:$0xf]
      %v955 = vld [vmem:[%s263 + $0xa58] sm:$0xf]
      %v956 = vld [vmem:[%s263 + $0xa5c] sm:$0xf]
      %v957 = vld [vmem:[%s263 + $0xa60] sm:$0xf]
      %v958 = vld [vmem:[%s263 + $0xa64] sm:$0xf]
      %v959 = vld [vmem:[%s263 + $0xa68] sm:$0xf]
      %v960 = vld [vmem:[%s263 + $0xa6c] sm:$0xf]
      %v961 = vld [vmem:[%s263 + $0xa70] sm:$0xf]
      %v962 = vld [vmem:[%s263 + $0xa74] sm:$0xf]
      %v963 = vld [vmem:[%s263 + $0xa78] sm:$0xf]
      %v964 = vld [vmem:[%s263 + $0xa7c] sm:$0xf]
      %v965 = vld [vmem:[%s263 + $0xa80] sm:$0xf]
      %v966 = vld [vmem:[%s263 + $0xa84] sm:$0xf]
      %v967 = vld [vmem:[%s263 + $0xa88] sm:$0xf]
      %v968 = vld [vmem:[%s263 + $0xa8c] sm:$0xf]
      %v969 = vld [vmem:[%s263 + $0xa90] sm:$0xf]
      %v970 = vld [vmem:[%s263 + $0xa94] sm:$0xf]
      %v971 = vld [vmem:[%s263 + $0xa98] sm:$0xf]
      %v972 = vld [vmem:[%s263 + $0xa9c] sm:$0xf]
      %v973 = vld [vmem:[%s263 + $0xaa0] sm:$0xf]
      %v974 = vld [vmem:[%s263 + $0xaa4] sm:$0xf]
      %v975 = vld [vmem:[%s263 + $0xaa8] sm:$0xf]
      %v976 = vld [vmem:[%s263 + $0xaac] sm:$0xf]
      %v977 = vld [vmem:[%s263 + $0xab0] sm:$0xf]
      %v978 = vld [vmem:[%s263 + $0xab4] sm:$0xf]
      %v979 = vld [vmem:[%s263 + $0xab8] sm:$0xf]
      %v980 = vld [vmem:[%s263 + $0xabc] sm:$0xf]
      %v981 = vld [vmem:[%s263 + $0xac0] sm:$0xf]
      %v982 = vld [vmem:[%s263 + $0xac4] sm:$0xf]
      %v983 = vld [vmem:[%s263 + $0xac8] sm:$0xf]
      %v984 = vld [vmem:[%s263 + $0xacc] sm:$0xf]
      %v985 = vld [vmem:[%s263 + $0xad0] sm:$0xf]
      %v986 = vld [vmem:[%s263 + $0xad4] sm:$0xf]
      %v987 = vld [vmem:[%s263 + $0xad8] sm:$0xf]
      %v988 = vld [vmem:[%s263 + $0xadc] sm:$0xf]
      %v989 = vld [vmem:[%s263 + $0xae0] sm:$0xf]
      %v990 = vld [vmem:[%s263 + $0xae4] sm:$0xf]
      %v991 = vld [vmem:[%s263 + $0xae8] sm:$0xf]
      %v992 = vld [vmem:[%s263 + $0xaec] sm:$0xf]
      %v993 = vld [vmem:[%s263 + $0xaf0] sm:$0xf]
      %v994 = vld [vmem:[%s263 + $0xaf4] sm:$0xf]
      %v995 = vld [vmem:[%s263 + $0xaf8] sm:$0xf]
      %v996 = vld [vmem:[%s263 + $0xafc] sm:$0xf]
      %v997 = vld [vmem:[%s263 + $0xb00] sm:$0xf]
      %v998 = vld [vmem:[%s263 + $0xb04] sm:$0xf]
      %v999 = vld [vmem:[%s263 + $0xb08] sm:$0xf]
      %v1000 = vld [vmem:[%s263 + $0xb0c] sm:$0xf]
      %v1001 = vld [vmem:[%s263 + $0xb10] sm:$0xf]
      %v1002 = vld [vmem:[%s263 + $0xb14] sm:$0xf]
      %v1003 = vld [vmem:[%s263 + $0xb18] sm:$0xf]
      %v1004 = vld [vmem:[%s263 + $0xb1c] sm:$0xf]
      %v1005 = vld [vmem:[%s263 + $0xb20] sm:$0xf]
      %v1006 = vld [vmem:[%s263 + $0xb24] sm:$0xf]
      %v1007 = vld [vmem:[%s263 + $0xb28] sm:$0xf]
      %v1008 = vld [vmem:[%s263 + $0xb2c] sm:$0xf]
      %v1009 = vld [vmem:[%s263 + $0xb30] sm:$0xf]
      %v1010 = vld [vmem:[%s263 + $0xb34] sm:$0xf]
      %v1011 = vld [vmem:[%s263 + $0xb38] sm:$0xf]
      %v1012 = vld [vmem:[%s263 + $0xb3c] sm:$0xf]
      %v1013 = vld [vmem:[%s263 + $0xb40] sm:$0xf]
      %v1014 = vld [vmem:[%s263 + $0xb44] sm:$0xf]
      %v1015 = vld [vmem:[%s263 + $0xb48] sm:$0xf]
      %v1016 = vld [vmem:[%s263 + $0xb4c] sm:$0xf]
      %v1017 = vld [vmem:[%s263 + $0xb50] sm:$0xf]
      %v1018 = vld [vmem:[%s263 + $0xb54] sm:$0xf]
      %v1019 = vld [vmem:[%s263 + $0xb58] sm:$0xf]
      %v1020 = vld [vmem:[%s263 + $0xb5c] sm:$0xf]
      %v1021 = vld [vmem:[%s263 + $0xb60] sm:$0xf]
      %v1022 = vld [vmem:[%s263 + $0xb64] sm:$0xf]
      %v1023 = vld [vmem:[%s263 + $0xb68] sm:$0xf]
      %v1024 = vld [vmem:[%s263 + $0xb6c] sm:$0xf]
      %v1025 = vld [vmem:[%s263 + $0xb70] sm:$0xf]
      %v1026 = vld [vmem:[%s263 + $0xb74] sm:$0xf]
      %v1027 = vld [vmem:[%s263 + $0xb78] sm:$0xf]
      %v1028 = vld [vmem:[%s263 + $0xb7c] sm:$0xf]
      %v1029 = vld [vmem:[%s263 + $0xb80] sm:$0xf]
      %v1030 = vld [vmem:[%s263 + $0xb84] sm:$0xf]
      %v1031 = vld [vmem:[%s263 + $0xb88] sm:$0xf]
      %v1032 = vld [vmem:[%s263 + $0xb8c] sm:$0xf]
      %v1033 = vld [vmem:[%s263 + $0xb90] sm:$0xf]
      %v1034 = vld [vmem:[%s263 + $0xb94] sm:$0xf]
      %v1035 = vld [vmem:[%s263 + $0xb98] sm:$0xf]
      %v1036 = vld [vmem:[%s263 + $0xb9c] sm:$0xf]
      %v1037 = vld [vmem:[%s263 + $0xba0] sm:$0xf]
      %v1038 = vld [vmem:[%s263 + $0xba4] sm:$0xf]
      %v1039 = vld [vmem:[%s263 + $0xba8] sm:$0xf]
      %v1040 = vld [vmem:[%s263 + $0xbac] sm:$0xf]
      %v1041 = vld [vmem:[%s263 + $0xbb0] sm:$0xf]
      %v1042 = vld [vmem:[%s263 + $0xbb4] sm:$0xf]
      %v1043 = vld [vmem:[%s263 + $0xbb8] sm:$0xf]
      %v1044 = vld [vmem:[%s263 + $0xbbc] sm:$0xf]
      %v1045 = vld [vmem:[%s263 + $0xbc0] sm:$0xf]
      %v1046 = vld [vmem:[%s263 + $0xbc4] sm:$0xf]
      %v1047 = vld [vmem:[%s263 + $0xbc8] sm:$0xf]
      %v1048 = vld [vmem:[%s263 + $0xbcc] sm:$0xf]
      %v1049 = vld [vmem:[%s263 + $0xbd0] sm:$0xf]
      %v1050 = vld [vmem:[%s263 + $0xbd4] sm:$0xf]
      %v1051 = vld [vmem:[%s263 + $0xbd8] sm:$0xf]
      %v1052 = vld [vmem:[%s263 + $0xbdc] sm:$0xf]
      %v1053 = vld [vmem:[%s263 + $0xbe0] sm:$0xf]
      %v1054 = vld [vmem:[%s263 + $0xbe4] sm:$0xf]
      %v1055 = vld [vmem:[%s263 + $0xbe8] sm:$0xf]
      %v1056 = vld [vmem:[%s263 + $0xbec] sm:$0xf]
      %v1057 = vld [vmem:[%s263 + $0xbf0] sm:$0xf]
      %v1058 = vld [vmem:[%s263 + $0xbf4] sm:$0xf]
      %v1059 = vld [vmem:[%s263 + $0xbf8] sm:$0xf]
      %v1060 = vld [vmem:[%s263 + $0xbfc] sm:$0xf]
      %v1061 = vld [vmem:[%s263 + $0xc00] sm:$0xf]
      %v1062 = vld [vmem:[%s263 + $0xc04] sm:$0xf]
      %v1063 = vld [vmem:[%s263 + $0xc08] sm:$0xf]
      %v1064 = vld [vmem:[%s263 + $0xc0c] sm:$0xf]
      %v1065 = vld [vmem:[%s263 + $0xc10] sm:$0xf]
      %v1066 = vld [vmem:[%s263 + $0xc14] sm:$0xf]
      %v1067 = vld [vmem:[%s263 + $0xc18] sm:$0xf]
      %v1068 = vld [vmem:[%s263 + $0xc1c] sm:$0xf]
      %v1069 = vld [vmem:[%s263 + $0xc20] sm:$0xf]
      %v1070 = vld [vmem:[%s263 + $0xc24] sm:$0xf]
      %v1071 = vld [vmem:[%s263 + $0xc28] sm:$0xf]
      %v1072 = vld [vmem:[%s263 + $0xc2c] sm:$0xf]
      %v1073 = vld [vmem:[%s263 + $0xc30] sm:$0xf]
      %v1074 = vld [vmem:[%s263 + $0xc34] sm:$0xf]
      %v1075 = vld [vmem:[%s263 + $0xc38] sm:$0xf]
      %v1076 = vld [vmem:[%s263 + $0xc3c] sm:$0xf]
      %v1077 = vld [vmem:[%s263 + $0xc40] sm:$0xf]
      %v1078 = vld [vmem:[%s263 + $0xc44] sm:$0xf]
      %v1079 = vld [vmem:[%s263 + $0xc48] sm:$0xf]
      %v1080 = vld [vmem:[%s263 + $0xc4c] sm:$0xf]
      %v1081 = vld [vmem:[%s263 + $0xc50] sm:$0xf]
      %v1082 = vld [vmem:[%s263 + $0xc54] sm:$0xf]
      %v1083 = vld [vmem:[%s263 + $0xc58] sm:$0xf]
      %v1084 = vld [vmem:[%s263 + $0xc5c] sm:$0xf]
      %v1085 = vld [vmem:[%s263 + $0xc60] sm:$0xf]
      %v1086 = vld [vmem:[%s263 + $0xc64] sm:$0xf]
      %v1087 = vld [vmem:[%s263 + $0xc68] sm:$0xf]
      %v1088 = vld [vmem:[%s263 + $0xc6c] sm:$0xf]
      %v1089 = vld [vmem:[%s263 + $0xc70] sm:$0xf]
      %v1090 = vld [vmem:[%s263 + $0xc74] sm:$0xf]
      %v1091 = vld [vmem:[%s263 + $0xc78] sm:$0xf]
      %v1092 = vld [vmem:[%s263 + $0xc7c] sm:$0xf]
      %v1093 = vld [vmem:[%s263 + $0xc80] sm:$0xf]
      %v1094 = vld [vmem:[%s263 + $0xc84] sm:$0xf]
      %v1095 = vld [vmem:[%s263 + $0xc88] sm:$0xf]
      %v1096 = vld [vmem:[%s263 + $0xc8c] sm:$0xf]
      %v1097 = vld [vmem:[%s263 + $0xc90] sm:$0xf]
      %v1098 = vld [vmem:[%s263 + $0xc94] sm:$0xf]
      %v1099 = vld [vmem:[%s263 + $0xc98] sm:$0xf]
      %v1100 = vld [vmem:[%s263 + $0xc9c] sm:$0xf]
      %v1101 = vld [vmem:[%s263 + $0xca0] sm:$0xf]
      %v1102 = vld [vmem:[%s263 + $0xca4] sm:$0xf]
      %v1103 = vld [vmem:[%s263 + $0xca8] sm:$0xf]
      %v1104 = vld [vmem:[%s263 + $0xcac] sm:$0xf]
      %v1105 = vld [vmem:[%s263 + $0xcb0] sm:$0xf]
      %v1106 = vld [vmem:[%s263 + $0xcb4] sm:$0xf]
      %v1107 = vld [vmem:[%s263 + $0xcb8] sm:$0xf]
      %v1108 = vld [vmem:[%s263 + $0xcbc] sm:$0xf]
      %v1109 = vld [vmem:[%s263 + $0xcc0] sm:$0xf]
      %v1110 = vld [vmem:[%s263 + $0xcc4] sm:$0xf]
      %v1111 = vld [vmem:[%s263 + $0xcc8] sm:$0xf]
      %v1112 = vld [vmem:[%s263 + $0xccc] sm:$0xf]
      %v1113 = vld [vmem:[%s263 + $0xcd0] sm:$0xf]
      %v1114 = vld [vmem:[%s263 + $0xcd4] sm:$0xf]
      %v1115 = vld [vmem:[%s263 + $0xcd8] sm:$0xf]
      %v1116 = vld [vmem:[%s263 + $0xcdc] sm:$0xf]
      %v1117 = vld [vmem:[%s263 + $0xce0] sm:$0xf]
      %v1118 = vld [vmem:[%s263 + $0xce4] sm:$0xf]
      %v1119 = vld [vmem:[%s263 + $0xce8] sm:$0xf]
      %v1120 = vld [vmem:[%s263 + $0xcec] sm:$0xf]
      %v1121 = vld [vmem:[%s263 + $0xcf0] sm:$0xf]
      %v1122 = vld [vmem:[%s263 + $0xcf4] sm:$0xf]
      %v1123 = vld [vmem:[%s263 + $0xcf8] sm:$0xf]
      %v1124 = vld [vmem:[%s263 + $0xcfc] sm:$0xf]
      %v1125 = vld [vmem:[%s263 + $0xd00] sm:$0xf]
      %v1126 = vld [vmem:[%s263 + $0xd04] sm:$0xf]
      %v1127 = vld [vmem:[%s263 + $0xd08] sm:$0xf]
      %v1128 = vld [vmem:[%s263 + $0xd0c] sm:$0xf]
      %v1129 = vld [vmem:[%s263 + $0xd10] sm:$0xf]
      %v1130 = vld [vmem:[%s263 + $0xd14] sm:$0xf]
      %v1131 = vld [vmem:[%s263 + $0xd18] sm:$0xf]
      %v1132 = vld [vmem:[%s263 + $0xd1c] sm:$0xf]
      %v1133 = vld [vmem:[%s263 + $0xd20] sm:$0xf]
      %v1134 = vld [vmem:[%s263 + $0xd24] sm:$0xf]
      %v1135 = vld [vmem:[%s263 + $0xd28] sm:$0xf]
      %v1136 = vld [vmem:[%s263 + $0xd2c] sm:$0xf]
      %v1137 = vld [vmem:[%s263 + $0xd30] sm:$0xf]
      %v1138 = vld [vmem:[%s263 + $0xd34] sm:$0xf]
      %v1139 = vld [vmem:[%s263 + $0xd38] sm:$0xf]
      %v1140 = vld [vmem:[%s263 + $0xd3c] sm:$0xf]
      %v1141 = vld [vmem:[%s263 + $0xd40] sm:$0xf]
      %v1142 = vld [vmem:[%s263 + $0xd44] sm:$0xf]
      %v1143 = vld [vmem:[%s263 + $0xd48] sm:$0xf]
      %v1144 = vld [vmem:[%s263 + $0xd4c] sm:$0xf]
      %v1145 = vld [vmem:[%s263 + $0xd50] sm:$0xf]
      %v1146 = vld [vmem:[%s263 + $0xd54] sm:$0xf]
      %v1147 = vld [vmem:[%s263 + $0xd58] sm:$0xf]
      %v1148 = vld [vmem:[%s263 + $0xd5c] sm:$0xf]
      %v1149 = vld [vmem:[%s263 + $0xd60] sm:$0xf]
      %v1150 = vld [vmem:[%s263 + $0xd64] sm:$0xf]
      %v1151 = vld [vmem:[%s263 + $0xd68] sm:$0xf]
      %v1152 = vld [vmem:[%s263 + $0xd6c] sm:$0xf]
      %v1153 = vld [vmem:[%s263 + $0xd70] sm:$0xf]
      %v1154 = vld [vmem:[%s263 + $0xd74] sm:$0xf]
      %v1155 = vld [vmem:[%s263 + $0xd78] sm:$0xf]
      %v1156 = vld [vmem:[%s263 + $0xd7c] sm:$0xf]
      %v1157 = vld [vmem:[%s263 + $0xd80] sm:$0xf]
      %v1158 = vld [vmem:[%s263 + $0xd84] sm:$0xf]
      %v1159 = vld [vmem:[%s263 + $0xd88] sm:$0xf]
      %v1160 = vld [vmem:[%s263 + $0xd8c] sm:$0xf]
      %v1161 = vld [vmem:[%s263 + $0xd90] sm:$0xf]
      %v1162 = vld [vmem:[%s263 + $0xd94] sm:$0xf]
      %v1163 = vld [vmem:[%s263 + $0xd98] sm:$0xf]
      %v1164 = vld [vmem:[%s263 + $0xd9c] sm:$0xf]
      %v1165 = vld [vmem:[%s263 + $0xda0] sm:$0xf]
      %v1166 = vld [vmem:[%s263 + $0xda4] sm:$0xf]
      %v1167 = vld [vmem:[%s263 + $0xda8] sm:$0xf]
      %v1168 = vld [vmem:[%s263 + $0xdac] sm:$0xf]
      %v1169 = vld [vmem:[%s263 + $0xdb0] sm:$0xf]
      %v1170 = vld [vmem:[%s263 + $0xdb4] sm:$0xf]
      %v1171 = vld [vmem:[%s263 + $0xdb8] sm:$0xf]
      %v1172 = vld [vmem:[%s263 + $0xdbc] sm:$0xf]
      %v1173 = vld [vmem:[%s263 + $0xdc0] sm:$0xf]
      %v1174 = vld [vmem:[%s263 + $0xdc4] sm:$0xf]
      %v1175 = vld [vmem:[%s263 + $0xdc8] sm:$0xf]
      %v1176 = vld [vmem:[%s263 + $0xdcc] sm:$0xf]
      %v1177 = vld [vmem:[%s263 + $0xdd0] sm:$0xf]
      %v1178 = vld [vmem:[%s263 + $0xdd4] sm:$0xf]
      %v1179 = vld [vmem:[%s263 + $0xdd8] sm:$0xf]
      %v1180 = vld [vmem:[%s263 + $0xddc] sm:$0xf]
      %v1181 = vld [vmem:[%s263 + $0xde0] sm:$0xf]
      %v1182 = vld [vmem:[%s263 + $0xde4] sm:$0xf]
      %v1183 = vld [vmem:[%s263 + $0xde8] sm:$0xf]
      %v1184 = vld [vmem:[%s263 + $0xdec] sm:$0xf]
      %v1185 = vld [vmem:[%s263 + $0xdf0] sm:$0xf]
      %v1186 = vld [vmem:[%s263 + $0xdf4] sm:$0xf]
      %v1187 = vld [vmem:[%s263 + $0xdf8] sm:$0xf]
      %v1188 = vld [vmem:[%s263 + $0xdfc] sm:$0xf]
      %v1189 = vld [vmem:[%s263 + $0xe00] sm:$0xf]
      %v1190 = vld [vmem:[%s263 + $0xe04] sm:$0xf]
      %v1191 = vld [vmem:[%s263 + $0xe08] sm:$0xf]
      %v1192 = vld [vmem:[%s263 + $0xe0c] sm:$0xf]
      %v1193 = vld [vmem:[%s263 + $0xe10] sm:$0xf]
      %v1194 = vld [vmem:[%s263 + $0xe14] sm:$0xf]
      %v1195 = vld [vmem:[%s263 + $0xe18] sm:$0xf]
      %v1196 = vld [vmem:[%s263 + $0xe1c] sm:$0xf]
      %v1197 = vld [vmem:[%s263 + $0xe20] sm:$0xf]
      %v1198 = vld [vmem:[%s263 + $0xe24] sm:$0xf]
      %v1199 = vld [vmem:[%s263 + $0xe28] sm:$0xf]
      %v1200 = vld [vmem:[%s263 + $0xe2c] sm:$0xf]
      %v1201 = vld [vmem:[%s263 + $0xe30] sm:$0xf]
      %v1202 = vld [vmem:[%s263 + $0xe34] sm:$0xf]
      %v1203 = vld [vmem:[%s263 + $0xe38] sm:$0xf]
      %v1204 = vld [vmem:[%s263 + $0xe3c] sm:$0xf]
      %v1205 = vld [vmem:[%s263 + $0xe40] sm:$0xf]
      %v1206 = vld [vmem:[%s263 + $0xe44] sm:$0xf]
      %v1207 = vld [vmem:[%s263 + $0xe48] sm:$0xf]
      %v1208 = vld [vmem:[%s263 + $0xe4c] sm:$0xf]
      %v1209 = vld [vmem:[%s263 + $0xe50] sm:$0xf]
      %v1210 = vld [vmem:[%s263 + $0xe54] sm:$0xf]
      %v1211 = vld [vmem:[%s263 + $0xe58] sm:$0xf]
      %v1212 = vld [vmem:[%s263 + $0xe5c] sm:$0xf]
      %v1213 = vld [vmem:[%s263 + $0xe60] sm:$0xf]
      %v1214 = vld [vmem:[%s263 + $0xe64] sm:$0xf]
      %v1215 = vld [vmem:[%s263 + $0xe68] sm:$0xf]
      %v1216 = vld [vmem:[%s263 + $0xe6c] sm:$0xf]
      %v1217 = vld [vmem:[%s263 + $0xe70] sm:$0xf]
      %v1218 = vld [vmem:[%s263 + $0xe74] sm:$0xf]
      %v1219 = vld [vmem:[%s263 + $0xe78] sm:$0xf]
      %v1220 = vld [vmem:[%s263 + $0xe7c] sm:$0xf]
      %v1221 = vld [vmem:[%s263 + $0xe80] sm:$0xf]
      %v1222 = vld [vmem:[%s263 + $0xe84] sm:$0xf]
      %v1223 = vld [vmem:[%s263 + $0xe88] sm:$0xf]
      %v1224 = vld [vmem:[%s263 + $0xe8c] sm:$0xf]
      %v1225 = vld [vmem:[%s263 + $0xe90] sm:$0xf]
      %v1226 = vld [vmem:[%s263 + $0xe94] sm:$0xf]
      %v1227 = vld [vmem:[%s263 + $0xe98] sm:$0xf]
      %v1228 = vld [vmem:[%s263 + $0xe9c] sm:$0xf]
      %v1229 = vld [vmem:[%s263 + $0xea0] sm:$0xf]
      %v1230 = vld [vmem:[%s263 + $0xea4] sm:$0xf]
      %v1231 = vld [vmem:[%s263 + $0xea8] sm:$0xf]
      %v1232 = vld [vmem:[%s263 + $0xeac] sm:$0xf]
      %v1233 = vld [vmem:[%s263 + $0xeb0] sm:$0xf]
      %v1234 = vld [vmem:[%s263 + $0xeb4] sm:$0xf]
      %v1235 = vld [vmem:[%s263 + $0xeb8] sm:$0xf]
      %v1236 = vld [vmem:[%s263 + $0xebc] sm:$0xf]
      %v1237 = vld [vmem:[%s263 + $0xec0] sm:$0xf]
      %v1238 = vld [vmem:[%s263 + $0xec4] sm:$0xf]
      %v1239 = vld [vmem:[%s263 + $0xec8] sm:$0xf]
      %v1240 = vld [vmem:[%s263 + $0xecc] sm:$0xf]
      %v1241 = vld [vmem:[%s263 + $0xed0] sm:$0xf]
      %v1242 = vld [vmem:[%s263 + $0xed4] sm:$0xf]
      %v1243 = vld [vmem:[%s263 + $0xed8] sm:$0xf]
      %v1244 = vld [vmem:[%s263 + $0xedc] sm:$0xf]
      %v1245 = vld [vmem:[%s263 + $0xee0] sm:$0xf]
      %v1246 = vld [vmem:[%s263 + $0xee4] sm:$0xf]
      %v1247 = vld [vmem:[%s263 + $0xee8] sm:$0xf]
      %v1248 = vld [vmem:[%s263 + $0xeec] sm:$0xf]
      %v1249 = vld [vmem:[%s263 + $0xef0] sm:$0xf]
      %v1250 = vld [vmem:[%s263 + $0xef4] sm:$0xf]
      %v1251 = vld [vmem:[%s263 + $0xef8] sm:$0xf]
      %v1252 = vld [vmem:[%s263 + $0xefc] sm:$0xf]
      %v1253 = vld [vmem:[%s263 + $0xf00] sm:$0xf]
      %v1254 = vld [vmem:[%s263 + $0xf04] sm:$0xf]
      %v1255 = vld [vmem:[%s263 + $0xf08] sm:$0xf]
      %v1256 = vld [vmem:[%s263 + $0xf0c] sm:$0xf]
      %v1257 = vld [vmem:[%s263 + $0xf10] sm:$0xf]
      %v1258 = vld [vmem:[%s263 + $0xf14] sm:$0xf]
      %v1259 = vld [vmem:[%s263 + $0xf18] sm:$0xf]
      %v1260 = vld [vmem:[%s263 + $0xf1c] sm:$0xf]
      %v1261 = vld [vmem:[%s263 + $0xf20] sm:$0xf]
      %v1262 = vld [vmem:[%s263 + $0xf24] sm:$0xf]
      %v1263 = vld [vmem:[%s263 + $0xf28] sm:$0xf]
      %v1264 = vld [vmem:[%s263 + $0xf2c] sm:$0xf]
      %v1265 = vld [vmem:[%s263 + $0xf30] sm:$0xf]
      %v1266 = vld [vmem:[%s263 + $0xf34] sm:$0xf]
      %v1267 = vld [vmem:[%s263 + $0xf38] sm:$0xf]
      %v1268 = vld [vmem:[%s263 + $0xf3c] sm:$0xf]
      %v1269 = vld [vmem:[%s263 + $0xf40] sm:$0xf]
      %v1270 = vld [vmem:[%s263 + $0xf44] sm:$0xf]
      %v1271 = vld [vmem:[%s263 + $0xf48] sm:$0xf]
      %v1272 = vld [vmem:[%s263 + $0xf4c] sm:$0xf]
      %v1273 = vld [vmem:[%s263 + $0xf50] sm:$0xf]
      %v1274 = vld [vmem:[%s263 + $0xf54] sm:$0xf]
      %v1275 = vld [vmem:[%s263 + $0xf58] sm:$0xf]
      %v1276 = vld [vmem:[%s263 + $0xf5c] sm:$0xf]
      %v1277 = vld [vmem:[%s263 + $0xf60] sm:$0xf]
      %v1278 = vld [vmem:[%s263 + $0xf64] sm:$0xf]
      %v1279 = vld [vmem:[%s263 + $0xf68] sm:$0xf]
      %v1280 = vld [vmem:[%s263 + $0xf6c] sm:$0xf]
      %v1281 = vld [vmem:[%s263 + $0xf70] sm:$0xf]
      %v1282 = vld [vmem:[%s263 + $0xf74] sm:$0xf]
      %v1283 = vld [vmem:[%s263 + $0xf78] sm:$0xf]
      %v1284 = vld [vmem:[%s263 + $0xf7c] sm:$0xf]
      %v1285 = vld [vmem:[%s263 + $0xf80] sm:$0xf]
      %v1286 = vld [vmem:[%s263 + $0xf84] sm:$0xf]
      %v1287 = vld [vmem:[%s263 + $0xf88] sm:$0xf]
      %v1288 = vld [vmem:[%s263 + $0xf8c] sm:$0xf]
      %v1289 = vld [vmem:[%s263 + $0xf90] sm:$0xf]
      %v1290 = vld [vmem:[%s263 + $0xf94] sm:$0xf]
      %v1291 = vld [vmem:[%s263 + $0xf98] sm:$0xf]
      %v1292 = vld [vmem:[%s263 + $0xf9c] sm:$0xf]
      %v1293 = vld [vmem:[%s263 + $0xfa0] sm:$0xf]
      %v1294 = vld [vmem:[%s263 + $0xfa4] sm:$0xf]
      %v1295 = vld [vmem:[%s263 + $0xfa8] sm:$0xf]
      %v1296 = vld [vmem:[%s263 + $0xfac] sm:$0xf]
      %v1297 = vld [vmem:[%s263 + $0xfb0] sm:$0xf]
      %v1298 = vld [vmem:[%s263 + $0xfb4] sm:$0xf]
      %v1299 = vld [vmem:[%s263 + $0xfb8] sm:$0xf]
      %v1300 = vld [vmem:[%s263 + $0xfbc] sm:$0xf]
      %v1301 = vld [vmem:[%s263 + $0xfc0] sm:$0xf]
      %v1302 = vld [vmem:[%s263 + $0xfc4] sm:$0xf]
      %v1303 = vld [vmem:[%s263 + $0xfc8] sm:$0xf]
      %v1304 = vld [vmem:[%s263 + $0xfcc] sm:$0xf]
      %v1305 = vld [vmem:[%s263 + $0xfd0] sm:$0xf]
      %v1306 = vld [vmem:[%s263 + $0xfd4] sm:$0xf]
      %v1307 = vld [vmem:[%s263 + $0xfd8] sm:$0xf]
      %v1308 = vld [vmem:[%s263 + $0xfdc] sm:$0xf]
      %v1309 = vld [vmem:[%s263 + $0xfe0] sm:$0xf]
      %v1310 = vld [vmem:[%s263 + $0xfe4] sm:$0xf]
      %v1311 = vld [vmem:[%s263 + $0xfe8] sm:$0xf]
      %v1312 = vld [vmem:[%s263 + $0xfec] sm:$0xf]
      %v1313 = vld [vmem:[%s263 + $0xff0] sm:$0xf]
      %v1314 = vld [vmem:[%s263 + $0xff4] sm:$0xf]
      %v1315 = vld [vmem:[%s263 + $0xff8] sm:$0xf]
      %v1316 = vld [vmem:[%s263 + $0xffc] sm:$0xf]
      %v1317 = vld [vmem:[%s263 + $0x1000] sm:$0xf]
      %v1318 = vld [vmem:[%s263 + $0x1004] sm:$0xf]
      %v1319 = vld [vmem:[%s263 + $0x1008] sm:$0xf]
      %v1320 = vld [vmem:[%s263 + $0x100c] sm:$0xf]
      %v1321 = vld [vmem:[%s263 + $0x1010] sm:$0xf]
      %v1322 = vld [vmem:[%s263 + $0x1014] sm:$0xf]
      %v1323 = vld [vmem:[%s263 + $0x1018] sm:$0xf]
      %v1324 = vld [vmem:[%s263 + $0x101c] sm:$0xf]
      %v1325 = vld [vmem:[%s263 + $0x1020] sm:$0xf]
      %v1326 = vld [vmem:[%s263 + $0x1024] sm:$0xf]
      %v1327 = vld [vmem:[%s263 + $0x1028] sm:$0xf]
      %v1328 = vld [vmem:[%s263 + $0x102c] sm:$0xf]
      %v1329 = vld [vmem:[%s263 + $0x1030] sm:$0xf]
      %v1330 = vld [vmem:[%s263 + $0x1034] sm:$0xf]
      %v1331 = vld [vmem:[%s263 + $0x1038] sm:$0xf]
      %v1332 = vld [vmem:[%s263 + $0x103c] sm:$0xf]
      %1334 = vst [vmem:[#allocation1] ss:$9 sm:$0xff] %v284
      %v1335 = vld [vmem:[#allocation1] sm:$0xff]
      %v1336 = vld [vmem:[#allocation1 + $0x9] sm:$0xff]
      %v1337 = vld [vmem:[#allocation1 + $0x12] sm:$0xff]
      %v1338 = vld [vmem:[#allocation1 + $0x1b] sm:$0xff]
      %v1339 = vld [vmem:[#allocation1 + $0x24] sm:$0xff]
      %v1340 = vld [vmem:[#allocation1 + $0x2d] sm:$0xff]
      %v1341 = vld [vmem:[#allocation1 + $0x36] sm:$0xff]
      %v1342 = vld [vmem:[#allocation1 + $0x3f] sm:$0xff]
      %1344 = vst [vmem:[#allocation1] ss:$9 sm:$0xff] %v285
      %v1345 = vld [vmem:[#allocation1] sm:$0xff]
      %v1346 = vld [vmem:[#allocation1 + $0x9] sm:$0xff]
      %v1347 = vld [vmem:[#allocation1 + $0x12] sm:$0xff]
      %v1348 = vld [vmem:[#allocation1 + $0x1b] sm:$0xff]
      %v1349 = vld [vmem:[#allocation1 + $0x24] sm:$0xff]
      %v1350 = vld [vmem:[#allocation1 + $0x2d] sm:$0xff]
      %v1351 = vld [vmem:[#allocation1 + $0x36] sm:$0xff]
      %v1352 = vld [vmem:[#allocation1 + $0x3f] sm:$0xff]
      %1354 = vst [vmem:[#allocation1] ss:$9 sm:$0xff] %v286
      %v1355 = vld [vmem:[#allocation1] sm:$0xff]
      %v1356 = vld [vmem:[#allocation1 + $0x9] sm:$0xff]
      %v1357 = vld [vmem:[#allocation1 + $0x12] sm:$0xff]
      %v1358 = vld [vmem:[#allocation1 + $0x1b] sm:$0xff]
      %v1359 = vld [vmem:[#allocation1 + $0x24] sm:$0xff]
      %v1360 = vld [vmem:[#allocation1 + $0x2d] sm:$0xff]
      %v1361 = vld [vmem:[#allocation1 + $0x36] sm:$0xff]
      %v1362 = vld [vmem:[#allocation1 + $0x3f] sm:$0xff]
      %1364 = vst [vmem:[#allocation1] ss:$9 sm:$0xff] %v287
      %v1365 = vld [vmem:[#allocation1] sm:$0xff]
      %v1366 = vld [vmem:[#allocation1 + $0x9] sm:$0xff]
      %v1367 = vld [vmem:[#allocation1 + $0x12] sm:$0xff]
      %v1368 = vld [vmem:[#allocation1 + $0x1b] sm:$0xff]
      %v1369 = vld [vmem:[#allocation1 + $0x24] sm:$0xff]
      %v1370 = vld [vmem:[#allocation1 + $0x2d] sm:$0xff]
      %v1371 = vld [vmem:[#allocation1 + $0x36] sm:$0xff]
      %v1372 = vld [vmem:[#allocation1 + $0x3f] sm:$0xff]
      %1374 = vst [vmem:[#allocation1] ss:$9 sm:$0xff] %v288
      %v1375 = vld [vmem:[#allocation1] sm:$0xff]
      %v1376 = vld [vmem:[#allocation1 + $0x9] sm:$0xff]
      %v1377 = vld [vmem:[#allocation1 + $0x12] sm:$0xff]
      %v1378 = vld [vmem:[#allocation1 + $0x1b] sm:$0xff]
      %v1379 = vld [vmem:[#allocation1 + $0x24] sm:$0xff]
      %v1380 = vld [vmem:[#allocation1 + $0x2d] sm:$0xff]
      %v1381 = vld [vmem:[#allocation1 + $0x36] sm:$0xff]
      %v1382 = vld [vmem:[#allocation1 + $0x3f] sm:$0xff]
      %1384 = vst [vmem:[#allocation1] ss:$9 sm:$0xff] %v289
      %v1385 = vld [vmem:[#allocation1] sm:$0xff]
      %v1386 = vld [vmem:[#allocation1 + $0x9] sm:$0xff]
      %v1387 = vld [vmem:[#allocation1 + $0x12] sm:$0xff]
      %v1388 = vld [vmem:[#allocation1 + $0x1b] sm:$0xff]
      %v1389 = vld [vmem:[#allocation1 + $0x24] sm:$0xff]
      %v1390 = vld [vmem:[#allocation1 + $0x2d] sm:$0xff]
      %v1391 = vld [vmem:[#allocation1 + $0x36] sm:$0xff]
      %v1392 = vld [vmem:[#allocation1 + $0x3f] sm:$0xff]
      %1394 = vst [vmem:[#allocation1] ss:$9 sm:$0xff] %v290
      %v1395 = vld [vmem:[#allocation1] sm:$0xff]
      %v1396 = vld [vmem:[#allocation1 + $0x9] sm:$0xff]
      %v1397 = vld [vmem:[#allocation1 + $0x12] sm:$0xff]
      %v1398 = vld [vmem:[#allocation1 + $0x1b] sm:$0xff]
      %v1399 = vld [vmem:[#allocation1 + $0x24] sm:$0xff]
      %v1400 = vld [vmem:[#allocation1 + $0x2d] sm:$0xff]
      %v1401 = vld [vmem:[#allocation1 + $0x36] sm:$0xff]
      %v1402 = vld [vmem:[#allocation1 + $0x3f] sm:$0xff]
      %1404 = vst [vmem:[#allocation1] ss:$9 sm:$0xff] %v291
      %v1405 = vld [vmem:[#allocation1] sm:$0xff]
      %v1406 = vld [vmem:[#allocation1 + $0x9] sm:$0xff]
      %v1407 = vld [vmem:[#allocation1 + $0x12] sm:$0xff]
      %v1408 = vld [vmem:[#allocation1 + $0x1b] sm:$0xff]
      %v1409 = vld [vmem:[#allocation1 + $0x24] sm:$0xff]
      %v1410 = vld [vmem:[#allocation1 + $0x2d] sm:$0xff]
      %v1411 = vld [vmem:[#allocation1 + $0x36] sm:$0xff]
      %v1412 = vld [vmem:[#allocation1 + $0x3f] sm:$0xff]
      %1414 = vst [vmem:[#allocation1] ss:$9 sm:$0xff] %v292
      %v1415 = vld [vmem:[#allocation1] sm:$0xff]
      %v2521 = vunpack.c.l.b16 %v293
      %v2522 = vunpack.c.l.b16 %v294
      %v2523 = vunpack.c.l.b16 %v295
      %v2524 = vunpack.c.l.b16 %v296
      %v2525 = vunpack.c.l.b16 %v297
      %v2526 = vunpack.c.l.b16 %v298
      %v2527 = vunpack.c.l.b16 %v299
      %v2528 = vunpack.c.l.b16 %v300
      %v2529 = vunpack.c.l.b16 %v301
      %v2530 = vunpack.c.l.b16 %v302
      %v2531 = vunpack.c.l.b16 %v303
      %v2532 = vunpack.c.l.b16 %v304
      %v2533 = vunpack.c.l.b16 %v305
      %v2534 = vunpack.c.l.b16 %v306
      %v2535 = vunpack.c.l.b16 %v307
      %v2536 = vunpack.c.l.b16 %v308
      %v2537 = vunpack.c.l.b16 %v309
      %v2538 = vunpack.c.l.b16 %v310
      %v2539 = vunpack.c.l.b16 %v311
      %v2540 = vunpack.c.l.b16 %v312
      %v2541 = vunpack.c.l.b16 %v313
      %v2542 = vunpack.c.l.b16 %v314
      %v2543 = vunpack.c.l.b16 %v315
      %v2544 = vunpack.c.l.b16 %v316
      %v2545 = vunpack.c.l.b16 %v317
      %v2546 = vunpack.c.l.b16 %v318
      %v2547 = vunpack.c.l.b16 %v319
      %v2548 = vunpack.c.l.b16 %v320
      %v2549 = vunpack.c.l.b16 %v321
      %v2550 = vunpack.c.l.b16 %v322
      %v2551 = vunpack.c.l.b16 %v323
      %v2552 = vunpack.c.l.b16 %v324
      %v2553 = vunpack.c.l.b16 %v325
      %v2554 = vunpack.c.l.b16 %v326
      %v2555 = vunpack.c.l.b16 %v327
      %v2556 = vunpack.c.l.b16 %v328
      %v2557 = vunpack.c.l.b16 %v329
      %v2558 = vunpack.c.l.b16 %v330
      %v2559 = vunpack.c.l.b16 %v331
      %v2560 = vunpack.c.l.b16 %v332
      %v2561 = vunpack.c.l.b16 %v333
      %v2562 = vunpack.c.l.b16 %v334
      %v2563 = vunpack.c.l.b16 %v335
      %v2564 = vunpack.c.l.b16 %v336
      %v2565 = vunpack.c.l.b16 %v337
      %v2566 = vunpack.c.l.b16 %v338
      %v2567 = vunpack.c.l.b16 %v339
      %v2568 = vunpack.c.l.b16 %v340
      %v2569 = vunpack.c.l.b16 %v341
      %v2570 = vunpack.c.l.b16 %v342
      %v2571 = vunpack.c.l.b16 %v343
      %v2572 = vunpack.c.l.b16 %v344
      %v2573 = vunpack.c.l.b16 %v345
      %v2574 = vunpack.c.l.b16 %v346
      %v2575 = vunpack.c.l.b16 %v347
      %v2576 = vunpack.c.l.b16 %v348
      %v2577 = vunpack.c.l.b16 %v349
      %v2578 = vunpack.c.l.b16 %v350
      %v2579 = vunpack.c.l.b16 %v351
      %v2580 = vunpack.c.l.b16 %v352
      %v2581 = vunpack.c.l.b16 %v353
      %v2582 = vunpack.c.l.b16 %v354
      %v2583 = vunpack.c.l.b16 %v355
      %v2584 = vunpack.c.l.b16 %v356
      %v2585 = vunpack.c.l.b16 %v357
      %v2586 = vunpack.c.l.b16 %v358
      %v2587 = vunpack.c.l.b16 %v359
      %v2588 = vunpack.c.l.b16 %v360
      %v2589 = vunpack.c.l.b16 %v361
      %v2590 = vunpack.c.l.b16 %v362
      %v2591 = vunpack.c.l.b16 %v363
      %v2592 = vunpack.c.l.b16 %v364
      %v2593 = vunpack.c.l.b16 %v365
      %v2594 = vunpack.c.l.b16 %v366
      %v2595 = vunpack.c.l.b16 %v367
      %v2596 = vunpack.c.l.b16 %v368
      %v2597 = vunpack.c.l.b16 %v369
      %v2598 = vunpack.c.l.b16 %v370
      %v2599 = vunpack.c.l.b16 %v371
      %v2600 = vunpack.c.l.b16 %v372
      %v2601 = vunpack.c.l.b16 %v373
      %v2602 = vunpack.c.l.b16 %v374
      %v2603 = vunpack.c.l.b16 %v375
      %v2604 = vunpack.c.l.b16 %v376
      %v2605 = vunpack.c.l.b16 %v377
      %v2606 = vunpack.c.l.b16 %v378
      %v2607 = vunpack.c.l.b16 %v379
      %v2608 = vunpack.c.l.b16 %v380
      %v2609 = vunpack.c.l.b16 %v381
      %v2610 = vunpack.c.l.b16 %v382
      %v2611 = vunpack.c.l.b16 %v383
      %v2612 = vunpack.c.l.b16 %v384
      %v2613 = vunpack.c.l.b16 %v385
      %v2614 = vunpack.c.l.b16 %v386
      %v2615 = vunpack.c.l.b16 %v387
      %v2616 = vunpack.c.l.b16 %v388
      %v2617 = vunpack.c.l.b16 %v389
      %v2618 = vunpack.c.l.b16 %v390
      %v2619 = vunpack.c.l.b16 %v391
      %v2620 = vunpack.c.l.b16 %v392
      %v2621 = vunpack.c.l.b16 %v393
      %v2622 = vunpack.c.l.b16 %v394
      %v2623 = vunpack.c.l.b16 %v395
      %v2624 = vunpack.c.l.b16 %v396
      %v2625 = vunpack.c.l.b16 %v397
      %v2626 = vunpack.c.l.b16 %v398
      %v2627 = vunpack.c.l.b16 %v399
      %v2628 = vunpack.c.l.b16 %v400
      %v2629 = vunpack.c.l.b16 %v401
      %v2630 = vunpack.c.l.b16 %v402
      %v2631 = vunpack.c.l.b16 %v403
      %v2632 = vunpack.c.l.b16 %v404
      %v2633 = vunpack.c.l.b16 %v405
      %v2634 = vunpack.c.l.b16 %v406
      %v2635 = vunpack.c.l.b16 %v407
      %v2636 = vunpack.c.l.b16 %v408
      %v2637 = vunpack.c.l.b16 %v409
      %v2638 = vunpack.c.l.b16 %v410
      %v2639 = vunpack.c.l.b16 %v411
      %v2640 = vunpack.c.l.b16 %v412
      %v2641 = vunpack.c.l.b16 %v413
      %v2642 = vunpack.c.l.b16 %v414
      %v2643 = vunpack.c.l.b16 %v415
      %v2644 = vunpack.c.l.b16 %v416
      %v2645 = vunpack.c.l.b16 %v417
      %v2646 = vunpack.c.l.b16 %v418
      %v2647 = vunpack.c.l.b16 %v419
      %v2648 = vunpack.c.l.b16 %v420
      %v2649 = vunpack.c.l.b16 %v421
      %v2650 = vunpack.c.l.b16 %v422
      %v2651 = vunpack.c.l.b16 %v423
      %v2652 = vunpack.c.l.b16 %v424
      %v2653 = vunpack.c.l.b16 %v425
      %v2654 = vunpack.c.l.b16 %v426
      %v2655 = vunpack.c.l.b16 %v427
      %v2656 = vunpack.c.l.b16 %v428
      %v2657 = vunpack.c.l.b16 %v429
      %v2658 = vunpack.c.l.b16 %v430
      %v2659 = vunpack.c.l.b16 %v431
      %v2660 = vunpack.c.l.b16 %v432
      %v2661 = vunpack.c.l.b16 %v433
      %v2662 = vunpack.c.l.b16 %v434
      %v2663 = vunpack.c.l.b16 %v435
      %v2664 = vunpack.c.l.b16 %v436
      %v2665 = vunpack.c.l.b16 %v437
      %v2666 = vunpack.c.l.b16 %v438
      %v2667 = vunpack.c.l.b16 %v439
      %v2668 = vunpack.c.l.b16 %v440
      %v2669 = vunpack.c.l.b16 %v441
      %v2670 = vunpack.c.l.b16 %v442
      %v2671 = vunpack.c.l.b16 %v443
      %v2672 = vunpack.c.l.b16 %v444
      %v2673 = vunpack.c.l.b16 %v445
      %v2674 = vunpack.c.l.b16 %v446
      %v2675 = vunpack.c.l.b16 %v447
      %v2676 = vunpack.c.l.b16 %v448
      %v2677 = vunpack.c.l.b16 %v449
      %v2678 = vunpack.c.l.b16 %v450
      %v2679 = vunpack.c.l.b16 %v451
      %v2680 = vunpack.c.l.b16 %v452
      %v2681 = vunpack.c.l.b16 %v453
      %v2682 = vunpack.c.l.b16 %v454
      %v2683 = vunpack.c.l.b16 %v455
      %v2684 = vunpack.c.l.b16 %v456
      %v2685 = vunpack.c.l.b16 %v457
      %v2686 = vunpack.c.l.b16 %v458
      %v2687 = vunpack.c.l.b16 %v459
      %v2688 = vunpack.c.l.b16 %v460
      %v2689 = vunpack.c.l.b16 %v461
      %v2690 = vunpack.c.l.b16 %v462
      %v2691 = vunpack.c.l.b16 %v463
      %v2692 = vunpack.c.l.b16 %v464
      %v2693 = vunpack.c.l.b16 %v465
      %v2694 = vunpack.c.l.b16 %v466
      %v2695 = vunpack.c.l.b16 %v467
      %v2696 = vunpack.c.l.b16 %v468
      %v2697 = vunpack.c.l.b16 %v469
      %v2698 = vunpack.c.l.b16 %v470
      %v2699 = vunpack.c.l.b16 %v471
      %v2700 = vunpack.c.l.b16 %v472
      %v2701 = vunpack.c.l.b16 %v473
      %v2702 = vunpack.c.l.b16 %v474
      %v2703 = vunpack.c.l.b16 %v475
      %v2704 = vunpack.c.l.b16 %v476
      %v2705 = vunpack.c.l.b16 %v477
      %v2706 = vunpack.c.l.b16 %v478
      %v2707 = vunpack.c.l.b16 %v479
      %v2708 = vunpack.c.l.b16 %v480
      %v2709 = vunpack.c.l.b16 %v481
      %v2710 = vunpack.c.l.b16 %v482
      %v2711 = vunpack.c.l.b16 %v483
      %v2712 = vunpack.c.l.b16 %v484
      %v2713 = vunpack.c.l.b16 %v485
      %v2714 = vunpack.c.l.b16 %v486
      %v2715 = vunpack.c.l.b16 %v487
      %v2716 = vunpack.c.l.b16 %v488
      %v2717 = vunpack.c.l.b16 %v489
      %v2718 = vunpack.c.l.b16 %v490
      %v2719 = vunpack.c.l.b16 %v491
      %v2720 = vunpack.c.l.b16 %v492
      %v2721 = vunpack.c.l.b16 %v493
      %v2722 = vunpack.c.l.b16 %v494
      %v2723 = vunpack.c.l.b16 %v495
      %v2724 = vunpack.c.l.b16 %v496
      %v2725 = vunpack.c.l.b16 %v497
      %v2726 = vunpack.c.l.b16 %v498
      %v2727 = vunpack.c.l.b16 %v499
      %v2728 = vunpack.c.l.b16 %v500
      %v2729 = vunpack.c.l.b16 %v501
      %v2730 = vunpack.c.l.b16 %v502
      %v2731 = vunpack.c.l.b16 %v503
      %v2732 = vunpack.c.l.b16 %v504
      %v2733 = vunpack.c.l.b16 %v505
      %v2734 = vunpack.c.l.b16 %v506
      %v2735 = vunpack.c.l.b16 %v507
      %v2736 = vunpack.c.l.b16 %v508
      %v2737 = vunpack.c.l.b16 %v509
      %v2738 = vunpack.c.l.b16 %v510
      %v2739 = vunpack.c.l.b16 %v511
      %v2740 = vunpack.c.l.b16 %v512
      %v2741 = vunpack.c.l.b16 %v513
      %v2742 = vunpack.c.l.b16 %v514
      %v2743 = vunpack.c.l.b16 %v515
      %v2744 = vunpack.c.l.b16 %v516
      %v2745 = vunpack.c.l.b16 %v517
      %v2746 = vunpack.c.l.b16 %v518
      %v2747 = vunpack.c.l.b16 %v519
      %v2748 = vunpack.c.l.b16 %v520
      %v2749 = vunpack.c.l.b16 %v521
      %v2750 = vunpack.c.l.b16 %v522
      %v2751 = vunpack.c.l.b16 %v523
      %v2752 = vunpack.c.l.b16 %v524
      %v2753 = vunpack.c.l.b16 %v525
      %v2754 = vunpack.c.l.b16 %v526
      %v2755 = vunpack.c.l.b16 %v527
      %v2756 = vunpack.c.l.b16 %v528
      %v2757 = vunpack.c.l.b16 %v529
      %v2758 = vunpack.c.l.b16 %v530
      %v2759 = vunpack.c.l.b16 %v531
      %v2760 = vunpack.c.l.b16 %v532
      %v2761 = vunpack.c.l.b16 %v533
      %v2762 = vunpack.c.l.b16 %v534
      %v2763 = vunpack.c.l.b16 %v535
      %v2764 = vunpack.c.l.b16 %v536
      %v2765 = vunpack.c.l.b16 %v537
      %v2766 = vunpack.c.l.b16 %v538
      %v2767 = vunpack.c.l.b16 %v539
      %v2768 = vunpack.c.l.b16 %v540
      %v2769 = vunpack.c.l.b16 %v541
      %v2770 = vunpack.c.l.b16 %v542
      %v2771 = vunpack.c.l.b16 %v543
      %v2772 = vunpack.c.l.b16 %v544
      %v2773 = vunpack.c.l.b16 %v545
      %v2774 = vunpack.c.l.b16 %v546
      %v2775 = vunpack.c.l.b16 %v547
      %v2776 = vunpack.c.l.b16 %v548
      %v2777 = vunpack.c.l.b16 %v549
      %v2778 = vunpack.c.l.b16 %v550
      %v2779 = vunpack.c.l.b16 %v551
      %v2780 = vunpack.c.l.b16 %v552
      %v2781 = vunpack.c.l.b16 %v553
      %v2782 = vunpack.c.l.b16 %v554
      %v2783 = vunpack.c.l.b16 %v555
      %v2784 = vunpack.c.l.b16 %v556
      %v2785 = vunpack.c.l.b16 %v557
      %v2786 = vunpack.c.l.b16 %v558
      %v2787 = vunpack.c.l.b16 %v559
      %v2788 = vunpack.c.l.b16 %v560
      %v2789 = vunpack.c.l.b16 %v561
      %v2790 = vunpack.c.l.b16 %v562
      %v2791 = vunpack.c.l.b16 %v563
      %v2792 = vunpack.c.l.b16 %v564
      %v2793 = vunpack.c.l.b16 %v565
      %v2794 = vunpack.c.l.b16 %v566
      %v2795 = vunpack.c.l.b16 %v567
      %v2796 = vunpack.c.l.b16 %v568
      %v2797 = vunpack.c.l.b16 %v569
      %v2798 = vunpack.c.l.b16 %v570
      %v2799 = vunpack.c.l.b16 %v571
      %v2800 = vunpack.c.l.b16 %v572
      %v2801 = vunpack.c.l.b16 %v573
      %v2802 = vunpack.c.l.b16 %v574
      %v2803 = vunpack.c.l.b16 %v575
      %v2804 = vunpack.c.l.b16 %v576
      %v2805 = vunpack.c.l.b16 %v577
      %v2806 = vunpack.c.l.b16 %v578
      %v2807 = vunpack.c.l.b16 %v579
      %v2808 = vunpack.c.l.b16 %v580
      %v2809 = vunpack.c.l.b16 %v581
      %v2810 = vunpack.c.l.b16 %v582
      %v2811 = vunpack.c.l.b16 %v583
      %v2812 = vunpack.c.l.b16 %v584
      %v2813 = vunpack.c.l.b16 %v585
      %v2814 = vunpack.c.l.b16 %v586
      %v2815 = vunpack.c.l.b16 %v587
      %v2816 = vunpack.c.l.b16 %v588
      %v2817 = vunpack.c.l.b16 %v589
      %v2818 = vunpack.c.l.b16 %v590
      %v2819 = vunpack.c.l.b16 %v591
      %v2820 = vunpack.c.l.b16 %v592
      %v2821 = vunpack.c.l.b16 %v593
      %v2822 = vunpack.c.l.b16 %v594
      %v2823 = vunpack.c.l.b16 %v595
      %v2824 = vunpack.c.l.b16 %v596
      %v2825 = vunpack.c.l.b16 %v597
      %v2826 = vunpack.c.l.b16 %v598
      %v2827 = vunpack.c.l.b16 %v599
      %v2828 = vunpack.c.l.b16 %v600
      %v2829 = vunpack.c.l.b16 %v601
      %v2830 = vunpack.c.l.b16 %v602
      %v2831 = vunpack.c.l.b16 %v603
      %v2832 = vunpack.c.l.b16 %v604
      %v2833 = vunpack.c.l.b16 %v605
      %v2834 = vunpack.c.l.b16 %v606
      %v2835 = vunpack.c.l.b16 %v607
      %v2836 = vunpack.c.l.b16 %v608
      %v2837 = vunpack.c.l.b16 %v609
      %v2838 = vunpack.c.l.b16 %v610
      %v2839 = vunpack.c.l.b16 %v611
      %v2840 = vunpack.c.l.b16 %v612
      %v2841 = vunpack.c.l.b16 %v613
      %v2842 = vunpack.c.l.b16 %v614
      %v2843 = vunpack.c.l.b16 %v615
      %v2844 = vunpack.c.l.b16 %v616
      %v2845 = vunpack.c.l.b16 %v617
      %v2846 = vunpack.c.l.b16 %v618
      %v2847 = vunpack.c.l.b16 %v619
      %v2848 = vunpack.c.l.b16 %v620
      %v2849 = vunpack.c.l.b16 %v621
      %v2850 = vunpack.c.l.b16 %v622
      %v2851 = vunpack.c.l.b16 %v623
      %v2852 = vunpack.c.l.b16 %v624
      %v2853 = vunpack.c.l.b16 %v625
      %v2854 = vunpack.c.l.b16 %v626
      %v2855 = vunpack.c.l.b16 %v627
      %v2856 = vunpack.c.l.b16 %v628
      %v2857 = vunpack.c.l.b16 %v629
      %v2858 = vunpack.c.l.b16 %v630
      %v2859 = vunpack.c.l.b16 %v631
      %v2860 = vunpack.c.l.b16 %v632
      %v2861 = vunpack.c.l.b16 %v633
      %v2862 = vunpack.c.l.b16 %v634
      %v2863 = vunpack.c.l.b16 %v635
      %v2864 = vunpack.c.l.b16 %v636
      %v2865 = vunpack.c.l.b16 %v637
      %v2866 = vunpack.c.l.b16 %v638
      %v2867 = vunpack.c.l.b16 %v639
      %v2868 = vunpack.c.l.b16 %v640
      %v2869 = vunpack.c.l.b16 %v641
      %v2870 = vunpack.c.l.b16 %v642
      %v2871 = vunpack.c.l.b16 %v643
      %v2872 = vunpack.c.l.b16 %v644
      %v2873 = vunpack.c.l.b16 %v645
      %v2874 = vunpack.c.l.b16 %v646
      %v2875 = vunpack.c.l.b16 %v647
      %v2876 = vunpack.c.l.b16 %v648
      %v2877 = vunpack.c.l.b16 %v649
      %v2878 = vunpack.c.l.b16 %v650
      %v2879 = vunpack.c.l.b16 %v651
      %v2880 = vunpack.c.l.b16 %v652
      %v2881 = vunpack.c.l.b16 %v653
      %v2882 = vunpack.c.l.b16 %v654
      %v2883 = vunpack.c.l.b16 %v655
      %v2884 = vunpack.c.l.b16 %v656
      %v2885 = vunpack.c.l.b16 %v657
      %v2886 = vunpack.c.l.b16 %v658
      %v2887 = vunpack.c.l.b16 %v659
      %v2888 = vunpack.c.l.b16 %v660
      %v2889 = vunpack.c.l.b16 %v661
      %v2890 = vunpack.c.l.b16 %v662
      %v2891 = vunpack.c.l.b16 %v663
      %v2892 = vunpack.c.l.b16 %v664
      %v2893 = vunpack.c.l.b16 %v665
      %v2894 = vunpack.c.l.b16 %v666
      %v2895 = vunpack.c.l.b16 %v667
      %v2896 = vunpack.c.l.b16 %v668
      %v2897 = vunpack.c.l.b16 %v669
      %v2898 = vunpack.c.l.b16 %v670
      %v2899 = vunpack.c.l.b16 %v671
      %v2900 = vunpack.c.l.b16 %v672
      %v2901 = vunpack.c.l.b16 %v673
      %v2902 = vunpack.c.l.b16 %v674
      %v2903 = vunpack.c.l.b16 %v675
      %v2904 = vunpack.c.l.b16 %v676
      %v2905 = vunpack.c.l.b16 %v677
      %v2906 = vunpack.c.l.b16 %v678
      %v2907 = vunpack.c.l.b16 %v679
      %v2908 = vunpack.c.l.b16 %v680
      %v2909 = vunpack.c.l.b16 %v681
      %v2910 = vunpack.c.l.b16 %v682
      %v2911 = vunpack.c.l.b16 %v683
      %v2912 = vunpack.c.l.b16 %v684
      %v2913 = vunpack.c.l.b16 %v685
      %v2914 = vunpack.c.l.b16 %v686
      %v2915 = vunpack.c.l.b16 %v687
      %v2916 = vunpack.c.l.b16 %v688
      %v2917 = vunpack.c.l.b16 %v689
      %v2918 = vunpack.c.l.b16 %v690
      %v2919 = vunpack.c.l.b16 %v691
      %v2920 = vunpack.c.l.b16 %v692
      %v2921 = vunpack.c.l.b16 %v693
      %v2922 = vunpack.c.l.b16 %v694
      %v2923 = vunpack.c.l.b16 %v695
      %v2924 = vunpack.c.l.b16 %v696
      %v2925 = vunpack.c.l.b16 %v697
      %v2926 = vunpack.c.l.b16 %v698
      %v2927 = vunpack.c.l.b16 %v699
      %v2928 = vunpack.c.l.b16 %v700
      %v2929 = vunpack.c.l.b16 %v701
      %v2930 = vunpack.c.l.b16 %v702
      %v2931 = vunpack.c.l.b16 %v703
      %v2932 = vunpack.c.l.b16 %v704
      %v2933 = vunpack.c.l.b16 %v705
      %v2934 = vunpack.c.l.b16 %v706
      %v2935 = vunpack.c.l.b16 %v707
      %v2936 = vunpack.c.l.b16 %v708
      %v2937 = vunpack.c.l.b16 %v709
      %v2938 = vunpack.c.l.b16 %v710
      %v2939 = vunpack.c.l.b16 %v711
      %v2940 = vunpack.c.l.b16 %v712
      %v2941 = vunpack.c.l.b16 %v713
      %v2942 = vunpack.c.l.b16 %v714
      %v2943 = vunpack.c.l.b16 %v715
      %v2944 = vunpack.c.l.b16 %v716
      %v2945 = vunpack.c.l.b16 %v717
      %v2946 = vunpack.c.l.b16 %v718
      %v2947 = vunpack.c.l.b16 %v719
      %v2948 = vunpack.c.l.b16 %v720
      %v2949 = vunpack.c.l.b16 %v721
      %v2950 = vunpack.c.l.b16 %v722
      %v2951 = vunpack.c.l.b16 %v723
      %v2952 = vunpack.c.l.b16 %v724
      %v2953 = vunpack.c.l.b16 %v725
      %v2954 = vunpack.c.l.b16 %v726
      %v2955 = vunpack.c.l.b16 %v727
      %v2956 = vunpack.c.l.b16 %v728
      %v2957 = vunpack.c.l.b16 %v729
      %v2958 = vunpack.c.l.b16 %v730
      %v2959 = vunpack.c.l.b16 %v731
      %v2960 = vunpack.c.l.b16 %v732
      %v2961 = vunpack.c.l.b16 %v733
      %v2962 = vunpack.c.l.b16 %v734
      %v2963 = vunpack.c.l.b16 %v735
      %v2964 = vunpack.c.l.b16 %v736
      %v2965 = vunpack.c.l.b16 %v737
      %v2966 = vunpack.c.l.b16 %v738
      %v2967 = vunpack.c.l.b16 %v739
      %v2968 = vunpack.c.l.b16 %v740
      %v2969 = vunpack.c.l.b16 %v741
      %v2970 = vunpack.c.l.b16 %v742
      %v2971 = vunpack.c.l.b16 %v743
      %v2972 = vunpack.c.l.b16 %v744
      %v2973 = vunpack.c.l.b16 %v745
      %v2974 = vunpack.c.l.b16 %v746
      %v2975 = vunpack.c.l.b16 %v747
      %v2976 = vunpack.c.l.b16 %v748
      %v2977 = vunpack.c.l.b16 %v749
      %v2978 = vunpack.c.l.b16 %v750
      %v2979 = vunpack.c.l.b16 %v751
      %v2980 = vunpack.c.l.b16 %v752
      %v2981 = vunpack.c.l.b16 %v753
      %v2982 = vunpack.c.l.b16 %v754
      %v2983 = vunpack.c.l.b16 %v755
      %v2984 = vunpack.c.l.b16 %v756
      %v2985 = vunpack.c.l.b16 %v757
      %v2986 = vunpack.c.l.b16 %v758
      %v2987 = vunpack.c.l.b16 %v759
      %v2988 = vunpack.c.l.b16 %v760
      %v2989 = vunpack.c.l.b16 %v761
      %v2990 = vunpack.c.l.b16 %v762
      %v2991 = vunpack.c.l.b16 %v763
      %v2992 = vunpack.c.l.b16 %v764
      %v2993 = vunpack.c.l.b16 %v765
      %v2994 = vunpack.c.l.b16 %v766
      %v2995 = vunpack.c.l.b16 %v767
      %v2996 = vunpack.c.l.b16 %v768
      %v2997 = vunpack.c.l.b16 %v769
      %v2998 = vunpack.c.l.b16 %v770
      %v2999 = vunpack.c.l.b16 %v771
      %v3000 = vunpack.c.l.b16 %v772
      %v3001 = vunpack.c.l.b16 %v773
      %v3002 = vunpack.c.l.b16 %v774
      %v3003 = vunpack.c.l.b16 %v775
      %v3004 = vunpack.c.l.b16 %v776
      %v3005 = vunpack.c.l.b16 %v777
      %v3006 = vunpack.c.l.b16 %v778
      %v3007 = vunpack.c.l.b16 %v779
      %v3008 = vunpack.c.l.b16 %v780
      %v3009 = vunpack.c.l.b16 %v781
      %v3010 = vunpack.c.l.b16 %v782
      %v3011 = vunpack.c.l.b16 %v783
      %v3012 = vunpack.c.l.b16 %v784
      %v3013 = vunpack.c.l.b16 %v785
      %v3014 = vunpack.c.l.b16 %v786
      %v3015 = vunpack.c.l.b16 %v787
      %v3016 = vunpack.c.l.b16 %v788
      %v3017 = vunpack.c.l.b16 %v789
      %v3018 = vunpack.c.l.b16 %v790
      %v3019 = vunpack.c.l.b16 %v791
      %v3020 = vunpack.c.l.b16 %v792
      %v3021 = vunpack.c.l.b16 %v793
      %v3022 = vunpack.c.l.b16 %v794
      %v3023 = vunpack.c.l.b16 %v795
      %v3024 = vunpack.c.l.b16 %v796
      %v3025 = vunpack.c.l.b16 %v797
      %v3026 = vunpack.c.l.b16 %v798
      %v3027 = vunpack.c.l.b16 %v799
      %v3028 = vunpack.c.l.b16 %v800
      %v3029 = vunpack.c.l.b16 %v801
      %v3030 = vunpack.c.l.b16 %v802
      %v3031 = vunpack.c.l.b16 %v803
      %v3032 = vunpack.c.l.b16 %v804
      %v3033 = vunpack.c.l.b16 %v805
      %v3034 = vunpack.c.l.b16 %v806
      %v3035 = vunpack.c.l.b16 %v807
      %v3036 = vunpack.c.l.b16 %v808
      %v3037 = vunpack.c.l.b16 %v809
      %v3038 = vunpack.c.l.b16 %v810
      %v3039 = vunpack.c.l.b16 %v811
      %v3040 = vunpack.c.l.b16 %v812
      %v3041 = vunpack.c.l.b16 %v813
      %v3042 = vunpack.c.l.b16 %v814
      %v3043 = vunpack.c.l.b16 %v815
      %v3044 = vunpack.c.l.b16 %v816
      %v3045 = vunpack.c.l.b16 %v817
      %v3046 = vunpack.c.l.b16 %v818
      %v3047 = vunpack.c.l.b16 %v819
      %v3048 = vunpack.c.l.b16 %v820
      %v3049 = vunpack.c.l.b16 %v821
      %v3050 = vunpack.c.l.b16 %v822
      %v3051 = vunpack.c.l.b16 %v823
      %v3052 = vunpack.c.l.b16 %v824
      %v3053 = vunpack.c.l.b16 %v825
      %v3054 = vunpack.c.l.b16 %v826
      %v3055 = vunpack.c.l.b16 %v827
      %v3056 = vunpack.c.l.b16 %v828
      %v3057 = vunpack.c.l.b16 %v829
      %v3058 = vunpack.c.l.b16 %v830
      %v3059 = vunpack.c.l.b16 %v831
      %v3060 = vunpack.c.l.b16 %v832
      %v3061 = vunpack.c.l.b16 %v833
      %v3062 = vunpack.c.l.b16 %v834
      %v3063 = vunpack.c.l.b16 %v835
      %v3064 = vunpack.c.l.b16 %v836
      %v3065 = vunpack.c.l.b16 %v837
      %v3066 = vunpack.c.l.b16 %v838
      %v3067 = vunpack.c.l.b16 %v839
      %v3068 = vunpack.c.l.b16 %v840
      %v3069 = vunpack.c.l.b16 %v841
      %v3070 = vunpack.c.l.b16 %v842
      %v3071 = vunpack.c.l.b16 %v843
      %v3072 = vunpack.c.l.b16 %v844
      %v3073 = vunpack.c.l.b16 %v845
      %v3074 = vunpack.c.l.b16 %v846
      %v3075 = vunpack.c.l.b16 %v847
      %v3076 = vunpack.c.l.b16 %v848
      %v3077 = vunpack.c.l.b16 %v849
      %v3078 = vunpack.c.l.b16 %v850
      %v3079 = vunpack.c.l.b16 %v851
      %v3080 = vunpack.c.l.b16 %v852
      %v3081 = vunpack.c.l.b16 %v853
      %v3082 = vunpack.c.l.b16 %v854
      %v3083 = vunpack.c.l.b16 %v855
      %v3084 = vunpack.c.l.b16 %v856
      %v3085 = vunpack.c.l.b16 %v857
      %v3086 = vunpack.c.l.b16 %v858
      %v3087 = vunpack.c.l.b16 %v859
      %v3088 = vunpack.c.l.b16 %v860
      %v3089 = vunpack.c.l.b16 %v861
      %v3090 = vunpack.c.l.b16 %v862
      %v3091 = vunpack.c.l.b16 %v863
      %v3092 = vunpack.c.l.b16 %v864
      %v3093 = vunpack.c.l.b16 %v865
      %v3094 = vunpack.c.l.b16 %v866
      %v3095 = vunpack.c.l.b16 %v867
      %v3096 = vunpack.c.l.b16 %v868
      %v3097 = vunpack.c.l.b16 %v869
      %v3098 = vunpack.c.l.b16 %v870
      %v3099 = vunpack.c.l.b16 %v871
      %v3100 = vunpack.c.l.b16 %v872
      %v3101 = vunpack.c.l.b16 %v873
      %v3102 = vunpack.c.l.b16 %v874
      %v3103 = vunpack.c.l.b16 %v875
      %v3104 = vunpack.c.l.b16 %v876
      %v3105 = vunpack.c.l.b16 %v877
      %v3106 = vunpack.c.l.b16 %v878
      %v3107 = vunpack.c.l.b16 %v879
      %v3108 = vunpack.c.l.b16 %v880
      %v3109 = vunpack.c.l.b16 %v881
      %v3110 = vunpack.c.l.b16 %v882
      %v3111 = vunpack.c.l.b16 %v883
      %v3112 = vunpack.c.l.b16 %v884
      %v3113 = vunpack.c.l.b16 %v885
      %v3114 = vunpack.c.l.b16 %v886
      %v3115 = vunpack.c.l.b16 %v887
      %v3116 = vunpack.c.l.b16 %v888
      %v3117 = vunpack.c.l.b16 %v889
      %v3118 = vunpack.c.l.b16 %v890
      %v3119 = vunpack.c.l.b16 %v891
      %v3120 = vunpack.c.l.b16 %v892
      %v3121 = vunpack.c.l.b16 %v893
      %v3122 = vunpack.c.l.b16 %v894
      %v3123 = vunpack.c.l.b16 %v895
      %v3124 = vunpack.c.l.b16 %v896
      %v3125 = vunpack.c.l.b16 %v897
      %v3126 = vunpack.c.l.b16 %v898
      %v3127 = vunpack.c.l.b16 %v899
      %v3128 = vunpack.c.l.b16 %v900
      %v3129 = vunpack.c.l.b16 %v901
      %v3130 = vunpack.c.l.b16 %v902
      %v3131 = vunpack.c.l.b16 %v903
      %v3132 = vunpack.c.l.b16 %v904
      %v3133 = vunpack.c.l.b16 %v905
      %v3134 = vunpack.c.l.b16 %v906
      %v3135 = vunpack.c.l.b16 %v907
      %v3136 = vunpack.c.l.b16 %v908
      %v3137 = vunpack.c.l.b16 %v909
      %v3138 = vunpack.c.l.b16 %v910
      %v3139 = vunpack.c.l.b16 %v911
      %v3140 = vunpack.c.l.b16 %v912
      %v3141 = vunpack.c.l.b16 %v913
      %v3142 = vunpack.c.l.b16 %v914
      %v3143 = vunpack.c.l.b16 %v915
      %v3144 = vunpack.c.l.b16 %v916
      %v3145 = vunpack.c.l.b16 %v917
      %v3146 = vunpack.c.l.b16 %v918
      %v3147 = vunpack.c.l.b16 %v919
      %v3148 = vunpack.c.l.b16 %v920
      %v3149 = vunpack.c.l.b16 %v921
      %v3150 = vunpack.c.l.b16 %v922
      %v3151 = vunpack.c.l.b16 %v923
      %v3152 = vunpack.c.l.b16 %v924
      %v3153 = vunpack.c.l.b16 %v925
      %v3154 = vunpack.c.l.b16 %v926
      %v3155 = vunpack.c.l.b16 %v927
      %v3156 = vunpack.c.l.b16 %v928
      %v3157 = vunpack.c.l.b16 %v929
      %v3158 = vunpack.c.l.b16 %v930
      %v3159 = vunpack.c.l.b16 %v931
      %v3160 = vunpack.c.l.b16 %v932
      %v3161 = vunpack.c.l.b16 %v933
      %v3162 = vunpack.c.l.b16 %v934
      %v3163 = vunpack.c.l.b16 %v935
      %v3164 = vunpack.c.l.b16 %v936
      %v3165 = vunpack.c.l.b16 %v937
      %v3166 = vunpack.c.l.b16 %v938
      %v3167 = vunpack.c.l.b16 %v939
      %v3168 = vunpack.c.l.b16 %v940
      %v3169 = vunpack.c.l.b16 %v941
      %v3170 = vunpack.c.l.b16 %v942
      %v3171 = vunpack.c.l.b16 %v943
      %v3172 = vunpack.c.l.b16 %v944
      %v3173 = vunpack.c.l.b16 %v945
      %v3174 = vunpack.c.l.b16 %v946
      %v3175 = vunpack.c.l.b16 %v947
      %v3176 = vunpack.c.l.b16 %v948
      %v3177 = vunpack.c.l.b16 %v949
      %v3178 = vunpack.c.l.b16 %v950
      %v3179 = vunpack.c.l.b16 %v951
      %v3180 = vunpack.c.l.b16 %v952
      %v3181 = vunpack.c.l.b16 %v953
      %v3182 = vunpack.c.l.b16 %v954
      %v3183 = vunpack.c.l.b16 %v955
      %v3184 = vunpack.c.l.b16 %v956
      %v3185 = vunpack.c.l.b16 %v957
      %v3186 = vunpack.c.l.b16 %v958
      %v3187 = vunpack.c.l.b16 %v959
      %v3188 = vunpack.c.l.b16 %v960
      %v3189 = vunpack.c.l.b16 %v961
      %v3190 = vunpack.c.l.b16 %v962
      %v3191 = vunpack.c.l.b16 %v963
      %v3192 = vunpack.c.l.b16 %v964
      %v3193 = vunpack.c.l.b16 %v965
      %v3194 = vunpack.c.l.b16 %v966
      %v3195 = vunpack.c.l.b16 %v967
      %v3196 = vunpack.c.l.b16 %v968
      %v3197 = vunpack.c.l.b16 %v969
      %v3198 = vunpack.c.l.b16 %v970
      %v3199 = vunpack.c.l.b16 %v971
      %v3200 = vunpack.c.l.b16 %v972
      %v3201 = vunpack.c.l.b16 %v973
      %v3202 = vunpack.c.l.b16 %v974
      %v3203 = vunpack.c.l.b16 %v975
      %v3204 = vunpack.c.l.b16 %v976
      %v3205 = vunpack.c.l.b16 %v977
      %v3206 = vunpack.c.l.b16 %v978
      %v3207 = vunpack.c.l.b16 %v979
      %v3208 = vunpack.c.l.b16 %v980
      %v3209 = vunpack.c.l.b16 %v981
      %v3210 = vunpack.c.l.b16 %v982
      %v3211 = vunpack.c.l.b16 %v983
      %v3212 = vunpack.c.l.b16 %v984
      %v3213 = vunpack.c.l.b16 %v985
      %v3214 = vunpack.c.l.b16 %v986
      %v3215 = vunpack.c.l.b16 %v987
      %v3216 = vunpack.c.l.b16 %v988
      %v3217 = vunpack.c.l.b16 %v989
      %v3218 = vunpack.c.l.b16 %v990
      %v3219 = vunpack.c.l.b16 %v991
      %v3220 = vunpack.c.l.b16 %v992
      %v3221 = vunpack.c.l.b16 %v993
      %v3222 = vunpack.c.l.b16 %v994
      %v3223 = vunpack.c.l.b16 %v995
      %v3224 = vunpack.c.l.b16 %v996
      %v3225 = vunpack.c.l.b16 %v997
      %v3226 = vunpack.c.l.b16 %v998
      %v3227 = vunpack.c.l.b16 %v999
      %v3228 = vunpack.c.l.b16 %v1000
      %v3229 = vunpack.c.l.b16 %v1001
      %v3230 = vunpack.c.l.b16 %v1002
      %v3231 = vunpack.c.l.b16 %v1003
      %v3232 = vunpack.c.l.b16 %v1004
      %v3233 = vunpack.c.l.b16 %v1005
      %v3234 = vunpack.c.l.b16 %v1006
      %v3235 = vunpack.c.l.b16 %v1007
      %v3236 = vunpack.c.l.b16 %v1008
      %v3237 = vunpack.c.l.b16 %v1009
      %v3238 = vunpack.c.l.b16 %v1010
      %v3239 = vunpack.c.l.b16 %v1011
      %v3240 = vunpack.c.l.b16 %v1012
      %v3241 = vunpack.c.l.b16 %v1013
      %v3242 = vunpack.c.l.b16 %v1014
      %v3243 = vunpack.c.l.b16 %v1015
      %v3244 = vunpack.c.l.b16 %v1016
      %v3245 = vunpack.c.l.b16 %v1017
      %v3246 = vunpack.c.l.b16 %v1018
      %v3247 = vunpack.c.l.b16 %v1019
      %v3248 = vunpack.c.l.b16 %v1020
      %v3249 = vunpack.c.l.b16 %v1021
      %v3250 = vunpack.c.l.b16 %v1022
      %v3251 = vunpack.c.l.b16 %v1023
      %v3252 = vunpack.c.l.b16 %v1024
      %v3253 = vunpack.c.l.b16 %v1025
      %v3254 = vunpack.c.l.b16 %v1026
      %v3255 = vunpack.c.l.b16 %v1027
      %v3256 = vunpack.c.l.b16 %v1028
      %v3257 = vunpack.c.l.b16 %v1029
      %v3258 = vunpack.c.l.b16 %v1030
      %v3259 = vunpack.c.l.b16 %v1031
      %v3260 = vunpack.c.l.b16 %v1032
      %v3261 = vunpack.c.l.b16 %v1033
      %v3262 = vunpack.c.l.b16 %v1034
      %v3263 = vunpack.c.l.b16 %v1035
      %v3264 = vunpack.c.l.b16 %v1036
      %v3265 = vunpack.c.l.b16 %v1037
      %v3266 = vunpack.c.l.b16 %v1038
      %v3267 = vunpack.c.l.b16 %v1039
      %v3268 = vunpack.c.l.b16 %v1040
      %v3269 = vunpack.c.l.b16 %v1041
      %v3270 = vunpack.c.l.b16 %v1042
      %v3271 = vunpack.c.l.b16 %v1043
      %v3272 = vunpack.c.l.b16 %v1044
      %v3273 = vunpack.c.l.b16 %v1045
      %v3274 = vunpack.c.l.b16 %v1046
      %v3275 = vunpack.c.l.b16 %v1047
      %v3276 = vunpack.c.l.b16 %v1048
      %v3277 = vunpack.c.l.b16 %v1049
      %v3278 = vunpack.c.l.b16 %v1050
      %v3279 = vunpack.c.l.b16 %v1051
      %v3280 = vunpack.c.l.b16 %v1052
      %v3281 = vunpack.c.l.b16 %v1053
      %v3282 = vunpack.c.l.b16 %v1054
      %v3283 = vunpack.c.l.b16 %v1055
      %v3284 = vunpack.c.l.b16 %v1056
      %v3285 = vunpack.c.l.b16 %v1057
      %v3286 = vunpack.c.l.b16 %v1058
      %v3287 = vunpack.c.l.b16 %v1059
      %v3288 = vunpack.c.l.b16 %v1060
      %v3289 = vunpack.c.l.b16 %v1061
      %v3290 = vunpack.c.l.b16 %v1062
      %v3291 = vunpack.c.l.b16 %v1063
      %v3292 = vunpack.c.l.b16 %v1064
      %v3293 = vunpack.c.l.b16 %v1065
      %v3294 = vunpack.c.l.b16 %v1066
      %v3295 = vunpack.c.l.b16 %v1067
      %v3296 = vunpack.c.l.b16 %v1068
      %v3297 = vunpack.c.l.b16 %v1069
      %v3298 = vunpack.c.l.b16 %v1070
      %v3299 = vunpack.c.l.b16 %v1071
      %v3300 = vunpack.c.l.b16 %v1072
      %v3301 = vunpack.c.l.b16 %v1073
      %v3302 = vunpack.c.l.b16 %v1074
      %v3303 = vunpack.c.l.b16 %v1075
      %v3304 = vunpack.c.l.b16 %v1076
      %v3305 = vunpack.c.l.b16 %v1077
      %v3306 = vunpack.c.l.b16 %v1078
      %v3307 = vunpack.c.l.b16 %v1079
      %v3308 = vunpack.c.l.b16 %v1080
      %v3309 = vunpack.c.l.b16 %v1081
      %v3310 = vunpack.c.l.b16 %v1082
      %v3311 = vunpack.c.l.b16 %v1083
      %v3312 = vunpack.c.l.b16 %v1084
      %v3313 = vunpack.c.l.b16 %v1085
      %v3314 = vunpack.c.l.b16 %v1086
      %v3315 = vunpack.c.l.b16 %v1087
      %v3316 = vunpack.c.l.b16 %v1088
      %v3317 = vunpack.c.l.b16 %v1089
      %v3318 = vunpack.c.l.b16 %v1090
      %v3319 = vunpack.c.l.b16 %v1091
      %v3320 = vunpack.c.l.b16 %v1092
      %v3321 = vunpack.c.l.b16 %v1093
      %v3322 = vunpack.c.l.b16 %v1094
      %v3323 = vunpack.c.l.b16 %v1095
      %v3324 = vunpack.c.l.b16 %v1096
      %v3325 = vunpack.c.l.b16 %v1097
      %v3326 = vunpack.c.l.b16 %v1098
      %v3327 = vunpack.c.l.b16 %v1099
      %v3328 = vunpack.c.l.b16 %v1100
      %v3329 = vunpack.c.l.b16 %v1101
      %v3330 = vunpack.c.l.b16 %v1102
      %v3331 = vunpack.c.l.b16 %v1103
      %v3332 = vunpack.c.l.b16 %v1104
      %v3333 = vunpack.c.l.b16 %v1105
      %v3334 = vunpack.c.l.b16 %v1106
      %v3335 = vunpack.c.l.b16 %v1107
      %v3336 = vunpack.c.l.b16 %v1108
      %v3337 = vunpack.c.l.b16 %v1109
      %v3338 = vunpack.c.l.b16 %v1110
      %v3339 = vunpack.c.l.b16 %v1111
      %v3340 = vunpack.c.l.b16 %v1112
      %v3341 = vunpack.c.l.b16 %v1113
      %v3342 = vunpack.c.l.b16 %v1114
      %v3343 = vunpack.c.l.b16 %v1115
      %v3344 = vunpack.c.l.b16 %v1116
      %v3345 = vunpack.c.l.b16 %v1117
      %v3346 = vunpack.c.l.b16 %v1118
      %v3347 = vunpack.c.l.b16 %v1119
      %v3348 = vunpack.c.l.b16 %v1120
      %v3349 = vunpack.c.l.b16 %v1121
      %v3350 = vunpack.c.l.b16 %v1122
      %v3351 = vunpack.c.l.b16 %v1123
      %v3352 = vunpack.c.l.b16 %v1124
      %v3353 = vunpack.c.l.b16 %v1125
      %v3354 = vunpack.c.l.b16 %v1126
      %v3355 = vunpack.c.l.b16 %v1127
      %v3356 = vunpack.c.l.b16 %v1128
      %v3357 = vunpack.c.l.b16 %v1129
      %v3358 = vunpack.c.l.b16 %v1130
      %v3359 = vunpack.c.l.b16 %v1131
      %v3360 = vunpack.c.l.b16 %v1132
      %v3361 = vunpack.c.l.b16 %v1133
      %v3362 = vunpack.c.l.b16 %v1134
      %v3363 = vunpack.c.l.b16 %v1135
      %v3364 = vunpack.c.l.b16 %v1136
      %v3365 = vunpack.c.l.b16 %v1137
      %v3366 = vunpack.c.l.b16 %v1138
      %v3367 = vunpack.c.l.b16 %v1139
      %v3368 = vunpack.c.l.b16 %v1140
      %v3369 = vunpack.c.l.b16 %v1141
      %v3370 = vunpack.c.l.b16 %v1142
      %v3371 = vunpack.c.l.b16 %v1143
      %v3372 = vunpack.c.l.b16 %v1144
      %v3373 = vunpack.c.l.b16 %v1145
      %v3374 = vunpack.c.l.b16 %v1146
      %v3375 = vunpack.c.l.b16 %v1147
      %v3376 = vunpack.c.l.b16 %v1148
      %v3377 = vunpack.c.l.b16 %v1149
      %v3378 = vunpack.c.l.b16 %v1150
      %v3379 = vunpack.c.l.b16 %v1151
      %v3380 = vunpack.c.l.b16 %v1152
      %v3381 = vunpack.c.l.b16 %v1153
      %v3382 = vunpack.c.l.b16 %v1154
      %v3383 = vunpack.c.l.b16 %v1155
      %v3384 = vunpack.c.l.b16 %v1156
      %v3385 = vunpack.c.l.b16 %v1157
      %v3386 = vunpack.c.l.b16 %v1158
      %v3387 = vunpack.c.l.b16 %v1159
      %v3388 = vunpack.c.l.b16 %v1160
      %v3389 = vunpack.c.l.b16 %v1161
      %v3390 = vunpack.c.l.b16 %v1162
      %v3391 = vunpack.c.l.b16 %v1163
      %v3392 = vunpack.c.l.b16 %v1164
      %v3393 = vunpack.c.l.b16 %v1165
      %v3394 = vunpack.c.l.b16 %v1166
      %v3395 = vunpack.c.l.b16 %v1167
      %v3396 = vunpack.c.l.b16 %v1168
      %v3397 = vunpack.c.l.b16 %v1169
      %v3398 = vunpack.c.l.b16 %v1170
      %v3399 = vunpack.c.l.b16 %v1171
      %v3400 = vunpack.c.l.b16 %v1172
      %v3401 = vunpack.c.l.b16 %v1173
      %v3402 = vunpack.c.l.b16 %v1174
      %v3403 = vunpack.c.l.b16 %v1175
      %v3404 = vunpack.c.l.b16 %v1176
      %v3405 = vunpack.c.l.b16 %v1177
      %v3406 = vunpack.c.l.b16 %v1178
      %v3407 = vunpack.c.l.b16 %v1179
      %v3408 = vunpack.c.l.b16 %v1180
      %v3409 = vunpack.c.l.b16 %v1181
      %v3410 = vunpack.c.l.b16 %v1182
      %v3411 = vunpack.c.l.b16 %v1183
      %v3412 = vunpack.c.l.b16 %v1184
      %v3413 = vunpack.c.l.b16 %v1185
      %v3414 = vunpack.c.l.b16 %v1186
      %v3415 = vunpack.c.l.b16 %v1187
      %v3416 = vunpack.c.l.b16 %v1188
      %v3417 = vunpack.c.l.b16 %v1189
      %v3418 = vunpack.c.l.b16 %v1190
      %v3419 = vunpack.c.l.b16 %v1191
      %v3420 = vunpack.c.l.b16 %v1192
      %v3421 = vunpack.c.l.b16 %v1193
      %v3422 = vunpack.c.l.b16 %v1194
      %v3423 = vunpack.c.l.b16 %v1195
      %v3424 = vunpack.c.l.b16 %v1196
      %v3425 = vunpack.c.l.b16 %v1197
      %v3426 = vunpack.c.l.b16 %v1198
      %v3427 = vunpack.c.l.b16 %v1199
      %v3428 = vunpack.c.l.b16 %v1200
      %v3429 = vunpack.c.l.b16 %v1201
      %v3430 = vunpack.c.l.b16 %v1202
      %v3431 = vunpack.c.l.b16 %v1203
      %v3432 = vunpack.c.l.b16 %v1204
      %v3433 = vunpack.c.l.b16 %v1205
      %v3434 = vunpack.c.l.b16 %v1206
      %v3435 = vunpack.c.l.b16 %v1207
      %v3436 = vunpack.c.l.b16 %v1208
      %v3437 = vunpack.c.l.b16 %v1209
      %v3438 = vunpack.c.l.b16 %v1210
      %v3439 = vunpack.c.l.b16 %v1211
      %v3440 = vunpack.c.l.b16 %v1212
      %v3441 = vunpack.c.l.b16 %v1213
      %v3442 = vunpack.c.l.b16 %v1214
      %v3443 = vunpack.c.l.b16 %v1215
      %v3444 = vunpack.c.l.b16 %v1216
      %v3445 = vunpack.c.l.b16 %v1217
      %v3446 = vunpack.c.l.b16 %v1218
      %v3447 = vunpack.c.l.b16 %v1219
      %v3448 = vunpack.c.l.b16 %v1220
      %v3449 = vunpack.c.l.b16 %v1221
      %v3450 = vunpack.c.l.b16 %v1222
      %v3451 = vunpack.c.l.b16 %v1223
      %v3452 = vunpack.c.l.b16 %v1224
      %v3453 = vunpack.c.l.b16 %v1225
      %v3454 = vunpack.c.l.b16 %v1226
      %v3455 = vunpack.c.l.b16 %v1227
      %v3456 = vunpack.c.l.b16 %v1228
      %v3457 = vunpack.c.l.b16 %v1229
      %v3458 = vunpack.c.l.b16 %v1230
      %v3459 = vunpack.c.l.b16 %v1231
      %v3460 = vunpack.c.l.b16 %v1232
      %v3461 = vunpack.c.l.b16 %v1233
      %v3462 = vunpack.c.l.b16 %v1234
      %v3463 = vunpack.c.l.b16 %v1235
      %v3464 = vunpack.c.l.b16 %v1236
      %v3465 = vunpack.c.l.b16 %v1237
      %v3466 = vunpack.c.l.b16 %v1238
      %v3467 = vunpack.c.l.b16 %v1239
      %v3468 = vunpack.c.l.b16 %v1240
      %v3469 = vunpack.c.l.b16 %v1241
      %v3470 = vunpack.c.l.b16 %v1242
      %v3471 = vunpack.c.l.b16 %v1243
      %v3472 = vunpack.c.l.b16 %v1244
      %v3473 = vunpack.c.l.b16 %v1245
      %v3474 = vunpack.c.l.b16 %v1246
      %v3475 = vunpack.c.l.b16 %v1247
      %v3476 = vunpack.c.l.b16 %v1248
      %v3477 = vunpack.c.l.b16 %v1249
      %v3478 = vunpack.c.l.b16 %v1250
      %v3479 = vunpack.c.l.b16 %v1251
      %v3480 = vunpack.c.l.b16 %v1252
      %v3481 = vunpack.c.l.b16 %v1253
      %v3482 = vunpack.c.l.b16 %v1254
      %v3483 = vunpack.c.l.b16 %v1255
      %v3484 = vunpack.c.l.b16 %v1256
      %v3485 = vunpack.c.l.b16 %v1257
      %v3486 = vunpack.c.l.b16 %v1258
      %v3487 = vunpack.c.l.b16 %v1259
      %v3488 = vunpack.c.l.b16 %v1260
      %v3489 = vunpack.c.l.b16 %v1261
      %v3490 = vunpack.c.l.b16 %v1262
      %v3491 = vunpack.c.l.b16 %v1263
      %v3492 = vunpack.c.l.b16 %v1264
      %v3493 = vunpack.c.l.b16 %v1265
      %v3494 = vunpack.c.l.b16 %v1266
      %v3495 = vunpack.c.l.b16 %v1267
      %v3496 = vunpack.c.l.b16 %v1268
      %v3497 = vunpack.c.l.b16 %v1269
      %v3498 = vunpack.c.l.b16 %v1270
      %v3499 = vunpack.c.l.b16 %v1271
      %v3500 = vunpack.c.l.b16 %v1272
      %v3501 = vunpack.c.l.b16 %v1273
      %v3502 = vunpack.c.l.b16 %v1274
      %v3503 = vunpack.c.l.b16 %v1275
      %v3504 = vunpack.c.l.b16 %v1276
      %v3505 = vunpack.c.l.b16 %v1277
      %v3506 = vunpack.c.l.b16 %v1278
      %v3507 = vunpack.c.l.b16 %v1279
      %v3508 = vunpack.c.l.b16 %v1280
      %v3509 = vunpack.c.l.b16 %v1281
      %v3510 = vunpack.c.l.b16 %v1282
      %v3511 = vunpack.c.l.b16 %v1283
      %v3512 = vunpack.c.l.b16 %v1284
      %v3513 = vunpack.c.l.b16 %v1285
      %v3514 = vunpack.c.l.b16 %v1286
      %v3515 = vunpack.c.l.b16 %v1287
      %v3516 = vunpack.c.l.b16 %v1288
      %v3517 = vunpack.c.l.b16 %v1289
      %v3518 = vunpack.c.l.b16 %v1290
      %v3519 = vunpack.c.l.b16 %v1291
      %v3520 = vunpack.c.l.b16 %v1292
      %v3521 = vunpack.c.l.b16 %v1293
      %v3522 = vunpack.c.l.b16 %v1294
      %v3523 = vunpack.c.l.b16 %v1295
      %v3524 = vunpack.c.l.b16 %v1296
      %v3525 = vunpack.c.l.b16 %v1297
      %v3526 = vunpack.c.l.b16 %v1298
      %v3527 = vunpack.c.l.b16 %v1299
      %v3528 = vunpack.c.l.b16 %v1300
      %v3529 = vunpack.c.l.b16 %v1301
      %v3530 = vunpack.c.l.b16 %v1302
      %v3531 = vunpack.c.l.b16 %v1303
      %v3532 = vunpack.c.l.b16 %v1304
      %v3533 = vunpack.c.l.b16 %v1305
      %v3534 = vunpack.c.l.b16 %v1306
      %v3535 = vunpack.c.l.b16 %v1307
      %v3536 = vunpack.c.l.b16 %v1308
      %v3537 = vunpack.c.l.b16 %v1309
      %v3538 = vunpack.c.l.b16 %v1310
      %v3539 = vunpack.c.l.b16 %v1311
      %v3540 = vunpack.c.l.b16 %v1312
      %v3541 = vunpack.c.l.b16 %v1313
      %v3542 = vunpack.c.l.b16 %v1314
      %v3543 = vunpack.c.l.b16 %v1315
      %v3544 = vunpack.c.l.b16 %v1316
      %v3545 = vunpack.c.l.b16 %v1317
      %v3546 = vunpack.c.l.b16 %v1318
      %v3547 = vunpack.c.l.b16 %v1319
      %v3548 = vunpack.c.l.b16 %v1320
      %v3549 = vunpack.c.l.b16 %v1321
      %v3550 = vunpack.c.l.b16 %v1322
      %v3551 = vunpack.c.l.b16 %v1323
      %v3552 = vunpack.c.l.b16 %v1324
      %v3553 = vunpack.c.l.b16 %v1325
      %v3554 = vunpack.c.l.b16 %v1326
      %v3555 = vunpack.c.l.b16 %v1327
      %v3556 = vunpack.c.l.b16 %v1328
      %v3557 = vunpack.c.l.b16 %v1329
      %v3558 = vunpack.c.l.b16 %v1330
      %v3559 = vunpack.c.l.b16 %v1331
      %v3560 = vunpack.c.l.b16 %v1332
      %v3561 = vpack.c.b16 %v2522, %v2521
      %v3562 = vpack.c.b16 %v2524, %v2523
      %v3563 = vpack.c.b16 %v2526, %v2525
      %v3564 = vpack.c.b16 %v2528, %v2527
      %v3565 = vpack.c.b16 %v2530, %v2529
      %v3566 = vpack.c.b16 %v2532, %v2531
      %v3567 = vpack.c.b16 %v2534, %v2533
      %v3568 = vpack.c.b16 %v2536, %v2535
      %v3569 = vpack.c.b16 %v2538, %v2537
      %v3570 = vpack.c.b16 %v2540, %v2539
      %v3571 = vpack.c.b16 %v2542, %v2541
      %v3572 = vpack.c.b16 %v2544, %v2543
      %v3573 = vpack.c.b16 %v2546, %v2545
      %v3574 = vpack.c.b16 %v2548, %v2547
      %v3575 = vpack.c.b16 %v2550, %v2549
      %v3576 = vpack.c.b16 %v2552, %v2551
      %v3577 = vpack.c.b16 %v2554, %v2553
      %v3578 = vpack.c.b16 %v2556, %v2555
      %v3579 = vpack.c.b16 %v2558, %v2557
      %v3580 = vpack.c.b16 %v2560, %v2559
      %v3581 = vpack.c.b16 %v2562, %v2561
      %v3582 = vpack.c.b16 %v2564, %v2563
      %v3583 = vpack.c.b16 %v2566, %v2565
      %v3584 = vpack.c.b16 %v2568, %v2567
      %v3585 = vpack.c.b16 %v2570, %v2569
      %v3586 = vpack.c.b16 %v2572, %v2571
      %v3587 = vpack.c.b16 %v2574, %v2573
      %v3588 = vpack.c.b16 %v2576, %v2575
      %v3589 = vpack.c.b16 %v2578, %v2577
      %v3590 = vpack.c.b16 %v2580, %v2579
      %v3591 = vpack.c.b16 %v2582, %v2581
      %v3592 = vpack.c.b16 %v2584, %v2583
      %v3593 = vpack.c.b16 %v2586, %v2585
      %v3594 = vpack.c.b16 %v2588, %v2587
      %v3595 = vpack.c.b16 %v2590, %v2589
      %v3596 = vpack.c.b16 %v2592, %v2591
      %v3597 = vpack.c.b16 %v2594, %v2593
      %v3598 = vpack.c.b16 %v2596, %v2595
      %v3599 = vpack.c.b16 %v2598, %v2597
      %v3600 = vpack.c.b16 %v2600, %v2599
      %v3601 = vpack.c.b16 %v2602, %v2601
      %v3602 = vpack.c.b16 %v2604, %v2603
      %v3603 = vpack.c.b16 %v2606, %v2605
      %v3604 = vpack.c.b16 %v2608, %v2607
      %v3605 = vpack.c.b16 %v2610, %v2609
      %v3606 = vpack.c.b16 %v2612, %v2611
      %v3607 = vpack.c.b16 %v2614, %v2613
      %v3608 = vpack.c.b16 %v2616, %v2615
      %v3609 = vpack.c.b16 %v2618, %v2617
      %v3610 = vpack.c.b16 %v2620, %v2619
      %v3611 = vpack.c.b16 %v2622, %v2621
      %v3612 = vpack.c.b16 %v2624, %v2623
      %v3613 = vpack.c.b16 %v2626, %v2625
      %v3614 = vpack.c.b16 %v2628, %v2627
      %v3615 = vpack.c.b16 %v2630, %v2629
      %v3616 = vpack.c.b16 %v2632, %v2631
      %v3617 = vpack.c.b16 %v2634, %v2633
      %v3618 = vpack.c.b16 %v2636, %v2635
      %v3619 = vpack.c.b16 %v2638, %v2637
      %v3620 = vpack.c.b16 %v2640, %v2639
      %v3621 = vpack.c.b16 %v2642, %v2641
      %v3622 = vpack.c.b16 %v2644, %v2643
      %v3623 = vpack.c.b16 %v2646, %v2645
      %v3624 = vpack.c.b16 %v2648, %v2647
      %v3625 = vpack.c.b16 %v2650, %v2649
      %v3626 = vpack.c.b16 %v2652, %v2651
      %v3627 = vpack.c.b16 %v2654, %v2653
      %v3628 = vpack.c.b16 %v2656, %v2655
      %v3629 = vpack.c.b16 %v2658, %v2657
      %v3630 = vpack.c.b16 %v2660, %v2659
      %v3631 = vpack.c.b16 %v2662, %v2661
      %v3632 = vpack.c.b16 %v2664, %v2663
      %v3633 = vpack.c.b16 %v2666, %v2665
      %v3634 = vpack.c.b16 %v2668, %v2667
      %v3635 = vpack.c.b16 %v2670, %v2669
      %v3636 = vpack.c.b16 %v2672, %v2671
      %v3637 = vpack.c.b16 %v2674, %v2673
      %v3638 = vpack.c.b16 %v2676, %v2675
      %v3639 = vpack.c.b16 %v2678, %v2677
      %v3640 = vpack.c.b16 %v2680, %v2679
      %v3641 = vpack.c.b16 %v2682, %v2681
      %v3642 = vpack.c.b16 %v2684, %v2683
      %v3643 = vpack.c.b16 %v2686, %v2685
      %v3644 = vpack.c.b16 %v2688, %v2687
      %v3645 = vpack.c.b16 %v2690, %v2689
      %v3646 = vpack.c.b16 %v2692, %v2691
      %v3647 = vpack.c.b16 %v2694, %v2693
      %v3648 = vpack.c.b16 %v2696, %v2695
      %v3649 = vpack.c.b16 %v2698, %v2697
      %v3650 = vpack.c.b16 %v2700, %v2699
      %v3651 = vpack.c.b16 %v2702, %v2701
      %v3652 = vpack.c.b16 %v2704, %v2703
      %v3653 = vpack.c.b16 %v2706, %v2705
      %v3654 = vpack.c.b16 %v2708, %v2707
      %v3655 = vpack.c.b16 %v2710, %v2709
      %v3656 = vpack.c.b16 %v2712, %v2711
      %v3657 = vpack.c.b16 %v2714, %v2713
      %v3658 = vpack.c.b16 %v2716, %v2715
      %v3659 = vpack.c.b16 %v2718, %v2717
      %v3660 = vpack.c.b16 %v2720, %v2719
      %v3661 = vpack.c.b16 %v2722, %v2721
      %v3662 = vpack.c.b16 %v2724, %v2723
      %v3663 = vpack.c.b16 %v2726, %v2725
      %v3664 = vpack.c.b16 %v2728, %v2727
      %v3665 = vpack.c.b16 %v2730, %v2729
      %v3666 = vpack.c.b16 %v2732, %v2731
      %v3667 = vpack.c.b16 %v2734, %v2733
      %v3668 = vpack.c.b16 %v2736, %v2735
      %v3669 = vpack.c.b16 %v2738, %v2737
      %v3670 = vpack.c.b16 %v2740, %v2739
      %v3671 = vpack.c.b16 %v2742, %v2741
      %v3672 = vpack.c.b16 %v2744, %v2743
      %v3673 = vpack.c.b16 %v2746, %v2745
      %v3674 = vpack.c.b16 %v2748, %v2747
      %v3675 = vpack.c.b16 %v2750, %v2749
      %v3676 = vpack.c.b16 %v2752, %v2751
      %v3677 = vpack.c.b16 %v2754, %v2753
      %v3678 = vpack.c.b16 %v2756, %v2755
      %v3679 = vpack.c.b16 %v2758, %v2757
      %v3680 = vpack.c.b16 %v2760, %v2759
      %v3681 = vpack.c.b16 %v2762, %v2761
      %v3682 = vpack.c.b16 %v2764, %v2763
      %v3683 = vpack.c.b16 %v2766, %v2765
      %v3684 = vpack.c.b16 %v2768, %v2767
      %v3685 = vpack.c.b16 %v2770, %v2769
      %v3686 = vpack.c.b16 %v2772, %v2771
      %v3687 = vpack.c.b16 %v2774, %v2773
      %v3688 = vpack.c.b16 %v2776, %v2775
      %v3689 = vpack.c.b16 %v2778, %v2777
      %v3690 = vpack.c.b16 %v2780, %v2779
      %v3691 = vpack.c.b16 %v2782, %v2781
      %v3692 = vpack.c.b16 %v2784, %v2783
      %v3693 = vpack.c.b16 %v2786, %v2785
      %v3694 = vpack.c.b16 %v2788, %v2787
      %v3695 = vpack.c.b16 %v2790, %v2789
      %v3696 = vpack.c.b16 %v2792, %v2791
      %v3697 = vpack.c.b16 %v2794, %v2793
      %v3698 = vpack.c.b16 %v2796, %v2795
      %v3699 = vpack.c.b16 %v2798, %v2797
      %v3700 = vpack.c.b16 %v2800, %v2799
      %v3701 = vpack.c.b16 %v2802, %v2801
      %v3702 = vpack.c.b16 %v2804, %v2803
      %v3703 = vpack.c.b16 %v2806, %v2805
      %v3704 = vpack.c.b16 %v2808, %v2807
      %v3705 = vpack.c.b16 %v2810, %v2809
      %v3706 = vpack.c.b16 %v2812, %v2811
      %v3707 = vpack.c.b16 %v2814, %v2813
      %v3708 = vpack.c.b16 %v2816, %v2815
      %v3709 = vpack.c.b16 %v2818, %v2817
      %v3710 = vpack.c.b16 %v2820, %v2819
      %v3711 = vpack.c.b16 %v2822, %v2821
      %v3712 = vpack.c.b16 %v2824, %v2823
      %v3713 = vpack.c.b16 %v2826, %v2825
      %v3714 = vpack.c.b16 %v2828, %v2827
      %v3715 = vpack.c.b16 %v2830, %v2829
      %v3716 = vpack.c.b16 %v2832, %v2831
      %v3717 = vpack.c.b16 %v2834, %v2833
      %v3718 = vpack.c.b16 %v2836, %v2835
      %v3719 = vpack.c.b16 %v2838, %v2837
      %v3720 = vpack.c.b16 %v2840, %v2839
      %v3721 = vpack.c.b16 %v2842, %v2841
      %v3722 = vpack.c.b16 %v2844, %v2843
      %v3723 = vpack.c.b16 %v2846, %v2845
      %v3724 = vpack.c.b16 %v2848, %v2847
      %v3725 = vpack.c.b16 %v2850, %v2849
      %v3726 = vpack.c.b16 %v2852, %v2851
      %v3727 = vpack.c.b16 %v2854, %v2853
      %v3728 = vpack.c.b16 %v2856, %v2855
      %v3729 = vpack.c.b16 %v2858, %v2857
      %v3730 = vpack.c.b16 %v2860, %v2859
      %v3731 = vpack.c.b16 %v2862, %v2861
      %v3732 = vpack.c.b16 %v2864, %v2863
      %v3733 = vpack.c.b16 %v2866, %v2865
      %v3734 = vpack.c.b16 %v2868, %v2867
      %v3735 = vpack.c.b16 %v2870, %v2869
      %v3736 = vpack.c.b16 %v2872, %v2871
      %v3737 = vpack.c.b16 %v2874, %v2873
      %v3738 = vpack.c.b16 %v2876, %v2875
      %v3739 = vpack.c.b16 %v2878, %v2877
      %v3740 = vpack.c.b16 %v2880, %v2879
      %v3741 = vpack.c.b16 %v2882, %v2881
      %v3742 = vpack.c.b16 %v2884, %v2883
      %v3743 = vpack.c.b16 %v2886, %v2885
      %v3744 = vpack.c.b16 %v2888, %v2887
      %v3745 = vpack.c.b16 %v2890, %v2889
      %v3746 = vpack.c.b16 %v2892, %v2891
      %v3747 = vpack.c.b16 %v2894, %v2893
      %v3748 = vpack.c.b16 %v2896, %v2895
      %v3749 = vpack.c.b16 %v2898, %v2897
      %v3750 = vpack.c.b16 %v2900, %v2899
      %v3751 = vpack.c.b16 %v2902, %v2901
      %v3752 = vpack.c.b16 %v2904, %v2903
      %v3753 = vpack.c.b16 %v2906, %v2905
      %v3754 = vpack.c.b16 %v2908, %v2907
      %v3755 = vpack.c.b16 %v2910, %v2909
      %v3756 = vpack.c.b16 %v2912, %v2911
      %v3757 = vpack.c.b16 %v2914, %v2913
      %v3758 = vpack.c.b16 %v2916, %v2915
      %v3759 = vpack.c.b16 %v2918, %v2917
      %v3760 = vpack.c.b16 %v2920, %v2919
      %v3761 = vpack.c.b16 %v2922, %v2921
      %v3762 = vpack.c.b16 %v2924, %v2923
      %v3763 = vpack.c.b16 %v2926, %v2925
      %v3764 = vpack.c.b16 %v2928, %v2927
      %v3765 = vpack.c.b16 %v2930, %v2929
      %v3766 = vpack.c.b16 %v2932, %v2931
      %v3767 = vpack.c.b16 %v2934, %v2933
      %v3768 = vpack.c.b16 %v2936, %v2935
      %v3769 = vpack.c.b16 %v2938, %v2937
      %v3770 = vpack.c.b16 %v2940, %v2939
      %v3771 = vpack.c.b16 %v2942, %v2941
      %v3772 = vpack.c.b16 %v2944, %v2943
      %v3773 = vpack.c.b16 %v2946, %v2945
      %v3774 = vpack.c.b16 %v2948, %v2947
      %v3775 = vpack.c.b16 %v2950, %v2949
      %v3776 = vpack.c.b16 %v2952, %v2951
      %v3777 = vpack.c.b16 %v2954, %v2953
      %v3778 = vpack.c.b16 %v2956, %v2955
      %v3779 = vpack.c.b16 %v2958, %v2957
      %v3780 = vpack.c.b16 %v2960, %v2959
      %v3781 = vpack.c.b16 %v2962, %v2961
      %v3782 = vpack.c.b16 %v2964, %v2963
      %v3783 = vpack.c.b16 %v2966, %v2965
      %v3784 = vpack.c.b16 %v2968, %v2967
      %v3785 = vpack.c.b16 %v2970, %v2969
      %v3786 = vpack.c.b16 %v2972, %v2971
      %v3787 = vpack.c.b16 %v2974, %v2973
      %v3788 = vpack.c.b16 %v2976, %v2975
      %v3789 = vpack.c.b16 %v2978, %v2977
      %v3790 = vpack.c.b16 %v2980, %v2979
      %v3791 = vpack.c.b16 %v2982, %v2981
      %v3792 = vpack.c.b16 %v2984, %v2983
      %v3793 = vpack.c.b16 %v2986, %v2985
      %v3794 = vpack.c.b16 %v2988, %v2987
      %v3795 = vpack.c.b16 %v2990, %v2989
      %v3796 = vpack.c.b16 %v2992, %v2991
      %v3797 = vpack.c.b16 %v2994, %v2993
      %v3798 = vpack.c.b16 %v2996, %v2995
      %v3799 = vpack.c.b16 %v2998, %v2997
      %v3800 = vpack.c.b16 %v3000, %v2999
      %v3801 = vpack.c.b16 %v3002, %v3001
      %v3802 = vpack.c.b16 %v3004, %v3003
      %v3803 = vpack.c.b16 %v3006, %v3005
      %v3804 = vpack.c.b16 %v3008, %v3007
      %v3805 = vpack.c.b16 %v3010, %v3009
      %v3806 = vpack.c.b16 %v3012, %v3011
      %v3807 = vpack.c.b16 %v3014, %v3013
      %v3808 = vpack.c.b16 %v3016, %v3015
      %v3809 = vpack.c.b16 %v3018, %v3017
      %v3810 = vpack.c.b16 %v3020, %v3019
      %v3811 = vpack.c.b16 %v3022, %v3021
      %v3812 = vpack.c.b16 %v3024, %v3023
      %v3813 = vpack.c.b16 %v3026, %v3025
      %v3814 = vpack.c.b16 %v3028, %v3027
      %v3815 = vpack.c.b16 %v3030, %v3029
      %v3816 = vpack.c.b16 %v3032, %v3031
      %v3817 = vpack.c.b16 %v3034, %v3033
      %v3818 = vpack.c.b16 %v3036, %v3035
      %v3819 = vpack.c.b16 %v3038, %v3037
      %v3820 = vpack.c.b16 %v3040, %v3039
      %v3821 = vpack.c.b16 %v3042, %v3041
      %v3822 = vpack.c.b16 %v3044, %v3043
      %v3823 = vpack.c.b16 %v3046, %v3045
      %v3824 = vpack.c.b16 %v3048, %v3047
      %v3825 = vpack.c.b16 %v3050, %v3049
      %v3826 = vpack.c.b16 %v3052, %v3051
      %v3827 = vpack.c.b16 %v3054, %v3053
      %v3828 = vpack.c.b16 %v3056, %v3055
      %v3829 = vpack.c.b16 %v3058, %v3057
      %v3830 = vpack.c.b16 %v3060, %v3059
      %v3831 = vpack.c.b16 %v3062, %v3061
      %v3832 = vpack.c.b16 %v3064, %v3063
      %v3833 = vpack.c.b16 %v3066, %v3065
      %v3834 = vpack.c.b16 %v3068, %v3067
      %v3835 = vpack.c.b16 %v3070, %v3069
      %v3836 = vpack.c.b16 %v3072, %v3071
      %v3837 = vpack.c.b16 %v3074, %v3073
      %v3838 = vpack.c.b16 %v3076, %v3075
      %v3839 = vpack.c.b16 %v3078, %v3077
      %v3840 = vpack.c.b16 %v3080, %v3079
      %v3841 = vpack.c.b16 %v3082, %v3081
      %v3842 = vpack.c.b16 %v3084, %v3083
      %v3843 = vpack.c.b16 %v3086, %v3085
      %v3844 = vpack.c.b16 %v3088, %v3087
      %v3845 = vpack.c.b16 %v3090, %v3089
      %v3846 = vpack.c.b16 %v3092, %v3091
      %v3847 = vpack.c.b16 %v3094, %v3093
      %v3848 = vpack.c.b16 %v3096, %v3095
      %v3849 = vpack.c.b16 %v3098, %v3097
      %v3850 = vpack.c.b16 %v3100, %v3099
      %v3851 = vpack.c.b16 %v3102, %v3101
      %v3852 = vpack.c.b16 %v3104, %v3103
      %v3853 = vpack.c.b16 %v3106, %v3105
      %v3854 = vpack.c.b16 %v3108, %v3107
      %v3855 = vpack.c.b16 %v3110, %v3109
      %v3856 = vpack.c.b16 %v3112, %v3111
      %v3857 = vpack.c.b16 %v3114, %v3113
      %v3858 = vpack.c.b16 %v3116, %v3115
      %v3859 = vpack.c.b16 %v3118, %v3117
      %v3860 = vpack.c.b16 %v3120, %v3119
      %v3861 = vpack.c.b16 %v3122, %v3121
      %v3862 = vpack.c.b16 %v3124, %v3123
      %v3863 = vpack.c.b16 %v3126, %v3125
      %v3864 = vpack.c.b16 %v3128, %v3127
      %v3865 = vpack.c.b16 %v3130, %v3129
      %v3866 = vpack.c.b16 %v3132, %v3131
      %v3867 = vpack.c.b16 %v3134, %v3133
      %v3868 = vpack.c.b16 %v3136, %v3135
      %v3869 = vpack.c.b16 %v3138, %v3137
      %v3870 = vpack.c.b16 %v3140, %v3139
      %v3871 = vpack.c.b16 %v3142, %v3141
      %v3872 = vpack.c.b16 %v3144, %v3143
      %v3873 = vpack.c.b16 %v3146, %v3145
      %v3874 = vpack.c.b16 %v3148, %v3147
      %v3875 = vpack.c.b16 %v3150, %v3149
      %v3876 = vpack.c.b16 %v3152, %v3151
      %v3877 = vpack.c.b16 %v3154, %v3153
      %v3878 = vpack.c.b16 %v3156, %v3155
      %v3879 = vpack.c.b16 %v3158, %v3157
      %v3880 = vpack.c.b16 %v3160, %v3159
      %v3881 = vpack.c.b16 %v3162, %v3161
      %v3882 = vpack.c.b16 %v3164, %v3163
      %v3883 = vpack.c.b16 %v3166, %v3165
      %v3884 = vpack.c.b16 %v3168, %v3167
      %v3885 = vpack.c.b16 %v3170, %v3169
      %v3886 = vpack.c.b16 %v3172, %v3171
      %v3887 = vpack.c.b16 %v3174, %v3173
      %v3888 = vpack.c.b16 %v3176, %v3175
      %v3889 = vpack.c.b16 %v3178, %v3177
      %v3890 = vpack.c.b16 %v3180, %v3179
      %v3891 = vpack.c.b16 %v3182, %v3181
      %v3892 = vpack.c.b16 %v3184, %v3183
      %v3893 = vpack.c.b16 %v3186, %v3185
      %v3894 = vpack.c.b16 %v3188, %v3187
      %v3895 = vpack.c.b16 %v3190, %v3189
      %v3896 = vpack.c.b16 %v3192, %v3191
      %v3897 = vpack.c.b16 %v3194, %v3193
      %v3898 = vpack.c.b16 %v3196, %v3195
      %v3899 = vpack.c.b16 %v3198, %v3197
      %v3900 = vpack.c.b16 %v3200, %v3199
      %v3901 = vpack.c.b16 %v3202, %v3201
      %v3902 = vpack.c.b16 %v3204, %v3203
      %v3903 = vpack.c.b16 %v3206, %v3205
      %v3904 = vpack.c.b16 %v3208, %v3207
      %v3905 = vpack.c.b16 %v3210, %v3209
      %v3906 = vpack.c.b16 %v3212, %v3211
      %v3907 = vpack.c.b16 %v3214, %v3213
      %v3908 = vpack.c.b16 %v3216, %v3215
      %v3909 = vpack.c.b16 %v3218, %v3217
      %v3910 = vpack.c.b16 %v3220, %v3219
      %v3911 = vpack.c.b16 %v3222, %v3221
      %v3912 = vpack.c.b16 %v3224, %v3223
      %v3913 = vpack.c.b16 %v3226, %v3225
      %v3914 = vpack.c.b16 %v3228, %v3227
      %v3915 = vpack.c.b16 %v3230, %v3229
      %v3916 = vpack.c.b16 %v3232, %v3231
      %v3917 = vpack.c.b16 %v3234, %v3233
      %v3918 = vpack.c.b16 %v3236, %v3235
      %v3919 = vpack.c.b16 %v3238, %v3237
      %v3920 = vpack.c.b16 %v3240, %v3239
      %v3921 = vpack.c.b16 %v3242, %v3241
      %v3922 = vpack.c.b16 %v3244, %v3243
      %v3923 = vpack.c.b16 %v3246, %v3245
      %v3924 = vpack.c.b16 %v3248, %v3247
      %v3925 = vpack.c.b16 %v3250, %v3249
      %v3926 = vpack.c.b16 %v3252, %v3251
      %v3927 = vpack.c.b16 %v3254, %v3253
      %v3928 = vpack.c.b16 %v3256, %v3255
      %v3929 = vpack.c.b16 %v3258, %v3257
      %v3930 = vpack.c.b16 %v3260, %v3259
      %v3931 = vpack.c.b16 %v3262, %v3261
      %v3932 = vpack.c.b16 %v3264, %v3263
      %v3933 = vpack.c.b16 %v3266, %v3265
      %v3934 = vpack.c.b16 %v3268, %v3267
      %v3935 = vpack.c.b16 %v3270, %v3269
      %v3936 = vpack.c.b16 %v3272, %v3271
      %v3937 = vpack.c.b16 %v3274, %v3273
      %v3938 = vpack.c.b16 %v3276, %v3275
      %v3939 = vpack.c.b16 %v3278, %v3277
      %v3940 = vpack.c.b16 %v3280, %v3279
      %v3941 = vpack.c.b16 %v3282, %v3281
      %v3942 = vpack.c.b16 %v3284, %v3283
      %v3943 = vpack.c.b16 %v3286, %v3285
      %v3944 = vpack.c.b16 %v3288, %v3287
      %v3945 = vpack.c.b16 %v3290, %v3289
      %v3946 = vpack.c.b16 %v3292, %v3291
      %v3947 = vpack.c.b16 %v3294, %v3293
      %v3948 = vpack.c.b16 %v3296, %v3295
      %v3949 = vpack.c.b16 %v3298, %v3297
      %v3950 = vpack.c.b16 %v3300, %v3299
      %v3951 = vpack.c.b16 %v3302, %v3301
      %v3952 = vpack.c.b16 %v3304, %v3303
      %v3953 = vpack.c.b16 %v3306, %v3305
      %v3954 = vpack.c.b16 %v3308, %v3307
      %v3955 = vpack.c.b16 %v3310, %v3309
      %v3956 = vpack.c.b16 %v3312, %v3311
      %v3957 = vpack.c.b16 %v3314, %v3313
      %v3958 = vpack.c.b16 %v3316, %v3315
      %v3959 = vpack.c.b16 %v3318, %v3317
      %v3960 = vpack.c.b16 %v3320, %v3319
      %v3961 = vpack.c.b16 %v3322, %v3321
      %v3962 = vpack.c.b16 %v3324, %v3323
      %v3963 = vpack.c.b16 %v3326, %v3325
      %v3964 = vpack.c.b16 %v3328, %v3327
      %v3965 = vpack.c.b16 %v3330, %v3329
      %v3966 = vpack.c.b16 %v3332, %v3331
      %v3967 = vpack.c.b16 %v3334, %v3333
      %v3968 = vpack.c.b16 %v3336, %v3335
      %v3969 = vpack.c.b16 %v3338, %v3337
      %v3970 = vpack.c.b16 %v3340, %v3339
      %v3971 = vpack.c.b16 %v3342, %v3341
      %v3972 = vpack.c.b16 %v3344, %v3343
      %v3973 = vpack.c.b16 %v3346, %v3345
      %v3974 = vpack.c.b16 %v3348, %v3347
      %v3975 = vpack.c.b16 %v3350, %v3349
      %v3976 = vpack.c.b16 %v3352, %v3351
      %v3977 = vpack.c.b16 %v3354, %v3353
      %v3978 = vpack.c.b16 %v3356, %v3355
      %v3979 = vpack.c.b16 %v3358, %v3357
      %v3980 = vpack.c.b16 %v3360, %v3359
      %v3981 = vpack.c.b16 %v3362, %v3361
      %v3982 = vpack.c.b16 %v3364, %v3363
      %v3983 = vpack.c.b16 %v3366, %v3365
      %v3984 = vpack.c.b16 %v3368, %v3367
      %v3985 = vpack.c.b16 %v3370, %v3369
      %v3986 = vpack.c.b16 %v3372, %v3371
      %v3987 = vpack.c.b16 %v3374, %v3373
      %v3988 = vpack.c.b16 %v3376, %v3375
      %v3989 = vpack.c.b16 %v3378, %v3377
      %v3990 = vpack.c.b16 %v3380, %v3379
      %v3991 = vpack.c.b16 %v3382, %v3381
      %v3992 = vpack.c.b16 %v3384, %v3383
      %v3993 = vpack.c.b16 %v3386, %v3385
      %v3994 = vpack.c.b16 %v3388, %v3387
      %v3995 = vpack.c.b16 %v3390, %v3389
      %v3996 = vpack.c.b16 %v3392, %v3391
      %v3997 = vpack.c.b16 %v3394, %v3393
      %v3998 = vpack.c.b16 %v3396, %v3395
      %v3999 = vpack.c.b16 %v3398, %v3397
      %v4000 = vpack.c.b16 %v3400, %v3399
      %v4001 = vpack.c.b16 %v3402, %v3401
      %v4002 = vpack.c.b16 %v3404, %v3403
      %v4003 = vpack.c.b16 %v3406, %v3405
      %v4004 = vpack.c.b16 %v3408, %v3407
      %v4005 = vpack.c.b16 %v3410, %v3409
      %v4006 = vpack.c.b16 %v3412, %v3411
      %v4007 = vpack.c.b16 %v3414, %v3413
      %v4008 = vpack.c.b16 %v3416, %v3415
      %v4009 = vpack.c.b16 %v3418, %v3417
      %v4010 = vpack.c.b16 %v3420, %v3419
      %v4011 = vpack.c.b16 %v3422, %v3421
      %v4012 = vpack.c.b16 %v3424, %v3423
      %v4013 = vpack.c.b16 %v3426, %v3425
      %v4014 = vpack.c.b16 %v3428, %v3427
      %v4015 = vpack.c.b16 %v3430, %v3429
      %v4016 = vpack.c.b16 %v3432, %v3431
      %v4017 = vpack.c.b16 %v3434, %v3433
      %v4018 = vpack.c.b16 %v3436, %v3435
      %v4019 = vpack.c.b16 %v3438, %v3437
      %v4020 = vpack.c.b16 %v3440, %v3439
      %v4021 = vpack.c.b16 %v3442, %v3441
      %v4022 = vpack.c.b16 %v3444, %v3443
      %v4023 = vpack.c.b16 %v3446, %v3445
      %v4024 = vpack.c.b16 %v3448, %v3447
      %v4025 = vpack.c.b16 %v3450, %v3449
      %v4026 = vpack.c.b16 %v3452, %v3451
      %v4027 = vpack.c.b16 %v3454, %v3453
      %v4028 = vpack.c.b16 %v3456, %v3455
      %v4029 = vpack.c.b16 %v3458, %v3457
      %v4030 = vpack.c.b16 %v3460, %v3459
      %v4031 = vpack.c.b16 %v3462, %v3461
      %v4032 = vpack.c.b16 %v3464, %v3463
      %v4033 = vpack.c.b16 %v3466, %v3465
      %v4034 = vpack.c.b16 %v3468, %v3467
      %v4035 = vpack.c.b16 %v3470, %v3469
      %v4036 = vpack.c.b16 %v3472, %v3471
      %v4037 = vpack.c.b16 %v3474, %v3473
      %v4038 = vpack.c.b16 %v3476, %v3475
      %v4039 = vpack.c.b16 %v3478, %v3477
      %v4040 = vpack.c.b16 %v3480, %v3479
      %v4041 = vpack.c.b16 %v3482, %v3481
      %v4042 = vpack.c.b16 %v3484, %v3483
      %v4043 = vpack.c.b16 %v3486, %v3485
      %v4044 = vpack.c.b16 %v3488, %v3487
      %v4045 = vpack.c.b16 %v3490, %v3489
      %v4046 = vpack.c.b16 %v3492, %v3491
      %v4047 = vpack.c.b16 %v3494, %v3493
      %v4048 = vpack.c.b16 %v3496, %v3495
      %v4049 = vpack.c.b16 %v3498, %v3497
      %v4050 = vpack.c.b16 %v3500, %v3499
      %v4051 = vpack.c.b16 %v3502, %v3501
      %v4052 = vpack.c.b16 %v3504, %v3503
      %v4053 = vpack.c.b16 %v3506, %v3505
      %v4054 = vpack.c.b16 %v3508, %v3507
      %v4055 = vpack.c.b16 %v3510, %v3509
      %v4056 = vpack.c.b16 %v3512, %v3511
      %v4057 = vpack.c.b16 %v3514, %v3513
      %v4058 = vpack.c.b16 %v3516, %v3515
      %v4059 = vpack.c.b16 %v3518, %v3517
      %v4060 = vpack.c.b16 %v3520, %v3519
      %v4061 = vpack.c.b16 %v3522, %v3521
      %v4062 = vpack.c.b16 %v3524, %v3523
      %v4063 = vpack.c.b16 %v3526, %v3525
      %v4064 = vpack.c.b16 %v3528, %v3527
      %v4065 = vpack.c.b16 %v3530, %v3529
      %v4066 = vpack.c.b16 %v3532, %v3531
      %v4067 = vpack.c.b16 %v3534, %v3533
      %v4068 = vpack.c.b16 %v3536, %v3535
      %v4069 = vpack.c.b16 %v3538, %v3537
      %v4070 = vpack.c.b16 %v3540, %v3539
      %v4071 = vpack.c.b16 %v3542, %v3541
      %v4072 = vpack.c.b16 %v3544, %v3543
      %v4073 = vpack.c.b16 %v3546, %v3545
      %v4074 = vpack.c.b16 %v3548, %v3547
      %v4075 = vpack.c.b16 %v3550, %v3549
      %v4076 = vpack.c.b16 %v3552, %v3551
      %v4077 = vpack.c.b16 %v3554, %v3553
      %v4078 = vpack.c.b16 %v3556, %v3555
      %v4079 = vpack.c.b16 %v3558, %v3557
      %v4080 = vpack.c.b16 %v3560, %v3559
      %4601 = vmatpush.bf16.msra.mxu0 %v3568
      %4602 = vmatpush.bf16.msra.mxu0 %v3567
      %4603 = vmatpush.bf16.msra.mxu0 %v3566
      %4604 = vmatpush.bf16.msra.mxu0 %v3565
      %4605 = vmatpush.bf16.msra.mxu0 %v3564
      %4606 = vmatpush.bf16.msra.mxu0 %v3563
      %4607 = vmatpush.bf16.msra.mxu0 %v3562
      %4608 = vmatpush.bf16.msra.mxu0 %v3561
      %4609 = vmatmul.bf16.gmra.mxu0 %v1335
      %v4610 = vpop.f32.mrf.mxu0
      %v4611 = vadd.f32 0.0, %v4610
      %v4612 = vpop.f32.mrf.mxu0
      %4613 = vdwg.mxu0
      %4614 = vmatpush.bf16.msra.mxu0 %v3576
      %4615 = vmatpush.bf16.msra.mxu0 %v3575
      %4616 = vmatpush.bf16.msra.mxu0 %v3574
      %4617 = vmatpush.bf16.msra.mxu0 %v3573
      %4618 = vmatpush.bf16.msra.mxu0 %v3572
      %4619 = vmatpush.bf16.msra.mxu0 %v3571
      %4620 = vmatpush.bf16.msra.mxu0 %v3570
      %4621 = vmatpush.bf16.msra.mxu0 %v3569
      %4622 = vmatmul.bf16.gmra.mxu0 %v1336
      %v4623 = vpop.f32.mrf.mxu0
      %v4624 = vadd.f32 %v4611, %v4623
      %v4625 = vpop.f32.mrf.mxu0
      %4626 = vdwg.mxu0
      %4627 = vmatpush.bf16.msra.mxu0 %v3584
      %4628 = vmatpush.bf16.msra.mxu0 %v3583
      %4629 = vmatpush.bf16.msra.mxu0 %v3582
      %4630 = vmatpush.bf16.msra.mxu0 %v3581
      %4631 = vmatpush.bf16.msra.mxu0 %v3580
      %4632 = vmatpush.bf16.msra.mxu0 %v3579
      %4633 = vmatpush.bf16.msra.mxu0 %v3578
      %4634 = vmatpush.bf16.msra.mxu0 %v3577
      %4635 = vmatmul.bf16.gmra.mxu0 %v1337
      %v4636 = vpop.f32.mrf.mxu0
      %v4637 = vadd.f32 %v4624, %v4636
      %v4638 = vpop.f32.mrf.mxu0
      %4639 = vdwg.mxu0
      %4640 = vmatpush.bf16.msra.mxu0 %v3592
      %4641 = vmatpush.bf16.msra.mxu0 %v3591
      %4642 = vmatpush.bf16.msra.mxu0 %v3590
      %4643 = vmatpush.bf16.msra.mxu0 %v3589
      %4644 = vmatpush.bf16.msra.mxu0 %v3588
      %4645 = vmatpush.bf16.msra.mxu0 %v3587
      %4646 = vmatpush.bf16.msra.mxu0 %v3586
      %4647 = vmatpush.bf16.msra.mxu0 %v3585
      %4648 = vmatmul.bf16.gmra.mxu0 %v1338
      %v4649 = vpop.f32.mrf.mxu0
      %v4650 = vadd.f32 %v4637, %v4649
      %v4651 = vpop.f32.mrf.mxu0
      %4652 = vdwg.mxu0
      %4653 = vmatpush.bf16.msra.mxu0 %v3600
      %4654 = vmatpush.bf16.msra.mxu0 %v3599
      %4655 = vmatpush.bf16.msra.mxu0 %v3598
      %4656 = vmatpush.bf16.msra.mxu0 %v3597
      %4657 = vmatpush.bf16.msra.mxu0 %v3596
      %4658 = vmatpush.bf16.msra.mxu0 %v3595
      %4659 = vmatpush.bf16.msra.mxu0 %v3594
      %4660 = vmatpush.bf16.msra.mxu0 %v3593
      %4661 = vmatmul.bf16.gmra.mxu0 %v1339
      %v4662 = vpop.f32.mrf.mxu0
      %v4663 = vadd.f32 %v4650, %v4662
      %v4664 = vpop.f32.mrf.mxu0
      %4665 = vdwg.mxu0
      %4666 = vmatpush.bf16.msra.mxu0 %v3608
      %4667 = vmatpush.bf16.msra.mxu0 %v3607
      %4668 = vmatpush.bf16.msra.mxu0 %v3606
      %4669 = vmatpush.bf16.msra.mxu0 %v3605
      %4670 = vmatpush.bf16.msra.mxu0 %v3604
      %4671 = vmatpush.bf16.msra.mxu0 %v3603
      %4672 = vmatpush.bf16.msra.mxu0 %v3602
      %4673 = vmatpush.bf16.msra.mxu0 %v3601
      %4674 = vmatmul.bf16.gmra.mxu0 %v1340
      %v4675 = vpop.f32.mrf.mxu0
      %v4676 = vadd.f32 %v4663, %v4675
      %v4677 = vpop.f32.mrf.mxu0
      %4678 = vdwg.mxu0
      %4679 = vmatpush.bf16.msra.mxu0 %v3616
      %4680 = vmatpush.bf16.msra.mxu0 %v3615
      %4681 = vmatpush.bf16.msra.mxu0 %v3614
      %4682 = vmatpush.bf16.msra.mxu0 %v3613
      %4683 = vmatpush.bf16.msra.mxu0 %v3612
      %4684 = vmatpush.bf16.msra.mxu0 %v3611
      %4685 = vmatpush.bf16.msra.mxu0 %v3610
      %4686 = vmatpush.bf16.msra.mxu0 %v3609
      %4687 = vmatmul.bf16.gmra.mxu0 %v1341
      %v4688 = vpop.f32.mrf.mxu0
      %v4689 = vadd.f32 %v4676, %v4688
      %v4690 = vpop.f32.mrf.mxu0
      %4691 = vdwg.mxu0
      %4692 = vmatpush.bf16.msra.mxu0 %v3624
      %4693 = vmatpush.bf16.msra.mxu0 %v3623
      %4694 = vmatpush.bf16.msra.mxu0 %v3622
      %4695 = vmatpush.bf16.msra.mxu0 %v3621
      %4696 = vmatpush.bf16.msra.mxu0 %v3620
      %4697 = vmatpush.bf16.msra.mxu0 %v3619
      %4698 = vmatpush.bf16.msra.mxu0 %v3618
      %4699 = vmatpush.bf16.msra.mxu0 %v3617
      %4700 = vmatmul.bf16.gmra.mxu0 %v1342
      %v4701 = vpop.f32.mrf.mxu0
      %v4702 = vadd.f32 %v4689, %v4701
      %v4703 = vpop.f32.mrf.mxu0
      %4704 = vdwg.mxu0
      %4705 = vmatpush.bf16.msra.mxu0 %v3632
      %4706 = vmatpush.bf16.msra.mxu0 %v3631
      %4707 = vmatpush.bf16.msra.mxu0 %v3630
      %4708 = vmatpush.bf16.msra.mxu0 %v3629
      %4709 = vmatpush.bf16.msra.mxu0 %v3628
      %4710 = vmatpush.bf16.msra.mxu0 %v3627
      %4711 = vmatpush.bf16.msra.mxu0 %v3626
      %4712 = vmatpush.bf16.msra.mxu0 %v3625
      %4713 = vmatmul.bf16.gmra.mxu0 %v1345
      %v4714 = vpop.f32.mrf.mxu0
      %v4715 = vadd.f32 %v4702, %v4714
      %v4716 = vpop.f32.mrf.mxu0
      %4717 = vdwg.mxu0
      %4718 = vmatpush.bf16.msra.mxu0 %v3640
      %4719 = vmatpush.bf16.msra.mxu0 %v3639
      %4720 = vmatpush.bf16.msra.mxu0 %v3638
      %4721 = vmatpush.bf16.msra.mxu0 %v3637
      %4722 = vmatpush.bf16.msra.mxu0 %v3636
      %4723 = vmatpush.bf16.msra.mxu0 %v3635
      %4724 = vmatpush.bf16.msra.mxu0 %v3634
      %4725 = vmatpush.bf16.msra.mxu0 %v3633
      %4726 = vmatmul.bf16.gmra.mxu0 %v1346
      %v4727 = vpop.f32.mrf.mxu0
      %v4728 = vadd.f32 %v4715, %v4727
      %v4729 = vpop.f32.mrf.mxu0
      %4730 = vdwg.mxu0
      %4731 = vmatpush.bf16.msra.mxu0 %v3648
      %4732 = vmatpush.bf16.msra.mxu0 %v3647
      %4733 = vmatpush.bf16.msra.mxu0 %v3646
      %4734 = vmatpush.bf16.msra.mxu0 %v3645
      %4735 = vmatpush.bf16.msra.mxu0 %v3644
      %4736 = vmatpush.bf16.msra.mxu0 %v3643
      %4737 = vmatpush.bf16.msra.mxu0 %v3642
      %4738 = vmatpush.bf16.msra.mxu0 %v3641
      %4739 = vmatmul.bf16.gmra.mxu0 %v1347
      %v4740 = vpop.f32.mrf.mxu0
      %v4741 = vadd.f32 %v4728, %v4740
      %v4742 = vpop.f32.mrf.mxu0
      %4743 = vdwg.mxu0
      %4744 = vmatpush.bf16.msra.mxu0 %v3656
      %4745 = vmatpush.bf16.msra.mxu0 %v3655
      %4746 = vmatpush.bf16.msra.mxu0 %v3654
      %4747 = vmatpush.bf16.msra.mxu0 %v3653
      %4748 = vmatpush.bf16.msra.mxu0 %v3652
      %4749 = vmatpush.bf16.msra.mxu0 %v3651
      %4750 = vmatpush.bf16.msra.mxu0 %v3650
      %4751 = vmatpush.bf16.msra.mxu0 %v3649
      %4752 = vmatmul.bf16.gmra.mxu0 %v1348
      %v4753 = vpop.f32.mrf.mxu0
      %v4754 = vadd.f32 %v4741, %v4753
      %v4755 = vpop.f32.mrf.mxu0
      %4756 = vdwg.mxu0
      %4757 = vmatpush.bf16.msra.mxu0 %v3664
      %4758 = vmatpush.bf16.msra.mxu0 %v3663
      %4759 = vmatpush.bf16.msra.mxu0 %v3662
      %4760 = vmatpush.bf16.msra.mxu0 %v3661
      %4761 = vmatpush.bf16.msra.mxu0 %v3660
      %4762 = vmatpush.bf16.msra.mxu0 %v3659
      %4763 = vmatpush.bf16.msra.mxu0 %v3658
      %4764 = vmatpush.bf16.msra.mxu0 %v3657
      %4765 = vmatmul.bf16.gmra.mxu0 %v1349
      %v4766 = vpop.f32.mrf.mxu0
      %v4767 = vadd.f32 %v4754, %v4766
      %v4768 = vpop.f32.mrf.mxu0
      %4769 = vdwg.mxu0
      %4770 = vmatpush.bf16.msra.mxu0 %v3672
      %4771 = vmatpush.bf16.msra.mxu0 %v3671
      %4772 = vmatpush.bf16.msra.mxu0 %v3670
      %4773 = vmatpush.bf16.msra.mxu0 %v3669
      %4774 = vmatpush.bf16.msra.mxu0 %v3668
      %4775 = vmatpush.bf16.msra.mxu0 %v3667
      %4776 = vmatpush.bf16.msra.mxu0 %v3666
      %4777 = vmatpush.bf16.msra.mxu0 %v3665
      %4778 = vmatmul.bf16.gmra.mxu0 %v1350
      %v4779 = vpop.f32.mrf.mxu0
      %v4780 = vadd.f32 %v4767, %v4779
      %v4781 = vpop.f32.mrf.mxu0
      %4782 = vdwg.mxu0
      %4783 = vmatpush.bf16.msra.mxu0 %v3680
      %4784 = vmatpush.bf16.msra.mxu0 %v3679
      %4785 = vmatpush.bf16.msra.mxu0 %v3678
      %4786 = vmatpush.bf16.msra.mxu0 %v3677
      %4787 = vmatpush.bf16.msra.mxu0 %v3676
      %4788 = vmatpush.bf16.msra.mxu0 %v3675
      %4789 = vmatpush.bf16.msra.mxu0 %v3674
      %4790 = vmatpush.bf16.msra.mxu0 %v3673
      %4791 = vmatmul.bf16.gmra.mxu0 %v1351
      %v4792 = vpop.f32.mrf.mxu0
      %v4793 = vadd.f32 %v4780, %v4792
      %v4794 = vpop.f32.mrf.mxu0
      %4795 = vdwg.mxu0
      %4796 = vmatpush.bf16.msra.mxu0 %v3688
      %4797 = vmatpush.bf16.msra.mxu0 %v3687
      %4798 = vmatpush.bf16.msra.mxu0 %v3686
      %4799 = vmatpush.bf16.msra.mxu0 %v3685
      %4800 = vmatpush.bf16.msra.mxu0 %v3684
      %4801 = vmatpush.bf16.msra.mxu0 %v3683
      %4802 = vmatpush.bf16.msra.mxu0 %v3682
      %4803 = vmatpush.bf16.msra.mxu0 %v3681
      %4804 = vmatmul.bf16.gmra.mxu0 %v1352
      %v4805 = vpop.f32.mrf.mxu0
      %v4806 = vadd.f32 %v4793, %v4805
      %v4807 = vpop.f32.mrf.mxu0
      %4808 = vdwg.mxu0
      %4809 = vmatpush.bf16.msra.mxu0 %v3696
      %4810 = vmatpush.bf16.msra.mxu0 %v3695
      %4811 = vmatpush.bf16.msra.mxu0 %v3694
      %4812 = vmatpush.bf16.msra.mxu0 %v3693
      %4813 = vmatpush.bf16.msra.mxu0 %v3692
      %4814 = vmatpush.bf16.msra.mxu0 %v3691
      %4815 = vmatpush.bf16.msra.mxu0 %v3690
      %4816 = vmatpush.bf16.msra.mxu0 %v3689
      %4817 = vmatmul.bf16.gmra.mxu0 %v1355
      %v4818 = vpop.f32.mrf.mxu0
      %v4819 = vadd.f32 %v4806, %v4818
      %v4820 = vpop.f32.mrf.mxu0
      %4821 = vdwg.mxu0
      %4822 = vmatpush.bf16.msra.mxu0 %v3704
      %4823 = vmatpush.bf16.msra.mxu0 %v3703
      %4824 = vmatpush.bf16.msra.mxu0 %v3702
      %4825 = vmatpush.bf16.msra.mxu0 %v3701
      %4826 = vmatpush.bf16.msra.mxu0 %v3700
      %4827 = vmatpush.bf16.msra.mxu0 %v3699
      %4828 = vmatpush.bf16.msra.mxu0 %v3698
      %4829 = vmatpush.bf16.msra.mxu0 %v3697
      %4830 = vmatmul.bf16.gmra.mxu0 %v1356
      %v4831 = vpop.f32.mrf.mxu0
      %v4832 = vadd.f32 %v4819, %v4831
      %v4833 = vpop.f32.mrf.mxu0
      %4834 = vdwg.mxu0
      %4835 = vmatpush.bf16.msra.mxu0 %v3712
      %4836 = vmatpush.bf16.msra.mxu0 %v3711
      %4837 = vmatpush.bf16.msra.mxu0 %v3710
      %4838 = vmatpush.bf16.msra.mxu0 %v3709
      %4839 = vmatpush.bf16.msra.mxu0 %v3708
      %4840 = vmatpush.bf16.msra.mxu0 %v3707
      %4841 = vmatpush.bf16.msra.mxu0 %v3706
      %4842 = vmatpush.bf16.msra.mxu0 %v3705
      %4843 = vmatmul.bf16.gmra.mxu0 %v1357
      %v4844 = vpop.f32.mrf.mxu0
      %v4845 = vadd.f32 %v4832, %v4844
      %v4846 = vpop.f32.mrf.mxu0
      %4847 = vdwg.mxu0
      %4848 = vmatpush.bf16.msra.mxu0 %v3720
      %4849 = vmatpush.bf16.msra.mxu0 %v3719
      %4850 = vmatpush.bf16.msra.mxu0 %v3718
      %4851 = vmatpush.bf16.msra.mxu0 %v3717
      %4852 = vmatpush.bf16.msra.mxu0 %v3716
      %4853 = vmatpush.bf16.msra.mxu0 %v3715
      %4854 = vmatpush.bf16.msra.mxu0 %v3714
      %4855 = vmatpush.bf16.msra.mxu0 %v3713
      %4856 = vmatmul.bf16.gmra.mxu0 %v1358
      %v4857 = vpop.f32.mrf.mxu0
      %v4858 = vadd.f32 %v4845, %v4857
      %v4859 = vpop.f32.mrf.mxu0
      %4860 = vdwg.mxu0
      %4861 = vmatpush.bf16.msra.mxu0 %v3728
      %4862 = vmatpush.bf16.msra.mxu0 %v3727
      %4863 = vmatpush.bf16.msra.mxu0 %v3726
      %4864 = vmatpush.bf16.msra.mxu0 %v3725
      %4865 = vmatpush.bf16.msra.mxu0 %v3724
      %4866 = vmatpush.bf16.msra.mxu0 %v3723
      %4867 = vmatpush.bf16.msra.mxu0 %v3722
      %4868 = vmatpush.bf16.msra.mxu0 %v3721
      %4869 = vmatmul.bf16.gmra.mxu0 %v1359
      %v4870 = vpop.f32.mrf.mxu0
      %v4871 = vadd.f32 %v4858, %v4870
      %v4872 = vpop.f32.mrf.mxu0
      %4873 = vdwg.mxu0
      %4874 = vmatpush.bf16.msra.mxu0 %v3736
      %4875 = vmatpush.bf16.msra.mxu0 %v3735
      %4876 = vmatpush.bf16.msra.mxu0 %v3734
      %4877 = vmatpush.bf16.msra.mxu0 %v3733
      %4878 = vmatpush.bf16.msra.mxu0 %v3732
      %4879 = vmatpush.bf16.msra.mxu0 %v3731
      %4880 = vmatpush.bf16.msra.mxu0 %v3730
      %4881 = vmatpush.bf16.msra.mxu0 %v3729
      %4882 = vmatmul.bf16.gmra.mxu0 %v1360
      %v4883 = vpop.f32.mrf.mxu0
      %v4884 = vadd.f32 %v4871, %v4883
      %v4885 = vpop.f32.mrf.mxu0
      %4886 = vdwg.mxu0
      %4887 = vmatpush.bf16.msra.mxu0 %v3744
      %4888 = vmatpush.bf16.msra.mxu0 %v3743
      %4889 = vmatpush.bf16.msra.mxu0 %v3742
      %4890 = vmatpush.bf16.msra.mxu0 %v3741
      %4891 = vmatpush.bf16.msra.mxu0 %v3740
      %4892 = vmatpush.bf16.msra.mxu0 %v3739
      %4893 = vmatpush.bf16.msra.mxu0 %v3738
      %4894 = vmatpush.bf16.msra.mxu0 %v3737
      %4895 = vmatmul.bf16.gmra.mxu0 %v1361
      %v4896 = vpop.f32.mrf.mxu0
      %v4897 = vadd.f32 %v4884, %v4896
      %v4898 = vpop.f32.mrf.mxu0
      %4899 = vdwg.mxu0
      %4900 = vmatpush.bf16.msra.mxu0 %v3752
      %4901 = vmatpush.bf16.msra.mxu0 %v3751
      %4902 = vmatpush.bf16.msra.mxu0 %v3750
      %4903 = vmatpush.bf16.msra.mxu0 %v3749
      %4904 = vmatpush.bf16.msra.mxu0 %v3748
      %4905 = vmatpush.bf16.msra.mxu0 %v3747
      %4906 = vmatpush.bf16.msra.mxu0 %v3746
      %4907 = vmatpush.bf16.msra.mxu0 %v3745
      %4908 = vmatmul.bf16.gmra.mxu0 %v1362
      %v4909 = vpop.f32.mrf.mxu0
      %v4910 = vadd.f32 %v4897, %v4909
      %v4911 = vpop.f32.mrf.mxu0
      %4912 = vdwg.mxu0
      %4913 = vmatpush.bf16.msra.mxu0 %v3760
      %4914 = vmatpush.bf16.msra.mxu0 %v3759
      %4915 = vmatpush.bf16.msra.mxu0 %v3758
      %4916 = vmatpush.bf16.msra.mxu0 %v3757
      %4917 = vmatpush.bf16.msra.mxu0 %v3756
      %4918 = vmatpush.bf16.msra.mxu0 %v3755
      %4919 = vmatpush.bf16.msra.mxu0 %v3754
      %4920 = vmatpush.bf16.msra.mxu0 %v3753
      %4921 = vmatmul.bf16.gmra.mxu0 %v1365
      %v4922 = vpop.f32.mrf.mxu0
      %v4923 = vadd.f32 %v4910, %v4922
      %v4924 = vpop.f32.mrf.mxu0
      %4925 = vdwg.mxu0
      %4926 = vmatpush.bf16.msra.mxu0 %v3768
      %4927 = vmatpush.bf16.msra.mxu0 %v3767
      %4928 = vmatpush.bf16.msra.mxu0 %v3766
      %4929 = vmatpush.bf16.msra.mxu0 %v3765
      %4930 = vmatpush.bf16.msra.mxu0 %v3764
      %4931 = vmatpush.bf16.msra.mxu0 %v3763
      %4932 = vmatpush.bf16.msra.mxu0 %v3762
      %4933 = vmatpush.bf16.msra.mxu0 %v3761
      %4934 = vmatmul.bf16.gmra.mxu0 %v1366
      %v4935 = vpop.f32.mrf.mxu0
      %v4936 = vadd.f32 %v4923, %v4935
      %v4937 = vpop.f32.mrf.mxu0
      %4938 = vdwg.mxu0
      %4939 = vmatpush.bf16.msra.mxu0 %v3776
      %4940 = vmatpush.bf16.msra.mxu0 %v3775
      %4941 = vmatpush.bf16.msra.mxu0 %v3774
      %4942 = vmatpush.bf16.msra.mxu0 %v3773
      %4943 = vmatpush.bf16.msra.mxu0 %v3772
      %4944 = vmatpush.bf16.msra.mxu0 %v3771
      %4945 = vmatpush.bf16.msra.mxu0 %v3770
      %4946 = vmatpush.bf16.msra.mxu0 %v3769
      %4947 = vmatmul.bf16.gmra.mxu0 %v1367
      %v4948 = vpop.f32.mrf.mxu0
      %v4949 = vadd.f32 %v4936, %v4948
      %v4950 = vpop.f32.mrf.mxu0
      %4951 = vdwg.mxu0
      %4952 = vmatpush.bf16.msra.mxu0 %v3784
      %4953 = vmatpush.bf16.msra.mxu0 %v3783
      %4954 = vmatpush.bf16.msra.mxu0 %v3782
      %4955 = vmatpush.bf16.msra.mxu0 %v3781
      %4956 = vmatpush.bf16.msra.mxu0 %v3780
      %4957 = vmatpush.bf16.msra.mxu0 %v3779
      %4958 = vmatpush.bf16.msra.mxu0 %v3778
      %4959 = vmatpush.bf16.msra.mxu0 %v3777
      %4960 = vmatmul.bf16.gmra.mxu0 %v1368
      %v4961 = vpop.f32.mrf.mxu0
      %v4962 = vadd.f32 %v4949, %v4961
      %v4963 = vpop.f32.mrf.mxu0
      %4964 = vdwg.mxu0
      %4965 = vmatpush.bf16.msra.mxu0 %v3792
      %4966 = vmatpush.bf16.msra.mxu0 %v3791
      %4967 = vmatpush.bf16.msra.mxu0 %v3790
      %4968 = vmatpush.bf16.msra.mxu0 %v3789
      %4969 = vmatpush.bf16.msra.mxu0 %v3788
      %4970 = vmatpush.bf16.msra.mxu0 %v3787
      %4971 = vmatpush.bf16.msra.mxu0 %v3786
      %4972 = vmatpush.bf16.msra.mxu0 %v3785
      %4973 = vmatmul.bf16.gmra.mxu0 %v1369
      %v4974 = vpop.f32.mrf.mxu0
      %v4975 = vadd.f32 %v4962, %v4974
      %v4976 = vpop.f32.mrf.mxu0
      %4977 = vdwg.mxu0
      %4978 = vmatpush.bf16.msra.mxu0 %v3800
      %4979 = vmatpush.bf16.msra.mxu0 %v3799
      %4980 = vmatpush.bf16.msra.mxu0 %v3798
      %4981 = vmatpush.bf16.msra.mxu0 %v3797
      %4982 = vmatpush.bf16.msra.mxu0 %v3796
      %4983 = vmatpush.bf16.msra.mxu0 %v3795
      %4984 = vmatpush.bf16.msra.mxu0 %v3794
      %4985 = vmatpush.bf16.msra.mxu0 %v3793
      %4986 = vmatmul.bf16.gmra.mxu0 %v1370
      %v4987 = vpop.f32.mrf.mxu0
      %v4988 = vadd.f32 %v4975, %v4987
      %v4989 = vpop.f32.mrf.mxu0
      %4990 = vdwg.mxu0
      %4991 = vmatpush.bf16.msra.mxu0 %v3808
      %4992 = vmatpush.bf16.msra.mxu0 %v3807
      %4993 = vmatpush.bf16.msra.mxu0 %v3806
      %4994 = vmatpush.bf16.msra.mxu0 %v3805
      %4995 = vmatpush.bf16.msra.mxu0 %v3804
      %4996 = vmatpush.bf16.msra.mxu0 %v3803
      %4997 = vmatpush.bf16.msra.mxu0 %v3802
      %4998 = vmatpush.bf16.msra.mxu0 %v3801
      %4999 = vmatmul.bf16.gmra.mxu0 %v1371
      %v5000 = vpop.f32.mrf.mxu0
      %v5001 = vadd.f32 %v4988, %v5000
      %v5002 = vpop.f32.mrf.mxu0
      %5003 = vdwg.mxu0
      %5004 = vmatpush.bf16.msra.mxu0 %v3816
      %5005 = vmatpush.bf16.msra.mxu0 %v3815
      %5006 = vmatpush.bf16.msra.mxu0 %v3814
      %5007 = vmatpush.bf16.msra.mxu0 %v3813
      %5008 = vmatpush.bf16.msra.mxu0 %v3812
      %5009 = vmatpush.bf16.msra.mxu0 %v3811
      %5010 = vmatpush.bf16.msra.mxu0 %v3810
      %5011 = vmatpush.bf16.msra.mxu0 %v3809
      %5012 = vmatmul.bf16.gmra.mxu0 %v1372
      %v5013 = vpop.f32.mrf.mxu0
      %v5014 = vadd.f32 %v5001, %v5013
      %v5015 = vpop.f32.mrf.mxu0
      %5016 = vdwg.mxu0
      %5017 = vmatpush.bf16.msra.mxu0 %v3824
      %5018 = vmatpush.bf16.msra.mxu0 %v3823
      %5019 = vmatpush.bf16.msra.mxu0 %v3822
      %5020 = vmatpush.bf16.msra.mxu0 %v3821
      %5021 = vmatpush.bf16.msra.mxu0 %v3820
      %5022 = vmatpush.bf16.msra.mxu0 %v3819
      %5023 = vmatpush.bf16.msra.mxu0 %v3818
      %5024 = vmatpush.bf16.msra.mxu0 %v3817
      %5025 = vmatmul.bf16.gmra.mxu0 %v1375
      %v5026 = vpop.f32.mrf.mxu0
      %v5027 = vadd.f32 %v5014, %v5026
      %v5028 = vpop.f32.mrf.mxu0
      %5029 = vdwg.mxu0
      %5030 = vmatpush.bf16.msra.mxu0 %v3832
      %5031 = vmatpush.bf16.msra.mxu0 %v3831
      %5032 = vmatpush.bf16.msra.mxu0 %v3830
      %5033 = vmatpush.bf16.msra.mxu0 %v3829
      %5034 = vmatpush.bf16.msra.mxu0 %v3828
      %5035 = vmatpush.bf16.msra.mxu0 %v3827
      %5036 = vmatpush.bf16.msra.mxu0 %v3826
      %5037 = vmatpush.bf16.msra.mxu0 %v3825
      %5038 = vmatmul.bf16.gmra.mxu0 %v1376
      %v5039 = vpop.f32.mrf.mxu0
      %v5040 = vadd.f32 %v5027, %v5039
      %v5041 = vpop.f32.mrf.mxu0
      %5042 = vdwg.mxu0
      %5043 = vmatpush.bf16.msra.mxu0 %v3840
      %5044 = vmatpush.bf16.msra.mxu0 %v3839
      %5045 = vmatpush.bf16.msra.mxu0 %v3838
      %5046 = vmatpush.bf16.msra.mxu0 %v3837
      %5047 = vmatpush.bf16.msra.mxu0 %v3836
      %5048 = vmatpush.bf16.msra.mxu0 %v3835
      %5049 = vmatpush.bf16.msra.mxu0 %v3834
      %5050 = vmatpush.bf16.msra.mxu0 %v3833
      %5051 = vmatmul.bf16.gmra.mxu0 %v1377
      %v5052 = vpop.f32.mrf.mxu0
      %v5053 = vadd.f32 %v5040, %v5052
      %v5054 = vpop.f32.mrf.mxu0
      %5055 = vdwg.mxu0
      %5056 = vmatpush.bf16.msra.mxu0 %v3848
      %5057 = vmatpush.bf16.msra.mxu0 %v3847
      %5058 = vmatpush.bf16.msra.mxu0 %v3846
      %5059 = vmatpush.bf16.msra.mxu0 %v3845
      %5060 = vmatpush.bf16.msra.mxu0 %v3844
      %5061 = vmatpush.bf16.msra.mxu0 %v3843
      %5062 = vmatpush.bf16.msra.mxu0 %v3842
      %5063 = vmatpush.bf16.msra.mxu0 %v3841
      %5064 = vmatmul.bf16.gmra.mxu0 %v1378
      %v5065 = vpop.f32.mrf.mxu0
      %v5066 = vadd.f32 %v5053, %v5065
      %v5067 = vpop.f32.mrf.mxu0
      %5068 = vdwg.mxu0
      %5069 = vmatpush.bf16.msra.mxu0 %v3856
      %5070 = vmatpush.bf16.msra.mxu0 %v3855
      %5071 = vmatpush.bf16.msra.mxu0 %v3854
      %5072 = vmatpush.bf16.msra.mxu0 %v3853
      %5073 = vmatpush.bf16.msra.mxu0 %v3852
      %5074 = vmatpush.bf16.msra.mxu0 %v3851
      %5075 = vmatpush.bf16.msra.mxu0 %v3850
      %5076 = vmatpush.bf16.msra.mxu0 %v3849
      %5077 = vmatmul.bf16.gmra.mxu0 %v1379
      %v5078 = vpop.f32.mrf.mxu0
      %v5079 = vadd.f32 %v5066, %v5078
      %v5080 = vpop.f32.mrf.mxu0
      %5081 = vdwg.mxu0
      %5082 = vmatpush.bf16.msra.mxu0 %v3864
      %5083 = vmatpush.bf16.msra.mxu0 %v3863
      %5084 = vmatpush.bf16.msra.mxu0 %v3862
      %5085 = vmatpush.bf16.msra.mxu0 %v3861
      %5086 = vmatpush.bf16.msra.mxu0 %v3860
      %5087 = vmatpush.bf16.msra.mxu0 %v3859
      %5088 = vmatpush.bf16.msra.mxu0 %v3858
      %5089 = vmatpush.bf16.msra.mxu0 %v3857
      %5090 = vmatmul.bf16.gmra.mxu0 %v1380
      %v5091 = vpop.f32.mrf.mxu0
      %v5092 = vadd.f32 %v5079, %v5091
      %v5093 = vpop.f32.mrf.mxu0
      %5094 = vdwg.mxu0
      %5095 = vmatpush.bf16.msra.mxu0 %v3872
      %5096 = vmatpush.bf16.msra.mxu0 %v3871
      %5097 = vmatpush.bf16.msra.mxu0 %v3870
      %5098 = vmatpush.bf16.msra.mxu0 %v3869
      %5099 = vmatpush.bf16.msra.mxu0 %v3868
      %5100 = vmatpush.bf16.msra.mxu0 %v3867
      %5101 = vmatpush.bf16.msra.mxu0 %v3866
      %5102 = vmatpush.bf16.msra.mxu0 %v3865
      %5103 = vmatmul.bf16.gmra.mxu0 %v1381
      %v5104 = vpop.f32.mrf.mxu0
      %v5105 = vadd.f32 %v5092, %v5104
      %v5106 = vpop.f32.mrf.mxu0
      %5107 = vdwg.mxu0
      %5108 = vmatpush.bf16.msra.mxu0 %v3880
      %5109 = vmatpush.bf16.msra.mxu0 %v3879
      %5110 = vmatpush.bf16.msra.mxu0 %v3878
      %5111 = vmatpush.bf16.msra.mxu0 %v3877
      %5112 = vmatpush.bf16.msra.mxu0 %v3876
      %5113 = vmatpush.bf16.msra.mxu0 %v3875
      %5114 = vmatpush.bf16.msra.mxu0 %v3874
      %5115 = vmatpush.bf16.msra.mxu0 %v3873
      %5116 = vmatmul.bf16.gmra.mxu0 %v1382
      %v5117 = vpop.f32.mrf.mxu0
      %v5118 = vadd.f32 %v5105, %v5117
      %v5119 = vpop.f32.mrf.mxu0
      %5120 = vdwg.mxu0
      %5121 = vmatpush.bf16.msra.mxu0 %v3888
      %5122 = vmatpush.bf16.msra.mxu0 %v3887
      %5123 = vmatpush.bf16.msra.mxu0 %v3886
      %5124 = vmatpush.bf16.msra.mxu0 %v3885
      %5125 = vmatpush.bf16.msra.mxu0 %v3884
      %5126 = vmatpush.bf16.msra.mxu0 %v3883
      %5127 = vmatpush.bf16.msra.mxu0 %v3882
      %5128 = vmatpush.bf16.msra.mxu0 %v3881
      %5129 = vmatmul.bf16.gmra.mxu0 %v1385
      %v5130 = vpop.f32.mrf.mxu0
      %v5131 = vadd.f32 %v5118, %v5130
      %v5132 = vpop.f32.mrf.mxu0
      %5133 = vdwg.mxu0
      %5134 = vmatpush.bf16.msra.mxu0 %v3896
      %5135 = vmatpush.bf16.msra.mxu0 %v3895
      %5136 = vmatpush.bf16.msra.mxu0 %v3894
      %5137 = vmatpush.bf16.msra.mxu0 %v3893
      %5138 = vmatpush.bf16.msra.mxu0 %v3892
      %5139 = vmatpush.bf16.msra.mxu0 %v3891
      %5140 = vmatpush.bf16.msra.mxu0 %v3890
      %5141 = vmatpush.bf16.msra.mxu0 %v3889
      %5142 = vmatmul.bf16.gmra.mxu0 %v1386
      %v5143 = vpop.f32.mrf.mxu0
      %v5144 = vadd.f32 %v5131, %v5143
      %v5145 = vpop.f32.mrf.mxu0
      %5146 = vdwg.mxu0
      %5147 = vmatpush.bf16.msra.mxu0 %v3904
      %5148 = vmatpush.bf16.msra.mxu0 %v3903
      %5149 = vmatpush.bf16.msra.mxu0 %v3902
      %5150 = vmatpush.bf16.msra.mxu0 %v3901
      %5151 = vmatpush.bf16.msra.mxu0 %v3900
      %5152 = vmatpush.bf16.msra.mxu0 %v3899
      %5153 = vmatpush.bf16.msra.mxu0 %v3898
      %5154 = vmatpush.bf16.msra.mxu0 %v3897
      %5155 = vmatmul.bf16.gmra.mxu0 %v1387
      %v5156 = vpop.f32.mrf.mxu0
      %v5157 = vadd.f32 %v5144, %v5156
      %v5158 = vpop.f32.mrf.mxu0
      %5159 = vdwg.mxu0
      %5160 = vmatpush.bf16.msra.mxu0 %v3912
      %5161 = vmatpush.bf16.msra.mxu0 %v3911
      %5162 = vmatpush.bf16.msra.mxu0 %v3910
      %5163 = vmatpush.bf16.msra.mxu0 %v3909
      %5164 = vmatpush.bf16.msra.mxu0 %v3908
      %5165 = vmatpush.bf16.msra.mxu0 %v3907
      %5166 = vmatpush.bf16.msra.mxu0 %v3906
      %5167 = vmatpush.bf16.msra.mxu0 %v3905
      %5168 = vmatmul.bf16.gmra.mxu0 %v1388
      %v5169 = vpop.f32.mrf.mxu0
      %v5170 = vadd.f32 %v5157, %v5169
      %v5171 = vpop.f32.mrf.mxu0
      %5172 = vdwg.mxu0
      %5173 = vmatpush.bf16.msra.mxu0 %v3920
      %5174 = vmatpush.bf16.msra.mxu0 %v3919
      %5175 = vmatpush.bf16.msra.mxu0 %v3918
      %5176 = vmatpush.bf16.msra.mxu0 %v3917
      %5177 = vmatpush.bf16.msra.mxu0 %v3916
      %5178 = vmatpush.bf16.msra.mxu0 %v3915
      %5179 = vmatpush.bf16.msra.mxu0 %v3914
      %5180 = vmatpush.bf16.msra.mxu0 %v3913
      %5181 = vmatmul.bf16.gmra.mxu0 %v1389
      %v5182 = vpop.f32.mrf.mxu0
      %v5183 = vadd.f32 %v5170, %v5182
      %v5184 = vpop.f32.mrf.mxu0
      %5185 = vdwg.mxu0
      %5186 = vmatpush.bf16.msra.mxu0 %v3928
      %5187 = vmatpush.bf16.msra.mxu0 %v3927
      %5188 = vmatpush.bf16.msra.mxu0 %v3926
      %5189 = vmatpush.bf16.msra.mxu0 %v3925
      %5190 = vmatpush.bf16.msra.mxu0 %v3924
      %5191 = vmatpush.bf16.msra.mxu0 %v3923
      %5192 = vmatpush.bf16.msra.mxu0 %v3922
      %5193 = vmatpush.bf16.msra.mxu0 %v3921
      %5194 = vmatmul.bf16.gmra.mxu0 %v1390
      %v5195 = vpop.f32.mrf.mxu0
      %v5196 = vadd.f32 %v5183, %v5195
      %v5197 = vpop.f32.mrf.mxu0
      %5198 = vdwg.mxu0
      %5199 = vmatpush.bf16.msra.mxu0 %v3936
      %5200 = vmatpush.bf16.msra.mxu0 %v3935
      %5201 = vmatpush.bf16.msra.mxu0 %v3934
      %5202 = vmatpush.bf16.msra.mxu0 %v3933
      %5203 = vmatpush.bf16.msra.mxu0 %v3932
      %5204 = vmatpush.bf16.msra.mxu0 %v3931
      %5205 = vmatpush.bf16.msra.mxu0 %v3930
      %5206 = vmatpush.bf16.msra.mxu0 %v3929
      %5207 = vmatmul.bf16.gmra.mxu0 %v1391
      %v5208 = vpop.f32.mrf.mxu0
      %v5209 = vadd.f32 %v5196, %v5208
      %v5210 = vpop.f32.mrf.mxu0
      %5211 = vdwg.mxu0
      %5212 = vmatpush.bf16.msra.mxu0 %v3944
      %5213 = vmatpush.bf16.msra.mxu0 %v3943
      %5214 = vmatpush.bf16.msra.mxu0 %v3942
      %5215 = vmatpush.bf16.msra.mxu0 %v3941
      %5216 = vmatpush.bf16.msra.mxu0 %v3940
      %5217 = vmatpush.bf16.msra.mxu0 %v3939
      %5218 = vmatpush.bf16.msra.mxu0 %v3938
      %5219 = vmatpush.bf16.msra.mxu0 %v3937
      %5220 = vmatmul.bf16.gmra.mxu0 %v1392
      %v5221 = vpop.f32.mrf.mxu0
      %v5222 = vadd.f32 %v5209, %v5221
      %v5223 = vpop.f32.mrf.mxu0
      %5224 = vdwg.mxu0
      %5225 = vmatpush.bf16.msra.mxu0 %v3952
      %5226 = vmatpush.bf16.msra.mxu0 %v3951
      %5227 = vmatpush.bf16.msra.mxu0 %v3950
      %5228 = vmatpush.bf16.msra.mxu0 %v3949
      %5229 = vmatpush.bf16.msra.mxu0 %v3948
      %5230 = vmatpush.bf16.msra.mxu0 %v3947
      %5231 = vmatpush.bf16.msra.mxu0 %v3946
      %5232 = vmatpush.bf16.msra.mxu0 %v3945
      %5233 = vmatmul.bf16.gmra.mxu0 %v1395
      %v5234 = vpop.f32.mrf.mxu0
      %v5235 = vadd.f32 %v5222, %v5234
      %v5236 = vpop.f32.mrf.mxu0
      %5237 = vdwg.mxu0
      %5238 = vmatpush.bf16.msra.mxu0 %v3960
      %5239 = vmatpush.bf16.msra.mxu0 %v3959
      %5240 = vmatpush.bf16.msra.mxu0 %v3958
      %5241 = vmatpush.bf16.msra.mxu0 %v3957
      %5242 = vmatpush.bf16.msra.mxu0 %v3956
      %5243 = vmatpush.bf16.msra.mxu0 %v3955
      %5244 = vmatpush.bf16.msra.mxu0 %v3954
      %5245 = vmatpush.bf16.msra.mxu0 %v3953
      %5246 = vmatmul.bf16.gmra.mxu0 %v1396
      %v5247 = vpop.f32.mrf.mxu0
      %v5248 = vadd.f32 %v5235, %v5247
      %v5249 = vpop.f32.mrf.mxu0
      %5250 = vdwg.mxu0
      %5251 = vmatpush.bf16.msra.mxu0 %v3968
      %5252 = vmatpush.bf16.msra.mxu0 %v3967
      %5253 = vmatpush.bf16.msra.mxu0 %v3966
      %5254 = vmatpush.bf16.msra.mxu0 %v3965
      %5255 = vmatpush.bf16.msra.mxu0 %v3964
      %5256 = vmatpush.bf16.msra.mxu0 %v3963
      %5257 = vmatpush.bf16.msra.mxu0 %v3962
      %5258 = vmatpush.bf16.msra.mxu0 %v3961
      %5259 = vmatmul.bf16.gmra.mxu0 %v1397
      %v5260 = vpop.f32.mrf.mxu0
      %v5261 = vadd.f32 %v5248, %v5260
      %v5262 = vpop.f32.mrf.mxu0
      %5263 = vdwg.mxu0
      %5264 = vmatpush.bf16.msra.mxu0 %v3976
      %5265 = vmatpush.bf16.msra.mxu0 %v3975
      %5266 = vmatpush.bf16.msra.mxu0 %v3974
      %5267 = vmatpush.bf16.msra.mxu0 %v3973
      %5268 = vmatpush.bf16.msra.mxu0 %v3972
      %5269 = vmatpush.bf16.msra.mxu0 %v3971
      %5270 = vmatpush.bf16.msra.mxu0 %v3970
      %5271 = vmatpush.bf16.msra.mxu0 %v3969
      %5272 = vmatmul.bf16.gmra.mxu0 %v1398
      %v5273 = vpop.f32.mrf.mxu0
      %v5274 = vadd.f32 %v5261, %v5273
      %v5275 = vpop.f32.mrf.mxu0
      %5276 = vdwg.mxu0
      %5277 = vmatpush.bf16.msra.mxu0 %v3984
      %5278 = vmatpush.bf16.msra.mxu0 %v3983
      %5279 = vmatpush.bf16.msra.mxu0 %v3982
      %5280 = vmatpush.bf16.msra.mxu0 %v3981
      %5281 = vmatpush.bf16.msra.mxu0 %v3980
      %5282 = vmatpush.bf16.msra.mxu0 %v3979
      %5283 = vmatpush.bf16.msra.mxu0 %v3978
      %5284 = vmatpush.bf16.msra.mxu0 %v3977
      %5285 = vmatmul.bf16.gmra.mxu0 %v1399
      %v5286 = vpop.f32.mrf.mxu0
      %v5287 = vadd.f32 %v5274, %v5286
      %v5288 = vpop.f32.mrf.mxu0
      %5289 = vdwg.mxu0
      %5290 = vmatpush.bf16.msra.mxu0 %v3992
      %5291 = vmatpush.bf16.msra.mxu0 %v3991
      %5292 = vmatpush.bf16.msra.mxu0 %v3990
      %5293 = vmatpush.bf16.msra.mxu0 %v3989
      %5294 = vmatpush.bf16.msra.mxu0 %v3988
      %5295 = vmatpush.bf16.msra.mxu0 %v3987
      %5296 = vmatpush.bf16.msra.mxu0 %v3986
      %5297 = vmatpush.bf16.msra.mxu0 %v3985
      %5298 = vmatmul.bf16.gmra.mxu0 %v1400
      %v5299 = vpop.f32.mrf.mxu0
      %v5300 = vadd.f32 %v5287, %v5299
      %v5301 = vpop.f32.mrf.mxu0
      %5302 = vdwg.mxu0
      %5303 = vmatpush.bf16.msra.mxu0 %v4000
      %5304 = vmatpush.bf16.msra.mxu0 %v3999
      %5305 = vmatpush.bf16.msra.mxu0 %v3998
      %5306 = vmatpush.bf16.msra.mxu0 %v3997
      %5307 = vmatpush.bf16.msra.mxu0 %v3996
      %5308 = vmatpush.bf16.msra.mxu0 %v3995
      %5309 = vmatpush.bf16.msra.mxu0 %v3994
      %5310 = vmatpush.bf16.msra.mxu0 %v3993
      %5311 = vmatmul.bf16.gmra.mxu0 %v1401
      %v5312 = vpop.f32.mrf.mxu0
      %v5313 = vadd.f32 %v5300, %v5312
      %v5314 = vpop.f32.mrf.mxu0
      %5315 = vdwg.mxu0
      %5316 = vmatpush.bf16.msra.mxu0 %v4008
      %5317 = vmatpush.bf16.msra.mxu0 %v4007
      %5318 = vmatpush.bf16.msra.mxu0 %v4006
      %5319 = vmatpush.bf16.msra.mxu0 %v4005
      %5320 = vmatpush.bf16.msra.mxu0 %v4004
      %5321 = vmatpush.bf16.msra.mxu0 %v4003
      %5322 = vmatpush.bf16.msra.mxu0 %v4002
      %5323 = vmatpush.bf16.msra.mxu0 %v4001
      %5324 = vmatmul.bf16.gmra.mxu0 %v1402
      %v5325 = vpop.f32.mrf.mxu0
      %v5326 = vadd.f32 %v5313, %v5325
      %v5327 = vpop.f32.mrf.mxu0
      %5328 = vdwg.mxu0
      %5329 = vmatpush.bf16.msra.mxu0 %v4016
      %5330 = vmatpush.bf16.msra.mxu0 %v4015
      %5331 = vmatpush.bf16.msra.mxu0 %v4014
      %5332 = vmatpush.bf16.msra.mxu0 %v4013
      %5333 = vmatpush.bf16.msra.mxu0 %v4012
      %5334 = vmatpush.bf16.msra.mxu0 %v4011
      %5335 = vmatpush.bf16.msra.mxu0 %v4010
      %5336 = vmatpush.bf16.msra.mxu0 %v4009
      %5337 = vmatmul.bf16.gmra.mxu0 %v1405
      %v5338 = vpop.f32.mrf.mxu0
      %v5339 = vadd.f32 %v5326, %v5338
      %v5340 = vpop.f32.mrf.mxu0
      %5341 = vdwg.mxu0
      %5342 = vmatpush.bf16.msra.mxu0 %v4024
      %5343 = vmatpush.bf16.msra.mxu0 %v4023
      %5344 = vmatpush.bf16.msra.mxu0 %v4022
      %5345 = vmatpush.bf16.msra.mxu0 %v4021
      %5346 = vmatpush.bf16.msra.mxu0 %v4020
      %5347 = vmatpush.bf16.msra.mxu0 %v4019
      %5348 = vmatpush.bf16.msra.mxu0 %v4018
      %5349 = vmatpush.bf16.msra.mxu0 %v4017
      %5350 = vmatmul.bf16.gmra.mxu0 %v1406
      %v5351 = vpop.f32.mrf.mxu0
      %v5352 = vadd.f32 %v5339, %v5351
      %v5353 = vpop.f32.mrf.mxu0
      %5354 = vdwg.mxu0
      %5355 = vmatpush.bf16.msra.mxu0 %v4032
      %5356 = vmatpush.bf16.msra.mxu0 %v4031
      %5357 = vmatpush.bf16.msra.mxu0 %v4030
      %5358 = vmatpush.bf16.msra.mxu0 %v4029
      %5359 = vmatpush.bf16.msra.mxu0 %v4028
      %5360 = vmatpush.bf16.msra.mxu0 %v4027
      %5361 = vmatpush.bf16.msra.mxu0 %v4026
      %5362 = vmatpush.bf16.msra.mxu0 %v4025
      %5363 = vmatmul.bf16.gmra.mxu0 %v1407
      %v5364 = vpop.f32.mrf.mxu0
      %v5365 = vadd.f32 %v5352, %v5364
      %v5366 = vpop.f32.mrf.mxu0
      %5367 = vdwg.mxu0
      %5368 = vmatpush.bf16.msra.mxu0 %v4040
      %5369 = vmatpush.bf16.msra.mxu0 %v4039
      %5370 = vmatpush.bf16.msra.mxu0 %v4038
      %5371 = vmatpush.bf16.msra.mxu0 %v4037
      %5372 = vmatpush.bf16.msra.mxu0 %v4036
      %5373 = vmatpush.bf16.msra.mxu0 %v4035
      %5374 = vmatpush.bf16.msra.mxu0 %v4034
      %5375 = vmatpush.bf16.msra.mxu0 %v4033
      %5376 = vmatmul.bf16.gmra.mxu0 %v1408
      %v5377 = vpop.f32.mrf.mxu0
      %v5378 = vadd.f32 %v5365, %v5377
      %v5379 = vpop.f32.mrf.mxu0
      %5380 = vdwg.mxu0
      %5381 = vmatpush.bf16.msra.mxu0 %v4048
      %5382 = vmatpush.bf16.msra.mxu0 %v4047
      %5383 = vmatpush.bf16.msra.mxu0 %v4046
      %5384 = vmatpush.bf16.msra.mxu0 %v4045
      %5385 = vmatpush.bf16.msra.mxu0 %v4044
      %5386 = vmatpush.bf16.msra.mxu0 %v4043
      %5387 = vmatpush.bf16.msra.mxu0 %v4042
      %5388 = vmatpush.bf16.msra.mxu0 %v4041
      %5389 = vmatmul.bf16.gmra.mxu0 %v1409
      %v5390 = vpop.f32.mrf.mxu0
      %v5391 = vadd.f32 %v5378, %v5390
      %v5392 = vpop.f32.mrf.mxu0
      %5393 = vdwg.mxu0
      %5394 = vmatpush.bf16.msra.mxu0 %v4056
      %5395 = vmatpush.bf16.msra.mxu0 %v4055
      %5396 = vmatpush.bf16.msra.mxu0 %v4054
      %5397 = vmatpush.bf16.msra.mxu0 %v4053
      %5398 = vmatpush.bf16.msra.mxu0 %v4052
      %5399 = vmatpush.bf16.msra.mxu0 %v4051
      %5400 = vmatpush.bf16.msra.mxu0 %v4050
      %5401 = vmatpush.bf16.msra.mxu0 %v4049
      %5402 = vmatmul.bf16.gmra.mxu0 %v1410
      %v5403 = vpop.f32.mrf.mxu0
      %v5404 = vadd.f32 %v5391, %v5403
      %v5405 = vpop.f32.mrf.mxu0
      %5406 = vdwg.mxu0
      %5407 = vmatpush.bf16.msra.mxu0 %v4064
      %5408 = vmatpush.bf16.msra.mxu0 %v4063
      %5409 = vmatpush.bf16.msra.mxu0 %v4062
      %5410 = vmatpush.bf16.msra.mxu0 %v4061
      %5411 = vmatpush.bf16.msra.mxu0 %v4060
      %5412 = vmatpush.bf16.msra.mxu0 %v4059
      %5413 = vmatpush.bf16.msra.mxu0 %v4058
      %5414 = vmatpush.bf16.msra.mxu0 %v4057
      %5415 = vmatmul.bf16.gmra.mxu0 %v1411
      %v5416 = vpop.f32.mrf.mxu0
      %v5417 = vadd.f32 %v5404, %v5416
      %v5418 = vpop.f32.mrf.mxu0
      %5419 = vdwg.mxu0
      %5420 = vmatpush.bf16.msra.mxu0 %v4072
      %5421 = vmatpush.bf16.msra.mxu0 %v4071
      %5422 = vmatpush.bf16.msra.mxu0 %v4070
      %5423 = vmatpush.bf16.msra.mxu0 %v4069
      %5424 = vmatpush.bf16.msra.mxu0 %v4068
      %5425 = vmatpush.bf16.msra.mxu0 %v4067
      %5426 = vmatpush.bf16.msra.mxu0 %v4066
      %5427 = vmatpush.bf16.msra.mxu0 %v4065
      %5428 = vmatmul.bf16.gmra.mxu0 %v1412
      %v5429 = vpop.f32.mrf.mxu0
      %v5430 = vadd.f32 %v5417, %v5429
      %v5431 = vpop.f32.mrf.mxu0
      %5432 = vdwg.mxu0
      %5433 = vmatpush.bf16.msra.mxu0 %v4080
      %5434 = vmatpush.bf16.msra.mxu0 %v4079
      %5435 = vmatpush.bf16.msra.mxu0 %v4078
      %5436 = vmatpush.bf16.msra.mxu0 %v4077
      %5437 = vmatpush.bf16.msra.mxu0 %v4076
      %5438 = vmatpush.bf16.msra.mxu0 %v4075
      %5439 = vmatpush.bf16.msra.mxu0 %v4074
      %5440 = vmatpush.bf16.msra.mxu0 %v4073
      %5441 = vmatmul.bf16.gmra.mxu0 %v1415
      %v5442 = vpop.f32.mrf.mxu0
      %v5443 = vadd.f32 %v5430, %v5442
      %v5444 = vpop.f32.mrf.mxu0
      %5445 = vdwg.mxu0
      %v5446 = vadd.f32 %v283, %v5443
      %vm5447 = vcmask 517120
      %5448 = vst.msk [vmem:[#allocation2] sm:$0x3] %vm5447, %v5446
      %p5449 = scmp.eq.s32.totalorder %s20, 4
      // Predicated region
      $region41: #{mycnn_forward.3} parent=35 // pred_check
        %p5450 = pneg %p5449
      $region42: #{mycnn_forward.3} parent=35 // pred_check_branch
        %5452 = sbr.rel (%p5450) target = $region44
      $region43: #{mycnn_forward.3} parent=35 // pred_region
        %v5453 = vld [vmem:[#allocation2] sm:$0x3]
        %v5454 = vld [vmem:[%s267] sm:$0x1]
        %v5456 = vperm.slane %v5454, 0
        %v5458 = vadd.f32 %v5453, %v5456
        %v5459 = vmax.f32 %v5458, 0.0
        %v5460 = vld [vmem:[%s272] sm:$0xff]
        %v5461 = vld [vmem:[%s272 + $0x8] sm:$0xff]
        %v5462 = vld [vmem:[%s272 + $0x10] sm:$0xff]
        %v5463 = vld [vmem:[%s272 + $0x18] sm:$0xff]
        %v5464 = vld [vmem:[%s272 + $0x20] sm:$0xff]
        %v5465 = vld [vmem:[%s272 + $0x28] sm:$0xff]
        %v5466 = vld [vmem:[%s272 + $0x30] sm:$0xff]
        %v5467 = vld [vmem:[%s272 + $0x38] sm:$0xff]
        %vm5468 = vcmask 523264
        %v5470 = vsel %vm5468, %v5459, 0
        %5472 = vmatpush.msra.mxu0 0.0
        %5473 = vmatpush.msra.mxu0 0.0
        %5474 = vmatpush.msra.mxu0 0.0
        %5475 = vmatpush.msra.mxu0 0.0
        %5476 = vmatpush.msra.mxu0 0.0
        %5477 = vmatpush.msra.mxu0 0.0
        %5478 = vmatpush.msra.mxu0 0.0
        %5479 = vmatpush.msra.mxu0 0.0
        %5480 = vmatpush.msra.mxu0 %v5467
        %5481 = vmatpush.msra.mxu0 %v5466
        %5482 = vmatpush.msra.mxu0 %v5465
        %5483 = vmatpush.msra.mxu0 %v5464
        %5484 = vmatpush.msra.mxu0 %v5463
        %5485 = vmatpush.msra.mxu0 %v5462
        %5486 = vmatpush.msra.mxu0 %v5461
        %5487 = vmatpush.msra.mxu0 %v5460
        %5488 = vmatmul.f32.gmra.mxu0 %v5470
        %v5489 = vpop.f32.mrf.mxu0
        %v5490 = vadd.f32 0.0, %v5489
        %5491 = vdwg.mxu0
        %vm5492 = vcmask 156672
        %5493 = vst.msk [vmem:[%s276] sm:$0x3] %vm5492, %v5490
      $region44: #{mycnn_forward.3} parent=35 // pred_fallthru
        _
      %p5494 = scmp.lt.s32.totalorder %s19, 1
      %s5495 = scalar_select %p5494, %s19, 1
      %s5496 = smul.addr %s5495, 2
      %s5497 = scalar_lea.vmem %s4, %s5496
      // Predicated region
      $region45: #{mycnn_forward.3} parent=35 // pred_check
        %p5498 = pneg %p151
      $region46: #{mycnn_forward.3} parent=35 // pred_check_branch
        %5500 = sbr.rel (%p5498) target = $region48
      $region47: #{mycnn_forward.3} parent=35 // pred_region
        _
      $region48: #{mycnn_forward.3} parent=35 // pred_fallthru
        _
    $region36: #{mycnn_forward.3} parent=5 // pred_fallthru
      _
    %p5501 = scmp.le.s32.totalorder 2, %s10
    // Predicated region
    $region49: #{mycnn_forward.3} parent=5 // pred_check
      %p5502 = pneg %p5501
    $region50: #{mycnn_forward.3} parent=5 // pred_check_branch
      %5504 = sbr.rel (%p5502) target = $region52
    $region51: #{mycnn_forward.3} parent=5 // pred_region
      %s5505 = ssub.s32 %s10, 2
      // Predicated region
      $region53: #{mycnn_forward.3} parent=51 // pred_check
        %p5506 = pneg %p157
      $region54: #{mycnn_forward.3} parent=51 // pred_check_branch
        %5508 = sbr.rel (%p5506) target = $region56
      $region55: #{mycnn_forward.3} parent=51 // pred_region
        %p5509 = scmp.lt.s32.totalorder %s21, 1
        %s5510 = scalar_select %p5509, %s21, 1
        %s5511 = smul.addr %s5510, 2
        %s5512 = scalar_lea.vmem %s4, %s5511
      $region56: #{mycnn_forward.3} parent=51 // pred_fallthru
        _
    $region52: #{mycnn_forward.3} parent=5 // pred_fallthru
      _
  $region6: #{mycnn_forward.3} parent=0 // loop_footer
    %s14 = sadd.s32 1, %s10
  $region7: #{mycnn_forward.3} parent=0 // loop_footer_branch
    %9 = sbr.rel target = $region3
  $region8: #{mycnn_forward.3} parent=0 // loop_exit
    _

</llo_original>
